<compile_context>
chip_gen: v7x
topology: tpu7x:2x2x1
jax: 0.10.0
libtpu: 0.0.40
codegen_flags: <defaults>
</compile_context>

<pallas_src>
import math
from functools import partial

import jax
import jax.numpy as jnp
from jax import lax
from jax.experimental import pallas as pl
from jax.experimental.pallas import tpu as pltpu

I_F_LEN = 256          # config.i_f_len
HIDDEN = I_F_LEN // 2  # shared-layer width (128)
N_TRANSITIONS = 20     # config.seq_len (21) - 1
OUT_PAD = 128          # lane-dense padded pose width (cols 0..6 real, rest 0)


# ---------------------------------------------------------------------------
# Pallas kernel
# ---------------------------------------------------------------------------
def _imu_vio_kernel(L, tile_n,
                    x_ref,
                    c1w, c1s, c1b,
                    c2w0, c2w1, c2w2, c2s, c2b,
                    c3w0, c3w1, c3w2, c3s, c3b,
                    pw_ref, pb_ref, sw_ref, sb_ref, hw_ref, hb_ref,
                    out_ref):
    """One tile = tile_n IMU windows, rows time-major (row = l*tile_n + n)."""
    T = tile_n
    f32 = jnp.float32
    bf16 = jnp.bfloat16

    def bn_lrelu(y, s, b):
        y = y * s + b                       # conv bias + eval-BN folded
        return jnp.where(y > 0, y, 0.1 * y)  # LeakyReLU(0.1)

    def shifted(h):
        # h[t-1] / h[t+1] within each window: row shift by T with zero blocks
        # at the window boundaries (l == 0 / l == L-1).  T is a multiple of the
        # sublane tiling, so these are aligned slices/concats (no matmuls).
        zero = jnp.zeros((T, h.shape[1]), h.dtype)
        h_prev = jnp.concatenate([zero, h[:-T, :]], axis=0)
        h_next = jnp.concatenate([h[T:, :], zero], axis=0)
        return h_prev, h_next

    # conv1: taps fused into one K=18 matmul (wrapper ships [x[t-1]|x[t]|x[t+1]])
    x = x_ref[...]                                                   # (R, 18) bf16
    y1 = jnp.dot(x, c1w[...], preferred_element_type=f32)
    h1 = bn_lrelu(y1, c1s[...], c1b[...]).astype(bf16)               # (R, 64)

    # conv2
    h1p, h1n = shifted(h1)
    y2 = (jnp.dot(h1p, c2w0[...], preferred_element_type=f32)
          + jnp.dot(h1, c2w1[...], preferred_element_type=f32)
          + jnp.dot(h1n, c2w2[...], preferred_element_type=f32))
    h2 = bn_lrelu(y2, c2s[...], c2b[...]).astype(bf16)               # (R, 128)

    # conv3
    h2p, h2n = shifted(h2)
    y3 = (jnp.dot(h2p, c3w0[...], preferred_element_type=f32)
          + jnp.dot(h2, c3w1[...], preferred_element_type=f32)
          + jnp.dot(h2n, c3w2[...], preferred_element_type=f32))
    h3 = bn_lrelu(y3, c3s[...], c3b[...]).astype(bf16)               # (R, 256)

    # proj: Linear(256*L, 256).  Time-major layout -> time step l of every
    # window in the tile is the contiguous, aligned slice h3[l*T:(l+1)*T].
    acc = jnp.zeros((T, I_F_LEN), f32)
    for l in range(L):                                               # static unroll
        h_l = h3[l * T:(l + 1) * T, :]                               # (T, 256)
        w_l = pw_ref[l * I_F_LEN:(l + 1) * I_F_LEN, :]               # (256, 256)
        acc = acc + jnp.dot(h_l, w_l, preferred_element_type=f32)
    fi = acc + pb_ref[...]                                           # (T, 256)

    # shared layer: Linear(256,128) + ReLU  (Dropout(0.1) identity in eval)
    sh = jnp.maximum(
        jnp.dot(fi.astype(bf16), sw_ref[...], preferred_element_type=f32)
        + sb_ref[...], 0.0)

    # combined heads, padded to 128 output lanes: [trans(3) | quat(4) | zeros]
    out = jnp.dot(sh.astype(bf16), hw_ref[...],
                  preferred_element_type=f32) + hb_ref[...]          # (T, 128)

    # normalize only the quaternion columns 3..6 (F.normalize, eps=1e-12)
    col = lax.broadcasted_iota(jnp.int32, out.shape, 1)
    qmask = (col >= 3) & (col < 7)
    ssq = jnp.sum(jnp.where(qmask, out * out, 0.0), axis=-1, keepdims=True)
    inv = lax.rsqrt(jnp.maximum(ssq, 1e-24))        # == 1 / max(||q||, 1e-12)
    out_ref[...] = jnp.where(qmask, out * inv, out)


# ---------------------------------------------------------------------------
# Wrapper: layout plumbing + pallas_call
# ---------------------------------------------------------------------------
def inertial_poses_pallas(params, imu, L):
    """imu: (B, N_TRANSITIONS*L, 6) -> poses (B*N_TRANSITIONS, 7)."""
    bf16 = jnp.bfloat16
    B = imu.shape[0]
    N = B * N_TRANSITIONS

    # Large-ish tile for MXU fill; keep it a multiple of the sublane tiling so
    # all in-kernel shifts/slices stay aligned.  Pad the window count so any N
    # works; with N > 32 the grid has >= 2 steps (both v7x TensorCores busy).
    tile_n = 64 if N >= 128 else 32
    n_pad = (-N) % tile_n
    num_tiles = (N + n_pad) // tile_n
    R = tile_n * L

    # Window-major (N, L, 6) -> fused-tap channels [x[t-1]|x[t]|x[t+1]] and
    # time-major tiles (row = l*tile_n + n), shipped to the kernel as bf16.
    x = imu.reshape(N, L, 6).astype(jnp.float32)
    if n_pad:
        x = jnp.concatenate([x, jnp.zeros((n_pad, L, 6), jnp.float32)], axis=0)
    xp = jnp.pad(x, ((0, 0), (1, 1), (0, 0)))
    x_cat = jnp.concatenate([xp[:, :-2], x, xp[:, 2:]], axis=-1)     # (Np, L, 18)
    x_tm = (x_cat.reshape(num_tiles, tile_n, L, 18)
                 .transpose(0, 2, 1, 3)
                 .reshape(num_tiles, R, 18)).astype(bf16)

    # Matmul weights in bf16 (f32 accumulation in-kernel); scales/biases in f32.
    c1w = jnp.concatenate([params['c1w0'], params['c1w1'], params['c1w2']],
                          axis=0).astype(bf16)                       # (18, 64)
    hw_pad = jnp.pad(params['hw'], ((0, 0), (0, OUT_PAD - 7))).astype(bf16)
    hb_pad = jnp.pad(params['hb'], ((0, 0), (0, OUT_PAD - 7)))
    weights = [
        c1w, params['c1s'], params['c1b'],
        params['c2w0'].astype(bf16), params['c2w1'].astype(bf16),
        params['c2w2'].astype(bf16), params['c2s'], params['c2b'],
        params['c3w0'].astype(bf16), params['c3w1'].astype(bf16),
        params['c3w2'].astype(bf16), params['c3s'], params['c3b'],
        params['pw'].astype(bf16), params['pb'],
        params['sw'].astype(bf16), params['sb'],
        hw_pad, hb_pad,
    ]

    in_specs = [pl.BlockSpec((None, R, 18), lambda i: (i, 0, 0))]
    in_specs += [pl.BlockSpec(w.shape, lambda i: (0, 0)) for w in weights]

    out = pl.pallas_call(
        partial(_imu_vio_kernel, L, tile_n),
        out_shape=jax.ShapeDtypeStruct((num_tiles, tile_n, OUT_PAD), jnp.float32),
        grid=(num_tiles,),
        in_specs=in_specs,
        out_specs=pl.BlockSpec((None, tile_n, OUT_PAD), lambda i: (i, 0, 0)),
        compiler_params=pltpu.CompilerParams(
            dimension_semantics=("parallel",),
            vmem_limit_bytes=48 << 20),
    )(x_tm, *weights)

    return out.reshape(num_tiles * tile_n, OUT_PAD)[:N, :7]


# ---------------------------------------------------------------------------
# Parameters (deterministic synthetic init, PyTorch-compatible shapes)
# ---------------------------------------------------------------------------
def init_params(key, L):
    keys = list(jax.random.split(key, 24))
    it = iter(keys)

    def nk():
        return next(it)

    def uniform(k, shape, bound):
        return jax.random.uniform(k, shape, jnp.float32, -bound, bound)

    p = {}

    def conv_layer(prefix, c_in, c_out):
        bound = 1.0 / math.sqrt(c_in * 3)
        w = uniform(nk(), (c_out, c_in, 3), bound)            # PyTorch Conv1d weight
        conv_b = uniform(nk(), (c_out,), bound)
        gamma = 1.0 + 0.1 * jax.random.normal(nk(), (c_out,), jnp.float32)
        beta = 0.1 * jax.random.normal(nk(), (c_out,), jnp.float32)
        r_mean = 0.1 * jax.random.normal(nk(), (c_out,), jnp.float32)
        r_var = jnp.ones((c_out,), jnp.float32)
        scale = gamma / jnp.sqrt(r_var + 1e-5)                # eval-mode BN fold
        bias = (conv_b - r_mean) * scale + beta
        p[prefix + 'w0'] = jnp.transpose(w[:, :, 0])          # tap for x[t-1]
        p[prefix + 'w1'] = jnp.transpose(w[:, :, 1])          # tap for x[t]
        p[prefix + 'w2'] = jnp.transpose(w[:, :, 2])          # tap for x[t+1]
        p[prefix + 's'] = scale.reshape(1, c_out)
        p[prefix + 'b'] = bias.reshape(1, c_out)

    conv_layer('c1', 6, 64)
    conv_layer('c2', 64, 128)
    conv_layer('c3', 128, 256)

    # proj: Linear(256 * L, 256).  PyTorch flattens the conv output in
    # (channel, time) order (index = c*L + l); permute to row = l*256 + c.
    in_f = I_F_LEN * L
    bound = 1.0 / math.sqrt(in_f)
    w_pt = uniform(nk(), (I_F_LEN, in_f), bound)
    p['pw'] = jnp.transpose(w_pt.reshape(I_F_LEN, I_F_LEN, L),
                            (2, 1, 0)).reshape(L * I_F_LEN, I_F_LEN)
    p['pb'] = uniform(nk(), (1, I_F_LEN), bound)

    # shared layer: Linear(256, 128)
    bound = 1.0 / math.sqrt(I_F_LEN)
    p['sw'] = jnp.transpose(uniform(nk(), (HIDDEN, I_F_LEN), bound))
    p['sb'] = uniform(nk(), (1, HIDDEN), bound)

    # heads: trans xavier_uniform (zero bias), rot xavier gain=0.01, bias[3]=0.1
    def xavier(k, out_f, fan_in, gain):
        b = gain * math.sqrt(6.0 / (fan_in + out_f))
        return jax.random.uniform(k, (out_f, fan_in), jnp.float32, -b, b)

    tw = xavier(nk(), 3, HIDDEN, 1.0)
    rw = xavier(nk(), 4, HIDDEN, 0.01)
    p['hw'] = jnp.concatenate([jnp.transpose(tw), jnp.transpose(rw)], axis=1)
    p['hb'] = jnp.zeros((7,), jnp.float32).at[6].set(0.1).reshape(1, 7)

    # learned loss scales
    p['s_t'] = jnp.zeros((), jnp.float32)
    p['s_r'] = jnp.zeros((), jnp.float32)
    p['s_p'] = jnp.zeros((), jnp.float32)
    return p


# ---------------------------------------------------------------------------
# Loss glue (plain JAX; cheap reductions on the kernel output)
# ---------------------------------------------------------------------------
def _losses(params, poses, gt_poses, epoch):
    n_trans = poses.shape[1]
    pred_trans, pred_rot = poses[..., :3], poses[..., 3:]
    gt_trans, gt_rot = gt_poses[..., :3], gt_poses[..., 3:]

    scale_norm = jnp.maximum(
        jnp.mean(jnp.linalg.norm(gt_trans.reshape(-1, 3), axis=-1)), 1.0)
    d = pred_trans / scale_norm - gt_trans / scale_norm
    ad = jnp.abs(d)
    trans_loss = jnp.mean(jnp.where(ad < 1.0, 0.5 * d * d, ad - 0.5))  # smooth_l1

    def normalize(q, eps):
        n = jnp.linalg.norm(q, axis=-1, keepdims=True)
        return q / jnp.maximum(n, eps)

    pq = normalize(pred_rot.reshape(-1, 4), 1e-8)
    gq = normalize(gt_rot.reshape(-1, 4), 1e-8)
    abs_dot = jnp.minimum(jnp.abs(jnp.sum(pq * gq, axis=-1)), 1.0 - 1e-7)
    rot_loss = jnp.mean(2.0 * jnp.arctan2(jnp.sqrt(1.0 - abs_dot ** 2), abs_dot))

    pred_path = jnp.sum(jnp.linalg.norm(pred_trans, axis=-1), axis=1) / n_trans
    gt_path = jnp.sum(jnp.linalg.norm(gt_trans, axis=-1), axis=1) / n_trans
    path_loss = jnp.mean((pred_path - gt_path) ** 2)

    s_t_c = jnp.clip(params['s_t'], -2.0, 2.0)
    s_r_c = jnp.clip(params['s_r'], -2.0, 2.0)
    s_p_c = jnp.clip(params['s_p'], -2.0, 2.0)
    pf = jnp.minimum(0.02 + 0.08 * epoch / 5.0, 0.1) / 0.1
    total = (jnp.exp(-s_t_c) * trans_loss + jnp.exp(-s_r_c) * rot_loss
             + jnp.exp(-s_p_c) * path_loss * pf
             + s_t_c + s_r_c + s_p_c * pf
             + 1e-4 * (s_t_c ** 2 + s_r_c ** 2 + s_p_c ** 2 * pf))
    return {'total_loss': total, 'trans_loss_raw': trans_loss,
            'rot_loss_raw': rot_loss, 'path_loss': path_loss,
            's_t': params['s_t'], 's_r': params['s_r'], 's_p': params['s_p'],
            's_t_c': s_t_c, 's_r_c': s_r_c, 's_p_c': s_p_c}


# ---------------------------------------------------------------------------
# Forward wrapper (inference / eval-mode forward of IMUOnlyVIO)
# ---------------------------------------------------------------------------
def imu_only_vio_forward(params, batch, epoch=0):
    imu = batch['imu']
    B, total, ch = imu.shape
    assert ch == 6, 'Expected 6 IMU channels'
    assert total % N_TRANSITIONS == 0
    L = total // N_TRANSITIONS

    poses = inertial_poses_pallas(params, imu, L).reshape(B, N_TRANSITIONS, 7)

    out = {'poses': poses}
    if 'gt_poses' in batch:
        out.update(_losses(params, poses, batch['gt_poses'], epoch))
    # TODO(synk): training-mode Dropout / BatchNorm batch statistics are not
    # reproduced (kernel implements the eval-mode forward).
    return out


# ---------------------------------------------------------------------------
# Pure-JAX reference (same bf16-operand / f32-accumulate matmul recipe)
# ---------------------------------------------------------------------------
def _reference_poses(params, imu, L):
    bf16 = jnp.bfloat16
    B = imu.shape[0]
    N = B * N_TRANSITIONS
    x = imu.reshape(N, L, 6).astype(jnp.float32)

    def conv(h, pre):
        hb = h.astype(bf16)
        hp = jnp.pad(hb, ((0, 0), (1, 1), (0, 0)))
        y = (jnp.einsum('nlc,cd->nld', hp[:, :-2], params[pre + 'w0'].astype(bf16),
                        preferred_element_type=jnp.float32)
             + jnp.einsum('nlc,cd->nld', hp[:, 1:-1], params[pre + 'w1'].astype(bf16),
                          preferred_element_type=jnp.float32)
             + jnp.einsum('nlc,cd->nld', hp[:, 2:], params[pre + 'w2'].astype(bf16),
                          preferred_element_type=jnp.float32))
        y = y * params[pre + 's'] + params[pre + 'b']
        return jnp.where(y > 0, y, 0.1 * y)

    h = conv(conv(conv(x, 'c1'), 'c2'), 'c3')                 # (N, L, 256)
    fi = jnp.dot(h.astype(bf16).reshape(N, L * I_F_LEN), params['pw'].astype(bf16),
                 preferred_element_type=jnp.float32) + params['pb']
    sh = jnp.maximum(jnp.dot(fi.astype(bf16), params['sw'].astype(bf16),
                             preferred_element_type=jnp.float32) + params['sb'], 0.0)
    out7 = jnp.dot(sh.astype(bf16), params['hw'].astype(bf16),
                   preferred_element_type=jnp.float32) + params['hb']
    trans, quat = out7[:, :3], out7[:, 3:]
    quat = quat / jnp.maximum(jnp.linalg.norm(quat, axis=-1, keepdims=True), 1e-12)
    return jnp.concatenate([trans, quat], axis=-1).reshape(B, N_TRANSITIONS, 7)


if __name__ == "__main__":
    key = jax.random.PRNGKey(0)
    k_imu, k_gt, k_par = jax.random.split(key, 3)

    B = 2
    L = 11                                    # samples per transition interval
    imu = 0.5 * jax.random.normal(k_imu, (B, N_TRANSITIONS * L, 6), jnp.float32)
    gt_poses = jax.random.normal(k_gt, (B, N_TRANSITIONS, 7), jnp.float32)
    params = init_params(k_par, L)

    batch = {'imu': imu, 'gt_poses': gt_poses}
    out = imu_only_vio_forward(params, batch, epoch=0)
    out = jax.block_until_ready(out)

    poses = out['poses']
    assert poses.shape == (B, N_TRANSITIONS, 7)
    assert bool(jnp.all(jnp.isfinite(poses)))
    assert bool(jnp.isfinite(out['total_loss']))

    ref = _reference_poses(params, imu, L)
    assert bool(jnp.allclose(poses, ref, atol=1e-3, rtol=1e-3)), \
        'Pallas kernel mismatch vs JAX reference'

    print("KERNEL_OK")
</pallas_src>

<mosaic_0001>
module attributes {stable_mosaic.version = 11 : i64} {
  func.func @_imu_vio_kernel(%arg0: i32, %arg1: memref<1x352x18xbf16, #tpu.memory_space<vmem>>, %arg2: memref<18x64xbf16, #tpu.memory_space<vmem>>, %arg3: memref<1x64xf32, #tpu.memory_space<vmem>>, %arg4: memref<1x64xf32, #tpu.memory_space<vmem>>, %arg5: memref<64x128xbf16, #tpu.memory_space<vmem>>, %arg6: memref<64x128xbf16, #tpu.memory_space<vmem>>, %arg7: memref<64x128xbf16, #tpu.memory_space<vmem>>, %arg8: memref<1x128xf32, #tpu.memory_space<vmem>>, %arg9: memref<1x128xf32, #tpu.memory_space<vmem>>, %arg10: memref<128x256xbf16, #tpu.memory_space<vmem>>, %arg11: memref<128x256xbf16, #tpu.memory_space<vmem>>, %arg12: memref<128x256xbf16, #tpu.memory_space<vmem>>, %arg13: memref<1x256xf32, #tpu.memory_space<vmem>>, %arg14: memref<1x256xf32, #tpu.memory_space<vmem>>, %arg15: memref<2816x256xbf16, #tpu.memory_space<vmem>>, %arg16: memref<1x256xf32, #tpu.memory_space<vmem>>, %arg17: memref<256x128xbf16, #tpu.memory_space<vmem>>, %arg18: memref<1x128xf32, #tpu.memory_space<vmem>>, %arg19: memref<128x128xbf16, #tpu.memory_space<vmem>>, %arg20: memref<1x128xf32, #tpu.memory_space<vmem>>, %arg21: memref<1x32x128xf32, #tpu.memory_space<vmem>>) attributes {dimension_semantics = [#tpu.dimension_semantics<parallel>], iteration_bounds = array<i64: 2>, scalar_prefetch = 0 : i64, scratch_operands = 0 : i64, tpu.core_type = #tpu.core_type<tc>, window_params = [{transform_indices = @transform_0, window_bounds = array<i64: 1, 352, 18>}, {pipeline_mode = #tpu.pipeline_mode<synchronous>, transform_indices = @transform_1, window_bounds = array<i64: 18, 64>}, {pipeline_mode = #tpu.pipeline_mode<synchronous>, transform_indices = @transform_2, window_bounds = array<i64: 1, 64>}, {pipeline_mode = #tpu.pipeline_mode<synchronous>, transform_indices = @transform_3, window_bounds = array<i64: 1, 64>}, {pipeline_mode = #tpu.pipeline_mode<synchronous>, transform_indices = @transform_4, window_bounds = array<i64: 64, 128>}, {pipeline_mode = #tpu.pipeline_mode<synchronous>, transform_indices = @transform_5, window_bounds = array<i64: 64, 128>}, {pipeline_mode = #tpu.pipeline_mode<synchronous>, transform_indices = @transform_6, window_bounds = array<i64: 64, 128>}, {pipeline_mode = #tpu.pipeline_mode<synchronous>, transform_indices = @transform_7, window_bounds = array<i64: 1, 128>}, {pipeline_mode = #tpu.pipeline_mode<synchronous>, transform_indices = @transform_8, window_bounds = array<i64: 1, 128>}, {pipeline_mode = #tpu.pipeline_mode<synchronous>, transform_indices = @transform_9, window_bounds = array<i64: 128, 256>}, {pipeline_mode = #tpu.pipeline_mode<synchronous>, transform_indices = @transform_10, window_bounds = array<i64: 128, 256>}, {pipeline_mode = #tpu.pipeline_mode<synchronous>, transform_indices = @transform_11, window_bounds = array<i64: 128, 256>}, {pipeline_mode = #tpu.pipeline_mode<synchronous>, transform_indices = @transform_12, window_bounds = array<i64: 1, 256>}, {pipeline_mode = #tpu.pipeline_mode<synchronous>, transform_indices = @transform_13, window_bounds = array<i64: 1, 256>}, {pipeline_mode = #tpu.pipeline_mode<synchronous>, transform_indices = @transform_14, window_bounds = array<i64: 2816, 256>}, {pipeline_mode = #tpu.pipeline_mode<synchronous>, transform_indices = @transform_15, window_bounds = array<i64: 1, 256>}, {pipeline_mode = #tpu.pipeline_mode<synchronous>, transform_indices = @transform_16, window_bounds = array<i64: 256, 128>}, {pipeline_mode = #tpu.pipeline_mode<synchronous>, transform_indices = @transform_17, window_bounds = array<i64: 1, 128>}, {pipeline_mode = #tpu.pipeline_mode<synchronous>, transform_indices = @transform_18, window_bounds = array<i64: 128, 128>}, {pipeline_mode = #tpu.pipeline_mode<synchronous>, transform_indices = @transform_19, window_bounds = array<i64: 1, 128>}, {transform_indices = @transform_20, window_bounds = array<i64: 1, 32, 128>}]} {
    %c0 = arith.constant 0 : index
    %c0_0 = arith.constant 0 : index
    %c0_1 = arith.constant 0 : index
    %0 = vector.load %arg1[%c0, %c0_0, %c0_1] : memref<1x352x18xbf16, #tpu.memory_space<vmem>>, vector<1x352x18xbf16>
    %1 = vector.shape_cast %0 : vector<1x352x18xbf16> to vector<352x18xbf16>
    %c0_2 = arith.constant 0 : index
    %c0_3 = arith.constant 0 : index
    %2 = vector.load %arg2[%c0_2, %c0_3] : memref<18x64xbf16, #tpu.memory_space<vmem>>, vector<18x64xbf16>
    %cst = arith.constant dense<0.000000e+00> : vector<352x64xf32>
    %3 = tpu.matmul %1, %2, %cst {dimension_numbers = #tpu.dot_dimension_numbers<[1], [0], [0], [1], [0, 0, 1, 1], [], []>} : vector<352x18xbf16>, vector<18x64xbf16>, vector<352x64xf32> -> vector<352x64xf32>
    %c0_4 = arith.constant 0 : index
    %c0_5 = arith.constant 0 : index
    %4 = vector.load %arg3[%c0_4, %c0_5] : memref<1x64xf32, #tpu.memory_space<vmem>>, vector<1x64xf32>
    %c0_6 = arith.constant 0 : index
    %c0_7 = arith.constant 0 : index
    %5 = vector.load %arg4[%c0_6, %c0_7] : memref<1x64xf32, #tpu.memory_space<vmem>>, vector<1x64xf32>
    %6 = vector.broadcast %4 : vector<1x64xf32> to vector<352x64xf32>
    %7 = arith.mulf %3, %6 : vector<352x64xf32>
    %8 = vector.broadcast %5 : vector<1x64xf32> to vector<352x64xf32>
    %9 = arith.addf %7, %8 : vector<352x64xf32>
    %cst_8 = arith.constant 0.000000e+00 : f32
    %10 = vector.broadcast %cst_8 : f32 to vector<352x64xf32>
    %11 = arith.cmpf ogt, %9, %10 : vector<352x64xf32>
    %cst_9 = arith.constant 1.000000e-01 : f32
    %12 = vector.broadcast %cst_9 : f32 to vector<352x64xf32>
    %13 = arith.mulf %12, %9 : vector<352x64xf32>
    %14 = arith.select %11, %9, %13 : vector<352x64xi1>, vector<352x64xf32>
    %15 = arith.truncf %14 : vector<352x64xf32> to vector<352x64xbf16>
    %cst_10 = arith.constant 0.000000e+00 : bf16
    %16 = vector.broadcast %cst_10 : bf16 to vector<32x64xbf16>
    %17 = vector.extract_strided_slice %15 {offsets = [0, 0], sizes = [320, 64], strides = [1, 1]} : vector<352x64xbf16> to vector<320x64xbf16>
    %18 = tpu.concatenate %16, %17 in 0 : vector<32x64xbf16>, vector<320x64xbf16> -> vector<352x64xbf16>
    %19 = vector.extract_strided_slice %15 {offsets = [32, 0], sizes = [320, 64], strides = [1, 1]} : vector<352x64xbf16> to vector<320x64xbf16>
    %20 = tpu.concatenate %19, %16 in 0 : vector<320x64xbf16>, vector<32x64xbf16> -> vector<352x64xbf16>
    %c0_11 = arith.constant 0 : index
    %c0_12 = arith.constant 0 : index
    %21 = vector.load %arg5[%c0_11, %c0_12] : memref<64x128xbf16, #tpu.memory_space<vmem>>, vector<64x128xbf16>
    %cst_13 = arith.constant dense<0.000000e+00> : vector<352x128xf32>
    %22 = tpu.matmul %18, %21, %cst_13 {dimension_numbers = #tpu.dot_dimension_numbers<[1], [0], [0], [1], [0, 0, 1, 1], [], []>} : vector<352x64xbf16>, vector<64x128xbf16>, vector<352x128xf32> -> vector<352x128xf32>
    %c0_14 = arith.constant 0 : index
    %c0_15 = arith.constant 0 : index
    %23 = vector.load %arg6[%c0_14, %c0_15] : memref<64x128xbf16, #tpu.memory_space<vmem>>, vector<64x128xbf16>
    %cst_16 = arith.constant dense<0.000000e+00> : vector<352x128xf32>
    %24 = tpu.matmul %15, %23, %cst_16 {dimension_numbers = #tpu.dot_dimension_numbers<[1], [0], [0], [1], [0, 0, 1, 1], [], []>} : vector<352x64xbf16>, vector<64x128xbf16>, vector<352x128xf32> -> vector<352x128xf32>
    %25 = arith.addf %22, %24 : vector<352x128xf32>
    %c0_17 = arith.constant 0 : index
    %c0_18 = arith.constant 0 : index
    %26 = vector.load %arg7[%c0_17, %c0_18] : memref<64x128xbf16, #tpu.memory_space<vmem>>, vector<64x128xbf16>
    %cst_19 = arith.constant dense<0.000000e+00> : vector<352x128xf32>
    %27 = tpu.matmul %20, %26, %cst_19 {dimension_numbers = #tpu.dot_dimension_numbers<[1], [0], [0], [1], [0, 0, 1, 1], [], []>} : vector<352x64xbf16>, vector<64x128xbf16>, vector<352x128xf32> -> vector<352x128xf32>
    %28 = arith.addf %25, %27 : vector<352x128xf32>
    %c0_20 = arith.constant 0 : index
    %c0_21 = arith.constant 0 : index
    %29 = vector.load %arg8[%c0_20, %c0_21] : memref<1x128xf32, #tpu.memory_space<vmem>>, vector<1x128xf32>
    %c0_22 = arith.constant 0 : index
    %c0_23 = arith.constant 0 : index
    %30 = vector.load %arg9[%c0_22, %c0_23] : memref<1x128xf32, #tpu.memory_space<vmem>>, vector<1x128xf32>
    %31 = vector.broadcast %29 : vector<1x128xf32> to vector<352x128xf32>
    %32 = arith.mulf %28, %31 : vector<352x128xf32>
    %33 = vector.broadcast %30 : vector<1x128xf32> to vector<352x128xf32>
    %34 = arith.addf %32, %33 : vector<352x128xf32>
    %cst_24 = arith.constant 0.000000e+00 : f32
    %35 = vector.broadcast %cst_24 : f32 to vector<352x128xf32>
    %36 = arith.cmpf ogt, %34, %35 : vector<352x128xf32>
    %cst_25 = arith.constant 1.000000e-01 : f32
    %37 = vector.broadcast %cst_25 : f32 to vector<352x128xf32>
    %38 = arith.mulf %37, %34 : vector<352x128xf32>
    %39 = arith.select %36, %34, %38 : vector<352x128xi1>, vector<352x128xf32>
    %40 = arith.truncf %39 : vector<352x128xf32> to vector<352x128xbf16>
    %cst_26 = arith.constant 0.000000e+00 : bf16
    %41 = vector.broadcast %cst_26 : bf16 to vector<32x128xbf16>
    %42 = vector.extract_strided_slice %40 {offsets = [0, 0], sizes = [320, 128], strides = [1, 1]} : vector<352x128xbf16> to vector<320x128xbf16>
    %43 = tpu.concatenate %41, %42 in 0 : vector<32x128xbf16>, vector<320x128xbf16> -> vector<352x128xbf16>
    %44 = vector.extract_strided_slice %40 {offsets = [32, 0], sizes = [320, 128], strides = [1, 1]} : vector<352x128xbf16> to vector<320x128xbf16>
    %45 = tpu.concatenate %44, %41 in 0 : vector<320x128xbf16>, vector<32x128xbf16> -> vector<352x128xbf16>
    %c0_27 = arith.constant 0 : index
    %c0_28 = arith.constant 0 : index
    %46 = vector.load %arg10[%c0_27, %c0_28] : memref<128x256xbf16, #tpu.memory_space<vmem>>, vector<128x256xbf16>
    %cst_29 = arith.constant dense<0.000000e+00> : vector<352x256xf32>
    %47 = tpu.matmul %43, %46, %cst_29 {dimension_numbers = #tpu.dot_dimension_numbers<[1], [0], [0], [1], [0, 0, 1, 1], [], []>} : vector<352x128xbf16>, vector<128x256xbf16>, vector<352x256xf32> -> vector<352x256xf32>
    %c0_30 = arith.constant 0 : index
    %c0_31 = arith.constant 0 : index
    %48 = vector.load %arg11[%c0_30, %c0_31] : memref<128x256xbf16, #tpu.memory_space<vmem>>, vector<128x256xbf16>
    %cst_32 = arith.constant dense<0.000000e+00> : vector<352x256xf32>
    %49 = tpu.matmul %40, %48, %cst_32 {dimension_numbers = #tpu.dot_dimension_numbers<[1], [0], [0], [1], [0, 0, 1, 1], [], []>} : vector<352x128xbf16>, vector<128x256xbf16>, vector<352x256xf32> -> vector<352x256xf32>
    %50 = arith.addf %47, %49 : vector<352x256xf32>
    %c0_33 = arith.constant 0 : index
    %c0_34 = arith.constant 0 : index
    %51 = vector.load %arg12[%c0_33, %c0_34] : memref<128x256xbf16, #tpu.memory_space<vmem>>, vector<128x256xbf16>
    %cst_35 = arith.constant dense<0.000000e+00> : vector<352x256xf32>
    %52 = tpu.matmul %45, %51, %cst_35 {dimension_numbers = #tpu.dot_dimension_numbers<[1], [0], [0], [1], [0, 0, 1, 1], [], []>} : vector<352x128xbf16>, vector<128x256xbf16>, vector<352x256xf32> -> vector<352x256xf32>
    %53 = arith.addf %50, %52 : vector<352x256xf32>
    %c0_36 = arith.constant 0 : index
    %c0_37 = arith.constant 0 : index
    %54 = vector.load %arg13[%c0_36, %c0_37] : memref<1x256xf32, #tpu.memory_space<vmem>>, vector<1x256xf32>
    %c0_38 = arith.constant 0 : index
    %c0_39 = arith.constant 0 : index
    %55 = vector.load %arg14[%c0_38, %c0_39] : memref<1x256xf32, #tpu.memory_space<vmem>>, vector<1x256xf32>
    %56 = vector.broadcast %54 : vector<1x256xf32> to vector<352x256xf32>
    %57 = arith.mulf %53, %56 : vector<352x256xf32>
    %58 = vector.broadcast %55 : vector<1x256xf32> to vector<352x256xf32>
    %59 = arith.addf %57, %58 : vector<352x256xf32>
    %cst_40 = arith.constant 0.000000e+00 : f32
    %60 = vector.broadcast %cst_40 : f32 to vector<352x256xf32>
    %61 = arith.cmpf ogt, %59, %60 : vector<352x256xf32>
    %cst_41 = arith.constant 1.000000e-01 : f32
    %62 = vector.broadcast %cst_41 : f32 to vector<352x256xf32>
    %63 = arith.mulf %62, %59 : vector<352x256xf32>
    %64 = arith.select %61, %59, %63 : vector<352x256xi1>, vector<352x256xf32>
    %65 = arith.truncf %64 : vector<352x256xf32> to vector<352x256xbf16>
    %cst_42 = arith.constant 0.000000e+00 : f32
    %66 = vector.broadcast %cst_42 : f32 to vector<32x256xf32>
    %67 = vector.extract_strided_slice %65 {offsets = [0, 0], sizes = [32, 256], strides = [1, 1]} : vector<352x256xbf16> to vector<32x256xbf16>
    %c0_43 = arith.constant 0 : index
    %c0_44 = arith.constant 0 : index
    %68 = vector.load %arg15[%c0_43, %c0_44] : memref<2816x256xbf16, #tpu.memory_space<vmem>>, vector<256x256xbf16>
    %cst_45 = arith.constant dense<0.000000e+00> : vector<32x256xf32>
    %69 = tpu.matmul %67, %68, %cst_45 {dimension_numbers = #tpu.dot_dimension_numbers<[1], [0], [0], [1], [0, 0, 1, 1], [], []>} : vector<32x256xbf16>, vector<256x256xbf16>, vector<32x256xf32> -> vector<32x256xf32>
    %70 = arith.addf %66, %69 : vector<32x256xf32>
    %71 = vector.extract_strided_slice %65 {offsets = [32, 0], sizes = [32, 256], strides = [1, 1]} : vector<352x256xbf16> to vector<32x256xbf16>
    %c256 = arith.constant 256 : index
    %c0_46 = arith.constant 0 : index
    %72 = vector.load %arg15[%c256, %c0_46] : memref<2816x256xbf16, #tpu.memory_space<vmem>>, vector<256x256xbf16>
    %cst_47 = arith.constant dense<0.000000e+00> : vector<32x256xf32>
    %73 = tpu.matmul %71, %72, %cst_47 {dimension_numbers = #tpu.dot_dimension_numbers<[1], [0], [0], [1], [0, 0, 1, 1], [], []>} : vector<32x256xbf16>, vector<256x256xbf16>, vector<32x256xf32> -> vector<32x256xf32>
    %74 = arith.addf %70, %73 : vector<32x256xf32>
    %75 = vector.extract_strided_slice %65 {offsets = [64, 0], sizes = [32, 256], strides = [1, 1]} : vector<352x256xbf16> to vector<32x256xbf16>
    %c512 = arith.constant 512 : index
    %c0_48 = arith.constant 0 : index
    %76 = vector.load %arg15[%c512, %c0_48] : memref<2816x256xbf16, #tpu.memory_space<vmem>>, vector<256x256xbf16>
    %cst_49 = arith.constant dense<0.000000e+00> : vector<32x256xf32>
    %77 = tpu.matmul %75, %76, %cst_49 {dimension_numbers = #tpu.dot_dimension_numbers<[1], [0], [0], [1], [0, 0, 1, 1], [], []>} : vector<32x256xbf16>, vector<256x256xbf16>, vector<32x256xf32> -> vector<32x256xf32>
    %78 = arith.addf %74, %77 : vector<32x256xf32>
    %79 = vector.extract_strided_slice %65 {offsets = [96, 0], sizes = [32, 256], strides = [1, 1]} : vector<352x256xbf16> to vector<32x256xbf16>
    %c768 = arith.constant 768 : index
    %c0_50 = arith.constant 0 : index
    %80 = vector.load %arg15[%c768, %c0_50] : memref<2816x256xbf16, #tpu.memory_space<vmem>>, vector<256x256xbf16>
    %cst_51 = arith.constant dense<0.000000e+00> : vector<32x256xf32>
    %81 = tpu.matmul %79, %80, %cst_51 {dimension_numbers = #tpu.dot_dimension_numbers<[1], [0], [0], [1], [0, 0, 1, 1], [], []>} : vector<32x256xbf16>, vector<256x256xbf16>, vector<32x256xf32> -> vector<32x256xf32>
    %82 = arith.addf %78, %81 : vector<32x256xf32>
    %83 = vector.extract_strided_slice %65 {offsets = [128, 0], sizes = [32, 256], strides = [1, 1]} : vector<352x256xbf16> to vector<32x256xbf16>
    %c1024 = arith.constant 1024 : index
    %c0_52 = arith.constant 0 : index
    %84 = vector.load %arg15[%c1024, %c0_52] : memref<2816x256xbf16, #tpu.memory_space<vmem>>, vector<256x256xbf16>
    %cst_53 = arith.constant dense<0.000000e+00> : vector<32x256xf32>
    %85 = tpu.matmul %83, %84, %cst_53 {dimension_numbers = #tpu.dot_dimension_numbers<[1], [0], [0], [1], [0, 0, 1, 1], [], []>} : vector<32x256xbf16>, vector<256x256xbf16>, vector<32x256xf32> -> vector<32x256xf32>
    %86 = arith.addf %82, %85 : vector<32x256xf32>
    %87 = vector.extract_strided_slice %65 {offsets = [160, 0], sizes = [32, 256], strides = [1, 1]} : vector<352x256xbf16> to vector<32x256xbf16>
    %c1280 = arith.constant 1280 : index
    %c0_54 = arith.constant 0 : index
    %88 = vector.load %arg15[%c1280, %c0_54] : memref<2816x256xbf16, #tpu.memory_space<vmem>>, vector<256x256xbf16>
    %cst_55 = arith.constant dense<0.000000e+00> : vector<32x256xf32>
    %89 = tpu.matmul %87, %88, %cst_55 {dimension_numbers = #tpu.dot_dimension_numbers<[1], [0], [0], [1], [0, 0, 1, 1], [], []>} : vector<32x256xbf16>, vector<256x256xbf16>, vector<32x256xf32> -> vector<32x256xf32>
    %90 = arith.addf %86, %89 : vector<32x256xf32>
    %91 = vector.extract_strided_slice %65 {offsets = [192, 0], sizes = [32, 256], strides = [1, 1]} : vector<352x256xbf16> to vector<32x256xbf16>
    %c1536 = arith.constant 1536 : index
    %c0_56 = arith.constant 0 : index
    %92 = vector.load %arg15[%c1536, %c0_56] : memref<2816x256xbf16, #tpu.memory_space<vmem>>, vector<256x256xbf16>
    %cst_57 = arith.constant dense<0.000000e+00> : vector<32x256xf32>
    %93 = tpu.matmul %91, %92, %cst_57 {dimension_numbers = #tpu.dot_dimension_numbers<[1], [0], [0], [1], [0, 0, 1, 1], [], []>} : vector<32x256xbf16>, vector<256x256xbf16>, vector<32x256xf32> -> vector<32x256xf32>
    %94 = arith.addf %90, %93 : vector<32x256xf32>
    %95 = vector.extract_strided_slice %65 {offsets = [224, 0], sizes = [32, 256], strides = [1, 1]} : vector<352x256xbf16> to vector<32x256xbf16>
    %c1792 = arith.constant 1792 : index
    %c0_58 = arith.constant 0 : index
    %96 = vector.load %arg15[%c1792, %c0_58] : memref<2816x256xbf16, #tpu.memory_space<vmem>>, vector<256x256xbf16>
    %cst_59 = arith.constant dense<0.000000e+00> : vector<32x256xf32>
    %97 = tpu.matmul %95, %96, %cst_59 {dimension_numbers = #tpu.dot_dimension_numbers<[1], [0], [0], [1], [0, 0, 1, 1], [], []>} : vector<32x256xbf16>, vector<256x256xbf16>, vector<32x256xf32> -> vector<32x256xf32>
    %98 = arith.addf %94, %97 : vector<32x256xf32>
    %99 = vector.extract_strided_slice %65 {offsets = [256, 0], sizes = [32, 256], strides = [1, 1]} : vector<352x256xbf16> to vector<32x256xbf16>
    %c2048 = arith.constant 2048 : index
    %c0_60 = arith.constant 0 : index
    %100 = vector.load %arg15[%c2048, %c0_60] : memref<2816x256xbf16, #tpu.memory_space<vmem>>, vector<256x256xbf16>
    %cst_61 = arith.constant dense<0.000000e+00> : vector<32x256xf32>
    %101 = tpu.matmul %99, %100, %cst_61 {dimension_numbers = #tpu.dot_dimension_numbers<[1], [0], [0], [1], [0, 0, 1, 1], [], []>} : vector<32x256xbf16>, vector<256x256xbf16>, vector<32x256xf32> -> vector<32x256xf32>
    %102 = arith.addf %98, %101 : vector<32x256xf32>
    %103 = vector.extract_strided_slice %65 {offsets = [288, 0], sizes = [32, 256], strides = [1, 1]} : vector<352x256xbf16> to vector<32x256xbf16>
    %c2304 = arith.constant 2304 : index
    %c0_62 = arith.constant 0 : index
    %104 = vector.load %arg15[%c2304, %c0_62] : memref<2816x256xbf16, #tpu.memory_space<vmem>>, vector<256x256xbf16>
    %cst_63 = arith.constant dense<0.000000e+00> : vector<32x256xf32>
    %105 = tpu.matmul %103, %104, %cst_63 {dimension_numbers = #tpu.dot_dimension_numbers<[1], [0], [0], [1], [0, 0, 1, 1], [], []>} : vector<32x256xbf16>, vector<256x256xbf16>, vector<32x256xf32> -> vector<32x256xf32>
    %106 = arith.addf %102, %105 : vector<32x256xf32>
    %107 = vector.extract_strided_slice %65 {offsets = [320, 0], sizes = [32, 256], strides = [1, 1]} : vector<352x256xbf16> to vector<32x256xbf16>
    %c2560 = arith.constant 2560 : index
    %c0_64 = arith.constant 0 : index
    %108 = vector.load %arg15[%c2560, %c0_64] : memref<2816x256xbf16, #tpu.memory_space<vmem>>, vector<256x256xbf16>
    %cst_65 = arith.constant dense<0.000000e+00> : vector<32x256xf32>
    %109 = tpu.matmul %107, %108, %cst_65 {dimension_numbers = #tpu.dot_dimension_numbers<[1], [0], [0], [1], [0, 0, 1, 1], [], []>} : vector<32x256xbf16>, vector<256x256xbf16>, vector<32x256xf32> -> vector<32x256xf32>
    %110 = arith.addf %106, %109 : vector<32x256xf32>
    %c0_66 = arith.constant 0 : index
    %c0_67 = arith.constant 0 : index
    %111 = vector.load %arg16[%c0_66, %c0_67] : memref<1x256xf32, #tpu.memory_space<vmem>>, vector<1x256xf32>
    %112 = vector.broadcast %111 : vector<1x256xf32> to vector<32x256xf32>
    %113 = arith.addf %110, %112 : vector<32x256xf32>
    %114 = arith.truncf %113 : vector<32x256xf32> to vector<32x256xbf16>
    %c0_68 = arith.constant 0 : index
    %c0_69 = arith.constant 0 : index
    %115 = vector.load %arg17[%c0_68, %c0_69] : memref<256x128xbf16, #tpu.memory_space<vmem>>, vector<256x128xbf16>
    %cst_70 = arith.constant dense<0.000000e+00> : vector<32x128xf32>
    %116 = tpu.matmul %114, %115, %cst_70 {dimension_numbers = #tpu.dot_dimension_numbers<[1], [0], [0], [1], [0, 0, 1, 1], [], []>} : vector<32x256xbf16>, vector<256x128xbf16>, vector<32x128xf32> -> vector<32x128xf32>
    %c0_71 = arith.constant 0 : index
    %c0_72 = arith.constant 0 : index
    %117 = vector.load %arg18[%c0_71, %c0_72] : memref<1x128xf32, #tpu.memory_space<vmem>>, vector<1x128xf32>
    %118 = vector.broadcast %117 : vector<1x128xf32> to vector<32x128xf32>
    %119 = arith.addf %116, %118 : vector<32x128xf32>
    %cst_73 = arith.constant 0.000000e+00 : f32
    %120 = vector.broadcast %cst_73 : f32 to vector<32x128xf32>
    %121 = arith.maximumf %119, %120 : vector<32x128xf32>
    %122 = arith.truncf %121 : vector<32x128xf32> to vector<32x128xbf16>
    %c0_74 = arith.constant 0 : index
    %c0_75 = arith.constant 0 : index
    %123 = vector.load %arg19[%c0_74, %c0_75] : memref<128x128xbf16, #tpu.memory_space<vmem>>, vector<128x128xbf16>
    %cst_76 = arith.constant dense<0.000000e+00> : vector<32x128xf32>
    %124 = tpu.matmul %122, %123, %cst_76 {dimension_numbers = #tpu.dot_dimension_numbers<[1], [0], [0], [1], [0, 0, 1, 1], [], []>} : vector<32x128xbf16>, vector<128x128xbf16>, vector<32x128xf32> -> vector<32x128xf32>
    %c0_77 = arith.constant 0 : index
    %c0_78 = arith.constant 0 : index
    %125 = vector.load %arg20[%c0_77, %c0_78] : memref<1x128xf32, #tpu.memory_space<vmem>>, vector<1x128xf32>
    %126 = vector.broadcast %125 : vector<1x128xf32> to vector<32x128xf32>
    %127 = arith.addf %124, %126 : vector<32x128xf32>
    %128 = tpu.iota {dimensions = array<i32: 1>} : vector<32x128xi32>
    %c3_i32 = arith.constant 3 : i32
    %129 = vector.broadcast %c3_i32 : i32 to vector<32x128xi32>
    %130 = arith.cmpi sge, %128, %129 : vector<32x128xi32>
    %c7_i32 = arith.constant 7 : i32
    %131 = vector.broadcast %c7_i32 : i32 to vector<32x128xi32>
    %132 = arith.cmpi slt, %128, %131 : vector<32x128xi32>
    %133 = arith.andi %130, %132 : vector<32x128xi1>
    %134 = arith.mulf %127, %127 : vector<32x128xf32>
    %cst_79 = arith.constant 0.000000e+00 : f32
    %135 = vector.broadcast %cst_79 : f32 to vector<32x128xf32>
    %136 = arith.select %133, %134, %135 : vector<32x128xi1>, vector<32x128xf32>
    %cst_80 = arith.constant dense<0.000000e+00> : vector<32xf32>
    %137 = vector.multi_reduction <add>, %136, %cst_80 [1] : vector<32x128xf32> to vector<32xf32>
    %138 = vector.shape_cast %137 : vector<32xf32> to vector<32x1xf32>
    %cst_81 = arith.constant 1.000000e-24 : f32
    %139 = vector.broadcast %cst_81 : f32 to vector<32x1xf32>
    %140 = arith.maximumf %138, %139 : vector<32x1xf32>
    %141 = math.rsqrt %140 : vector<32x1xf32>
    %142 = vector.broadcast %141 : vector<32x1xf32> to vector<32x128xf32>
    %143 = arith.mulf %127, %142 : vector<32x128xf32>
    %144 = arith.select %133, %143, %127 : vector<32x128xi1>, vector<32x128xf32>
    %c0_82 = arith.constant 0 : index
    %c0_83 = arith.constant 0 : index
    %c0_84 = arith.constant 0 : index
    %145 = vector.load %arg21[%c0_82, %c0_83, %c0_84] : memref<1x32x128xf32, #tpu.memory_space<vmem>>, vector<1x32x128xf32>
    %146 = vector.shape_cast %145 : vector<1x32x128xf32> to vector<32x128xf32>
    %147 = vector.shape_cast %144 : vector<32x128xf32> to vector<1x32x128xf32>
    tpu.vector_store %arg21[%c0_82, %c0_83, %c0_84], %147 {strides = array<i32>} : memref<1x32x128xf32, #tpu.memory_space<vmem>>, vector<1x32x128xf32>,
    return
  }
  func.func @transform_0(%arg0: i32) -> (i32, i32, i32) {
    %c0_i32 = arith.constant 0 : i32
    %c0_i32_0 = arith.constant 0 : i32
    %c0_i32_1 = arith.constant 0 : i32
    return %arg0, %c0_i32, %c0_i32_0 : i32, i32, i32
  }
  func.func @transform_1(%arg0: i32) -> (i32, i32) {
    %c0_i32 = arith.constant 0 : i32
    %c0_i32_0 = arith.constant 0 : i32
    %c0_i32_1 = arith.constant 0 : i32
    return %c0_i32, %c0_i32_0 : i32, i32
  }
  func.func @transform_2(%arg0: i32) -> (i32, i32) {
    %c0_i32 = arith.constant 0 : i32
    %c0_i32_0 = arith.constant 0 : i32
    %c0_i32_1 = arith.constant 0 : i32
    return %c0_i32, %c0_i32_0 : i32, i32
  }
  func.func @transform_3(%arg0: i32) -> (i32, i32) {
    %c0_i32 = arith.constant 0 : i32
    %c0_i32_0 = arith.constant 0 : i32
    %c0_i32_1 = arith.constant 0 : i32
    return %c0_i32, %c0_i32_0 : i32, i32
  }
  func.func @transform_4(%arg0: i32) -> (i32, i32) {
    %c0_i32 = arith.constant 0 : i32
    %c0_i32_0 = arith.constant 0 : i32
    %c0_i32_1 = arith.constant 0 : i32
    return %c0_i32, %c0_i32_0 : i32, i32
  }
  func.func @transform_5(%arg0: i32) -> (i32, i32) {
    %c0_i32 = arith.constant 0 : i32
    %c0_i32_0 = arith.constant 0 : i32
    %c0_i32_1 = arith.constant 0 : i32
    return %c0_i32, %c0_i32_0 : i32, i32
  }
  func.func @transform_6(%arg0: i32) -> (i32, i32) {
    %c0_i32 = arith.constant 0 : i32
    %c0_i32_0 = arith.constant 0 : i32
    %c0_i32_1 = arith.constant 0 : i32
    return %c0_i32, %c0_i32_0 : i32, i32
  }
  func.func @transform_7(%arg0: i32) -> (i32, i32) {
    %c0_i32 = arith.constant 0 : i32
    %c0_i32_0 = arith.constant 0 : i32
    %c0_i32_1 = arith.constant 0 : i32
    return %c0_i32, %c0_i32_0 : i32, i32
  }
  func.func @transform_8(%arg0: i32) -> (i32, i32) {
    %c0_i32 = arith.constant 0 : i32
    %c0_i32_0 = arith.constant 0 : i32
    %c0_i32_1 = arith.constant 0 : i32
    return %c0_i32, %c0_i32_0 : i32, i32
  }
  func.func @transform_9(%arg0: i32) -> (i32, i32) {
    %c0_i32 = arith.constant 0 : i32
    %c0_i32_0 = arith.constant 0 : i32
    %c0_i32_1 = arith.constant 0 : i32
    return %c0_i32, %c0_i32_0 : i32, i32
  }
  func.func @transform_10(%arg0: i32) -> (i32, i32) {
    %c0_i32 = arith.constant 0 : i32
    %c0_i32_0 = arith.constant 0 : i32
    %c0_i32_1 = arith.constant 0 : i32
    return %c0_i32, %c0_i32_0 : i32, i32
  }
  func.func @transform_11(%arg0: i32) -> (i32, i32) {
    %c0_i32 = arith.constant 0 : i32
    %c0_i32_0 = arith.constant 0 : i32
    %c0_i32_1 = arith.constant 0 : i32
    return %c0_i32, %c0_i32_0 : i32, i32
  }
  func.func @transform_12(%arg0: i32) -> (i32, i32) {
    %c0_i32 = arith.constant 0 : i32
    %c0_i32_0 = arith.constant 0 : i32
    %c0_i32_1 = arith.constant 0 : i32
    return %c0_i32, %c0_i32_0 : i32, i32
  }
  func.func @transform_13(%arg0: i32) -> (i32, i32) {
    %c0_i32 = arith.constant 0 : i32
    %c0_i32_0 = arith.constant 0 : i32
    %c0_i32_1 = arith.constant 0 : i32
    return %c0_i32, %c0_i32_0 : i32, i32
  }
  func.func @transform_14(%arg0: i32) -> (i32, i32) {
    %c0_i32 = arith.constant 0 : i32
    %c0_i32_0 = arith.constant 0 : i32
    %c0_i32_1 = arith.constant 0 : i32
    return %c0_i32, %c0_i32_0 : i32, i32
  }
  func.func @transform_15(%arg0: i32) -> (i32, i32) {
    %c0_i32 = arith.constant 0 : i32
    %c0_i32_0 = arith.constant 0 : i32
    %c0_i32_1 = arith.constant 0 : i32
    return %c0_i32, %c0_i32_0 : i32, i32
  }
  func.func @transform_16(%arg0: i32) -> (i32, i32) {
    %c0_i32 = arith.constant 0 : i32
    %c0_i32_0 = arith.constant 0 : i32
    %c0_i32_1 = arith.constant 0 : i32
    return %c0_i32, %c0_i32_0 : i32, i32
  }
  func.func @transform_17(%arg0: i32) -> (i32, i32) {
    %c0_i32 = arith.constant 0 : i32
    %c0_i32_0 = arith.constant 0 : i32
    %c0_i32_1 = arith.constant 0 : i32
    return %c0_i32, %c0_i32_0 : i32, i32
  }
  func.func @transform_18(%arg0: i32) -> (i32, i32) {
    %c0_i32 = arith.constant 0 : i32
    %c0_i32_0 = arith.constant 0 : i32
    %c0_i32_1 = arith.constant 0 : i32
    return %c0_i32, %c0_i32_0 : i32, i32
  }
  func.func @transform_19(%arg0: i32) -> (i32, i32) {
    %c0_i32 = arith.constant 0 : i32
    %c0_i32_0 = arith.constant 0 : i32
    %c0_i32_1 = arith.constant 0 : i32
    return %c0_i32, %c0_i32_0 : i32, i32
  }
  func.func @transform_20(%arg0: i32) -> (i32, i32, i32) {
    %c0_i32 = arith.constant 0 : i32
    %c0_i32_0 = arith.constant 0 : i32
    %c0_i32_1 = arith.constant 0 : i32
    return %arg0, %c0_i32, %c0_i32_0 : i32, i32, i32
  }
}

</mosaic_0001>

<llo_original>
// kernel: tpu_custom_call.1
$region0: #{tpu_custom_call.1}
  #allocation0 [shape = 'u32[]', space=smem, size = 0x4, offset = 0x4, fixed_abs, tag = 'smem constant byte address 0x4 - core index']
  #allocation1 [shape = 'u32[144,128]{1,0:T(1,128)}', space=vmem, size = 0x12000, scoped, tag = 'internal scratch']
  %s0 = inlined_call_operand.vmem [shape: bf16[2,352,18], index: 0, kind: input, shape index: {}]
  %s1 = inlined_call_operand.hbm [shape: bf16[18,64], index: 1, kind: input, shape index: {}]
  %s2 = inlined_call_operand.hbm [shape: f32[1,64], index: 2, kind: input, shape index: {}]
  %s3 = inlined_call_operand.hbm [shape: f32[1,64], index: 3, kind: input, shape index: {}]
  %s4 = inlined_call_operand.hbm [shape: bf16[64,128], index: 4, kind: input, shape index: {}]
  %s5 = inlined_call_operand.hbm [shape: bf16[64,128], index: 5, kind: input, shape index: {}]
  %s6 = inlined_call_operand.hbm [shape: bf16[64,128], index: 6, kind: input, shape index: {}]
  %s7 = inlined_call_operand.hbm [shape: f32[1,128], index: 7, kind: input, shape index: {}]
  %s8 = inlined_call_operand.hbm [shape: f32[1,128], index: 8, kind: input, shape index: {}]
  %s9 = inlined_call_operand.hbm [shape: bf16[128,256], index: 9, kind: input, shape index: {}]
  %s10 = inlined_call_operand.hbm [shape: bf16[128,256], index: 10, kind: input, shape index: {}]
  %s11 = inlined_call_operand.hbm [shape: bf16[128,256], index: 11, kind: input, shape index: {}]
  %s12 = inlined_call_operand.hbm [shape: f32[1,256], index: 12, kind: input, shape index: {}]
  %s13 = inlined_call_operand.hbm [shape: f32[1,256], index: 13, kind: input, shape index: {}]
  %s14 = inlined_call_operand.hbm [shape: bf16[2816,256], index: 14, kind: input, shape index: {}]
  %s15 = inlined_call_operand.hbm [shape: f32[1,256], index: 15, kind: input, shape index: {}]
  %s16 = inlined_call_operand.hbm [shape: bf16[256,128], index: 16, kind: input, shape index: {}]
  %s17 = inlined_call_operand.hbm [shape: f32[1,128], index: 17, kind: input, shape index: {}]
  %s18 = inlined_call_operand.hbm [shape: bf16[128,128], index: 18, kind: input, shape index: {}]
  %s19 = inlined_call_operand.hbm [shape: f32[1,128], index: 19, kind: input, shape index: {}]
  %s20 = inlined_call_operand.hbm [shape: f32[2,32,128], index: 20, kind: output, shape index: {}]
  %s21 = sld [smem:[#allocation0]]
  $region189: #{tpu_custom_call.1} parent=0
    _
  %s23 = ssub.s32 1, %s21
  %s24 = scalar_select 0, %s23, %s21
  $region1: #{tpu_custom_call.1} parent=0
    #allocation2 [shape = 'u8[6144]{0}', space=vmem, size = 0x1800, scoped, tag = 'input window, operand 1, single buffered']
    #allocation3 [shape = 's32[2]{0}', space=sflag, size = 0x8, scoped, tag = 'scoped memory for tpu_custom_call.1']
    #allocation4 [shape = 's32[2]{0}', space=sflag, size = 0x8, scoped, tag = 'scoped memory for tpu_custom_call.1']
    #allocation5 [shape = 'u8[512]{0}', space=vmem, size = 0x400, scoped, tag = 'input window, operand 2, single buffered']
    #allocation6 [shape = 's32[1]{0}', space=sflag, size = 0x4, scoped, tag = 'scoped memory for tpu_custom_call.1']
    #allocation7 [shape = 'u8[512]{0}', space=vmem, size = 0x400, scoped, tag = 'input window, operand 3, single buffered']
    #allocation8 [shape = 'u8[16384]{0}', space=vmem, size = 0x4000, scoped, tag = 'input window, operand 4, single buffered']
    #allocation9 [shape = 's32[1]{0}', space=sflag, size = 0x4, scoped, tag = 'scoped memory for tpu_custom_call.1']
    #allocation10 [shape = 'u8[16384]{0}', space=vmem, size = 0x4000, scoped, tag = 'input window, operand 5, single buffered']
    #allocation11 [shape = 'u8[16384]{0}', space=vmem, size = 0x4000, scoped, tag = 'input window, operand 6, single buffered']
    #allocation12 [shape = 's32[1]{0}', space=sflag, size = 0x4, scoped, tag = 'scoped memory for tpu_custom_call.1']
    #allocation13 [shape = 'u8[512]{0}', space=vmem, size = 0x400, scoped, tag = 'input window, operand 7, single buffered']
    #allocation14 [shape = 'u8[512]{0}', space=vmem, size = 0x400, scoped, tag = 'input window, operand 8, single buffered']
    #allocation15 [shape = 's32[1]{0}', space=sflag, size = 0x4, scoped, tag = 'scoped memory for tpu_custom_call.1']
    #allocation16 [shape = 'u8[65536]{0}', space=vmem, size = 0x10000, scoped, tag = 'input window, operand 9, single buffered']
    #allocation17 [shape = 'u8[65536]{0}', space=vmem, size = 0x10000, scoped, tag = 'input window, operand 10, single buffered']
    #allocation18 [shape = 's32[1]{0}', space=sflag, size = 0x4, scoped, tag = 'scoped memory for tpu_custom_call.1']
    #allocation19 [shape = 'u8[65536]{0}', space=vmem, size = 0x10000, scoped, tag = 'input window, operand 11, single buffered']
    #allocation20 [shape = 'u8[1024]{0}', space=vmem, size = 0x400, scoped, tag = 'input window, operand 12, single buffered']
    #allocation21 [shape = 's32[1]{0}', space=sflag, size = 0x4, scoped, tag = 'scoped memory for tpu_custom_call.1']
    #allocation22 [shape = 'u8[1024]{0}', space=vmem, size = 0x400, scoped, tag = 'input window, operand 13, single buffered']
    #allocation23 [shape = 'u8[1441792]{0}', space=vmem, size = 0x160000, scoped, tag = 'input window, operand 14, single buffered']
    #allocation24 [shape = 's32[1]{0}', space=sflag, size = 0x4, scoped, tag = 'scoped memory for tpu_custom_call.1']
    #allocation25 [shape = 'u8[1024]{0}', space=vmem, size = 0x400, scoped, tag = 'input window, operand 15, single buffered']
    #allocation26 [shape = 'u8[65536]{0}', space=vmem, size = 0x10000, scoped, tag = 'input window, operand 16, single buffered']
    #allocation27 [shape = 's32[1]{0}', space=sflag, size = 0x4, scoped, tag = 'scoped memory for tpu_custom_call.1']
    #allocation28 [shape = 'u8[512]{0}', space=vmem, size = 0x400, scoped, tag = 'input window, operand 17, single buffered']
    #allocation29 [shape = 'u8[32768]{0}', space=vmem, size = 0x8000, scoped, tag = 'input window, operand 18, single buffered']
    #allocation30 [shape = 's32[1]{0}', space=sflag, size = 0x4, scoped, tag = 'scoped memory for tpu_custom_call.1']
    #allocation31 [shape = 'u8[512]{0}', space=vmem, size = 0x400, scoped, tag = 'input window, operand 19, single buffered']
    #allocation32 [shape = 'u8[32768]{0}', space=vmem, size = 0x8000, scoped, tag = 'output window, operand 0']
    %25 = vsyncpa [#allocation3], 0
    %26 = vsyncpa [#allocation6], 0
    %27 = vsyncpa [#allocation9], 0
    %28 = vsyncpa [#allocation12], 0
    %29 = vsyncpa [#allocation15], 0
    %30 = vsyncpa [#allocation18], 0
    %31 = vsyncpa [#allocation21], 0
    %32 = vsyncpa [#allocation24], 0
    %33 = vsyncpa [#allocation27], 0
    %34 = vsyncpa [#allocation30], 0
    %35 = vsyncpa [#allocation4], 0
    %s36 = scalar_lea.sflag [#allocation4], 1
    %37 = vsyncpa %s36, 0
    loop: start=0, step=1, limit=4
    $region2: #{tpu_custom_call.1} parent=1 // loop_pre_header
      _
    $region3: #{tpu_custom_call.1} parent=1 // loop_header
      %s39 = sphi 0, %s43
      %p40 = scmp.ge.s32.totalorder %s39, 4
      %s49 = sphi 0, %s51
      %s52 = sphi 0, %s49
      %s53 = sphi 0, %s52
      %s69 = sphi 0, %s53
      %s73 = sphi 0, %s73
      %s75 = sphi 0, %s73
      %s76 = sphi 0, %s75
      %s90 = sphi 0, %s76
      %s94 = sphi 0, %s94
      %s96 = sphi 0, %s94
      %s97 = sphi 0, %s96
      %s111 = sphi 0, %s97
      %s115 = sphi 0, %s115
      %s117 = sphi 0, %s115
      %s118 = sphi 0, %s117
      %s132 = sphi 0, %s118
      %s136 = sphi 0, %s136
      %s138 = sphi 0, %s136
      %s139 = sphi 0, %s138
      %s153 = sphi 0, %s139
      %s157 = sphi 0, %s157
      %s159 = sphi 0, %s157
      %s160 = sphi 0, %s159
      %s174 = sphi 0, %s160
      %s178 = sphi 0, %s178
      %s180 = sphi 0, %s178
      %s181 = sphi 0, %s180
      %s195 = sphi 0, %s181
      %s199 = sphi 0, %s199
      %s201 = sphi 0, %s199
      %s202 = sphi 0, %s201
      %s216 = sphi 0, %s202
      %s220 = sphi 0, %s220
      %s222 = sphi 0, %s220
      %s223 = sphi 0, %s222
      %s237 = sphi 0, %s223
      %s241 = sphi 0, %s241
      %s243 = sphi 0, %s241
      %s244 = sphi 0, %s243
      %s258 = sphi 0, %s244
      %s262 = sphi 0, %s262
      %s264 = sphi 0, %s262
      %s265 = sphi 0, %s264
      %s279 = sphi 0, %s265
      %s283 = sphi 0, %s283
      %s285 = sphi 0, %s283
      %s286 = sphi 0, %s285
      %s300 = sphi 0, %s286
      %s304 = sphi 0, %s304
      %s306 = sphi 0, %s304
      %s307 = sphi 0, %s306
      %s321 = sphi 0, %s307
      %s325 = sphi 0, %s325
      %s327 = sphi 0, %s325
      %s328 = sphi 0, %s327
      %s342 = sphi 0, %s328
      %s346 = sphi 0, %s346
      %s348 = sphi 0, %s346
      %s349 = sphi 0, %s348
      %s363 = sphi 0, %s349
      %s367 = sphi 0, %s367
      %s369 = sphi 0, %s367
      %s370 = sphi 0, %s369
      %s384 = sphi 0, %s370
      %s388 = sphi 0, %s388
      %s390 = sphi 0, %s388
      %s391 = sphi 0, %s390
      %s405 = sphi 0, %s391
      %s409 = sphi 0, %s409
      %s411 = sphi 0, %s409
      %s412 = sphi 0, %s411
      %s426 = sphi 0, %s412
      %s430 = sphi 0, %s430
      %s432 = sphi 0, %s430
      %s433 = sphi 0, %s432
      %s447 = sphi 0, %s433
      %s451 = sphi 0, %s451
      %s453 = sphi 0, %s451
      %s454 = sphi 0, %s453
      %s468 = sphi 0, %s454
      %s474 = sphi 0, %s476
      %s477 = sphi 0, %s474
      %s478 = sphi 0, %s477
      %s494 = sphi 0, %s478
    $region4: #{tpu_custom_call.1} parent=1 // loop_header_branch
      %42 = sbr.rel (%p40) target = $region8
    $region5: #{tpu_custom_call.1} parent=1 // loop_body
      %s44 = ssub.s32 %s39, 1
      %s45 = ssub.s32 %s39, 2
      %s46 = sadd.s32 %s39, 1
      %s47 = ssub.s32 %s39, %s46
      %p48 = scmp.eq.s32.totalorder %s47, 0
      %s50 = sadd.s32 %s49, 1
      %s51 = scalar_select %p48, %s49, %s50
      %p54 = pneg %p48
      %p55 = scmp.eq.s32.totalorder %s39, 1
      %p56 = por %p54, %p55
      %p57 = scmp.ne.s32.totalorder %s49, %s52
      %p58 = scmp.eq.s32.totalorder %s39, 0
      %p59 = por %p57, %p58
      %p60 = scmp.ne.s32.totalorder %s49, %s52
      %p61 = scmp.eq.s32.totalorder %s44, 1
      %p62 = por %p60, %p61
      %p63 = scmp.ne.s32.totalorder %s52, %s53
      %p64 = scmp.eq.s32.totalorder %s44, 0
      %p65 = por %p63, %p64
      %p66 = scmp.ne.s32.totalorder %s52, %s53
      %p67 = scmp.eq.s32.totalorder %s45, 1
      %p68 = por %p66, %p67
      %p70 = scmp.ne.s32.totalorder %s53, %s69
      %p71 = scmp.eq.s32.totalorder %s45, 0
      %p72 = por %p70, %p71
      %s74 = sadd.s32 %s73, 1
      %p77 = scmp.eq.s32.totalorder %s39, 1
      %p78 = scmp.ne.s32.totalorder %s73, %s75
      %p79 = scmp.eq.s32.totalorder %s39, 0
      %p80 = por %p78, %p79
      %p81 = scmp.ne.s32.totalorder %s73, %s75
      %p82 = scmp.eq.s32.totalorder %s44, 1
      %p83 = por %p81, %p82
      %p84 = scmp.ne.s32.totalorder %s75, %s76
      %p85 = scmp.eq.s32.totalorder %s44, 0
      %p86 = por %p84, %p85
      %p87 = scmp.ne.s32.totalorder %s75, %s76
      %p88 = scmp.eq.s32.totalorder %s45, 1
      %p89 = por %p87, %p88
      %p91 = scmp.ne.s32.totalorder %s76, %s90
      %p92 = scmp.eq.s32.totalorder %s45, 0
      %p93 = por %p91, %p92
      %s95 = sadd.s32 %s94, 1
      %p98 = scmp.eq.s32.totalorder %s39, 1
      %p99 = scmp.ne.s32.totalorder %s94, %s96
      %p100 = scmp.eq.s32.totalorder %s39, 0
      %p101 = por %p99, %p100
      %p102 = scmp.ne.s32.totalorder %s94, %s96
      %p103 = scmp.eq.s32.totalorder %s44, 1
      %p104 = por %p102, %p103
      %p105 = scmp.ne.s32.totalorder %s96, %s97
      %p106 = scmp.eq.s32.totalorder %s44, 0
      %p107 = por %p105, %p106
      %p108 = scmp.ne.s32.totalorder %s96, %s97
      %p109 = scmp.eq.s32.totalorder %s45, 1
      %p110 = por %p108, %p109
      %p112 = scmp.ne.s32.totalorder %s97, %s111
      %p113 = scmp.eq.s32.totalorder %s45, 0
      %p114 = por %p112, %p113
      %s116 = sadd.s32 %s115, 1
      %p119 = scmp.eq.s32.totalorder %s39, 1
      %p120 = scmp.ne.s32.totalorder %s115, %s117
      %p121 = scmp.eq.s32.totalorder %s39, 0
      %p122 = por %p120, %p121
      %p123 = scmp.ne.s32.totalorder %s115, %s117
      %p124 = scmp.eq.s32.totalorder %s44, 1
      %p125 = por %p123, %p124
      %p126 = scmp.ne.s32.totalorder %s117, %s118
      %p127 = scmp.eq.s32.totalorder %s44, 0
      %p128 = por %p126, %p127
      %p129 = scmp.ne.s32.totalorder %s117, %s118
      %p130 = scmp.eq.s32.totalorder %s45, 1
      %p131 = por %p129, %p130
      %p133 = scmp.ne.s32.totalorder %s118, %s132
      %p134 = scmp.eq.s32.totalorder %s45, 0
      %p135 = por %p133, %p134
      %s137 = sadd.s32 %s136, 1
      %p140 = scmp.eq.s32.totalorder %s39, 1
      %p141 = scmp.ne.s32.totalorder %s136, %s138
      %p142 = scmp.eq.s32.totalorder %s39, 0
      %p143 = por %p141, %p142
      %p144 = scmp.ne.s32.totalorder %s136, %s138
      %p145 = scmp.eq.s32.totalorder %s44, 1
      %p146 = por %p144, %p145
      %p147 = scmp.ne.s32.totalorder %s138, %s139
      %p148 = scmp.eq.s32.totalorder %s44, 0
      %p149 = por %p147, %p148
      %p150 = scmp.ne.s32.totalorder %s138, %s139
      %p151 = scmp.eq.s32.totalorder %s45, 1
      %p152 = por %p150, %p151
      %p154 = scmp.ne.s32.totalorder %s139, %s153
      %p155 = scmp.eq.s32.totalorder %s45, 0
      %p156 = por %p154, %p155
      %s158 = sadd.s32 %s157, 1
      %p161 = scmp.eq.s32.totalorder %s39, 1
      %p162 = scmp.ne.s32.totalorder %s157, %s159
      %p163 = scmp.eq.s32.totalorder %s39, 0
      %p164 = por %p162, %p163
      %p165 = scmp.ne.s32.totalorder %s157, %s159
      %p166 = scmp.eq.s32.totalorder %s44, 1
      %p167 = por %p165, %p166
      %p168 = scmp.ne.s32.totalorder %s159, %s160
      %p169 = scmp.eq.s32.totalorder %s44, 0
      %p170 = por %p168, %p169
      %p171 = scmp.ne.s32.totalorder %s159, %s160
      %p172 = scmp.eq.s32.totalorder %s45, 1
      %p173 = por %p171, %p172
      %p175 = scmp.ne.s32.totalorder %s160, %s174
      %p176 = scmp.eq.s32.totalorder %s45, 0
      %p177 = por %p175, %p176
      %s179 = sadd.s32 %s178, 1
      %p182 = scmp.eq.s32.totalorder %s39, 1
      %p183 = scmp.ne.s32.totalorder %s178, %s180
      %p184 = scmp.eq.s32.totalorder %s39, 0
      %p185 = por %p183, %p184
      %p186 = scmp.ne.s32.totalorder %s178, %s180
      %p187 = scmp.eq.s32.totalorder %s44, 1
      %p188 = por %p186, %p187
      %p189 = scmp.ne.s32.totalorder %s180, %s181
      %p190 = scmp.eq.s32.totalorder %s44, 0
      %p191 = por %p189, %p190
      %p192 = scmp.ne.s32.totalorder %s180, %s181
      %p193 = scmp.eq.s32.totalorder %s45, 1
      %p194 = por %p192, %p193
      %p196 = scmp.ne.s32.totalorder %s181, %s195
      %p197 = scmp.eq.s32.totalorder %s45, 0
      %p198 = por %p196, %p197
      %s200 = sadd.s32 %s199, 1
      %p203 = scmp.eq.s32.totalorder %s39, 1
      %p204 = scmp.ne.s32.totalorder %s199, %s201
      %p205 = scmp.eq.s32.totalorder %s39, 0
      %p206 = por %p204, %p205
      %p207 = scmp.ne.s32.totalorder %s199, %s201
      %p208 = scmp.eq.s32.totalorder %s44, 1
      %p209 = por %p207, %p208
      %p210 = scmp.ne.s32.totalorder %s201, %s202
      %p211 = scmp.eq.s32.totalorder %s44, 0
      %p212 = por %p210, %p211
      %p213 = scmp.ne.s32.totalorder %s201, %s202
      %p214 = scmp.eq.s32.totalorder %s45, 1
      %p215 = por %p213, %p214
      %p217 = scmp.ne.s32.totalorder %s202, %s216
      %p218 = scmp.eq.s32.totalorder %s45, 0
      %p219 = por %p217, %p218
      %s221 = sadd.s32 %s220, 1
      %p224 = scmp.eq.s32.totalorder %s39, 1
      %p225 = scmp.ne.s32.totalorder %s220, %s222
      %p226 = scmp.eq.s32.totalorder %s39, 0
      %p227 = por %p225, %p226
      %p228 = scmp.ne.s32.totalorder %s220, %s222
      %p229 = scmp.eq.s32.totalorder %s44, 1
      %p230 = por %p228, %p229
      %p231 = scmp.ne.s32.totalorder %s222, %s223
      %p232 = scmp.eq.s32.totalorder %s44, 0
      %p233 = por %p231, %p232
      %p234 = scmp.ne.s32.totalorder %s222, %s223
      %p235 = scmp.eq.s32.totalorder %s45, 1
      %p236 = por %p234, %p235
      %p238 = scmp.ne.s32.totalorder %s223, %s237
      %p239 = scmp.eq.s32.totalorder %s45, 0
      %p240 = por %p238, %p239
      %s242 = sadd.s32 %s241, 1
      %p245 = scmp.eq.s32.totalorder %s39, 1
      %p246 = scmp.ne.s32.totalorder %s241, %s243
      %p247 = scmp.eq.s32.totalorder %s39, 0
      %p248 = por %p246, %p247
      %p249 = scmp.ne.s32.totalorder %s241, %s243
      %p250 = scmp.eq.s32.totalorder %s44, 1
      %p251 = por %p249, %p250
      %p252 = scmp.ne.s32.totalorder %s243, %s244
      %p253 = scmp.eq.s32.totalorder %s44, 0
      %p254 = por %p252, %p253
      %p255 = scmp.ne.s32.totalorder %s243, %s244
      %p256 = scmp.eq.s32.totalorder %s45, 1
      %p257 = por %p255, %p256
      %p259 = scmp.ne.s32.totalorder %s244, %s258
      %p260 = scmp.eq.s32.totalorder %s45, 0
      %p261 = por %p259, %p260
      %s263 = sadd.s32 %s262, 1
      %p266 = scmp.eq.s32.totalorder %s39, 1
      %p267 = scmp.ne.s32.totalorder %s262, %s264
      %p268 = scmp.eq.s32.totalorder %s39, 0
      %p269 = por %p267, %p268
      %p270 = scmp.ne.s32.totalorder %s262, %s264
      %p271 = scmp.eq.s32.totalorder %s44, 1
      %p272 = por %p270, %p271
      %p273 = scmp.ne.s32.totalorder %s264, %s265
      %p274 = scmp.eq.s32.totalorder %s44, 0
      %p275 = por %p273, %p274
      %p276 = scmp.ne.s32.totalorder %s264, %s265
      %p277 = scmp.eq.s32.totalorder %s45, 1
      %p278 = por %p276, %p277
      %p280 = scmp.ne.s32.totalorder %s265, %s279
      %p281 = scmp.eq.s32.totalorder %s45, 0
      %p282 = por %p280, %p281
      %s284 = sadd.s32 %s283, 1
      %p287 = scmp.eq.s32.totalorder %s39, 1
      %p288 = scmp.ne.s32.totalorder %s283, %s285
      %p289 = scmp.eq.s32.totalorder %s39, 0
      %p290 = por %p288, %p289
      %p291 = scmp.ne.s32.totalorder %s283, %s285
      %p292 = scmp.eq.s32.totalorder %s44, 1
      %p293 = por %p291, %p292
      %p294 = scmp.ne.s32.totalorder %s285, %s286
      %p295 = scmp.eq.s32.totalorder %s44, 0
      %p296 = por %p294, %p295
      %p297 = scmp.ne.s32.totalorder %s285, %s286
      %p298 = scmp.eq.s32.totalorder %s45, 1
      %p299 = por %p297, %p298
      %p301 = scmp.ne.s32.totalorder %s286, %s300
      %p302 = scmp.eq.s32.totalorder %s45, 0
      %p303 = por %p301, %p302
      %s305 = sadd.s32 %s304, 1
      %p308 = scmp.eq.s32.totalorder %s39, 1
      %p309 = scmp.ne.s32.totalorder %s304, %s306
      %p310 = scmp.eq.s32.totalorder %s39, 0
      %p311 = por %p309, %p310
      %p312 = scmp.ne.s32.totalorder %s304, %s306
      %p313 = scmp.eq.s32.totalorder %s44, 1
      %p314 = por %p312, %p313
      %p315 = scmp.ne.s32.totalorder %s306, %s307
      %p316 = scmp.eq.s32.totalorder %s44, 0
      %p317 = por %p315, %p316
      %p318 = scmp.ne.s32.totalorder %s306, %s307
      %p319 = scmp.eq.s32.totalorder %s45, 1
      %p320 = por %p318, %p319
      %p322 = scmp.ne.s32.totalorder %s307, %s321
      %p323 = scmp.eq.s32.totalorder %s45, 0
      %p324 = por %p322, %p323
      %s326 = sadd.s32 %s325, 1
      %p329 = scmp.eq.s32.totalorder %s39, 1
      %p330 = scmp.ne.s32.totalorder %s325, %s327
      %p331 = scmp.eq.s32.totalorder %s39, 0
      %p332 = por %p330, %p331
      %p333 = scmp.ne.s32.totalorder %s325, %s327
      %p334 = scmp.eq.s32.totalorder %s44, 1
      %p335 = por %p333, %p334
      %p336 = scmp.ne.s32.totalorder %s327, %s328
      %p337 = scmp.eq.s32.totalorder %s44, 0
      %p338 = por %p336, %p337
      %p339 = scmp.ne.s32.totalorder %s327, %s328
      %p340 = scmp.eq.s32.totalorder %s45, 1
      %p341 = por %p339, %p340
      %p343 = scmp.ne.s32.totalorder %s328, %s342
      %p344 = scmp.eq.s32.totalorder %s45, 0
      %p345 = por %p343, %p344
      %s347 = sadd.s32 %s346, 1
      %p350 = scmp.eq.s32.totalorder %s39, 1
      %p351 = scmp.ne.s32.totalorder %s346, %s348
      %p352 = scmp.eq.s32.totalorder %s39, 0
      %p353 = por %p351, %p352
      %p354 = scmp.ne.s32.totalorder %s346, %s348
      %p355 = scmp.eq.s32.totalorder %s44, 1
      %p356 = por %p354, %p355
      %p357 = scmp.ne.s32.totalorder %s348, %s349
      %p358 = scmp.eq.s32.totalorder %s44, 0
      %p359 = por %p357, %p358
      %p360 = scmp.ne.s32.totalorder %s348, %s349
      %p361 = scmp.eq.s32.totalorder %s45, 1
      %p362 = por %p360, %p361
      %p364 = scmp.ne.s32.totalorder %s349, %s363
      %p365 = scmp.eq.s32.totalorder %s45, 0
      %p366 = por %p364, %p365
      %s368 = sadd.s32 %s367, 1
      %p371 = scmp.eq.s32.totalorder %s39, 1
      %p372 = scmp.ne.s32.totalorder %s367, %s369
      %p373 = scmp.eq.s32.totalorder %s39, 0
      %p374 = por %p372, %p373
      %p375 = scmp.ne.s32.totalorder %s367, %s369
      %p376 = scmp.eq.s32.totalorder %s44, 1
      %p377 = por %p375, %p376
      %p378 = scmp.ne.s32.totalorder %s369, %s370
      %p379 = scmp.eq.s32.totalorder %s44, 0
      %p380 = por %p378, %p379
      %p381 = scmp.ne.s32.totalorder %s369, %s370
      %p382 = scmp.eq.s32.totalorder %s45, 1
      %p383 = por %p381, %p382
      %p385 = scmp.ne.s32.totalorder %s370, %s384
      %p386 = scmp.eq.s32.totalorder %s45, 0
      %p387 = por %p385, %p386
      %s389 = sadd.s32 %s388, 1
      %p392 = scmp.eq.s32.totalorder %s39, 1
      %p393 = scmp.ne.s32.totalorder %s388, %s390
      %p394 = scmp.eq.s32.totalorder %s39, 0
      %p395 = por %p393, %p394
      %p396 = scmp.ne.s32.totalorder %s388, %s390
      %p397 = scmp.eq.s32.totalorder %s44, 1
      %p398 = por %p396, %p397
      %p399 = scmp.ne.s32.totalorder %s390, %s391
      %p400 = scmp.eq.s32.totalorder %s44, 0
      %p401 = por %p399, %p400
      %p402 = scmp.ne.s32.totalorder %s390, %s391
      %p403 = scmp.eq.s32.totalorder %s45, 1
      %p404 = por %p402, %p403
      %p406 = scmp.ne.s32.totalorder %s391, %s405
      %p407 = scmp.eq.s32.totalorder %s45, 0
      %p408 = por %p406, %p407
      %s410 = sadd.s32 %s409, 1
      %p413 = scmp.eq.s32.totalorder %s39, 1
      %p414 = scmp.ne.s32.totalorder %s409, %s411
      %p415 = scmp.eq.s32.totalorder %s39, 0
      %p416 = por %p414, %p415
      %p417 = scmp.ne.s32.totalorder %s409, %s411
      %p418 = scmp.eq.s32.totalorder %s44, 1
      %p419 = por %p417, %p418
      %p420 = scmp.ne.s32.totalorder %s411, %s412
      %p421 = scmp.eq.s32.totalorder %s44, 0
      %p422 = por %p420, %p421
      %p423 = scmp.ne.s32.totalorder %s411, %s412
      %p424 = scmp.eq.s32.totalorder %s45, 1
      %p425 = por %p423, %p424
      %p427 = scmp.ne.s32.totalorder %s412, %s426
      %p428 = scmp.eq.s32.totalorder %s45, 0
      %p429 = por %p427, %p428
      %s431 = sadd.s32 %s430, 1
      %p434 = scmp.eq.s32.totalorder %s39, 1
      %p435 = scmp.ne.s32.totalorder %s430, %s432
      %p436 = scmp.eq.s32.totalorder %s39, 0
      %p437 = por %p435, %p436
      %p438 = scmp.ne.s32.totalorder %s430, %s432
      %p439 = scmp.eq.s32.totalorder %s44, 1
      %p440 = por %p438, %p439
      %p441 = scmp.ne.s32.totalorder %s432, %s433
      %p442 = scmp.eq.s32.totalorder %s44, 0
      %p443 = por %p441, %p442
      %p444 = scmp.ne.s32.totalorder %s432, %s433
      %p445 = scmp.eq.s32.totalorder %s45, 1
      %p446 = por %p444, %p445
      %p448 = scmp.ne.s32.totalorder %s433, %s447
      %p449 = scmp.eq.s32.totalorder %s45, 0
      %p450 = por %p448, %p449
      %s452 = sadd.s32 %s451, 1
      %p455 = scmp.eq.s32.totalorder %s39, 1
      %p456 = scmp.ne.s32.totalorder %s451, %s453
      %p457 = scmp.eq.s32.totalorder %s39, 0
      %p458 = por %p456, %p457
      %p459 = scmp.ne.s32.totalorder %s451, %s453
      %p460 = scmp.eq.s32.totalorder %s44, 1
      %p461 = por %p459, %p460
      %p462 = scmp.ne.s32.totalorder %s453, %s454
      %p463 = scmp.eq.s32.totalorder %s44, 0
      %p464 = por %p462, %p463
      %p465 = scmp.ne.s32.totalorder %s453, %s454
      %p466 = scmp.eq.s32.totalorder %s45, 1
      %p467 = por %p465, %p466
      %p469 = scmp.ne.s32.totalorder %s454, %s468
      %p470 = scmp.eq.s32.totalorder %s45, 0
      %p471 = por %p469, %p470
      %s472 = ssub.s32 %s39, %s46
      %p473 = scmp.eq.s32.totalorder %s472, 0
      %s475 = sadd.s32 %s474, 1
      %s476 = scalar_select %p473, %s474, %s475
      %p479 = pneg %p473
      %p480 = scmp.eq.s32.totalorder %s39, 1
      %p481 = por %p479, %p480
      %p482 = scmp.ne.s32.totalorder %s474, %s477
      %p483 = scmp.eq.s32.totalorder %s39, 0
      %p484 = por %p482, %p483
      %p485 = scmp.ne.s32.totalorder %s474, %s477
      %p486 = scmp.eq.s32.totalorder %s44, 1
      %p487 = por %p485, %p486
      %p488 = scmp.ne.s32.totalorder %s477, %s478
      %p489 = scmp.eq.s32.totalorder %s44, 0
      %p490 = por %p488, %p489
      %p491 = scmp.ne.s32.totalorder %s477, %s478
      %p492 = scmp.eq.s32.totalorder %s45, 1
      %p493 = por %p491, %p492
      %p495 = scmp.ne.s32.totalorder %s478, %s494
      %p496 = scmp.eq.s32.totalorder %s45, 0
      %p497 = por %p495, %p496
      %p498 = scmp.le.s32.totalorder 1, %s39
      %p499 = scmp.lt.s32.totalorder %s39, 3
      %p500 = pnand %p498, %p499
      %p501 = pneg %p500
      // Predicated region
      $region9: #{tpu_custom_call.1} parent=5 // pred_check
        _
      $region10: #{tpu_custom_call.1} parent=5 // pred_check_branch
        %503 = sbr.rel (%p500) target = $region12
      $region11: #{tpu_custom_call.1} parent=5 // pred_region
        %s504 = ssub.s32 %s39, 1
        // Predicated region
        $region13: #{tpu_custom_call.1} parent=11 // pred_check
          %p505 = pneg %p86
        $region14: #{tpu_custom_call.1} parent=11 // pred_check_branch
          %507 = sbr.rel (%p505) target = $region16
        $region15: #{tpu_custom_call.1} parent=11 // pred_region
          %s509 = ssub.s32 192, 192
          %510 = vsyncadd [#allocation3], %s509
          %s511 = sshll.u32 [#allocation2], 4
          %s512 = int_to_ptr.vmem [resolvable:$true] %s511
          %517 = dma.hbm_to_vmem [thread:$0]  %s1, 192, %s512, [#allocation3], 64, 64, 4
        $region16: #{tpu_custom_call.1} parent=11 // pred_fallthru
          _
        // Predicated region
        $region17: #{tpu_custom_call.1} parent=11 // pred_check
          %p518 = pneg %p107
        $region18: #{tpu_custom_call.1} parent=11 // pred_check_branch
          %520 = sbr.rel (%p518) target = $region20
        $region19: #{tpu_custom_call.1} parent=11 // pred_region
          %s522 = ssub.s32 16, 16
          %523 = vsyncadd [#allocation6], %s522
          %s525 = sshll.u32 [#allocation5], 4
          %s526 = int_to_ptr.vmem [resolvable:$true] %s525
          %528 = dma.hbm_to_vmem [thread:$0]  %s2, 16, %s526, [#allocation6]
        $region20: #{tpu_custom_call.1} parent=11 // pred_fallthru
          _
        // Predicated region
        $region21: #{tpu_custom_call.1} parent=11 // pred_check
          %p529 = pneg %p128
        $region22: #{tpu_custom_call.1} parent=11 // pred_check_branch
          %531 = sbr.rel (%p529) target = $region24
        $region23: #{tpu_custom_call.1} parent=11 // pred_region
          %s533 = ssub.s32 16, 16
          %534 = vsyncadd [#allocation6], %s533
          %s536 = sshll.u32 [#allocation7], 4
          %s537 = int_to_ptr.vmem [resolvable:$true] %s536
          %539 = dma.hbm_to_vmem [thread:$0]  %s3, 16, %s537, [#allocation6]
        $region24: #{tpu_custom_call.1} parent=11 // pred_fallthru
          _
        // Predicated region
        $region25: #{tpu_custom_call.1} parent=11 // pred_check
          %p540 = pneg %p149
        $region26: #{tpu_custom_call.1} parent=11 // pred_check_branch
          %542 = sbr.rel (%p540) target = $region28
        $region27: #{tpu_custom_call.1} parent=11 // pred_region
          %s544 = ssub.s32 512, 512
          %545 = vsyncadd [#allocation9], %s544
          %s546 = sshll.u32 [#allocation8], 4
          %s547 = int_to_ptr.vmem [resolvable:$true] %s546
          %552 = dma.hbm_to_vmem [thread:$0]  %s4, 512, %s547, [#allocation9], 64, 64, 4
        $region28: #{tpu_custom_call.1} parent=11 // pred_fallthru
          _
        // Predicated region
        $region29: #{tpu_custom_call.1} parent=11 // pred_check
          %p553 = pneg %p170
        $region30: #{tpu_custom_call.1} parent=11 // pred_check_branch
          %555 = sbr.rel (%p553) target = $region32
        $region31: #{tpu_custom_call.1} parent=11 // pred_region
          %s557 = ssub.s32 512, 512
          %558 = vsyncadd [#allocation9], %s557
          %s559 = sshll.u32 [#allocation10], 4
          %s560 = int_to_ptr.vmem [resolvable:$true] %s559
          %565 = dma.hbm_to_vmem [thread:$0]  %s5, 512, %s560, [#allocation9], 64, 64, 4
        $region32: #{tpu_custom_call.1} parent=11 // pred_fallthru
          _
        // Predicated region
        $region33: #{tpu_custom_call.1} parent=11 // pred_check
          %p566 = pneg %p191
        $region34: #{tpu_custom_call.1} parent=11 // pred_check_branch
          %568 = sbr.rel (%p566) target = $region36
        $region35: #{tpu_custom_call.1} parent=11 // pred_region
          %s570 = ssub.s32 512, 512
          %571 = vsyncadd [#allocation12], %s570
          %s572 = sshll.u32 [#allocation11], 4
          %s573 = int_to_ptr.vmem [resolvable:$true] %s572
          %578 = dma.hbm_to_vmem [thread:$0]  %s6, 512, %s573, [#allocation12], 64, 64, 4
        $region36: #{tpu_custom_call.1} parent=11 // pred_fallthru
          _
        // Predicated region
        $region37: #{tpu_custom_call.1} parent=11 // pred_check
          %p579 = pneg %p212
        $region38: #{tpu_custom_call.1} parent=11 // pred_check_branch
          %581 = sbr.rel (%p579) target = $region40
        $region39: #{tpu_custom_call.1} parent=11 // pred_region
          %s583 = ssub.s32 16, 16
          %584 = vsyncadd [#allocation12], %s583
          %s586 = sshll.u32 [#allocation13], 4
          %s587 = int_to_ptr.vmem [resolvable:$true] %s586
          %589 = dma.hbm_to_vmem [thread:$0]  %s7, 16, %s587, [#allocation12]
        $region40: #{tpu_custom_call.1} parent=11 // pred_fallthru
          _
        // Predicated region
        $region41: #{tpu_custom_call.1} parent=11 // pred_check
          %p590 = pneg %p233
        $region42: #{tpu_custom_call.1} parent=11 // pred_check_branch
          %592 = sbr.rel (%p590) target = $region44
        $region43: #{tpu_custom_call.1} parent=11 // pred_region
          %s594 = ssub.s32 16, 16
          %595 = vsyncadd [#allocation15], %s594
          %s597 = sshll.u32 [#allocation14], 4
          %s598 = int_to_ptr.vmem [resolvable:$true] %s597
          %600 = dma.hbm_to_vmem [thread:$0]  %s8, 16, %s598, [#allocation15]
        $region44: #{tpu_custom_call.1} parent=11 // pred_fallthru
          _
        // Predicated region
        $region45: #{tpu_custom_call.1} parent=11 // pred_check
          %p601 = pneg %p254
        $region46: #{tpu_custom_call.1} parent=11 // pred_check_branch
          %603 = sbr.rel (%p601) target = $region48
        $region47: #{tpu_custom_call.1} parent=11 // pred_region
          %s605 = ssub.s32 2048, 2048
          %606 = vsyncadd [#allocation15], %s605
          %s607 = sshll.u32 [#allocation16], 4
          %s608 = int_to_ptr.vmem [resolvable:$true] %s607
          %613 = dma.hbm_to_vmem [thread:$0]  %s9, 2048, %s608, [#allocation15], 128, 128, 8
        $region48: #{tpu_custom_call.1} parent=11 // pred_fallthru
          _
        // Predicated region
        $region49: #{tpu_custom_call.1} parent=11 // pred_check
          %p614 = pneg %p275
        $region50: #{tpu_custom_call.1} parent=11 // pred_check_branch
          %616 = sbr.rel (%p614) target = $region52
        $region51: #{tpu_custom_call.1} parent=11 // pred_region
          %s618 = ssub.s32 2048, 2048
          %619 = vsyncadd [#allocation18], %s618
          %s620 = sshll.u32 [#allocation17], 4
          %s621 = int_to_ptr.vmem [resolvable:$true] %s620
          %626 = dma.hbm_to_vmem [thread:$0]  %s10, 2048, %s621, [#allocation18], 128, 128, 8
        $region52: #{tpu_custom_call.1} parent=11 // pred_fallthru
          _
        // Predicated region
        $region53: #{tpu_custom_call.1} parent=11 // pred_check
          %p627 = pneg %p296
        $region54: #{tpu_custom_call.1} parent=11 // pred_check_branch
          %629 = sbr.rel (%p627) target = $region56
        $region55: #{tpu_custom_call.1} parent=11 // pred_region
          %s631 = ssub.s32 2048, 2048
          %632 = vsyncadd [#allocation18], %s631
          %s633 = sshll.u32 [#allocation19], 4
          %s634 = int_to_ptr.vmem [resolvable:$true] %s633
          %639 = dma.hbm_to_vmem [thread:$0]  %s11, 2048, %s634, [#allocation18], 128, 128, 8
        $region56: #{tpu_custom_call.1} parent=11 // pred_fallthru
          _
        // Predicated region
        $region57: #{tpu_custom_call.1} parent=11 // pred_check
          %p640 = pneg %p317
        $region58: #{tpu_custom_call.1} parent=11 // pred_check_branch
          %642 = sbr.rel (%p640) target = $region60
        $region59: #{tpu_custom_call.1} parent=11 // pred_region
          %s644 = ssub.s32 32, 32
          %645 = vsyncadd [#allocation21], %s644
          %s647 = sshll.u32 [#allocation20], 4
          %s648 = int_to_ptr.vmem [resolvable:$true] %s647
          %650 = dma.hbm_to_vmem [thread:$0]  %s12, 32, %s648, [#allocation21]
        $region60: #{tpu_custom_call.1} parent=11 // pred_fallthru
          _
        // Predicated region
        $region61: #{tpu_custom_call.1} parent=11 // pred_check
          %p651 = pneg %p338
        $region62: #{tpu_custom_call.1} parent=11 // pred_check_branch
          %653 = sbr.rel (%p651) target = $region64
        $region63: #{tpu_custom_call.1} parent=11 // pred_region
          %s655 = ssub.s32 32, 32
          %656 = vsyncadd [#allocation21], %s655
          %s658 = sshll.u32 [#allocation22], 4
          %s659 = int_to_ptr.vmem [resolvable:$true] %s658
          %661 = dma.hbm_to_vmem [thread:$0]  %s13, 32, %s659, [#allocation21]
        $region64: #{tpu_custom_call.1} parent=11 // pred_fallthru
          _
        // Predicated region
        $region65: #{tpu_custom_call.1} parent=11 // pred_check
          %p662 = pneg %p359
        $region66: #{tpu_custom_call.1} parent=11 // pred_check_branch
          %664 = sbr.rel (%p662) target = $region68
        $region67: #{tpu_custom_call.1} parent=11 // pred_region
          %s666 = ssub.s32 45056, 45056
          %667 = vsyncadd [#allocation24], %s666
          %s668 = sshll.u32 [#allocation23], 4
          %s669 = int_to_ptr.vmem [resolvable:$true] %s668
          %674 = dma.hbm_to_vmem [thread:$0]  %s14, 45056, %s669, [#allocation24], 128, 128, 8
        $region68: #{tpu_custom_call.1} parent=11 // pred_fallthru
          _
        // Predicated region
        $region69: #{tpu_custom_call.1} parent=11 // pred_check
          %p675 = pneg %p380
        $region70: #{tpu_custom_call.1} parent=11 // pred_check_branch
          %677 = sbr.rel (%p675) target = $region72
        $region71: #{tpu_custom_call.1} parent=11 // pred_region
          %s679 = ssub.s32 32, 32
          %680 = vsyncadd [#allocation24], %s679
          %s682 = sshll.u32 [#allocation25], 4
          %s683 = int_to_ptr.vmem [resolvable:$true] %s682
          %685 = dma.hbm_to_vmem [thread:$0]  %s15, 32, %s683, [#allocation24]
        $region72: #{tpu_custom_call.1} parent=11 // pred_fallthru
          _
        // Predicated region
        $region73: #{tpu_custom_call.1} parent=11 // pred_check
          %p686 = pneg %p401
        $region74: #{tpu_custom_call.1} parent=11 // pred_check_branch
          %688 = sbr.rel (%p686) target = $region76
        $region75: #{tpu_custom_call.1} parent=11 // pred_region
          %s690 = ssub.s32 2048, 2048
          %691 = vsyncadd [#allocation27], %s690
          %s692 = sshll.u32 [#allocation26], 4
          %s693 = int_to_ptr.vmem [resolvable:$true] %s692
          %698 = dma.hbm_to_vmem [thread:$0]  %s16, 2048, %s693, [#allocation27], 64, 64, 4
        $region76: #{tpu_custom_call.1} parent=11 // pred_fallthru
          _
        // Predicated region
        $region77: #{tpu_custom_call.1} parent=11 // pred_check
          %p699 = pneg %p422
        $region78: #{tpu_custom_call.1} parent=11 // pred_check_branch
          %701 = sbr.rel (%p699) target = $region80
        $region79: #{tpu_custom_call.1} parent=11 // pred_region
          %s703 = ssub.s32 16, 16
          %704 = vsyncadd [#allocation27], %s703
          %s706 = sshll.u32 [#allocation28], 4
          %s707 = int_to_ptr.vmem [resolvable:$true] %s706
          %709 = dma.hbm_to_vmem [thread:$0]  %s17, 16, %s707, [#allocation27]
        $region80: #{tpu_custom_call.1} parent=11 // pred_fallthru
          _
        // Predicated region
        $region81: #{tpu_custom_call.1} parent=11 // pred_check
          %p710 = pneg %p443
        $region82: #{tpu_custom_call.1} parent=11 // pred_check_branch
          %712 = sbr.rel (%p710) target = $region84
        $region83: #{tpu_custom_call.1} parent=11 // pred_region
          %s714 = ssub.s32 1024, 1024
          %715 = vsyncadd [#allocation30], %s714
          %s716 = sshll.u32 [#allocation29], 4
          %s717 = int_to_ptr.vmem [resolvable:$true] %s716
          %722 = dma.hbm_to_vmem [thread:$0]  %s18, 1024, %s717, [#allocation30], 64, 64, 4
        $region84: #{tpu_custom_call.1} parent=11 // pred_fallthru
          _
        // Predicated region
        $region85: #{tpu_custom_call.1} parent=11 // pred_check
          %p723 = pneg %p464
        $region86: #{tpu_custom_call.1} parent=11 // pred_check_branch
          %725 = sbr.rel (%p723) target = $region88
        $region87: #{tpu_custom_call.1} parent=11 // pred_region
          %s727 = ssub.s32 16, 16
          %728 = vsyncadd [#allocation30], %s727
          %s730 = sshll.u32 [#allocation31], 4
          %s731 = int_to_ptr.vmem [resolvable:$true] %s730
          %733 = dma.hbm_to_vmem [thread:$0]  %s19, 16, %s731, [#allocation30]
        $region88: #{tpu_custom_call.1} parent=11 // pred_fallthru
          _
      $region12: #{tpu_custom_call.1} parent=5 // pred_fallthru
        _
      %p734 = scmp.lt.s32.totalorder %s39, 2
      // Predicated region
      $region89: #{tpu_custom_call.1} parent=5 // pred_check
        %p735 = pneg %p734
      $region90: #{tpu_custom_call.1} parent=5 // pred_check_branch
        %737 = sbr.rel (%p735) target = $region92
      $region91: #{tpu_custom_call.1} parent=5 // pred_region
        // Predicated region
        $region93: #{tpu_custom_call.1} parent=91 // pred_check
          %p738 = pneg %p59
        $region94: #{tpu_custom_call.1} parent=91 // pred_check_branch
          %740 = sbr.rel (%p738) target = $region96
        $region95: #{tpu_custom_call.1} parent=91 // pred_region
          %p741 = scmp.lt.s32.totalorder %s39, 1
          %s742 = scalar_select %p741, %s39, 1
          %s743 = smul.addr %s742, 44
          %s744 = smul.addr %s743, 4
          %s745 = scalar_lea.vmem %s0, %s744
        $region96: #{tpu_custom_call.1} parent=91 // pred_fallthru
          _
      $region92: #{tpu_custom_call.1} parent=5 // pred_fallthru
        _
      %p746 = scmp.le.s32.totalorder 1, %s39
      %p747 = scmp.lt.s32.totalorder %s39, 3
      %p748 = pnand %p746, %p747
      %p749 = pneg %p748
      // Predicated region
      $region97: #{tpu_custom_call.1} parent=5 // pred_check
        _
      $region98: #{tpu_custom_call.1} parent=5 // pred_check_branch
        %751 = sbr.rel (%p748) target = $region100
      $region99: #{tpu_custom_call.1} parent=5 // pred_region
        %s752 = ssub.s32 %s39, 1
        // Predicated region
        $region101: #{tpu_custom_call.1} parent=99 // pred_check
          %p753 = pneg %p86
        $region102: #{tpu_custom_call.1} parent=99 // pred_check_branch
          %755 = sbr.rel (%p753) target = $region104
        $region103: #{tpu_custom_call.1} parent=99 // pred_region
          %756 = dma.done [#allocation3], 192
        $region104: #{tpu_custom_call.1} parent=99 // pred_fallthru
          _
        // Predicated region
        $region105: #{tpu_custom_call.1} parent=99 // pred_check
          %p757 = pneg %p107
        $region106: #{tpu_custom_call.1} parent=99 // pred_check_branch
          %759 = sbr.rel (%p757) target = $region108
        $region107: #{tpu_custom_call.1} parent=99 // pred_region
          %760 = dma.done [#allocation6], 16
        $region108: #{tpu_custom_call.1} parent=99 // pred_fallthru
          _
        // Predicated region
        $region109: #{tpu_custom_call.1} parent=99 // pred_check
          %p761 = pneg %p128
        $region110: #{tpu_custom_call.1} parent=99 // pred_check_branch
          %763 = sbr.rel (%p761) target = $region112
        $region111: #{tpu_custom_call.1} parent=99 // pred_region
          %764 = dma.done [#allocation6], 16
        $region112: #{tpu_custom_call.1} parent=99 // pred_fallthru
          _
        // Predicated region
        $region113: #{tpu_custom_call.1} parent=99 // pred_check
          %p765 = pneg %p149
        $region114: #{tpu_custom_call.1} parent=99 // pred_check_branch
          %767 = sbr.rel (%p765) target = $region116
        $region115: #{tpu_custom_call.1} parent=99 // pred_region
          %768 = dma.done [#allocation9], 512
        $region116: #{tpu_custom_call.1} parent=99 // pred_fallthru
          _
        // Predicated region
        $region117: #{tpu_custom_call.1} parent=99 // pred_check
          %p769 = pneg %p170
        $region118: #{tpu_custom_call.1} parent=99 // pred_check_branch
          %771 = sbr.rel (%p769) target = $region120
        $region119: #{tpu_custom_call.1} parent=99 // pred_region
          %772 = dma.done [#allocation9], 512
        $region120: #{tpu_custom_call.1} parent=99 // pred_fallthru
          _
        // Predicated region
        $region121: #{tpu_custom_call.1} parent=99 // pred_check
          %p773 = pneg %p191
        $region122: #{tpu_custom_call.1} parent=99 // pred_check_branch
          %775 = sbr.rel (%p773) target = $region124
        $region123: #{tpu_custom_call.1} parent=99 // pred_region
          %776 = dma.done [#allocation12], 512
        $region124: #{tpu_custom_call.1} parent=99 // pred_fallthru
          _
        // Predicated region
        $region125: #{tpu_custom_call.1} parent=99 // pred_check
          %p777 = pneg %p212
        $region126: #{tpu_custom_call.1} parent=99 // pred_check_branch
          %779 = sbr.rel (%p777) target = $region128
        $region127: #{tpu_custom_call.1} parent=99 // pred_region
          %780 = dma.done [#allocation12], 16
        $region128: #{tpu_custom_call.1} parent=99 // pred_fallthru
          _
        // Predicated region
        $region129: #{tpu_custom_call.1} parent=99 // pred_check
          %p781 = pneg %p233
        $region130: #{tpu_custom_call.1} parent=99 // pred_check_branch
          %783 = sbr.rel (%p781) target = $region132
        $region131: #{tpu_custom_call.1} parent=99 // pred_region
          %784 = dma.done [#allocation15], 16
        $region132: #{tpu_custom_call.1} parent=99 // pred_fallthru
          _
        // Predicated region
        $region133: #{tpu_custom_call.1} parent=99 // pred_check
          %p785 = pneg %p254
        $region134: #{tpu_custom_call.1} parent=99 // pred_check_branch
          %787 = sbr.rel (%p785) target = $region136
        $region135: #{tpu_custom_call.1} parent=99 // pred_region
          %788 = dma.done [#allocation15], 2048
        $region136: #{tpu_custom_call.1} parent=99 // pred_fallthru
          _
        // Predicated region
        $region137: #{tpu_custom_call.1} parent=99 // pred_check
          %p789 = pneg %p275
        $region138: #{tpu_custom_call.1} parent=99 // pred_check_branch
          %791 = sbr.rel (%p789) target = $region140
        $region139: #{tpu_custom_call.1} parent=99 // pred_region
          %792 = dma.done [#allocation18], 2048
        $region140: #{tpu_custom_call.1} parent=99 // pred_fallthru
          _
        // Predicated region
        $region141: #{tpu_custom_call.1} parent=99 // pred_check
          %p793 = pneg %p296
        $region142: #{tpu_custom_call.1} parent=99 // pred_check_branch
          %795 = sbr.rel (%p793) target = $region144
        $region143: #{tpu_custom_call.1} parent=99 // pred_region
          %796 = dma.done [#allocation18], 2048
        $region144: #{tpu_custom_call.1} parent=99 // pred_fallthru
          _
        // Predicated region
        $region145: #{tpu_custom_call.1} parent=99 // pred_check
          %p797 = pneg %p317
        $region146: #{tpu_custom_call.1} parent=99 // pred_check_branch
          %799 = sbr.rel (%p797) target = $region148
        $region147: #{tpu_custom_call.1} parent=99 // pred_region
          %800 = dma.done [#allocation21], 32
        $region148: #{tpu_custom_call.1} parent=99 // pred_fallthru
          _
        // Predicated region
        $region149: #{tpu_custom_call.1} parent=99 // pred_check
          %p801 = pneg %p338
        $region150: #{tpu_custom_call.1} parent=99 // pred_check_branch
          %803 = sbr.rel (%p801) target = $region152
        $region151: #{tpu_custom_call.1} parent=99 // pred_region
          %804 = dma.done [#allocation21], 32
        $region152: #{tpu_custom_call.1} parent=99 // pred_fallthru
          _
        // Predicated region
        $region153: #{tpu_custom_call.1} parent=99 // pred_check
          %p805 = pneg %p359
        $region154: #{tpu_custom_call.1} parent=99 // pred_check_branch
          %807 = sbr.rel (%p805) target = $region156
        $region155: #{tpu_custom_call.1} parent=99 // pred_region
          %808 = dma.done [#allocation24], 45056
        $region156: #{tpu_custom_call.1} parent=99 // pred_fallthru
          _
        // Predicated region
        $region157: #{tpu_custom_call.1} parent=99 // pred_check
          %p809 = pneg %p380
        $region158: #{tpu_custom_call.1} parent=99 // pred_check_branch
          %811 = sbr.rel (%p809) target = $region160
        $region159: #{tpu_custom_call.1} parent=99 // pred_region
          %812 = dma.done [#allocation24], 32
        $region160: #{tpu_custom_call.1} parent=99 // pred_fallthru
          _
        // Predicated region
        $region161: #{tpu_custom_call.1} parent=99 // pred_check
          %p813 = pneg %p401
        $region162: #{tpu_custom_call.1} parent=99 // pred_check_branch
          %815 = sbr.rel (%p813) target = $region164
        $region163: #{tpu_custom_call.1} parent=99 // pred_region
          %816 = dma.done [#allocation27], 2048
        $region164: #{tpu_custom_call.1} parent=99 // pred_fallthru
          _
        // Predicated region
        $region165: #{tpu_custom_call.1} parent=99 // pred_check
          %p817 = pneg %p422
        $region166: #{tpu_custom_call.1} parent=99 // pred_check_branch
          %819 = sbr.rel (%p817) target = $region168
        $region167: #{tpu_custom_call.1} parent=99 // pred_region
          %820 = dma.done [#allocation27], 16
        $region168: #{tpu_custom_call.1} parent=99 // pred_fallthru
          _
        // Predicated region
        $region169: #{tpu_custom_call.1} parent=99 // pred_check
          %p821 = pneg %p443
        $region170: #{tpu_custom_call.1} parent=99 // pred_check_branch
          %823 = sbr.rel (%p821) target = $region172
        $region171: #{tpu_custom_call.1} parent=99 // pred_region
          %824 = dma.done [#allocation30], 1024
        $region172: #{tpu_custom_call.1} parent=99 // pred_fallthru
          _
        // Predicated region
        $region173: #{tpu_custom_call.1} parent=99 // pred_check
          %p825 = pneg %p464
        $region174: #{tpu_custom_call.1} parent=99 // pred_check_branch
          %827 = sbr.rel (%p825) target = $region176
        $region175: #{tpu_custom_call.1} parent=99 // pred_region
          %828 = dma.done [#allocation30], 16
        $region176: #{tpu_custom_call.1} parent=99 // pred_fallthru
          _
        %p829 = scmp.lt.s32.totalorder %s44, 1
        %s830 = scalar_select %p829, %s44, 1
        %s831 = smul.addr %s830, 44
        %s832 = smul.addr %s831, 4
        %s833 = scalar_lea.vmem %s0, %s832
        %p834 = pneg %p65
        %p835 = pneg %p62
        %p836 = pneg %p86
        %p837 = pneg %p83
        %p838 = pneg %p107
        %p839 = pneg %p104
        %p840 = pneg %p128
        %p841 = pneg %p125
        %p842 = pneg %p149
        %p843 = pneg %p146
        %p844 = pneg %p170
        %p845 = pneg %p167
        %p846 = pneg %p191
        %p847 = pneg %p188
        %p848 = pneg %p212
        %p849 = pneg %p209
        %p850 = pneg %p233
        %p851 = pneg %p230
        %p852 = pneg %p254
        %p853 = pneg %p251
        %p854 = pneg %p275
        %p855 = pneg %p272
        %p856 = pneg %p296
        %p857 = pneg %p293
        %p858 = pneg %p317
        %p859 = pneg %p314
        %p860 = pneg %p338
        %p861 = pneg %p335
        %p862 = pneg %p359
        %p863 = pneg %p356
        %p864 = pneg %p380
        %p865 = pneg %p377
        %p866 = pneg %p401
        %p867 = pneg %p398
        %p868 = pneg %p422
        %p869 = pneg %p419
        %p870 = pneg %p443
        %p871 = pneg %p440
        %p872 = pneg %p464
        %p873 = pneg %p461
        %p874 = pneg %p490
        %p875 = pneg %p487
        %s876 = sand.u32 %s477, 1
        %s877 = scalar_lea.sflag [#allocation4], %s876
        %s878 = sand.u32 %s477, 1
        %s879 = smul.addr %s878, 32
        %s880 = scalar_lea.vmem [#allocation32], %s879
        %p881 = scmp.lt.s32.totalorder %s44, 1
        %s882 = scalar_select %p881, %s44, 1
        %s883 = smul.addr %s882, 44
        %s884 = smul.addr %s883, 4
        %s885 = scalar_lea.vmem %s0, %s884
        %v887 = vld [vmem:[%s885] sm:$0xf]
        %v888 = vld [vmem:[%s885 + $0x4] sm:$0xf]
        %v889 = vld [vmem:[%s885 + $0x8] sm:$0xf]
        %v890 = vld [vmem:[%s885 + $0xc] sm:$0xf]
        %v891 = vld [vmem:[%s885 + $0x10] sm:$0xf]
        %v892 = vld [vmem:[%s885 + $0x14] sm:$0xf]
        %v893 = vld [vmem:[%s885 + $0x18] sm:$0xf]
        %v894 = vld [vmem:[%s885 + $0x1c] sm:$0xf]
        %v895 = vld [vmem:[%s885 + $0x20] sm:$0xf]
        %v896 = vld [vmem:[%s885 + $0x24] sm:$0xf]
        %v897 = vld [vmem:[%s885 + $0x28] sm:$0xf]
        %v898 = vld [vmem:[%s885 + $0x2c] sm:$0xf]
        %v899 = vld [vmem:[%s885 + $0x30] sm:$0xf]
        %v900 = vld [vmem:[%s885 + $0x34] sm:$0xf]
        %v901 = vld [vmem:[%s885 + $0x38] sm:$0xf]
        %v902 = vld [vmem:[%s885 + $0x3c] sm:$0xf]
        %v903 = vld [vmem:[%s885 + $0x40] sm:$0xf]
        %v904 = vld [vmem:[%s885 + $0x44] sm:$0xf]
        %v905 = vld [vmem:[%s885 + $0x48] sm:$0xf]
        %v906 = vld [vmem:[%s885 + $0x4c] sm:$0xf]
        %v907 = vld [vmem:[%s885 + $0x50] sm:$0xf]
        %v908 = vld [vmem:[%s885 + $0x54] sm:$0xf]
        %v909 = vld [vmem:[%s885 + $0x58] sm:$0xf]
        %v910 = vld [vmem:[%s885 + $0x5c] sm:$0xf]
        %v911 = vld [vmem:[%s885 + $0x60] sm:$0xf]
        %v912 = vld [vmem:[%s885 + $0x64] sm:$0xf]
        %v913 = vld [vmem:[%s885 + $0x68] sm:$0xf]
        %v914 = vld [vmem:[%s885 + $0x6c] sm:$0xf]
        %v915 = vld [vmem:[%s885 + $0x70] sm:$0xf]
        %v916 = vld [vmem:[%s885 + $0x74] sm:$0xf]
        %v917 = vld [vmem:[%s885 + $0x78] sm:$0xf]
        %v918 = vld [vmem:[%s885 + $0x7c] sm:$0xf]
        %v919 = vld [vmem:[%s885 + $0x80] sm:$0xf]
        %v920 = vld [vmem:[%s885 + $0x84] sm:$0xf]
        %v921 = vld [vmem:[%s885 + $0x88] sm:$0xf]
        %v922 = vld [vmem:[%s885 + $0x8c] sm:$0xf]
        %v923 = vld [vmem:[%s885 + $0x90] sm:$0xf]
        %v924 = vld [vmem:[%s885 + $0x94] sm:$0xf]
        %v925 = vld [vmem:[%s885 + $0x98] sm:$0xf]
        %v926 = vld [vmem:[%s885 + $0x9c] sm:$0xf]
        %v927 = vld [vmem:[%s885 + $0xa0] sm:$0xf]
        %v928 = vld [vmem:[%s885 + $0xa4] sm:$0xf]
        %v929 = vld [vmem:[%s885 + $0xa8] sm:$0xf]
        %v930 = vld [vmem:[%s885 + $0xac] sm:$0xf]
        %v931 = vld [vmem:[#allocation2] sm:$0xf]
        %v932 = vld [vmem:[#allocation2 + $0x4] sm:$0xf]
        %v933 = vld [vmem:[#allocation2 + $0x8] sm:$0x1]
        %v978 = vunpack.c.l.b16 %v887
        %v979 = vunpack.c.l.b16 %v888
        %v980 = vunpack.c.l.b16 %v889
        %v981 = vunpack.c.l.b16 %v890
        %v982 = vunpack.c.l.b16 %v891
        %v983 = vunpack.c.l.b16 %v892
        %v984 = vunpack.c.l.b16 %v893
        %v985 = vunpack.c.l.b16 %v894
        %v986 = vunpack.c.l.b16 %v895
        %v987 = vunpack.c.l.b16 %v896
        %v988 = vunpack.c.l.b16 %v897
        %v989 = vunpack.c.l.b16 %v898
        %v990 = vunpack.c.l.b16 %v899
        %v991 = vunpack.c.l.b16 %v900
        %v992 = vunpack.c.l.b16 %v901
        %v993 = vunpack.c.l.b16 %v902
        %v994 = vunpack.c.l.b16 %v903
        %v995 = vunpack.c.l.b16 %v904
        %v996 = vunpack.c.l.b16 %v905
        %v997 = vunpack.c.l.b16 %v906
        %v998 = vunpack.c.l.b16 %v907
        %v999 = vunpack.c.l.b16 %v908
        %v1000 = vunpack.c.l.b16 %v909
        %v1001 = vunpack.c.l.b16 %v910
        %v1002 = vunpack.c.l.b16 %v911
        %v1003 = vunpack.c.l.b16 %v912
        %v1004 = vunpack.c.l.b16 %v913
        %v1005 = vunpack.c.l.b16 %v914
        %v1006 = vunpack.c.l.b16 %v915
        %v1007 = vunpack.c.l.b16 %v916
        %v1008 = vunpack.c.l.b16 %v917
        %v1009 = vunpack.c.l.b16 %v918
        %v1010 = vunpack.c.l.b16 %v919
        %v1011 = vunpack.c.l.b16 %v920
        %v1012 = vunpack.c.l.b16 %v921
        %v1013 = vunpack.c.l.b16 %v922
        %v1014 = vunpack.c.l.b16 %v923
        %v1015 = vunpack.c.l.b16 %v924
        %v1016 = vunpack.c.l.b16 %v925
        %v1017 = vunpack.c.l.b16 %v926
        %v1018 = vunpack.c.l.b16 %v927
        %v1019 = vunpack.c.l.b16 %v928
        %v1020 = vunpack.c.l.b16 %v929
        %v1021 = vunpack.c.l.b16 %v930
        %v1022 = vpack.c.b16 %v979, %v978
        %v1023 = vpack.c.b16 %v981, %v980
        %v1024 = vpack.c.b16 %v983, %v982
        %v1025 = vpack.c.b16 %v985, %v984
        %v1026 = vpack.c.b16 %v987, %v986
        %v1027 = vpack.c.b16 %v989, %v988
        %v1028 = vpack.c.b16 %v991, %v990
        %v1029 = vpack.c.b16 %v993, %v992
        %v1030 = vpack.c.b16 %v995, %v994
        %v1031 = vpack.c.b16 %v997, %v996
        %v1032 = vpack.c.b16 %v999, %v998
        %v1033 = vpack.c.b16 %v1001, %v1000
        %v1034 = vpack.c.b16 %v1003, %v1002
        %v1035 = vpack.c.b16 %v1005, %v1004
        %v1036 = vpack.c.b16 %v1007, %v1006
        %v1037 = vpack.c.b16 %v1009, %v1008
        %v1038 = vpack.c.b16 %v1011, %v1010
        %v1039 = vpack.c.b16 %v1013, %v1012
        %v1040 = vpack.c.b16 %v1015, %v1014
        %v1041 = vpack.c.b16 %v1017, %v1016
        %v1042 = vpack.c.b16 %v1019, %v1018
        %v1043 = vpack.c.b16 %v1021, %v1020
        %v1047 = vunpack.c.l.b16 %v931
        %v1048 = vunpack.c.l.b16 %v932
        %v1049 = vunpack.c.l.b16 %v933
        %v1050 = vpack.c.b16 %v1048, %v1047
        %v1051 = vpack.c.b16 %v1049, %v1049
        %vm1053 = vcmask 146432
        %v1055 = vsel %vm1053, %v1022, 0
        %v1058 = vsel %vm1053, %v1023, 0
        %v1061 = vsel %vm1053, %v1024, 0
        %v1064 = vsel %vm1053, %v1025, 0
        %v1067 = vsel %vm1053, %v1026, 0
        %v1070 = vsel %vm1053, %v1027, 0
        %v1073 = vsel %vm1053, %v1028, 0
        %v1076 = vsel %vm1053, %v1029, 0
        %v1079 = vsel %vm1053, %v1030, 0
        %v1082 = vsel %vm1053, %v1031, 0
        %v1085 = vsel %vm1053, %v1032, 0
        %v1088 = vsel %vm1053, %v1033, 0
        %v1091 = vsel %vm1053, %v1034, 0
        %v1094 = vsel %vm1053, %v1035, 0
        %v1097 = vsel %vm1053, %v1036, 0
        %v1100 = vsel %vm1053, %v1037, 0
        %v1103 = vsel %vm1053, %v1038, 0
        %v1106 = vsel %vm1053, %v1039, 0
        %v1109 = vsel %vm1053, %v1040, 0
        %v1112 = vsel %vm1053, %v1041, 0
        %v1115 = vsel %vm1053, %v1042, 0
        %v1118 = vsel %vm1053, %v1043, 0
        %vm1120 = vcmask 1040384
        %v1122 = vsel %vm1120, %v1051, 0
        %1124 = vmatprep.subr.bf16.mxu0 0
        %1125 = vmatpush1.bf16.msra.mxu0 %v1050
        %1126 = vmatprep.subr.bf16.mxu0 0
        %1127 = vmatpush1.bf16.msra.mxu0 %v1122
        %1128 = vmatprep.subr.bf16.mxu0 0
        %1129 = vmatpush1.bf16.msra.mxu0 0
        %1130 = vmatprep.subr.bf16.mxu0 0
        %1131 = vmatpush1.bf16.msra.mxu0 0
        %1132 = vmatprep.subr.bf16.mxu0 0
        %1133 = vmatpush1.bf16.msra.mxu0 0
        %1134 = vmatprep.subr.bf16.mxu0 0
        %1135 = vmatpush1.bf16.msra.mxu0 0
        %1136 = vmatprep.subr.bf16.mxu0 0
        %1137 = vmatpush1.bf16.msra.mxu0 0
        %1138 = vmatprep.subr.bf16.mxu0 0
        %1139 = vmatpush1.bf16.msra.mxu0 0
        %1140 = vmatprep.subr.bf16.mxu0 0
        %1141 = vmatpush1.bf16.msra.mxu0 0
        %1142 = vmatprep.subr.bf16.mxu0 0
        %1143 = vmatpush1.bf16.msra.mxu0 0
        %1144 = vmatprep.subr.bf16.mxu0 0
        %1145 = vmatpush1.bf16.msra.mxu0 0
        %1146 = vmatprep.subr.bf16.mxu0 0
        %1147 = vmatpush1.bf16.msra.mxu0 0
        %1148 = vmatprep.subr.bf16.mxu0 0
        %1149 = vmatpush1.bf16.msra.mxu0 0
        %1150 = vmatprep.subr.bf16.mxu0 0
        %1151 = vmatpush1.bf16.msra.mxu0 0
        %1152 = vmatprep.subr.bf16.mxu0 0
        %1153 = vmatpush1.bf16.msra.mxu0 0
        %1154 = vmatprep.subr.bf16.mxu0 0
        %1155 = vmatpush1.bf16.msra.mxu0 0
        %1156 = vmatprep.mubr.bf16.mxu0 0
        %1157 = vmatmul.mubr.bf16.gmra.mrb[0].mxu0 %v1055
        %v1158 = vpop.f32.mrb[0].mxu0
        %v1159 = vadd.f32 0.0, %v1158
        %v1160 = vpop.f32.mrb[0].mxu0
        %v1161 = vpop.f32.mrb[0].mxu0
        %v1162 = vadd.f32 0.0, %v1161
        %v1163 = vpop.f32.mrb[0].mxu0
        %1164 = vmatprep.mubr.bf16.mxu0 0
        %1165 = vmatmul.mubr.bf16.gmra.mrb[0].mxu0 %v1058
        %v1166 = vpop.f32.mrb[0].mxu0
        %v1167 = vadd.f32 0.0, %v1166
        %v1168 = vpop.f32.mrb[0].mxu0
        %v1169 = vpop.f32.mrb[0].mxu0
        %v1170 = vadd.f32 0.0, %v1169
        %v1171 = vpop.f32.mrb[0].mxu0
        %1172 = vmatprep.mubr.bf16.mxu0 0
        %1173 = vmatmul.mubr.bf16.gmra.mrb[0].mxu0 %v1061
        %v1174 = vpop.f32.mrb[0].mxu0
        %v1175 = vadd.f32 0.0, %v1174
        %v1176 = vpop.f32.mrb[0].mxu0
        %v1177 = vpop.f32.mrb[0].mxu0
        %v1178 = vadd.f32 0.0, %v1177
        %v1179 = vpop.f32.mrb[0].mxu0
        %1180 = vmatprep.mubr.bf16.mxu0 0
        %1181 = vmatmul.mubr.bf16.gmra.mrb[0].mxu0 %v1064
        %v1182 = vpop.f32.mrb[0].mxu0
        %v1183 = vadd.f32 0.0, %v1182
        %v1184 = vpop.f32.mrb[0].mxu0
        %v1185 = vpop.f32.mrb[0].mxu0
        %v1186 = vadd.f32 0.0, %v1185
        %v1187 = vpop.f32.mrb[0].mxu0
        %1188 = vmatprep.mubr.bf16.mxu0 0
        %1189 = vmatmul.mubr.bf16.gmra.mrb[0].mxu0 %v1067
        %v1190 = vpop.f32.mrb[0].mxu0
        %v1191 = vadd.f32 0.0, %v1190
        %v1192 = vpop.f32.mrb[0].mxu0
        %v1193 = vpop.f32.mrb[0].mxu0
        %v1194 = vadd.f32 0.0, %v1193
        %v1195 = vpop.f32.mrb[0].mxu0
        %1196 = vmatprep.mubr.bf16.mxu0 0
        %1197 = vmatmul.mubr.bf16.gmra.mrb[0].mxu0 %v1070
        %v1198 = vpop.f32.mrb[0].mxu0
        %v1199 = vadd.f32 0.0, %v1198
        %v1200 = vpop.f32.mrb[0].mxu0
        %v1201 = vpop.f32.mrb[0].mxu0
        %v1202 = vadd.f32 0.0, %v1201
        %v1203 = vpop.f32.mrb[0].mxu0
        %1204 = vmatprep.mubr.bf16.mxu0 0
        %1205 = vmatmul.mubr.bf16.gmra.mrb[0].mxu0 %v1073
        %v1206 = vpop.f32.mrb[0].mxu0
        %v1207 = vadd.f32 0.0, %v1206
        %v1208 = vpop.f32.mrb[0].mxu0
        %v1209 = vpop.f32.mrb[0].mxu0
        %v1210 = vadd.f32 0.0, %v1209
        %v1211 = vpop.f32.mrb[0].mxu0
        %1212 = vmatprep.mubr.bf16.mxu0 0
        %1213 = vmatmul.mubr.bf16.gmra.mrb[0].mxu0 %v1076
        %v1214 = vpop.f32.mrb[0].mxu0
        %v1215 = vadd.f32 0.0, %v1214
        %v1216 = vpop.f32.mrb[0].mxu0
        %v1217 = vpop.f32.mrb[0].mxu0
        %v1218 = vadd.f32 0.0, %v1217
        %v1219 = vpop.f32.mrb[0].mxu0
        %1220 = vmatprep.mubr.bf16.mxu0 0
        %1221 = vmatmul.mubr.bf16.gmra.mrb[0].mxu0 %v1079
        %v1222 = vpop.f32.mrb[0].mxu0
        %v1223 = vadd.f32 0.0, %v1222
        %v1224 = vpop.f32.mrb[0].mxu0
        %v1225 = vpop.f32.mrb[0].mxu0
        %v1226 = vadd.f32 0.0, %v1225
        %v1227 = vpop.f32.mrb[0].mxu0
        %1228 = vmatprep.mubr.bf16.mxu0 0
        %1229 = vmatmul.mubr.bf16.gmra.mrb[0].mxu0 %v1082
        %v1230 = vpop.f32.mrb[0].mxu0
        %v1231 = vadd.f32 0.0, %v1230
        %v1232 = vpop.f32.mrb[0].mxu0
        %v1233 = vpop.f32.mrb[0].mxu0
        %v1234 = vadd.f32 0.0, %v1233
        %v1235 = vpop.f32.mrb[0].mxu0
        %1236 = vmatprep.mubr.bf16.mxu0 0
        %1237 = vmatmul.mubr.bf16.gmra.mrb[0].mxu0 %v1085
        %v1238 = vpop.f32.mrb[0].mxu0
        %v1239 = vadd.f32 0.0, %v1238
        %v1240 = vpop.f32.mrb[0].mxu0
        %v1241 = vpop.f32.mrb[0].mxu0
        %v1242 = vadd.f32 0.0, %v1241
        %v1243 = vpop.f32.mrb[0].mxu0
        %1244 = vmatprep.mubr.bf16.mxu0 0
        %1245 = vmatmul.mubr.bf16.gmra.mrb[0].mxu0 %v1088
        %v1246 = vpop.f32.mrb[0].mxu0
        %v1247 = vadd.f32 0.0, %v1246
        %v1248 = vpop.f32.mrb[0].mxu0
        %v1249 = vpop.f32.mrb[0].mxu0
        %v1250 = vadd.f32 0.0, %v1249
        %v1251 = vpop.f32.mrb[0].mxu0
        %1252 = vmatprep.mubr.bf16.mxu0 0
        %1253 = vmatmul.mubr.bf16.gmra.mrb[0].mxu0 %v1091
        %v1254 = vpop.f32.mrb[0].mxu0
        %v1255 = vadd.f32 0.0, %v1254
        %v1256 = vpop.f32.mrb[0].mxu0
        %v1257 = vpop.f32.mrb[0].mxu0
        %v1258 = vadd.f32 0.0, %v1257
        %v1259 = vpop.f32.mrb[0].mxu0
        %1260 = vmatprep.mubr.bf16.mxu0 0
        %1261 = vmatmul.mubr.bf16.gmra.mrb[0].mxu0 %v1094
        %v1262 = vpop.f32.mrb[0].mxu0
        %v1263 = vadd.f32 0.0, %v1262
        %v1264 = vpop.f32.mrb[0].mxu0
        %v1265 = vpop.f32.mrb[0].mxu0
        %v1266 = vadd.f32 0.0, %v1265
        %v1267 = vpop.f32.mrb[0].mxu0
        %1268 = vmatprep.mubr.bf16.mxu0 0
        %1269 = vmatmul.mubr.bf16.gmra.mrb[0].mxu0 %v1097
        %v1270 = vpop.f32.mrb[0].mxu0
        %v1271 = vadd.f32 0.0, %v1270
        %v1272 = vpop.f32.mrb[0].mxu0
        %v1273 = vpop.f32.mrb[0].mxu0
        %v1274 = vadd.f32 0.0, %v1273
        %v1275 = vpop.f32.mrb[0].mxu0
        %1276 = vmatprep.mubr.bf16.mxu0 0
        %1277 = vmatmul.mubr.bf16.gmra.mrb[0].mxu0 %v1100
        %v1278 = vpop.f32.mrb[0].mxu0
        %v1279 = vadd.f32 0.0, %v1278
        %v1280 = vpop.f32.mrb[0].mxu0
        %v1281 = vpop.f32.mrb[0].mxu0
        %v1282 = vadd.f32 0.0, %v1281
        %v1283 = vpop.f32.mrb[0].mxu0
        %1284 = vmatprep.mubr.bf16.mxu0 0
        %1285 = vmatmul.mubr.bf16.gmra.mrb[0].mxu0 %v1103
        %v1286 = vpop.f32.mrb[0].mxu0
        %v1287 = vadd.f32 0.0, %v1286
        %v1288 = vpop.f32.mrb[0].mxu0
        %v1289 = vpop.f32.mrb[0].mxu0
        %v1290 = vadd.f32 0.0, %v1289
        %v1291 = vpop.f32.mrb[0].mxu0
        %1292 = vmatprep.mubr.bf16.mxu0 0
        %1293 = vmatmul.mubr.bf16.gmra.mrb[0].mxu0 %v1106
        %v1294 = vpop.f32.mrb[0].mxu0
        %v1295 = vadd.f32 0.0, %v1294
        %v1296 = vpop.f32.mrb[0].mxu0
        %v1297 = vpop.f32.mrb[0].mxu0
        %v1298 = vadd.f32 0.0, %v1297
        %v1299 = vpop.f32.mrb[0].mxu0
        %1300 = vmatprep.mubr.bf16.mxu0 0
        %1301 = vmatmul.mubr.bf16.gmra.mrb[0].mxu0 %v1109
        %v1302 = vpop.f32.mrb[0].mxu0
        %v1303 = vadd.f32 0.0, %v1302
        %v1304 = vpop.f32.mrb[0].mxu0
        %v1305 = vpop.f32.mrb[0].mxu0
        %v1306 = vadd.f32 0.0, %v1305
        %v1307 = vpop.f32.mrb[0].mxu0
        %1308 = vmatprep.mubr.bf16.mxu0 0
        %1309 = vmatmul.mubr.bf16.gmra.mrb[0].mxu0 %v1112
        %v1310 = vpop.f32.mrb[0].mxu0
        %v1311 = vadd.f32 0.0, %v1310
        %v1312 = vpop.f32.mrb[0].mxu0
        %v1313 = vpop.f32.mrb[0].mxu0
        %v1314 = vadd.f32 0.0, %v1313
        %v1315 = vpop.f32.mrb[0].mxu0
        %1316 = vmatprep.mubr.bf16.mxu0 0
        %1317 = vmatmul.mubr.bf16.gmra.mrb[0].mxu0 %v1115
        %v1318 = vpop.f32.mrb[0].mxu0
        %v1319 = vadd.f32 0.0, %v1318
        %v1320 = vpop.f32.mrb[0].mxu0
        %v1321 = vpop.f32.mrb[0].mxu0
        %v1322 = vadd.f32 0.0, %v1321
        %v1323 = vpop.f32.mrb[0].mxu0
        %1324 = vmatprep.mubr.bf16.mxu0 0
        %1325 = vmatmul.mubr.bf16.gmra.mrb[0].mxu0 %v1118
        %v1326 = vpop.f32.mrb[0].mxu0
        %v1327 = vadd.f32 0.0, %v1326
        %v1328 = vpop.f32.mrb[0].mxu0
        %v1329 = vpop.f32.mrb[0].mxu0
        %v1330 = vadd.f32 0.0, %v1329
        %v1331 = vpop.f32.mrb[0].mxu0
        %1332 = vdwg.mxu0
        %v1333 = vld [vmem:[#allocation5] sm:$0x1]
        %v1334 = vld [vmem:[#allocation7] sm:$0x1]
        %v1336 = vlaneseq
        %v1337 = vshrl.u32 %v1336, 7
        %v1338 = vsub.s32 0, %v1337
        %v1339 = vrot.slane %v1333, %v1338
        %v1341 = vmul.f32 %v1159, %v1339
        %v1342 = vmul.f32 %v1162, %v1339
        %v1343 = vmul.f32 %v1167, %v1339
        %v1344 = vmul.f32 %v1170, %v1339
        %v1345 = vmul.f32 %v1175, %v1339
        %v1346 = vmul.f32 %v1178, %v1339
        %v1347 = vmul.f32 %v1183, %v1339
        %v1348 = vmul.f32 %v1186, %v1339
        %v1349 = vmul.f32 %v1191, %v1339
        %v1350 = vmul.f32 %v1194, %v1339
        %v1351 = vmul.f32 %v1199, %v1339
        %v1352 = vmul.f32 %v1202, %v1339
        %v1353 = vmul.f32 %v1207, %v1339
        %v1354 = vmul.f32 %v1210, %v1339
        %v1355 = vmul.f32 %v1215, %v1339
        %v1356 = vmul.f32 %v1218, %v1339
        %v1357 = vmul.f32 %v1223, %v1339
        %v1358 = vmul.f32 %v1226, %v1339
        %v1359 = vmul.f32 %v1231, %v1339
        %v1360 = vmul.f32 %v1234, %v1339
        %v1361 = vmul.f32 %v1239, %v1339
        %v1362 = vmul.f32 %v1242, %v1339
        %v1363 = vmul.f32 %v1247, %v1339
        %v1364 = vmul.f32 %v1250, %v1339
        %v1365 = vmul.f32 %v1255, %v1339
        %v1366 = vmul.f32 %v1258, %v1339
        %v1367 = vmul.f32 %v1263, %v1339
        %v1368 = vmul.f32 %v1266, %v1339
        %v1369 = vmul.f32 %v1271, %v1339
        %v1370 = vmul.f32 %v1274, %v1339
        %v1371 = vmul.f32 %v1279, %v1339
        %v1372 = vmul.f32 %v1282, %v1339
        %v1373 = vmul.f32 %v1287, %v1339
        %v1374 = vmul.f32 %v1290, %v1339
        %v1375 = vmul.f32 %v1295, %v1339
        %v1376 = vmul.f32 %v1298, %v1339
        %v1377 = vmul.f32 %v1303, %v1339
        %v1378 = vmul.f32 %v1306, %v1339
        %v1379 = vmul.f32 %v1311, %v1339
        %v1380 = vmul.f32 %v1314, %v1339
        %v1381 = vmul.f32 %v1319, %v1339
        %v1382 = vmul.f32 %v1322, %v1339
        %v1383 = vmul.f32 %v1327, %v1339
        %v1384 = vmul.f32 %v1330, %v1339
        %v1386 = vlaneseq
        %v1387 = vshrl.u32 %v1386, 7
        %v1388 = vsub.s32 0, %v1387
        %v1389 = vrot.slane %v1334, %v1388
        %v1391 = vadd.f32 %v1341, %v1389
        %v1392 = vadd.f32 %v1342, %v1389
        %v1393 = vadd.f32 %v1343, %v1389
        %v1394 = vadd.f32 %v1344, %v1389
        %v1395 = vadd.f32 %v1345, %v1389
        %v1396 = vadd.f32 %v1346, %v1389
        %v1397 = vadd.f32 %v1347, %v1389
        %v1398 = vadd.f32 %v1348, %v1389
        %v1399 = vadd.f32 %v1349, %v1389
        %v1400 = vadd.f32 %v1350, %v1389
        %v1401 = vadd.f32 %v1351, %v1389
        %v1402 = vadd.f32 %v1352, %v1389
        %v1403 = vadd.f32 %v1353, %v1389
        %v1404 = vadd.f32 %v1354, %v1389
        %v1405 = vadd.f32 %v1355, %v1389
        %v1406 = vadd.f32 %v1356, %v1389
        %v1407 = vadd.f32 %v1357, %v1389
        %v1408 = vadd.f32 %v1358, %v1389
        %v1409 = vadd.f32 %v1359, %v1389
        %v1410 = vadd.f32 %v1360, %v1389
        %v1411 = vadd.f32 %v1361, %v1389
        %v1412 = vadd.f32 %v1362, %v1389
        %v1413 = vadd.f32 %v1363, %v1389
        %v1414 = vadd.f32 %v1364, %v1389
        %v1415 = vadd.f32 %v1365, %v1389
        %v1416 = vadd.f32 %v1366, %v1389
        %v1417 = vadd.f32 %v1367, %v1389
        %v1418 = vadd.f32 %v1368, %v1389
        %v1419 = vadd.f32 %v1369, %v1389
        %v1420 = vadd.f32 %v1370, %v1389
        %v1421 = vadd.f32 %v1371, %v1389
        %v1422 = vadd.f32 %v1372, %v1389
        %v1423 = vadd.f32 %v1373, %v1389
        %v1424 = vadd.f32 %v1374, %v1389
        %v1425 = vadd.f32 %v1375, %v1389
        %v1426 = vadd.f32 %v1376, %v1389
        %v1427 = vadd.f32 %v1377, %v1389
        %v1428 = vadd.f32 %v1378, %v1389
        %v1429 = vadd.f32 %v1379, %v1389
        %v1430 = vadd.f32 %v1380, %v1389
        %v1431 = vadd.f32 %v1381, %v1389
        %v1432 = vadd.f32 %v1382, %v1389
        %v1433 = vadd.f32 %v1383, %v1389
        %v1434 = vadd.f32 %v1384, %v1389
        %vm1435 = vcmp.gt.f32.partialorder %v1391, 0.0
        %vm1436 = vcmp.gt.f32.partialorder %v1392, 0.0
        %vm1437 = vcmp.gt.f32.partialorder %v1393, 0.0
        %vm1438 = vcmp.gt.f32.partialorder %v1394, 0.0
        %vm1439 = vcmp.gt.f32.partialorder %v1395, 0.0
        %vm1440 = vcmp.gt.f32.partialorder %v1396, 0.0
        %vm1441 = vcmp.gt.f32.partialorder %v1397, 0.0
        %vm1442 = vcmp.gt.f32.partialorder %v1398, 0.0
        %vm1443 = vcmp.gt.f32.partialorder %v1399, 0.0
        %vm1444 = vcmp.gt.f32.partialorder %v1400, 0.0
        %vm1445 = vcmp.gt.f32.partialorder %v1401, 0.0
        %vm1446 = vcmp.gt.f32.partialorder %v1402, 0.0
        %vm1447 = vcmp.gt.f32.partialorder %v1403, 0.0
        %vm1448 = vcmp.gt.f32.partialorder %v1404, 0.0
        %vm1449 = vcmp.gt.f32.partialorder %v1405, 0.0
        %vm1450 = vcmp.gt.f32.partialorder %v1406, 0.0
        %vm1451 = vcmp.gt.f32.partialorder %v1407, 0.0
        %vm1452 = vcmp.gt.f32.partialorder %v1408, 0.0
        %vm1453 = vcmp.gt.f32.partialorder %v1409, 0.0
        %vm1454 = vcmp.gt.f32.partialorder %v1410, 0.0
        %vm1455 = vcmp.gt.f32.partialorder %v1411, 0.0
        %vm1456 = vcmp.gt.f32.partialorder %v1412, 0.0
        %vm1457 = vcmp.gt.f32.partialorder %v1413, 0.0
        %vm1458 = vcmp.gt.f32.partialorder %v1414, 0.0
        %vm1459 = vcmp.gt.f32.partialorder %v1415, 0.0
        %vm1460 = vcmp.gt.f32.partialorder %v1416, 0.0
        %vm1461 = vcmp.gt.f32.partialorder %v1417, 0.0
        %vm1462 = vcmp.gt.f32.partialorder %v1418, 0.0
        %vm1463 = vcmp.gt.f32.partialorder %v1419, 0.0
        %vm1464 = vcmp.gt.f32.partialorder %v1420, 0.0
        %vm1465 = vcmp.gt.f32.partialorder %v1421, 0.0
        %vm1466 = vcmp.gt.f32.partialorder %v1422, 0.0
        %vm1467 = vcmp.gt.f32.partialorder %v1423, 0.0
        %vm1468 = vcmp.gt.f32.partialorder %v1424, 0.0
        %vm1469 = vcmp.gt.f32.partialorder %v1425, 0.0
        %vm1470 = vcmp.gt.f32.partialorder %v1426, 0.0
        %vm1471 = vcmp.gt.f32.partialorder %v1427, 0.0
        %vm1472 = vcmp.gt.f32.partialorder %v1428, 0.0
        %vm1473 = vcmp.gt.f32.partialorder %v1429, 0.0
        %vm1474 = vcmp.gt.f32.partialorder %v1430, 0.0
        %vm1475 = vcmp.gt.f32.partialorder %v1431, 0.0
        %vm1476 = vcmp.gt.f32.partialorder %v1432, 0.0
        %vm1477 = vcmp.gt.f32.partialorder %v1433, 0.0
        %vm1478 = vcmp.gt.f32.partialorder %v1434, 0.0
        %v1479 = vmul.f32 %v1391, 0.1
        %v1480 = vmul.f32 %v1392, 0.1
        %v1481 = vmul.f32 %v1393, 0.1
        %v1482 = vmul.f32 %v1394, 0.1
        %v1483 = vmul.f32 %v1395, 0.1
        %v1484 = vmul.f32 %v1396, 0.1
        %v1485 = vmul.f32 %v1397, 0.1
        %v1486 = vmul.f32 %v1398, 0.1
        %v1487 = vmul.f32 %v1399, 0.1
        %v1488 = vmul.f32 %v1400, 0.1
        %v1489 = vmul.f32 %v1401, 0.1
        %v1490 = vmul.f32 %v1402, 0.1
        %v1491 = vmul.f32 %v1403, 0.1
        %v1492 = vmul.f32 %v1404, 0.1
        %v1493 = vmul.f32 %v1405, 0.1
        %v1494 = vmul.f32 %v1406, 0.1
        %v1495 = vmul.f32 %v1407, 0.1
        %v1496 = vmul.f32 %v1408, 0.1
        %v1497 = vmul.f32 %v1409, 0.1
        %v1498 = vmul.f32 %v1410, 0.1
        %v1499 = vmul.f32 %v1411, 0.1
        %v1500 = vmul.f32 %v1412, 0.1
        %v1501 = vmul.f32 %v1413, 0.1
        %v1502 = vmul.f32 %v1414, 0.1
        %v1503 = vmul.f32 %v1415, 0.1
        %v1504 = vmul.f32 %v1416, 0.1
        %v1505 = vmul.f32 %v1417, 0.1
        %v1506 = vmul.f32 %v1418, 0.1
        %v1507 = vmul.f32 %v1419, 0.1
        %v1508 = vmul.f32 %v1420, 0.1
        %v1509 = vmul.f32 %v1421, 0.1
        %v1510 = vmul.f32 %v1422, 0.1
        %v1511 = vmul.f32 %v1423, 0.1
        %v1512 = vmul.f32 %v1424, 0.1
        %v1513 = vmul.f32 %v1425, 0.1
        %v1514 = vmul.f32 %v1426, 0.1
        %v1515 = vmul.f32 %v1427, 0.1
        %v1516 = vmul.f32 %v1428, 0.1
        %v1517 = vmul.f32 %v1429, 0.1
        %v1518 = vmul.f32 %v1430, 0.1
        %v1519 = vmul.f32 %v1431, 0.1
        %v1520 = vmul.f32 %v1432, 0.1
        %v1521 = vmul.f32 %v1433, 0.1
        %v1522 = vmul.f32 %v1434, 0.1
        %v1523 = vsel %vm1435, %v1391, %v1479
        %v1524 = vsel %vm1436, %v1392, %v1480
        %v1525 = vsel %vm1437, %v1393, %v1481
        %v1526 = vsel %vm1438, %v1394, %v1482
        %v1527 = vsel %vm1439, %v1395, %v1483
        %v1528 = vsel %vm1440, %v1396, %v1484
        %v1529 = vsel %vm1441, %v1397, %v1485
        %v1530 = vsel %vm1442, %v1398, %v1486
        %v1531 = vsel %vm1443, %v1399, %v1487
        %v1532 = vsel %vm1444, %v1400, %v1488
        %v1533 = vsel %vm1445, %v1401, %v1489
        %v1534 = vsel %vm1446, %v1402, %v1490
        %v1535 = vsel %vm1447, %v1403, %v1491
        %v1536 = vsel %vm1448, %v1404, %v1492
        %v1537 = vsel %vm1449, %v1405, %v1493
        %v1538 = vsel %vm1450, %v1406, %v1494
        %v1539 = vsel %vm1451, %v1407, %v1495
        %v1540 = vsel %vm1452, %v1408, %v1496
        %v1541 = vsel %vm1453, %v1409, %v1497
        %v1542 = vsel %vm1454, %v1410, %v1498
        %v1543 = vsel %vm1455, %v1411, %v1499
        %v1544 = vsel %vm1456, %v1412, %v1500
        %v1545 = vsel %vm1457, %v1413, %v1501
        %v1546 = vsel %vm1458, %v1414, %v1502
        %v1547 = vsel %vm1459, %v1415, %v1503
        %v1548 = vsel %vm1460, %v1416, %v1504
        %v1549 = vsel %vm1461, %v1417, %v1505
        %v1550 = vsel %vm1462, %v1418, %v1506
        %v1551 = vsel %vm1463, %v1419, %v1507
        %v1552 = vsel %vm1464, %v1420, %v1508
        %v1553 = vsel %vm1465, %v1421, %v1509
        %v1554 = vsel %vm1466, %v1422, %v1510
        %v1555 = vsel %vm1467, %v1423, %v1511
        %v1556 = vsel %vm1468, %v1424, %v1512
        %v1557 = vsel %vm1469, %v1425, %v1513
        %v1558 = vsel %vm1470, %v1426, %v1514
        %v1559 = vsel %vm1471, %v1427, %v1515
        %v1560 = vsel %vm1472, %v1428, %v1516
        %v1561 = vsel %vm1473, %v1429, %v1517
        %v1562 = vsel %vm1474, %v1430, %v1518
        %v1563 = vsel %vm1475, %v1431, %v1519
        %v1564 = vsel %vm1476, %v1432, %v1520
        %v1565 = vsel %vm1477, %v1433, %v1521
        %v1566 = vsel %vm1478, %v1434, %v1522
        %v1567 = vpack.c.bf16 %v1524, %v1523
        %v1568 = vpack.c.bf16 %v1526, %v1525
        %v1569 = vpack.c.bf16 %v1528, %v1527
        %v1570 = vpack.c.bf16 %v1530, %v1529
        %v1571 = vpack.c.bf16 %v1532, %v1531
        %v1572 = vpack.c.bf16 %v1534, %v1533
        %v1573 = vpack.c.bf16 %v1536, %v1535
        %v1574 = vpack.c.bf16 %v1538, %v1537
        %v1575 = vpack.c.bf16 %v1540, %v1539
        %v1576 = vpack.c.bf16 %v1542, %v1541
        %v1577 = vpack.c.bf16 %v1544, %v1543
        %v1578 = vpack.c.bf16 %v1546, %v1545
        %v1579 = vpack.c.bf16 %v1548, %v1547
        %v1580 = vpack.c.bf16 %v1550, %v1549
        %v1581 = vpack.c.bf16 %v1552, %v1551
        %v1582 = vpack.c.bf16 %v1554, %v1553
        %v1583 = vpack.c.bf16 %v1556, %v1555
        %v1584 = vpack.c.bf16 %v1558, %v1557
        %v1585 = vpack.c.bf16 %v1560, %v1559
        %v1586 = vpack.c.bf16 %v1562, %v1561
        %v1587 = vpack.c.bf16 %v1564, %v1563
        %v1588 = vpack.c.bf16 %v1566, %v1565
        %v1589 = vld [vmem:[#allocation8] sm:$0xf]
        %v1590 = vld [vmem:[#allocation8 + $0x4] sm:$0xf]
        %v1591 = vld [vmem:[#allocation8 + $0x8] sm:$0xf]
        %v1592 = vld [vmem:[#allocation8 + $0xc] sm:$0xf]
        %v1593 = vld [vmem:[#allocation8 + $0x10] sm:$0xf]
        %v1594 = vld [vmem:[#allocation8 + $0x14] sm:$0xf]
        %v1595 = vld [vmem:[#allocation8 + $0x18] sm:$0xf]
        %v1596 = vld [vmem:[#allocation8 + $0x1c] sm:$0xf]
        %v1597 = vld [vmem:[#allocation10] sm:$0xf]
        %v1598 = vld [vmem:[#allocation10 + $0x4] sm:$0xf]
        %v1599 = vld [vmem:[#allocation10 + $0x8] sm:$0xf]
        %v1600 = vld [vmem:[#allocation10 + $0xc] sm:$0xf]
        %v1601 = vld [vmem:[#allocation10 + $0x10] sm:$0xf]
        %v1602 = vld [vmem:[#allocation10 + $0x14] sm:$0xf]
        %v1603 = vld [vmem:[#allocation10 + $0x18] sm:$0xf]
        %v1604 = vld [vmem:[#allocation10 + $0x1c] sm:$0xf]
        %v1613 = vunpack.c.l.b16 %v1597
        %v1614 = vunpack.c.l.b16 %v1598
        %v1615 = vunpack.c.l.b16 %v1599
        %v1616 = vunpack.c.l.b16 %v1600
        %v1617 = vunpack.c.l.b16 %v1601
        %v1618 = vunpack.c.l.b16 %v1602
        %v1619 = vunpack.c.l.b16 %v1603
        %v1620 = vunpack.c.l.b16 %v1604
        %v1621 = vpack.c.b16 %v1614, %v1613
        %v1622 = vpack.c.b16 %v1616, %v1615
        %v1623 = vpack.c.b16 %v1618, %v1617
        %v1624 = vpack.c.b16 %v1620, %v1619
        %vm1629 = vcmask 523264
        %v1631 = vsel %vm1629, %v1567, 0
        %v1634 = vsel %vm1629, %v1568, 0
        %v1637 = vsel %vm1629, %v1569, 0
        %v1640 = vsel %vm1629, %v1570, 0
        %v1643 = vsel %vm1629, %v1571, 0
        %v1646 = vsel %vm1629, %v1572, 0
        %v1649 = vsel %vm1629, %v1573, 0
        %v1652 = vsel %vm1629, %v1574, 0
        %v1655 = vsel %vm1629, %v1575, 0
        %v1658 = vsel %vm1629, %v1576, 0
        %v1661 = vsel %vm1629, %v1577, 0
        %v1664 = vsel %vm1629, %v1578, 0
        %v1667 = vsel %vm1629, %v1579, 0
        %v1670 = vsel %vm1629, %v1580, 0
        %v1673 = vsel %vm1629, %v1581, 0
        %v1676 = vsel %vm1629, %v1582, 0
        %v1679 = vsel %vm1629, %v1583, 0
        %v1682 = vsel %vm1629, %v1584, 0
        %v1685 = vsel %vm1629, %v1585, 0
        %v1688 = vsel %vm1629, %v1586, 0
        %v1691 = vsel %vm1629, %v1587, 0
        %v1694 = vsel %vm1629, %v1588, 0
        %1696 = vmatprep.subr.bf16.mxu0 0
        %1697 = vmatpush1.bf16.msra.mxu0 %v1621
        %1698 = vmatprep.subr.bf16.mxu0 0
        %1699 = vmatpush1.bf16.msra.mxu0 %v1622
        %1700 = vmatprep.subr.bf16.mxu0 0
        %1701 = vmatpush1.bf16.msra.mxu0 %v1623
        %1702 = vmatprep.subr.bf16.mxu0 0
        %1703 = vmatpush1.bf16.msra.mxu0 %v1624
        %1704 = vmatprep.subr.bf16.mxu0 0
        %1705 = vmatpush1.bf16.msra.mxu0 0
        %1706 = vmatprep.subr.bf16.mxu0 0
        %1707 = vmatpush1.bf16.msra.mxu0 0
        %1708 = vmatprep.subr.bf16.mxu0 0
        %1709 = vmatpush1.bf16.msra.mxu0 0
        %1710 = vmatprep.subr.bf16.mxu0 0
        %1711 = vmatpush1.bf16.msra.mxu0 0
        %1712 = vmatprep.subr.bf16.mxu0 0
        %1713 = vmatpush1.bf16.msra.mxu0 0
        %1714 = vmatprep.subr.bf16.mxu0 0
        %1715 = vmatpush1.bf16.msra.mxu0 0
        %1716 = vmatprep.subr.bf16.mxu0 0
        %1717 = vmatpush1.bf16.msra.mxu0 0
        %1718 = vmatprep.subr.bf16.mxu0 0
        %1719 = vmatpush1.bf16.msra.mxu0 0
        %1720 = vmatprep.subr.bf16.mxu0 0
        %1721 = vmatpush1.bf16.msra.mxu0 0
        %1722 = vmatprep.subr.bf16.mxu0 0
        %1723 = vmatpush1.bf16.msra.mxu0 0
        %1724 = vmatprep.subr.bf16.mxu0 0
        %1725 = vmatpush1.bf16.msra.mxu0 0
        %1726 = vmatprep.subr.bf16.mxu0 0
        %1727 = vmatpush1.bf16.msra.mxu0 0
        %1728 = vmatprep.mubr.bf16.mxu0 0
        %1729 = vmatmul.mubr.bf16.gmra.mrb[0].mxu0 %v1631
        %v1730 = vpop.f32.mrb[0].mxu0
        %v1731 = vadd.f32 0.0, %v1730
        %v1732 = vpop.f32.mrb[0].mxu0
        %v1733 = vpop.f32.mrb[0].mxu0
        %v1734 = vadd.f32 0.0, %v1733
        %v1735 = vpop.f32.mrb[0].mxu0
        %1736 = vmatprep.mubr.bf16.mxu0 0
        %1737 = vmatmul.mubr.bf16.gmra.mrb[0].mxu0 %v1634
        %v1738 = vpop.f32.mrb[0].mxu0
        %v1739 = vadd.f32 0.0, %v1738
        %v1740 = vpop.f32.mrb[0].mxu0
        %v1741 = vpop.f32.mrb[0].mxu0
        %v1742 = vadd.f32 0.0, %v1741
        %v1743 = vpop.f32.mrb[0].mxu0
        %1744 = vmatprep.mubr.bf16.mxu0 0
        %1745 = vmatmul.mubr.bf16.gmra.mrb[0].mxu0 %v1637
        %v1746 = vpop.f32.mrb[0].mxu0
        %v1747 = vadd.f32 0.0, %v1746
        %v1748 = vpop.f32.mrb[0].mxu0
        %v1749 = vpop.f32.mrb[0].mxu0
        %v1750 = vadd.f32 0.0, %v1749
        %v1751 = vpop.f32.mrb[0].mxu0
        %1752 = vmatprep.mubr.bf16.mxu0 0
        %1753 = vmatmul.mubr.bf16.gmra.mrb[0].mxu0 %v1640
        %v1754 = vpop.f32.mrb[0].mxu0
        %v1755 = vadd.f32 0.0, %v1754
        %v1756 = vpop.f32.mrb[0].mxu0
        %v1757 = vpop.f32.mrb[0].mxu0
        %v1758 = vadd.f32 0.0, %v1757
        %v1759 = vpop.f32.mrb[0].mxu0
        %1760 = vmatprep.mubr.bf16.mxu0 0
        %1761 = vmatmul.mubr.bf16.gmra.mrb[0].mxu0 %v1643
        %v1762 = vpop.f32.mrb[0].mxu0
        %v1763 = vadd.f32 0.0, %v1762
        %v1764 = vpop.f32.mrb[0].mxu0
        %v1765 = vpop.f32.mrb[0].mxu0
        %v1766 = vadd.f32 0.0, %v1765
        %v1767 = vpop.f32.mrb[0].mxu0
        %1768 = vmatprep.mubr.bf16.mxu0 0
        %1769 = vmatmul.mubr.bf16.gmra.mrb[0].mxu0 %v1646
        %v1770 = vpop.f32.mrb[0].mxu0
        %v1771 = vadd.f32 0.0, %v1770
        %v1772 = vpop.f32.mrb[0].mxu0
        %v1773 = vpop.f32.mrb[0].mxu0
        %v1774 = vadd.f32 0.0, %v1773
        %v1775 = vpop.f32.mrb[0].mxu0
        %1776 = vmatprep.mubr.bf16.mxu0 0
        %1777 = vmatmul.mubr.bf16.gmra.mrb[0].mxu0 %v1649
        %v1778 = vpop.f32.mrb[0].mxu0
        %v1779 = vadd.f32 0.0, %v1778
        %v1780 = vpop.f32.mrb[0].mxu0
        %v1781 = vpop.f32.mrb[0].mxu0
        %v1782 = vadd.f32 0.0, %v1781
        %v1783 = vpop.f32.mrb[0].mxu0
        %1784 = vmatprep.mubr.bf16.mxu0 0
        %1785 = vmatmul.mubr.bf16.gmra.mrb[0].mxu0 %v1652
        %v1786 = vpop.f32.mrb[0].mxu0
        %v1787 = vadd.f32 0.0, %v1786
        %v1788 = vpop.f32.mrb[0].mxu0
        %v1789 = vpop.f32.mrb[0].mxu0
        %v1790 = vadd.f32 0.0, %v1789
        %v1791 = vpop.f32.mrb[0].mxu0
        %1792 = vmatprep.mubr.bf16.mxu0 0
        %1793 = vmatmul.mubr.bf16.gmra.mrb[0].mxu0 %v1655
        %v1794 = vpop.f32.mrb[0].mxu0
        %v1795 = vadd.f32 0.0, %v1794
        %v1796 = vpop.f32.mrb[0].mxu0
        %v1797 = vpop.f32.mrb[0].mxu0
        %v1798 = vadd.f32 0.0, %v1797
        %v1799 = vpop.f32.mrb[0].mxu0
        %1800 = vmatprep.mubr.bf16.mxu0 0
        %1801 = vmatmul.mubr.bf16.gmra.mrb[0].mxu0 %v1658
        %v1802 = vpop.f32.mrb[0].mxu0
        %v1803 = vadd.f32 0.0, %v1802
        %v1804 = vpop.f32.mrb[0].mxu0
        %v1805 = vpop.f32.mrb[0].mxu0
        %v1806 = vadd.f32 0.0, %v1805
        %v1807 = vpop.f32.mrb[0].mxu0
        %1808 = vmatprep.mubr.bf16.mxu0 0
        %1809 = vmatmul.mubr.bf16.gmra.mrb[0].mxu0 %v1661
        %v1810 = vpop.f32.mrb[0].mxu0
        %v1811 = vadd.f32 0.0, %v1810
        %v1812 = vpop.f32.mrb[0].mxu0
        %v1813 = vpop.f32.mrb[0].mxu0
        %v1814 = vadd.f32 0.0, %v1813
        %v1815 = vpop.f32.mrb[0].mxu0
        %1816 = vmatprep.mubr.bf16.mxu0 0
        %1817 = vmatmul.mubr.bf16.gmra.mrb[0].mxu0 %v1664
        %v1818 = vpop.f32.mrb[0].mxu0
        %v1819 = vadd.f32 0.0, %v1818
        %v1820 = vpop.f32.mrb[0].mxu0
        %v1821 = vpop.f32.mrb[0].mxu0
        %v1822 = vadd.f32 0.0, %v1821
        %v1823 = vpop.f32.mrb[0].mxu0
        %1824 = vmatprep.mubr.bf16.mxu0 0
        %1825 = vmatmul.mubr.bf16.gmra.mrb[0].mxu0 %v1667
        %v1826 = vpop.f32.mrb[0].mxu0
        %v1827 = vadd.f32 0.0, %v1826
        %v1828 = vpop.f32.mrb[0].mxu0
        %v1829 = vpop.f32.mrb[0].mxu0
        %v1830 = vadd.f32 0.0, %v1829
        %v1831 = vpop.f32.mrb[0].mxu0
        %1832 = vmatprep.mubr.bf16.mxu0 0
        %1833 = vmatmul.mubr.bf16.gmra.mrb[0].mxu0 %v1670
        %v1834 = vpop.f32.mrb[0].mxu0
        %v1835 = vadd.f32 0.0, %v1834
        %v1836 = vpop.f32.mrb[0].mxu0
        %v1837 = vpop.f32.mrb[0].mxu0
        %v1838 = vadd.f32 0.0, %v1837
        %v1839 = vpop.f32.mrb[0].mxu0
        %1840 = vmatprep.mubr.bf16.mxu0 0
        %1841 = vmatmul.mubr.bf16.gmra.mrb[0].mxu0 %v1673
        %v1842 = vpop.f32.mrb[0].mxu0
        %v1843 = vadd.f32 0.0, %v1842
        %v1844 = vpop.f32.mrb[0].mxu0
        %v1845 = vpop.f32.mrb[0].mxu0
        %v1846 = vadd.f32 0.0, %v1845
        %v1847 = vpop.f32.mrb[0].mxu0
        %1848 = vmatprep.mubr.bf16.mxu0 0
        %1849 = vmatmul.mubr.bf16.gmra.mrb[0].mxu0 %v1676
        %v1850 = vpop.f32.mrb[0].mxu0
        %v1851 = vadd.f32 0.0, %v1850
        %v1852 = vpop.f32.mrb[0].mxu0
        %v1853 = vpop.f32.mrb[0].mxu0
        %v1854 = vadd.f32 0.0, %v1853
        %v1855 = vpop.f32.mrb[0].mxu0
        %1856 = vmatprep.mubr.bf16.mxu0 0
        %1857 = vmatmul.mubr.bf16.gmra.mrb[0].mxu0 %v1679
        %v1858 = vpop.f32.mrb[0].mxu0
        %v1859 = vadd.f32 0.0, %v1858
        %v1860 = vpop.f32.mrb[0].mxu0
        %v1861 = vpop.f32.mrb[0].mxu0
        %v1862 = vadd.f32 0.0, %v1861
        %v1863 = vpop.f32.mrb[0].mxu0
        %1864 = vmatprep.mubr.bf16.mxu0 0
        %1865 = vmatmul.mubr.bf16.gmra.mrb[0].mxu0 %v1682
        %v1866 = vpop.f32.mrb[0].mxu0
        %v1867 = vadd.f32 0.0, %v1866
        %v1868 = vpop.f32.mrb[0].mxu0
        %v1869 = vpop.f32.mrb[0].mxu0
        %v1870 = vadd.f32 0.0, %v1869
        %v1871 = vpop.f32.mrb[0].mxu0
        %1872 = vmatprep.mubr.bf16.mxu0 0
        %1873 = vmatmul.mubr.bf16.gmra.mrb[0].mxu0 %v1685
        %v1874 = vpop.f32.mrb[0].mxu0
        %v1875 = vadd.f32 0.0, %v1874
        %v1876 = vpop.f32.mrb[0].mxu0
        %v1877 = vpop.f32.mrb[0].mxu0
        %v1878 = vadd.f32 0.0, %v1877
        %v1879 = vpop.f32.mrb[0].mxu0
        %1880 = vmatprep.mubr.bf16.mxu0 0
        %1881 = vmatmul.mubr.bf16.gmra.mrb[0].mxu0 %v1688
        %v1882 = vpop.f32.mrb[0].mxu0
        %v1883 = vadd.f32 0.0, %v1882
        %v1884 = vpop.f32.mrb[0].mxu0
        %v1885 = vpop.f32.mrb[0].mxu0
        %v1886 = vadd.f32 0.0, %v1885
        %v1887 = vpop.f32.mrb[0].mxu0
        %1888 = vmatprep.mubr.bf16.mxu0 0
        %1889 = vmatmul.mubr.bf16.gmra.mrb[0].mxu0 %v1691
        %v1890 = vpop.f32.mrb[0].mxu0
        %v1891 = vadd.f32 0.0, %v1890
        %v1892 = vpop.f32.mrb[0].mxu0
        %v1893 = vpop.f32.mrb[0].mxu0
        %v1894 = vadd.f32 0.0, %v1893
        %v1895 = vpop.f32.mrb[0].mxu0
        %1896 = vmatprep.mubr.bf16.mxu0 0
        %1897 = vmatmul.mubr.bf16.gmra.mrb[0].mxu0 %v1694
        %v1898 = vpop.f32.mrb[0].mxu0
        %v1899 = vadd.f32 0.0, %v1898
        %v1900 = vpop.f32.mrb[0].mxu0
        %v1901 = vpop.f32.mrb[0].mxu0
        %v1902 = vadd.f32 0.0, %v1901
        %v1903 = vpop.f32.mrb[0].mxu0
        %1904 = vdwg.mxu0
        %v1913 = vunpack.c.l.b16 %v1589
        %v1914 = vunpack.c.l.b16 %v1590
        %v1915 = vunpack.c.l.b16 %v1591
        %v1916 = vunpack.c.l.b16 %v1592
        %v1917 = vunpack.c.l.b16 %v1593
        %v1918 = vunpack.c.l.b16 %v1594
        %v1919 = vunpack.c.l.b16 %v1595
        %v1920 = vunpack.c.l.b16 %v1596
        %v1921 = vpack.c.b16 %v1914, %v1913
        %v1922 = vpack.c.b16 %v1916, %v1915
        %v1923 = vpack.c.b16 %v1918, %v1917
        %v1924 = vpack.c.b16 %v1920, %v1919
        %v1930 = vsel %vm1629, 0, 0
        %1932 = vmatprep.subr.bf16.mxu0 0
        %1933 = vmatpush1.bf16.msra.mxu0 %v1921
        %1934 = vmatprep.subr.bf16.mxu0 0
        %1935 = vmatpush1.bf16.msra.mxu0 %v1922
        %1936 = vmatprep.subr.bf16.mxu0 0
        %1937 = vmatpush1.bf16.msra.mxu0 %v1923
        %1938 = vmatprep.subr.bf16.mxu0 0
        %1939 = vmatpush1.bf16.msra.mxu0 %v1924
        %1940 = vmatprep.subr.bf16.mxu0 0
        %1941 = vmatpush1.bf16.msra.mxu0 0
        %1942 = vmatprep.subr.bf16.mxu0 0
        %1943 = vmatpush1.bf16.msra.mxu0 0
        %1944 = vmatprep.subr.bf16.mxu0 0
        %1945 = vmatpush1.bf16.msra.mxu0 0
        %1946 = vmatprep.subr.bf16.mxu0 0
        %1947 = vmatpush1.bf16.msra.mxu0 0
        %1948 = vmatprep.subr.bf16.mxu0 0
        %1949 = vmatpush1.bf16.msra.mxu0 0
        %1950 = vmatprep.subr.bf16.mxu0 0
        %1951 = vmatpush1.bf16.msra.mxu0 0
        %1952 = vmatprep.subr.bf16.mxu0 0
        %1953 = vmatpush1.bf16.msra.mxu0 0
        %1954 = vmatprep.subr.bf16.mxu0 0
        %1955 = vmatpush1.bf16.msra.mxu0 0
        %1956 = vmatprep.subr.bf16.mxu0 0
        %1957 = vmatpush1.bf16.msra.mxu0 0
        %1958 = vmatprep.subr.bf16.mxu0 0
        %1959 = vmatpush1.bf16.msra.mxu0 0
        %1960 = vmatprep.subr.bf16.mxu0 0
        %1961 = vmatpush1.bf16.msra.mxu0 0
        %1962 = vmatprep.subr.bf16.mxu0 0
        %1963 = vmatpush1.bf16.msra.mxu0 0
        %1964 = vmatprep.mubr.bf16.mxu0 0
        %1965 = vmatmul.mubr.bf16.gmra.mrb[0].mxu0 %v1930
        %v1966 = vpop.f32.mrb[0].mxu0
        %v1967 = vadd.f32 %v1731, %v1966
        %v1968 = vpop.f32.mrb[0].mxu0
        %v1969 = vpop.f32.mrb[0].mxu0
        %v1970 = vadd.f32 %v1734, %v1969
        %v1971 = vpop.f32.mrb[0].mxu0
        %1972 = vmatprep.mubr.bf16.mxu0 0
        %1973 = vmatmul.mubr.bf16.gmra.mrb[0].mxu0 %v1930
        %v1974 = vpop.f32.mrb[0].mxu0
        %v1975 = vadd.f32 %v1739, %v1974
        %v1976 = vpop.f32.mrb[0].mxu0
        %v1977 = vpop.f32.mrb[0].mxu0
        %v1978 = vadd.f32 %v1742, %v1977
        %v1979 = vpop.f32.mrb[0].mxu0
        %1980 = vmatprep.mubr.bf16.mxu0 0
        %1981 = vmatmul.mubr.bf16.gmra.mrb[0].mxu0 %v1631
        %v1982 = vpop.f32.mrb[0].mxu0
        %v1983 = vadd.f32 %v1747, %v1982
        %v1984 = vpop.f32.mrb[0].mxu0
        %v1985 = vpop.f32.mrb[0].mxu0
        %v1986 = vadd.f32 %v1750, %v1985
        %v1987 = vpop.f32.mrb[0].mxu0
        %1988 = vmatprep.mubr.bf16.mxu0 0
        %1989 = vmatmul.mubr.bf16.gmra.mrb[0].mxu0 %v1634
        %v1990 = vpop.f32.mrb[0].mxu0
        %v1991 = vadd.f32 %v1755, %v1990
        %v1992 = vpop.f32.mrb[0].mxu0
        %v1993 = vpop.f32.mrb[0].mxu0
        %v1994 = vadd.f32 %v1758, %v1993
        %v1995 = vpop.f32.mrb[0].mxu0
        %1996 = vmatprep.mubr.bf16.mxu0 0
        %1997 = vmatmul.mubr.bf16.gmra.mrb[0].mxu0 %v1637
        %v1998 = vpop.f32.mrb[0].mxu0
        %v1999 = vadd.f32 %v1763, %v1998
        %v2000 = vpop.f32.mrb[0].mxu0
        %v2001 = vpop.f32.mrb[0].mxu0
        %v2002 = vadd.f32 %v1766, %v2001
        %v2003 = vpop.f32.mrb[0].mxu0
        %2004 = vmatprep.mubr.bf16.mxu0 0
        %2005 = vmatmul.mubr.bf16.gmra.mrb[0].mxu0 %v1640
        %v2006 = vpop.f32.mrb[0].mxu0
        %v2007 = vadd.f32 %v1771, %v2006
        %v2008 = vpop.f32.mrb[0].mxu0
        %v2009 = vpop.f32.mrb[0].mxu0
        %v2010 = vadd.f32 %v1774, %v2009
        %v2011 = vpop.f32.mrb[0].mxu0
        %2012 = vmatprep.mubr.bf16.mxu0 0
        %2013 = vmatmul.mubr.bf16.gmra.mrb[0].mxu0 %v1643
        %v2014 = vpop.f32.mrb[0].mxu0
        %v2015 = vadd.f32 %v1779, %v2014
        %v2016 = vpop.f32.mrb[0].mxu0
        %v2017 = vpop.f32.mrb[0].mxu0
        %v2018 = vadd.f32 %v1782, %v2017
        %v2019 = vpop.f32.mrb[0].mxu0
        %2020 = vmatprep.mubr.bf16.mxu0 0
        %2021 = vmatmul.mubr.bf16.gmra.mrb[0].mxu0 %v1646
        %v2022 = vpop.f32.mrb[0].mxu0
        %v2023 = vadd.f32 %v1787, %v2022
        %v2024 = vpop.f32.mrb[0].mxu0
        %v2025 = vpop.f32.mrb[0].mxu0
        %v2026 = vadd.f32 %v1790, %v2025
        %v2027 = vpop.f32.mrb[0].mxu0
        %2028 = vmatprep.mubr.bf16.mxu0 0
        %2029 = vmatmul.mubr.bf16.gmra.mrb[0].mxu0 %v1649
        %v2030 = vpop.f32.mrb[0].mxu0
        %v2031 = vadd.f32 %v1795, %v2030
        %v2032 = vpop.f32.mrb[0].mxu0
        %v2033 = vpop.f32.mrb[0].mxu0
        %v2034 = vadd.f32 %v1798, %v2033
        %v2035 = vpop.f32.mrb[0].mxu0
        %2036 = vmatprep.mubr.bf16.mxu0 0
        %2037 = vmatmul.mubr.bf16.gmra.mrb[0].mxu0 %v1652
        %v2038 = vpop.f32.mrb[0].mxu0
        %v2039 = vadd.f32 %v1803, %v2038
        %v2040 = vpop.f32.mrb[0].mxu0
        %v2041 = vpop.f32.mrb[0].mxu0
        %v2042 = vadd.f32 %v1806, %v2041
        %v2043 = vpop.f32.mrb[0].mxu0
        %2044 = vmatprep.mubr.bf16.mxu0 0
        %2045 = vmatmul.mubr.bf16.gmra.mrb[0].mxu0 %v1655
        %v2046 = vpop.f32.mrb[0].mxu0
        %v2047 = vadd.f32 %v1811, %v2046
        %v2048 = vpop.f32.mrb[0].mxu0
        %v2049 = vpop.f32.mrb[0].mxu0
        %v2050 = vadd.f32 %v1814, %v2049
        %v2051 = vpop.f32.mrb[0].mxu0
        %2052 = vmatprep.mubr.bf16.mxu0 0
        %2053 = vmatmul.mubr.bf16.gmra.mrb[0].mxu0 %v1658
        %v2054 = vpop.f32.mrb[0].mxu0
        %v2055 = vadd.f32 %v1819, %v2054
        %v2056 = vpop.f32.mrb[0].mxu0
        %v2057 = vpop.f32.mrb[0].mxu0
        %v2058 = vadd.f32 %v1822, %v2057
        %v2059 = vpop.f32.mrb[0].mxu0
        %2060 = vmatprep.mubr.bf16.mxu0 0
        %2061 = vmatmul.mubr.bf16.gmra.mrb[0].mxu0 %v1661
        %v2062 = vpop.f32.mrb[0].mxu0
        %v2063 = vadd.f32 %v1827, %v2062
        %v2064 = vpop.f32.mrb[0].mxu0
        %v2065 = vpop.f32.mrb[0].mxu0
        %v2066 = vadd.f32 %v1830, %v2065
        %v2067 = vpop.f32.mrb[0].mxu0
        %2068 = vmatprep.mubr.bf16.mxu0 0
        %2069 = vmatmul.mubr.bf16.gmra.mrb[0].mxu0 %v1664
        %v2070 = vpop.f32.mrb[0].mxu0
        %v2071 = vadd.f32 %v1835, %v2070
        %v2072 = vpop.f32.mrb[0].mxu0
        %v2073 = vpop.f32.mrb[0].mxu0
        %v2074 = vadd.f32 %v1838, %v2073
        %v2075 = vpop.f32.mrb[0].mxu0
        %2076 = vmatprep.mubr.bf16.mxu0 0
        %2077 = vmatmul.mubr.bf16.gmra.mrb[0].mxu0 %v1667
        %v2078 = vpop.f32.mrb[0].mxu0
        %v2079 = vadd.f32 %v1843, %v2078
        %v2080 = vpop.f32.mrb[0].mxu0
        %v2081 = vpop.f32.mrb[0].mxu0
        %v2082 = vadd.f32 %v1846, %v2081
        %v2083 = vpop.f32.mrb[0].mxu0
        %2084 = vmatprep.mubr.bf16.mxu0 0
        %2085 = vmatmul.mubr.bf16.gmra.mrb[0].mxu0 %v1670
        %v2086 = vpop.f32.mrb[0].mxu0
        %v2087 = vadd.f32 %v1851, %v2086
        %v2088 = vpop.f32.mrb[0].mxu0
        %v2089 = vpop.f32.mrb[0].mxu0
        %v2090 = vadd.f32 %v1854, %v2089
        %v2091 = vpop.f32.mrb[0].mxu0
        %2092 = vmatprep.mubr.bf16.mxu0 0
        %2093 = vmatmul.mubr.bf16.gmra.mrb[0].mxu0 %v1673
        %v2094 = vpop.f32.mrb[0].mxu0
        %v2095 = vadd.f32 %v1859, %v2094
        %v2096 = vpop.f32.mrb[0].mxu0
        %v2097 = vpop.f32.mrb[0].mxu0
        %v2098 = vadd.f32 %v1862, %v2097
        %v2099 = vpop.f32.mrb[0].mxu0
        %2100 = vmatprep.mubr.bf16.mxu0 0
        %2101 = vmatmul.mubr.bf16.gmra.mrb[0].mxu0 %v1676
        %v2102 = vpop.f32.mrb[0].mxu0
        %v2103 = vadd.f32 %v1867, %v2102
        %v2104 = vpop.f32.mrb[0].mxu0
        %v2105 = vpop.f32.mrb[0].mxu0
        %v2106 = vadd.f32 %v1870, %v2105
        %v2107 = vpop.f32.mrb[0].mxu0
        %2108 = vmatprep.mubr.bf16.mxu0 0
        %2109 = vmatmul.mubr.bf16.gmra.mrb[0].mxu0 %v1679
        %v2110 = vpop.f32.mrb[0].mxu0
        %v2111 = vadd.f32 %v1875, %v2110
        %v2112 = vpop.f32.mrb[0].mxu0
        %v2113 = vpop.f32.mrb[0].mxu0
        %v2114 = vadd.f32 %v1878, %v2113
        %v2115 = vpop.f32.mrb[0].mxu0
        %2116 = vmatprep.mubr.bf16.mxu0 0
        %2117 = vmatmul.mubr.bf16.gmra.mrb[0].mxu0 %v1682
        %v2118 = vpop.f32.mrb[0].mxu0
        %v2119 = vadd.f32 %v1883, %v2118
        %v2120 = vpop.f32.mrb[0].mxu0
        %v2121 = vpop.f32.mrb[0].mxu0
        %v2122 = vadd.f32 %v1886, %v2121
        %v2123 = vpop.f32.mrb[0].mxu0
        %2124 = vmatprep.mubr.bf16.mxu0 0
        %2125 = vmatmul.mubr.bf16.gmra.mrb[0].mxu0 %v1685
        %v2126 = vpop.f32.mrb[0].mxu0
        %v2127 = vadd.f32 %v1891, %v2126
        %v2128 = vpop.f32.mrb[0].mxu0
        %v2129 = vpop.f32.mrb[0].mxu0
        %v2130 = vadd.f32 %v1894, %v2129
        %v2131 = vpop.f32.mrb[0].mxu0
        %2132 = vmatprep.mubr.bf16.mxu0 0
        %2133 = vmatmul.mubr.bf16.gmra.mrb[0].mxu0 %v1688
        %v2134 = vpop.f32.mrb[0].mxu0
        %v2135 = vadd.f32 %v1899, %v2134
        %v2136 = vpop.f32.mrb[0].mxu0
        %v2137 = vpop.f32.mrb[0].mxu0
        %v2138 = vadd.f32 %v1902, %v2137
        %v2139 = vpop.f32.mrb[0].mxu0
        %2140 = vdwg.mxu0
        %v2141 = vld [vmem:[#allocation11] sm:$0xf]
        %v2142 = vld [vmem:[#allocation11 + $0x4] sm:$0xf]
        %v2143 = vld [vmem:[#allocation11 + $0x8] sm:$0xf]
        %v2144 = vld [vmem:[#allocation11 + $0xc] sm:$0xf]
        %v2145 = vld [vmem:[#allocation11 + $0x10] sm:$0xf]
        %v2146 = vld [vmem:[#allocation11 + $0x14] sm:$0xf]
        %v2147 = vld [vmem:[#allocation11 + $0x18] sm:$0xf]
        %v2148 = vld [vmem:[#allocation11 + $0x1c] sm:$0xf]
        %v2157 = vunpack.c.l.b16 %v2141
        %v2158 = vunpack.c.l.b16 %v2142
        %v2159 = vunpack.c.l.b16 %v2143
        %v2160 = vunpack.c.l.b16 %v2144
        %v2161 = vunpack.c.l.b16 %v2145
        %v2162 = vunpack.c.l.b16 %v2146
        %v2163 = vunpack.c.l.b16 %v2147
        %v2164 = vunpack.c.l.b16 %v2148
        %v2165 = vpack.c.b16 %v2158, %v2157
        %v2166 = vpack.c.b16 %v2160, %v2159
        %v2167 = vpack.c.b16 %v2162, %v2161
        %v2168 = vpack.c.b16 %v2164, %v2163
        %2173 = vmatprep.subr.bf16.mxu0 0
        %2174 = vmatpush1.bf16.msra.mxu0 %v2165
        %2175 = vmatprep.subr.bf16.mxu0 0
        %2176 = vmatpush1.bf16.msra.mxu0 %v2166
        %2177 = vmatprep.subr.bf16.mxu0 0
        %2178 = vmatpush1.bf16.msra.mxu0 %v2167
        %2179 = vmatprep.subr.bf16.mxu0 0
        %2180 = vmatpush1.bf16.msra.mxu0 %v2168
        %2181 = vmatprep.subr.bf16.mxu0 0
        %2182 = vmatpush1.bf16.msra.mxu0 0
        %2183 = vmatprep.subr.bf16.mxu0 0
        %2184 = vmatpush1.bf16.msra.mxu0 0
        %2185 = vmatprep.subr.bf16.mxu0 0
        %2186 = vmatpush1.bf16.msra.mxu0 0
        %2187 = vmatprep.subr.bf16.mxu0 0
        %2188 = vmatpush1.bf16.msra.mxu0 0
        %2189 = vmatprep.subr.bf16.mxu0 0
        %2190 = vmatpush1.bf16.msra.mxu0 0
        %2191 = vmatprep.subr.bf16.mxu0 0
        %2192 = vmatpush1.bf16.msra.mxu0 0
        %2193 = vmatprep.subr.bf16.mxu0 0
        %2194 = vmatpush1.bf16.msra.mxu0 0
        %2195 = vmatprep.subr.bf16.mxu0 0
        %2196 = vmatpush1.bf16.msra.mxu0 0
        %2197 = vmatprep.subr.bf16.mxu0 0
        %2198 = vmatpush1.bf16.msra.mxu0 0
        %2199 = vmatprep.subr.bf16.mxu0 0
        %2200 = vmatpush1.bf16.msra.mxu0 0
        %2201 = vmatprep.subr.bf16.mxu0 0
        %2202 = vmatpush1.bf16.msra.mxu0 0
        %2203 = vmatprep.subr.bf16.mxu0 0
        %2204 = vmatpush1.bf16.msra.mxu0 0
        %2205 = vmatprep.mubr.bf16.mxu0 0
        %2206 = vmatmul.mubr.bf16.gmra.mrb[0].mxu0 %v1637
        %v2207 = vpop.f32.mrb[0].mxu0
        %v2208 = vadd.f32 0.0, %v2207
        %v2209 = vpop.f32.mrb[0].mxu0
        %v2210 = vpop.f32.mrb[0].mxu0
        %v2211 = vadd.f32 0.0, %v2210
        %v2212 = vpop.f32.mrb[0].mxu0
        %2213 = vmatprep.mubr.bf16.mxu0 0
        %2214 = vmatmul.mubr.bf16.gmra.mrb[0].mxu0 %v1640
        %v2215 = vpop.f32.mrb[0].mxu0
        %v2216 = vadd.f32 0.0, %v2215
        %v2217 = vpop.f32.mrb[0].mxu0
        %v2218 = vpop.f32.mrb[0].mxu0
        %v2219 = vadd.f32 0.0, %v2218
        %v2220 = vpop.f32.mrb[0].mxu0
        %2221 = vmatprep.mubr.bf16.mxu0 0
        %2222 = vmatmul.mubr.bf16.gmra.mrb[0].mxu0 %v1643
        %v2223 = vpop.f32.mrb[0].mxu0
        %v2224 = vadd.f32 0.0, %v2223
        %v2225 = vpop.f32.mrb[0].mxu0
        %v2226 = vpop.f32.mrb[0].mxu0
        %v2227 = vadd.f32 0.0, %v2226
        %v2228 = vpop.f32.mrb[0].mxu0
        %2229 = vmatprep.mubr.bf16.mxu0 0
        %2230 = vmatmul.mubr.bf16.gmra.mrb[0].mxu0 %v1646
        %v2231 = vpop.f32.mrb[0].mxu0
        %v2232 = vadd.f32 0.0, %v2231
        %v2233 = vpop.f32.mrb[0].mxu0
        %v2234 = vpop.f32.mrb[0].mxu0
        %v2235 = vadd.f32 0.0, %v2234
        %v2236 = vpop.f32.mrb[0].mxu0
        %2237 = vmatprep.mubr.bf16.mxu0 0
        %2238 = vmatmul.mubr.bf16.gmra.mrb[0].mxu0 %v1649
        %v2239 = vpop.f32.mrb[0].mxu0
        %v2240 = vadd.f32 0.0, %v2239
        %v2241 = vpop.f32.mrb[0].mxu0
        %v2242 = vpop.f32.mrb[0].mxu0
        %v2243 = vadd.f32 0.0, %v2242
        %v2244 = vpop.f32.mrb[0].mxu0
        %2245 = vmatprep.mubr.bf16.mxu0 0
        %2246 = vmatmul.mubr.bf16.gmra.mrb[0].mxu0 %v1652
        %v2247 = vpop.f32.mrb[0].mxu0
        %v2248 = vadd.f32 0.0, %v2247
        %v2249 = vpop.f32.mrb[0].mxu0
        %v2250 = vpop.f32.mrb[0].mxu0
        %v2251 = vadd.f32 0.0, %v2250
        %v2252 = vpop.f32.mrb[0].mxu0
        %2253 = vmatprep.mubr.bf16.mxu0 0
        %2254 = vmatmul.mubr.bf16.gmra.mrb[0].mxu0 %v1655
        %v2255 = vpop.f32.mrb[0].mxu0
        %v2256 = vadd.f32 0.0, %v2255
        %v2257 = vpop.f32.mrb[0].mxu0
        %v2258 = vpop.f32.mrb[0].mxu0
        %v2259 = vadd.f32 0.0, %v2258
        %v2260 = vpop.f32.mrb[0].mxu0
        %2261 = vmatprep.mubr.bf16.mxu0 0
        %2262 = vmatmul.mubr.bf16.gmra.mrb[0].mxu0 %v1658
        %v2263 = vpop.f32.mrb[0].mxu0
        %v2264 = vadd.f32 0.0, %v2263
        %v2265 = vpop.f32.mrb[0].mxu0
        %v2266 = vpop.f32.mrb[0].mxu0
        %v2267 = vadd.f32 0.0, %v2266
        %v2268 = vpop.f32.mrb[0].mxu0
        %2269 = vmatprep.mubr.bf16.mxu0 0
        %2270 = vmatmul.mubr.bf16.gmra.mrb[0].mxu0 %v1661
        %v2271 = vpop.f32.mrb[0].mxu0
        %v2272 = vadd.f32 0.0, %v2271
        %v2273 = vpop.f32.mrb[0].mxu0
        %v2274 = vpop.f32.mrb[0].mxu0
        %v2275 = vadd.f32 0.0, %v2274
        %v2276 = vpop.f32.mrb[0].mxu0
        %2277 = vmatprep.mubr.bf16.mxu0 0
        %2278 = vmatmul.mubr.bf16.gmra.mrb[0].mxu0 %v1664
        %v2279 = vpop.f32.mrb[0].mxu0
        %v2280 = vadd.f32 0.0, %v2279
        %v2281 = vpop.f32.mrb[0].mxu0
        %v2282 = vpop.f32.mrb[0].mxu0
        %v2283 = vadd.f32 0.0, %v2282
        %v2284 = vpop.f32.mrb[0].mxu0
        %2285 = vmatprep.mubr.bf16.mxu0 0
        %2286 = vmatmul.mubr.bf16.gmra.mrb[0].mxu0 %v1667
        %v2287 = vpop.f32.mrb[0].mxu0
        %v2288 = vadd.f32 0.0, %v2287
        %v2289 = vpop.f32.mrb[0].mxu0
        %v2290 = vpop.f32.mrb[0].mxu0
        %v2291 = vadd.f32 0.0, %v2290
        %v2292 = vpop.f32.mrb[0].mxu0
        %2293 = vmatprep.mubr.bf16.mxu0 0
        %2294 = vmatmul.mubr.bf16.gmra.mrb[0].mxu0 %v1670
        %v2295 = vpop.f32.mrb[0].mxu0
        %v2296 = vadd.f32 0.0, %v2295
        %v2297 = vpop.f32.mrb[0].mxu0
        %v2298 = vpop.f32.mrb[0].mxu0
        %v2299 = vadd.f32 0.0, %v2298
        %v2300 = vpop.f32.mrb[0].mxu0
        %2301 = vmatprep.mubr.bf16.mxu0 0
        %2302 = vmatmul.mubr.bf16.gmra.mrb[0].mxu0 %v1673
        %v2303 = vpop.f32.mrb[0].mxu0
        %v2304 = vadd.f32 0.0, %v2303
        %v2305 = vpop.f32.mrb[0].mxu0
        %v2306 = vpop.f32.mrb[0].mxu0
        %v2307 = vadd.f32 0.0, %v2306
        %v2308 = vpop.f32.mrb[0].mxu0
        %2309 = vmatprep.mubr.bf16.mxu0 0
        %2310 = vmatmul.mubr.bf16.gmra.mrb[0].mxu0 %v1676
        %v2311 = vpop.f32.mrb[0].mxu0
        %v2312 = vadd.f32 0.0, %v2311
        %v2313 = vpop.f32.mrb[0].mxu0
        %v2314 = vpop.f32.mrb[0].mxu0
        %v2315 = vadd.f32 0.0, %v2314
        %v2316 = vpop.f32.mrb[0].mxu0
        %2317 = vmatprep.mubr.bf16.mxu0 0
        %2318 = vmatmul.mubr.bf16.gmra.mrb[0].mxu0 %v1679
        %v2319 = vpop.f32.mrb[0].mxu0
        %v2320 = vadd.f32 0.0, %v2319
        %v2321 = vpop.f32.mrb[0].mxu0
        %v2322 = vpop.f32.mrb[0].mxu0
        %v2323 = vadd.f32 0.0, %v2322
        %v2324 = vpop.f32.mrb[0].mxu0
        %2325 = vmatprep.mubr.bf16.mxu0 0
        %2326 = vmatmul.mubr.bf16.gmra.mrb[0].mxu0 %v1682
        %v2327 = vpop.f32.mrb[0].mxu0
        %v2328 = vadd.f32 0.0, %v2327
        %v2329 = vpop.f32.mrb[0].mxu0
        %v2330 = vpop.f32.mrb[0].mxu0
        %v2331 = vadd.f32 0.0, %v2330
        %v2332 = vpop.f32.mrb[0].mxu0
        %2333 = vmatprep.mubr.bf16.mxu0 0
        %2334 = vmatmul.mubr.bf16.gmra.mrb[0].mxu0 %v1685
        %v2335 = vpop.f32.mrb[0].mxu0
        %v2336 = vadd.f32 0.0, %v2335
        %v2337 = vpop.f32.mrb[0].mxu0
        %v2338 = vpop.f32.mrb[0].mxu0
        %v2339 = vadd.f32 0.0, %v2338
        %v2340 = vpop.f32.mrb[0].mxu0
        %2341 = vmatprep.mubr.bf16.mxu0 0
        %2342 = vmatmul.mubr.bf16.gmra.mrb[0].mxu0 %v1688
        %v2343 = vpop.f32.mrb[0].mxu0
        %v2344 = vadd.f32 0.0, %v2343
        %v2345 = vpop.f32.mrb[0].mxu0
        %v2346 = vpop.f32.mrb[0].mxu0
        %v2347 = vadd.f32 0.0, %v2346
        %v2348 = vpop.f32.mrb[0].mxu0
        %2349 = vmatprep.mubr.bf16.mxu0 0
        %2350 = vmatmul.mubr.bf16.gmra.mrb[0].mxu0 %v1691
        %v2351 = vpop.f32.mrb[0].mxu0
        %v2352 = vadd.f32 0.0, %v2351
        %v2353 = vpop.f32.mrb[0].mxu0
        %v2354 = vpop.f32.mrb[0].mxu0
        %v2355 = vadd.f32 0.0, %v2354
        %v2356 = vpop.f32.mrb[0].mxu0
        %2357 = vmatprep.mubr.bf16.mxu0 0
        %2358 = vmatmul.mubr.bf16.gmra.mrb[0].mxu0 %v1694
        %v2359 = vpop.f32.mrb[0].mxu0
        %v2360 = vadd.f32 0.0, %v2359
        %v2361 = vpop.f32.mrb[0].mxu0
        %v2362 = vpop.f32.mrb[0].mxu0
        %v2363 = vadd.f32 0.0, %v2362
        %v2364 = vpop.f32.mrb[0].mxu0
        %2365 = vmatprep.mubr.bf16.mxu0 0
        %2366 = vmatmul.mubr.bf16.gmra.mrb[0].mxu0 %v1930
        %v2367 = vpop.f32.mrb[0].mxu0
        %v2368 = vadd.f32 0.0, %v2367
        %v2369 = vpop.f32.mrb[0].mxu0
        %v2370 = vpop.f32.mrb[0].mxu0
        %v2371 = vadd.f32 0.0, %v2370
        %v2372 = vpop.f32.mrb[0].mxu0
        %2373 = vmatprep.mubr.bf16.mxu0 0
        %2374 = vmatmul.mubr.bf16.gmra.mrb[0].mxu0 %v1930
        %v2375 = vpop.f32.mrb[0].mxu0
        %v2376 = vadd.f32 0.0, %v2375
        %v2377 = vpop.f32.mrb[0].mxu0
        %v2378 = vpop.f32.mrb[0].mxu0
        %v2379 = vadd.f32 0.0, %v2378
        %v2380 = vpop.f32.mrb[0].mxu0
        %2381 = vdwg.mxu0
        %v2382 = vadd.f32 %v1967, %v2208
        %v2383 = vadd.f32 %v1970, %v2211
        %v2384 = vadd.f32 %v1975, %v2216
        %v2385 = vadd.f32 %v1978, %v2219
        %v2386 = vadd.f32 %v1983, %v2224
        %v2387 = vadd.f32 %v1986, %v2227
        %v2388 = vadd.f32 %v1991, %v2232
        %v2389 = vadd.f32 %v1994, %v2235
        %v2390 = vadd.f32 %v1999, %v2240
        %v2391 = vadd.f32 %v2002, %v2243
        %v2392 = vadd.f32 %v2007, %v2248
        %v2393 = vadd.f32 %v2010, %v2251
        %v2394 = vadd.f32 %v2015, %v2256
        %v2395 = vadd.f32 %v2018, %v2259
        %v2396 = vadd.f32 %v2023, %v2264
        %v2397 = vadd.f32 %v2026, %v2267
        %v2398 = vadd.f32 %v2031, %v2272
        %v2399 = vadd.f32 %v2034, %v2275
        %v2400 = vadd.f32 %v2039, %v2280
        %v2401 = vadd.f32 %v2042, %v2283
        %v2402 = vadd.f32 %v2047, %v2288
        %v2403 = vadd.f32 %v2050, %v2291
        %v2404 = vadd.f32 %v2055, %v2296
        %v2405 = vadd.f32 %v2058, %v2299
        %v2406 = vadd.f32 %v2063, %v2304
        %v2407 = vadd.f32 %v2066, %v2307
        %v2408 = vadd.f32 %v2071, %v2312
        %v2409 = vadd.f32 %v2074, %v2315
        %v2410 = vadd.f32 %v2079, %v2320
        %v2411 = vadd.f32 %v2082, %v2323
        %v2412 = vadd.f32 %v2087, %v2328
        %v2413 = vadd.f32 %v2090, %v2331
        %v2414 = vadd.f32 %v2095, %v2336
        %v2415 = vadd.f32 %v2098, %v2339
        %v2416 = vadd.f32 %v2103, %v2344
        %v2417 = vadd.f32 %v2106, %v2347
        %v2418 = vadd.f32 %v2111, %v2352
        %v2419 = vadd.f32 %v2114, %v2355
        %v2420 = vadd.f32 %v2119, %v2360
        %v2421 = vadd.f32 %v2122, %v2363
        %v2422 = vadd.f32 %v2127, %v2368
        %v2423 = vadd.f32 %v2130, %v2371
        %v2424 = vadd.f32 %v2135, %v2376
        %v2425 = vadd.f32 %v2138, %v2379
        %v2426 = vld [vmem:[#allocation13] sm:$0x1]
        %v2427 = vld [vmem:[#allocation14] sm:$0x1]
        %v2429 = vlaneseq
        %v2430 = vshrl.u32 %v2429, 7
        %v2431 = vsub.s32 0, %v2430
        %v2432 = vrot.slane %v2426, %v2431
        %v2434 = vmul.f32 %v2382, %v2432
        %v2435 = vmul.f32 %v2383, %v2432
        %v2436 = vmul.f32 %v2384, %v2432
        %v2437 = vmul.f32 %v2385, %v2432
        %v2438 = vmul.f32 %v2386, %v2432
        %v2439 = vmul.f32 %v2387, %v2432
        %v2440 = vmul.f32 %v2388, %v2432
        %v2441 = vmul.f32 %v2389, %v2432
        %v2442 = vmul.f32 %v2390, %v2432
        %v2443 = vmul.f32 %v2391, %v2432
        %v2444 = vmul.f32 %v2392, %v2432
        %v2445 = vmul.f32 %v2393, %v2432
        %v2446 = vmul.f32 %v2394, %v2432
        %v2447 = vmul.f32 %v2395, %v2432
        %v2448 = vmul.f32 %v2396, %v2432
        %v2449 = vmul.f32 %v2397, %v2432
        %v2450 = vmul.f32 %v2398, %v2432
        %v2451 = vmul.f32 %v2399, %v2432
        %v2452 = vmul.f32 %v2400, %v2432
        %v2453 = vmul.f32 %v2401, %v2432
        %v2454 = vmul.f32 %v2402, %v2432
        %v2455 = vmul.f32 %v2403, %v2432
        %v2456 = vmul.f32 %v2404, %v2432
        %v2457 = vmul.f32 %v2405, %v2432
        %v2458 = vmul.f32 %v2406, %v2432
        %v2459 = vmul.f32 %v2407, %v2432
        %v2460 = vmul.f32 %v2408, %v2432
        %v2461 = vmul.f32 %v2409, %v2432
        %v2462 = vmul.f32 %v2410, %v2432
        %v2463 = vmul.f32 %v2411, %v2432
        %v2464 = vmul.f32 %v2412, %v2432
        %v2465 = vmul.f32 %v2413, %v2432
        %v2466 = vmul.f32 %v2414, %v2432
        %v2467 = vmul.f32 %v2415, %v2432
        %v2468 = vmul.f32 %v2416, %v2432
        %v2469 = vmul.f32 %v2417, %v2432
        %v2470 = vmul.f32 %v2418, %v2432
        %v2471 = vmul.f32 %v2419, %v2432
        %v2472 = vmul.f32 %v2420, %v2432
        %v2473 = vmul.f32 %v2421, %v2432
        %v2474 = vmul.f32 %v2422, %v2432
        %v2475 = vmul.f32 %v2423, %v2432
        %v2476 = vmul.f32 %v2424, %v2432
        %v2477 = vmul.f32 %v2425, %v2432
        %v2479 = vlaneseq
        %v2480 = vshrl.u32 %v2479, 7
        %v2481 = vsub.s32 0, %v2480
        %v2482 = vrot.slane %v2427, %v2481
        %v2484 = vadd.f32 %v2434, %v2482
        %v2485 = vadd.f32 %v2435, %v2482
        %v2486 = vadd.f32 %v2436, %v2482
        %v2487 = vadd.f32 %v2437, %v2482
        %v2488 = vadd.f32 %v2438, %v2482
        %v2489 = vadd.f32 %v2439, %v2482
        %v2490 = vadd.f32 %v2440, %v2482
        %v2491 = vadd.f32 %v2441, %v2482
        %v2492 = vadd.f32 %v2442, %v2482
        %v2493 = vadd.f32 %v2443, %v2482
        %v2494 = vadd.f32 %v2444, %v2482
        %v2495 = vadd.f32 %v2445, %v2482
        %v2496 = vadd.f32 %v2446, %v2482
        %v2497 = vadd.f32 %v2447, %v2482
        %v2498 = vadd.f32 %v2448, %v2482
        %v2499 = vadd.f32 %v2449, %v2482
        %v2500 = vadd.f32 %v2450, %v2482
        %v2501 = vadd.f32 %v2451, %v2482
        %v2502 = vadd.f32 %v2452, %v2482
        %v2503 = vadd.f32 %v2453, %v2482
        %v2504 = vadd.f32 %v2454, %v2482
        %v2505 = vadd.f32 %v2455, %v2482
        %v2506 = vadd.f32 %v2456, %v2482
        %v2507 = vadd.f32 %v2457, %v2482
        %v2508 = vadd.f32 %v2458, %v2482
        %v2509 = vadd.f32 %v2459, %v2482
        %v2510 = vadd.f32 %v2460, %v2482
        %v2511 = vadd.f32 %v2461, %v2482
        %v2512 = vadd.f32 %v2462, %v2482
        %v2513 = vadd.f32 %v2463, %v2482
        %v2514 = vadd.f32 %v2464, %v2482
        %v2515 = vadd.f32 %v2465, %v2482
        %v2516 = vadd.f32 %v2466, %v2482
        %v2517 = vadd.f32 %v2467, %v2482
        %v2518 = vadd.f32 %v2468, %v2482
        %v2519 = vadd.f32 %v2469, %v2482
        %v2520 = vadd.f32 %v2470, %v2482
        %v2521 = vadd.f32 %v2471, %v2482
        %v2522 = vadd.f32 %v2472, %v2482
        %v2523 = vadd.f32 %v2473, %v2482
        %v2524 = vadd.f32 %v2474, %v2482
        %v2525 = vadd.f32 %v2475, %v2482
        %v2526 = vadd.f32 %v2476, %v2482
        %v2527 = vadd.f32 %v2477, %v2482
        %vm2528 = vcmp.gt.f32.partialorder %v2484, 0.0
        %vm2529 = vcmp.gt.f32.partialorder %v2485, 0.0
        %vm2530 = vcmp.gt.f32.partialorder %v2486, 0.0
        %vm2531 = vcmp.gt.f32.partialorder %v2487, 0.0
        %vm2532 = vcmp.gt.f32.partialorder %v2488, 0.0
        %vm2533 = vcmp.gt.f32.partialorder %v2489, 0.0
        %vm2534 = vcmp.gt.f32.partialorder %v2490, 0.0
        %vm2535 = vcmp.gt.f32.partialorder %v2491, 0.0
        %vm2536 = vcmp.gt.f32.partialorder %v2492, 0.0
        %vm2537 = vcmp.gt.f32.partialorder %v2493, 0.0
        %vm2538 = vcmp.gt.f32.partialorder %v2494, 0.0
        %vm2539 = vcmp.gt.f32.partialorder %v2495, 0.0
        %vm2540 = vcmp.gt.f32.partialorder %v2496, 0.0
        %vm2541 = vcmp.gt.f32.partialorder %v2497, 0.0
        %vm2542 = vcmp.gt.f32.partialorder %v2498, 0.0
        %vm2543 = vcmp.gt.f32.partialorder %v2499, 0.0
        %vm2544 = vcmp.gt.f32.partialorder %v2500, 0.0
        %vm2545 = vcmp.gt.f32.partialorder %v2501, 0.0
        %vm2546 = vcmp.gt.f32.partialorder %v2502, 0.0
        %vm2547 = vcmp.gt.f32.partialorder %v2503, 0.0
        %vm2548 = vcmp.gt.f32.partialorder %v2504, 0.0
        %vm2549 = vcmp.gt.f32.partialorder %v2505, 0.0
        %vm2550 = vcmp.gt.f32.partialorder %v2506, 0.0
        %vm2551 = vcmp.gt.f32.partialorder %v2507, 0.0
        %vm2552 = vcmp.gt.f32.partialorder %v2508, 0.0
        %vm2553 = vcmp.gt.f32.partialorder %v2509, 0.0
        %vm2554 = vcmp.gt.f32.partialorder %v2510, 0.0
        %vm2555 = vcmp.gt.f32.partialorder %v2511, 0.0
        %vm2556 = vcmp.gt.f32.partialorder %v2512, 0.0
        %vm2557 = vcmp.gt.f32.partialorder %v2513, 0.0
        %vm2558 = vcmp.gt.f32.partialorder %v2514, 0.0
        %vm2559 = vcmp.gt.f32.partialorder %v2515, 0.0
        %vm2560 = vcmp.gt.f32.partialorder %v2516, 0.0
        %vm2561 = vcmp.gt.f32.partialorder %v2517, 0.0
        %vm2562 = vcmp.gt.f32.partialorder %v2518, 0.0
        %vm2563 = vcmp.gt.f32.partialorder %v2519, 0.0
        %vm2564 = vcmp.gt.f32.partialorder %v2520, 0.0
        %vm2565 = vcmp.gt.f32.partialorder %v2521, 0.0
        %vm2566 = vcmp.gt.f32.partialorder %v2522, 0.0
        %vm2567 = vcmp.gt.f32.partialorder %v2523, 0.0
        %vm2568 = vcmp.gt.f32.partialorder %v2524, 0.0
        %vm2569 = vcmp.gt.f32.partialorder %v2525, 0.0
        %vm2570 = vcmp.gt.f32.partialorder %v2526, 0.0
        %vm2571 = vcmp.gt.f32.partialorder %v2527, 0.0
        %v2572 = vmul.f32 %v2484, 0.1
        %v2573 = vmul.f32 %v2485, 0.1
        %v2574 = vmul.f32 %v2486, 0.1
        %v2575 = vmul.f32 %v2487, 0.1
        %v2576 = vmul.f32 %v2488, 0.1
        %v2577 = vmul.f32 %v2489, 0.1
        %v2578 = vmul.f32 %v2490, 0.1
        %v2579 = vmul.f32 %v2491, 0.1
        %v2580 = vmul.f32 %v2492, 0.1
        %v2581 = vmul.f32 %v2493, 0.1
        %v2582 = vmul.f32 %v2494, 0.1
        %v2583 = vmul.f32 %v2495, 0.1
        %v2584 = vmul.f32 %v2496, 0.1
        %v2585 = vmul.f32 %v2497, 0.1
        %v2586 = vmul.f32 %v2498, 0.1
        %v2587 = vmul.f32 %v2499, 0.1
        %v2588 = vmul.f32 %v2500, 0.1
        %v2589 = vmul.f32 %v2501, 0.1
        %v2590 = vmul.f32 %v2502, 0.1
        %v2591 = vmul.f32 %v2503, 0.1
        %v2592 = vmul.f32 %v2504, 0.1
        %v2593 = vmul.f32 %v2505, 0.1
        %v2594 = vmul.f32 %v2506, 0.1
        %v2595 = vmul.f32 %v2507, 0.1
        %v2596 = vmul.f32 %v2508, 0.1
        %v2597 = vmul.f32 %v2509, 0.1
        %v2598 = vmul.f32 %v2510, 0.1
        %v2599 = vmul.f32 %v2511, 0.1
        %v2600 = vmul.f32 %v2512, 0.1
        %v2601 = vmul.f32 %v2513, 0.1
        %v2602 = vmul.f32 %v2514, 0.1
        %v2603 = vmul.f32 %v2515, 0.1
        %v2604 = vmul.f32 %v2516, 0.1
        %v2605 = vmul.f32 %v2517, 0.1
        %v2606 = vmul.f32 %v2518, 0.1
        %v2607 = vmul.f32 %v2519, 0.1
        %v2608 = vmul.f32 %v2520, 0.1
        %v2609 = vmul.f32 %v2521, 0.1
        %v2610 = vmul.f32 %v2522, 0.1
        %v2611 = vmul.f32 %v2523, 0.1
        %v2612 = vmul.f32 %v2524, 0.1
        %v2613 = vmul.f32 %v2525, 0.1
        %v2614 = vmul.f32 %v2526, 0.1
        %v2615 = vmul.f32 %v2527, 0.1
        %v2616 = vsel %vm2528, %v2484, %v2572
        %v2617 = vsel %vm2529, %v2485, %v2573
        %v2618 = vsel %vm2530, %v2486, %v2574
        %v2619 = vsel %vm2531, %v2487, %v2575
        %v2620 = vsel %vm2532, %v2488, %v2576
        %v2621 = vsel %vm2533, %v2489, %v2577
        %v2622 = vsel %vm2534, %v2490, %v2578
        %v2623 = vsel %vm2535, %v2491, %v2579
        %v2624 = vsel %vm2536, %v2492, %v2580
        %v2625 = vsel %vm2537, %v2493, %v2581
        %v2626 = vsel %vm2538, %v2494, %v2582
        %v2627 = vsel %vm2539, %v2495, %v2583
        %v2628 = vsel %vm2540, %v2496, %v2584
        %v2629 = vsel %vm2541, %v2497, %v2585
        %v2630 = vsel %vm2542, %v2498, %v2586
        %v2631 = vsel %vm2543, %v2499, %v2587
        %v2632 = vsel %vm2544, %v2500, %v2588
        %v2633 = vsel %vm2545, %v2501, %v2589
        %v2634 = vsel %vm2546, %v2502, %v2590
        %v2635 = vsel %vm2547, %v2503, %v2591
        %v2636 = vsel %vm2548, %v2504, %v2592
        %v2637 = vsel %vm2549, %v2505, %v2593
        %v2638 = vsel %vm2550, %v2506, %v2594
        %v2639 = vsel %vm2551, %v2507, %v2595
        %v2640 = vsel %vm2552, %v2508, %v2596
        %v2641 = vsel %vm2553, %v2509, %v2597
        %v2642 = vsel %vm2554, %v2510, %v2598
        %v2643 = vsel %vm2555, %v2511, %v2599
        %v2644 = vsel %vm2556, %v2512, %v2600
        %v2645 = vsel %vm2557, %v2513, %v2601
        %v2646 = vsel %vm2558, %v2514, %v2602
        %v2647 = vsel %vm2559, %v2515, %v2603
        %v2648 = vsel %vm2560, %v2516, %v2604
        %v2649 = vsel %vm2561, %v2517, %v2605
        %v2650 = vsel %vm2562, %v2518, %v2606
        %v2651 = vsel %vm2563, %v2519, %v2607
        %v2652 = vsel %vm2564, %v2520, %v2608
        %v2653 = vsel %vm2565, %v2521, %v2609
        %v2654 = vsel %vm2566, %v2522, %v2610
        %v2655 = vsel %vm2567, %v2523, %v2611
        %v2656 = vsel %vm2568, %v2524, %v2612
        %v2657 = vsel %vm2569, %v2525, %v2613
        %v2658 = vsel %vm2570, %v2526, %v2614
        %v2659 = vsel %vm2571, %v2527, %v2615
        %v2660 = vpack.c.bf16 %v2617, %v2616
        %v2661 = vpack.c.bf16 %v2619, %v2618
        %v2662 = vpack.c.bf16 %v2621, %v2620
        %v2663 = vpack.c.bf16 %v2623, %v2622
        %v2664 = vpack.c.bf16 %v2625, %v2624
        %v2665 = vpack.c.bf16 %v2627, %v2626
        %v2666 = vpack.c.bf16 %v2629, %v2628
        %v2667 = vpack.c.bf16 %v2631, %v2630
        %v2668 = vpack.c.bf16 %v2633, %v2632
        %v2669 = vpack.c.bf16 %v2635, %v2634
        %v2670 = vpack.c.bf16 %v2637, %v2636
        %v2671 = vpack.c.bf16 %v2639, %v2638
        %v2672 = vpack.c.bf16 %v2641, %v2640
        %v2673 = vpack.c.bf16 %v2643, %v2642
        %v2674 = vpack.c.bf16 %v2645, %v2644
        %v2675 = vpack.c.bf16 %v2647, %v2646
        %v2676 = vpack.c.bf16 %v2649, %v2648
        %v2677 = vpack.c.bf16 %v2651, %v2650
        %v2678 = vpack.c.bf16 %v2653, %v2652
        %v2679 = vpack.c.bf16 %v2655, %v2654
        %v2680 = vpack.c.bf16 %v2657, %v2656
        %v2681 = vpack.c.bf16 %v2659, %v2658
        %v2682 = vld [vmem:[#allocation16] sm:$0xff]
        %v2683 = vld [vmem:[#allocation16 + $0x8] sm:$0xff]
        %v2684 = vld [vmem:[#allocation16 + $0x10] sm:$0xff]
        %v2685 = vld [vmem:[#allocation16 + $0x18] sm:$0xff]
        %v2686 = vld [vmem:[#allocation16 + $0x20] sm:$0xff]
        %v2687 = vld [vmem:[#allocation16 + $0x28] sm:$0xff]
        %v2688 = vld [vmem:[#allocation16 + $0x30] sm:$0xff]
        %v2689 = vld [vmem:[#allocation16 + $0x38] sm:$0xff]
        %v2690 = vld [vmem:[#allocation16 + $0x40] sm:$0xff]
        %v2691 = vld [vmem:[#allocation16 + $0x48] sm:$0xff]
        %v2692 = vld [vmem:[#allocation16 + $0x50] sm:$0xff]
        %v2693 = vld [vmem:[#allocation16 + $0x58] sm:$0xff]
        %v2694 = vld [vmem:[#allocation16 + $0x60] sm:$0xff]
        %v2695 = vld [vmem:[#allocation16 + $0x68] sm:$0xff]
        %v2696 = vld [vmem:[#allocation16 + $0x70] sm:$0xff]
        %v2697 = vld [vmem:[#allocation16 + $0x78] sm:$0xff]
        %v2698 = vld [vmem:[#allocation17] sm:$0xff]
        %v2699 = vld [vmem:[#allocation17 + $0x8] sm:$0xff]
        %v2700 = vld [vmem:[#allocation17 + $0x10] sm:$0xff]
        %v2701 = vld [vmem:[#allocation17 + $0x18] sm:$0xff]
        %v2702 = vld [vmem:[#allocation17 + $0x20] sm:$0xff]
        %v2703 = vld [vmem:[#allocation17 + $0x28] sm:$0xff]
        %v2704 = vld [vmem:[#allocation17 + $0x30] sm:$0xff]
        %v2705 = vld [vmem:[#allocation17 + $0x38] sm:$0xff]
        %v2706 = vld [vmem:[#allocation17 + $0x40] sm:$0xff]
        %v2707 = vld [vmem:[#allocation17 + $0x48] sm:$0xff]
        %v2708 = vld [vmem:[#allocation17 + $0x50] sm:$0xff]
        %v2709 = vld [vmem:[#allocation17 + $0x58] sm:$0xff]
        %v2710 = vld [vmem:[#allocation17 + $0x60] sm:$0xff]
        %v2711 = vld [vmem:[#allocation17 + $0x68] sm:$0xff]
        %v2712 = vld [vmem:[#allocation17 + $0x70] sm:$0xff]
        %v2713 = vld [vmem:[#allocation17 + $0x78] sm:$0xff]
        %v2730 = vunpack.c.l.b16 %v2698
        %v2731 = vunpack.c.h.b16 %v2698
        %v2732 = vunpack.c.l.b16 %v2699
        %v2733 = vunpack.c.h.b16 %v2699
        %v2734 = vunpack.c.l.b16 %v2700
        %v2735 = vunpack.c.h.b16 %v2700
        %v2736 = vunpack.c.l.b16 %v2701
        %v2737 = vunpack.c.h.b16 %v2701
        %v2738 = vunpack.c.l.b16 %v2702
        %v2739 = vunpack.c.h.b16 %v2702
        %v2740 = vunpack.c.l.b16 %v2703
        %v2741 = vunpack.c.h.b16 %v2703
        %v2742 = vunpack.c.l.b16 %v2704
        %v2743 = vunpack.c.h.b16 %v2704
        %v2744 = vunpack.c.l.b16 %v2705
        %v2745 = vunpack.c.h.b16 %v2705
        %v2746 = vunpack.c.l.b16 %v2706
        %v2747 = vunpack.c.h.b16 %v2706
        %v2748 = vunpack.c.l.b16 %v2707
        %v2749 = vunpack.c.h.b16 %v2707
        %v2750 = vunpack.c.l.b16 %v2708
        %v2751 = vunpack.c.h.b16 %v2708
        %v2752 = vunpack.c.l.b16 %v2709
        %v2753 = vunpack.c.h.b16 %v2709
        %v2754 = vunpack.c.l.b16 %v2710
        %v2755 = vunpack.c.h.b16 %v2710
        %v2756 = vunpack.c.l.b16 %v2711
        %v2757 = vunpack.c.h.b16 %v2711
        %v2758 = vunpack.c.l.b16 %v2712
        %v2759 = vunpack.c.h.b16 %v2712
        %v2760 = vunpack.c.l.b16 %v2713
        %v2761 = vunpack.c.h.b16 %v2713
        %v2762 = vpack.c.b16 %v2732, %v2730
        %v2763 = vpack.c.b16 %v2733, %v2731
        %v2764 = vpack.c.b16 %v2736, %v2734
        %v2765 = vpack.c.b16 %v2737, %v2735
        %v2766 = vpack.c.b16 %v2740, %v2738
        %v2767 = vpack.c.b16 %v2741, %v2739
        %v2768 = vpack.c.b16 %v2744, %v2742
        %v2769 = vpack.c.b16 %v2745, %v2743
        %v2770 = vpack.c.b16 %v2748, %v2746
        %v2771 = vpack.c.b16 %v2749, %v2747
        %v2772 = vpack.c.b16 %v2752, %v2750
        %v2773 = vpack.c.b16 %v2753, %v2751
        %v2774 = vpack.c.b16 %v2756, %v2754
        %v2775 = vpack.c.b16 %v2757, %v2755
        %v2776 = vpack.c.b16 %v2760, %v2758
        %v2777 = vpack.c.b16 %v2761, %v2759
        %2794 = vmatprep.subr.bf16.mxu0 %v2763
        %2795 = vmatpush1.bf16.msra.mxu0 %v2762
        %2796 = vmatprep.subr.bf16.mxu0 %v2765
        %2797 = vmatpush1.bf16.msra.mxu0 %v2764
        %2798 = vmatprep.subr.bf16.mxu0 %v2767
        %2799 = vmatpush1.bf16.msra.mxu0 %v2766
        %2800 = vmatprep.subr.bf16.mxu0 %v2769
        %2801 = vmatpush1.bf16.msra.mxu0 %v2768
        %2802 = vmatprep.subr.bf16.mxu0 %v2771
        %2803 = vmatpush1.bf16.msra.mxu0 %v2770
        %2804 = vmatprep.subr.bf16.mxu0 %v2773
        %2805 = vmatpush1.bf16.msra.mxu0 %v2772
        %2806 = vmatprep.subr.bf16.mxu0 %v2775
        %2807 = vmatpush1.bf16.msra.mxu0 %v2774
        %2808 = vmatprep.subr.bf16.mxu0 %v2777
        %2809 = vmatpush1.bf16.msra.mxu0 %v2776
        %2810 = vmatprep.subr.bf16.mxu0 0
        %2811 = vmatpush1.bf16.msra.mxu0 0
        %2812 = vmatprep.subr.bf16.mxu0 0
        %2813 = vmatpush1.bf16.msra.mxu0 0
        %2814 = vmatprep.subr.bf16.mxu0 0
        %2815 = vmatpush1.bf16.msra.mxu0 0
        %2816 = vmatprep.subr.bf16.mxu0 0
        %2817 = vmatpush1.bf16.msra.mxu0 0
        %2818 = vmatprep.subr.bf16.mxu0 0
        %2819 = vmatpush1.bf16.msra.mxu0 0
        %2820 = vmatprep.subr.bf16.mxu0 0
        %2821 = vmatpush1.bf16.msra.mxu0 0
        %2822 = vmatprep.subr.bf16.mxu0 0
        %2823 = vmatpush1.bf16.msra.mxu0 0
        %2824 = vmatprep.subr.bf16.mxu0 0
        %2825 = vmatpush1.bf16.msra.mxu0 0
        %2826 = vmatprep.mubr.bf16.mxu0 0
        %2827 = vmatmul.mubr.bf16.gmra.mrb[0].mxu0 %v2660
        %v2828 = vpop.f32.mrb[0].mxu0
        %v2829 = vadd.f32 0.0, %v2828
        %v2830 = vpop.f32.mrb[0].mxu0
        %v2831 = vadd.f32 0.0, %v2830
        %v2832 = vpop.f32.mrb[0].mxu0
        %v2833 = vadd.f32 0.0, %v2832
        %v2834 = vpop.f32.mrb[0].mxu0
        %v2835 = vadd.f32 0.0, %v2834
        %2836 = vmatprep.mubr.bf16.mxu0 0
        %2837 = vmatmul.mubr.bf16.gmra.mrb[0].mxu0 %v2661
        %v2838 = vpop.f32.mrb[0].mxu0
        %v2839 = vadd.f32 0.0, %v2838
        %v2840 = vpop.f32.mrb[0].mxu0
        %v2841 = vadd.f32 0.0, %v2840
        %v2842 = vpop.f32.mrb[0].mxu0
        %v2843 = vadd.f32 0.0, %v2842
        %v2844 = vpop.f32.mrb[0].mxu0
        %v2845 = vadd.f32 0.0, %v2844
        %2846 = vmatprep.mubr.bf16.mxu0 0
        %2847 = vmatmul.mubr.bf16.gmra.mrb[0].mxu0 %v2662
        %v2848 = vpop.f32.mrb[0].mxu0
        %v2849 = vadd.f32 0.0, %v2848
        %v2850 = vpop.f32.mrb[0].mxu0
        %v2851 = vadd.f32 0.0, %v2850
        %v2852 = vpop.f32.mrb[0].mxu0
        %v2853 = vadd.f32 0.0, %v2852
        %v2854 = vpop.f32.mrb[0].mxu0
        %v2855 = vadd.f32 0.0, %v2854
        %2856 = vmatprep.mubr.bf16.mxu0 0
        %2857 = vmatmul.mubr.bf16.gmra.mrb[0].mxu0 %v2663
        %v2858 = vpop.f32.mrb[0].mxu0
        %v2859 = vadd.f32 0.0, %v2858
        %v2860 = vpop.f32.mrb[0].mxu0
        %v2861 = vadd.f32 0.0, %v2860
        %v2862 = vpop.f32.mrb[0].mxu0
        %v2863 = vadd.f32 0.0, %v2862
        %v2864 = vpop.f32.mrb[0].mxu0
        %v2865 = vadd.f32 0.0, %v2864
        %2866 = vmatprep.mubr.bf16.mxu0 0
        %2867 = vmatmul.mubr.bf16.gmra.mrb[0].mxu0 %v2664
        %v2868 = vpop.f32.mrb[0].mxu0
        %v2869 = vadd.f32 0.0, %v2868
        %v2870 = vpop.f32.mrb[0].mxu0
        %v2871 = vadd.f32 0.0, %v2870
        %v2872 = vpop.f32.mrb[0].mxu0
        %v2873 = vadd.f32 0.0, %v2872
        %v2874 = vpop.f32.mrb[0].mxu0
        %v2875 = vadd.f32 0.0, %v2874
        %2876 = vmatprep.mubr.bf16.mxu0 0
        %2877 = vmatmul.mubr.bf16.gmra.mrb[0].mxu0 %v2665
        %v2878 = vpop.f32.mrb[0].mxu0
        %v2879 = vadd.f32 0.0, %v2878
        %v2880 = vpop.f32.mrb[0].mxu0
        %v2881 = vadd.f32 0.0, %v2880
        %v2882 = vpop.f32.mrb[0].mxu0
        %v2883 = vadd.f32 0.0, %v2882
        %v2884 = vpop.f32.mrb[0].mxu0
        %v2885 = vadd.f32 0.0, %v2884
        %2886 = vmatprep.mubr.bf16.mxu0 0
        %2887 = vmatmul.mubr.bf16.gmra.mrb[0].mxu0 %v2666
        %v2888 = vpop.f32.mrb[0].mxu0
        %v2889 = vadd.f32 0.0, %v2888
        %v2890 = vpop.f32.mrb[0].mxu0
        %v2891 = vadd.f32 0.0, %v2890
        %v2892 = vpop.f32.mrb[0].mxu0
        %v2893 = vadd.f32 0.0, %v2892
        %v2894 = vpop.f32.mrb[0].mxu0
        %v2895 = vadd.f32 0.0, %v2894
        %2896 = vmatprep.mubr.bf16.mxu0 0
        %2897 = vmatmul.mubr.bf16.gmra.mrb[0].mxu0 %v2667
        %v2898 = vpop.f32.mrb[0].mxu0
        %v2899 = vadd.f32 0.0, %v2898
        %v2900 = vpop.f32.mrb[0].mxu0
        %v2901 = vadd.f32 0.0, %v2900
        %v2902 = vpop.f32.mrb[0].mxu0
        %v2903 = vadd.f32 0.0, %v2902
        %v2904 = vpop.f32.mrb[0].mxu0
        %v2905 = vadd.f32 0.0, %v2904
        %2906 = vmatprep.mubr.bf16.mxu0 0
        %2907 = vmatmul.mubr.bf16.gmra.mrb[0].mxu0 %v2668
        %v2908 = vpop.f32.mrb[0].mxu0
        %v2909 = vadd.f32 0.0, %v2908
        %v2910 = vpop.f32.mrb[0].mxu0
        %v2911 = vadd.f32 0.0, %v2910
        %v2912 = vpop.f32.mrb[0].mxu0
        %v2913 = vadd.f32 0.0, %v2912
        %v2914 = vpop.f32.mrb[0].mxu0
        %v2915 = vadd.f32 0.0, %v2914
        %2916 = vmatprep.mubr.bf16.mxu0 0
        %2917 = vmatmul.mubr.bf16.gmra.mrb[0].mxu0 %v2669
        %v2918 = vpop.f32.mrb[0].mxu0
        %v2919 = vadd.f32 0.0, %v2918
        %v2920 = vpop.f32.mrb[0].mxu0
        %v2921 = vadd.f32 0.0, %v2920
        %v2922 = vpop.f32.mrb[0].mxu0
        %v2923 = vadd.f32 0.0, %v2922
        %v2924 = vpop.f32.mrb[0].mxu0
        %v2925 = vadd.f32 0.0, %v2924
        %2926 = vmatprep.mubr.bf16.mxu0 0
        %2927 = vmatmul.mubr.bf16.gmra.mrb[0].mxu0 %v2670
        %v2928 = vpop.f32.mrb[0].mxu0
        %v2929 = vadd.f32 0.0, %v2928
        %v2930 = vpop.f32.mrb[0].mxu0
        %v2931 = vadd.f32 0.0, %v2930
        %v2932 = vpop.f32.mrb[0].mxu0
        %v2933 = vadd.f32 0.0, %v2932
        %v2934 = vpop.f32.mrb[0].mxu0
        %v2935 = vadd.f32 0.0, %v2934
        %2936 = vmatprep.mubr.bf16.mxu0 0
        %2937 = vmatmul.mubr.bf16.gmra.mrb[0].mxu0 %v2671
        %v2938 = vpop.f32.mrb[0].mxu0
        %v2939 = vadd.f32 0.0, %v2938
        %v2940 = vpop.f32.mrb[0].mxu0
        %v2941 = vadd.f32 0.0, %v2940
        %v2942 = vpop.f32.mrb[0].mxu0
        %v2943 = vadd.f32 0.0, %v2942
        %v2944 = vpop.f32.mrb[0].mxu0
        %v2945 = vadd.f32 0.0, %v2944
        %2946 = vmatprep.mubr.bf16.mxu0 0
        %2947 = vmatmul.mubr.bf16.gmra.mrb[0].mxu0 %v2672
        %v2948 = vpop.f32.mrb[0].mxu0
        %v2949 = vadd.f32 0.0, %v2948
        %v2950 = vpop.f32.mrb[0].mxu0
        %v2951 = vadd.f32 0.0, %v2950
        %v2952 = vpop.f32.mrb[0].mxu0
        %v2953 = vadd.f32 0.0, %v2952
        %v2954 = vpop.f32.mrb[0].mxu0
        %v2955 = vadd.f32 0.0, %v2954
        %2956 = vmatprep.mubr.bf16.mxu0 0
        %2957 = vmatmul.mubr.bf16.gmra.mrb[0].mxu0 %v2673
        %v2958 = vpop.f32.mrb[0].mxu0
        %v2959 = vadd.f32 0.0, %v2958
        %v2960 = vpop.f32.mrb[0].mxu0
        %v2961 = vadd.f32 0.0, %v2960
        %v2962 = vpop.f32.mrb[0].mxu0
        %v2963 = vadd.f32 0.0, %v2962
        %v2964 = vpop.f32.mrb[0].mxu0
        %v2965 = vadd.f32 0.0, %v2964
        %2966 = vmatprep.mubr.bf16.mxu0 0
        %2967 = vmatmul.mubr.bf16.gmra.mrb[0].mxu0 %v2674
        %v2968 = vpop.f32.mrb[0].mxu0
        %v2969 = vadd.f32 0.0, %v2968
        %v2970 = vpop.f32.mrb[0].mxu0
        %v2971 = vadd.f32 0.0, %v2970
        %v2972 = vpop.f32.mrb[0].mxu0
        %v2973 = vadd.f32 0.0, %v2972
        %v2974 = vpop.f32.mrb[0].mxu0
        %v2975 = vadd.f32 0.0, %v2974
        %2976 = vmatprep.mubr.bf16.mxu0 0
        %2977 = vmatmul.mubr.bf16.gmra.mrb[0].mxu0 %v2675
        %v2978 = vpop.f32.mrb[0].mxu0
        %v2979 = vadd.f32 0.0, %v2978
        %v2980 = vpop.f32.mrb[0].mxu0
        %v2981 = vadd.f32 0.0, %v2980
        %v2982 = vpop.f32.mrb[0].mxu0
        %v2983 = vadd.f32 0.0, %v2982
        %v2984 = vpop.f32.mrb[0].mxu0
        %v2985 = vadd.f32 0.0, %v2984
        %2986 = vmatprep.mubr.bf16.mxu0 0
        %2987 = vmatmul.mubr.bf16.gmra.mrb[0].mxu0 %v2676
        %v2988 = vpop.f32.mrb[0].mxu0
        %v2989 = vadd.f32 0.0, %v2988
        %v2990 = vpop.f32.mrb[0].mxu0
        %v2991 = vadd.f32 0.0, %v2990
        %v2992 = vpop.f32.mrb[0].mxu0
        %v2993 = vadd.f32 0.0, %v2992
        %v2994 = vpop.f32.mrb[0].mxu0
        %v2995 = vadd.f32 0.0, %v2994
        %2996 = vmatprep.mubr.bf16.mxu0 0
        %2997 = vmatmul.mubr.bf16.gmra.mrb[0].mxu0 %v2677
        %v2998 = vpop.f32.mrb[0].mxu0
        %v2999 = vadd.f32 0.0, %v2998
        %v3000 = vpop.f32.mrb[0].mxu0
        %v3001 = vadd.f32 0.0, %v3000
        %v3002 = vpop.f32.mrb[0].mxu0
        %v3003 = vadd.f32 0.0, %v3002
        %v3004 = vpop.f32.mrb[0].mxu0
        %v3005 = vadd.f32 0.0, %v3004
        %3006 = vmatprep.mubr.bf16.mxu0 0
        %3007 = vmatmul.mubr.bf16.gmra.mrb[0].mxu0 %v2678
        %v3008 = vpop.f32.mrb[0].mxu0
        %v3009 = vadd.f32 0.0, %v3008
        %v3010 = vpop.f32.mrb[0].mxu0
        %v3011 = vadd.f32 0.0, %v3010
        %v3012 = vpop.f32.mrb[0].mxu0
        %v3013 = vadd.f32 0.0, %v3012
        %v3014 = vpop.f32.mrb[0].mxu0
        %v3015 = vadd.f32 0.0, %v3014
        %3016 = vmatprep.mubr.bf16.mxu0 0
        %3017 = vmatmul.mubr.bf16.gmra.mrb[0].mxu0 %v2679
        %v3018 = vpop.f32.mrb[0].mxu0
        %v3019 = vadd.f32 0.0, %v3018
        %v3020 = vpop.f32.mrb[0].mxu0
        %v3021 = vadd.f32 0.0, %v3020
        %v3022 = vpop.f32.mrb[0].mxu0
        %v3023 = vadd.f32 0.0, %v3022
        %v3024 = vpop.f32.mrb[0].mxu0
        %v3025 = vadd.f32 0.0, %v3024
        %3026 = vmatprep.mubr.bf16.mxu0 0
        %3027 = vmatmul.mubr.bf16.gmra.mrb[0].mxu0 %v2680
        %v3028 = vpop.f32.mrb[0].mxu0
        %v3029 = vadd.f32 0.0, %v3028
        %v3030 = vpop.f32.mrb[0].mxu0
        %v3031 = vadd.f32 0.0, %v3030
        %v3032 = vpop.f32.mrb[0].mxu0
        %v3033 = vadd.f32 0.0, %v3032
        %v3034 = vpop.f32.mrb[0].mxu0
        %v3035 = vadd.f32 0.0, %v3034
        %3036 = vmatprep.mubr.bf16.mxu0 0
        %3037 = vmatmul.mubr.bf16.gmra.mrb[0].mxu0 %v2681
        %v3038 = vpop.f32.mrb[0].mxu0
        %v3039 = vadd.f32 0.0, %v3038
        %v3040 = vpop.f32.mrb[0].mxu0
        %v3041 = vadd.f32 0.0, %v3040
        %v3042 = vpop.f32.mrb[0].mxu0
        %v3043 = vadd.f32 0.0, %v3042
        %v3044 = vpop.f32.mrb[0].mxu0
        %v3045 = vadd.f32 0.0, %v3044
        %3046 = vdwg.mxu0
        %v3063 = vunpack.c.l.b16 %v2682
        %v3064 = vunpack.c.h.b16 %v2682
        %v3065 = vunpack.c.l.b16 %v2683
        %v3066 = vunpack.c.h.b16 %v2683
        %v3067 = vunpack.c.l.b16 %v2684
        %v3068 = vunpack.c.h.b16 %v2684
        %v3069 = vunpack.c.l.b16 %v2685
        %v3070 = vunpack.c.h.b16 %v2685
        %v3071 = vunpack.c.l.b16 %v2686
        %v3072 = vunpack.c.h.b16 %v2686
        %v3073 = vunpack.c.l.b16 %v2687
        %v3074 = vunpack.c.h.b16 %v2687
        %v3075 = vunpack.c.l.b16 %v2688
        %v3076 = vunpack.c.h.b16 %v2688
        %v3077 = vunpack.c.l.b16 %v2689
        %v3078 = vunpack.c.h.b16 %v2689
        %v3079 = vunpack.c.l.b16 %v2690
        %v3080 = vunpack.c.h.b16 %v2690
        %v3081 = vunpack.c.l.b16 %v2691
        %v3082 = vunpack.c.h.b16 %v2691
        %v3083 = vunpack.c.l.b16 %v2692
        %v3084 = vunpack.c.h.b16 %v2692
        %v3085 = vunpack.c.l.b16 %v2693
        %v3086 = vunpack.c.h.b16 %v2693
        %v3087 = vunpack.c.l.b16 %v2694
        %v3088 = vunpack.c.h.b16 %v2694
        %v3089 = vunpack.c.l.b16 %v2695
        %v3090 = vunpack.c.h.b16 %v2695
        %v3091 = vunpack.c.l.b16 %v2696
        %v3092 = vunpack.c.h.b16 %v2696
        %v3093 = vunpack.c.l.b16 %v2697
        %v3094 = vunpack.c.h.b16 %v2697
        %v3095 = vpack.c.b16 %v3065, %v3063
        %v3096 = vpack.c.b16 %v3066, %v3064
        %v3097 = vpack.c.b16 %v3069, %v3067
        %v3098 = vpack.c.b16 %v3070, %v3068
        %v3099 = vpack.c.b16 %v3073, %v3071
        %v3100 = vpack.c.b16 %v3074, %v3072
        %v3101 = vpack.c.b16 %v3077, %v3075
        %v3102 = vpack.c.b16 %v3078, %v3076
        %v3103 = vpack.c.b16 %v3081, %v3079
        %v3104 = vpack.c.b16 %v3082, %v3080
        %v3105 = vpack.c.b16 %v3085, %v3083
        %v3106 = vpack.c.b16 %v3086, %v3084
        %v3107 = vpack.c.b16 %v3089, %v3087
        %v3108 = vpack.c.b16 %v3090, %v3088
        %v3109 = vpack.c.b16 %v3093, %v3091
        %v3110 = vpack.c.b16 %v3094, %v3092
        %3127 = vmatprep.subr.bf16.mxu0 %v3096
        %3128 = vmatpush1.bf16.msra.mxu0 %v3095
        %3129 = vmatprep.subr.bf16.mxu0 %v3098
        %3130 = vmatpush1.bf16.msra.mxu0 %v3097
        %3131 = vmatprep.subr.bf16.mxu0 %v3100
        %3132 = vmatpush1.bf16.msra.mxu0 %v3099
        %3133 = vmatprep.subr.bf16.mxu0 %v3102
        %3134 = vmatpush1.bf16.msra.mxu0 %v3101
        %3135 = vmatprep.subr.bf16.mxu0 %v3104
        %3136 = vmatpush1.bf16.msra.mxu0 %v3103
        %3137 = vmatprep.subr.bf16.mxu0 %v3106
        %3138 = vmatpush1.bf16.msra.mxu0 %v3105
        %3139 = vmatprep.subr.bf16.mxu0 %v3108
        %3140 = vmatpush1.bf16.msra.mxu0 %v3107
        %3141 = vmatprep.subr.bf16.mxu0 %v3110
        %3142 = vmatpush1.bf16.msra.mxu0 %v3109
        %3143 = vmatprep.subr.bf16.mxu0 0
        %3144 = vmatpush1.bf16.msra.mxu0 0
        %3145 = vmatprep.subr.bf16.mxu0 0
        %3146 = vmatpush1.bf16.msra.mxu0 0
        %3147 = vmatprep.subr.bf16.mxu0 0
        %3148 = vmatpush1.bf16.msra.mxu0 0
        %3149 = vmatprep.subr.bf16.mxu0 0
        %3150 = vmatpush1.bf16.msra.mxu0 0
        %3151 = vmatprep.subr.bf16.mxu0 0
        %3152 = vmatpush1.bf16.msra.mxu0 0
        %3153 = vmatprep.subr.bf16.mxu0 0
        %3154 = vmatpush1.bf16.msra.mxu0 0
        %3155 = vmatprep.subr.bf16.mxu0 0
        %3156 = vmatpush1.bf16.msra.mxu0 0
        %3157 = vmatprep.subr.bf16.mxu0 0
        %3158 = vmatpush1.bf16.msra.mxu0 0
        %3159 = vmatprep.mubr.bf16.mxu0 0
        %3160 = vmatmul.mubr.bf16.gmra.mrb[0].mxu0 0
        %v3161 = vpop.f32.mrb[0].mxu0
        %v3162 = vadd.f32 %v2829, %v3161
        %v3163 = vpop.f32.mrb[0].mxu0
        %v3164 = vadd.f32 %v2831, %v3163
        %v3165 = vpop.f32.mrb[0].mxu0
        %v3166 = vadd.f32 %v2833, %v3165
        %v3167 = vpop.f32.mrb[0].mxu0
        %v3168 = vadd.f32 %v2835, %v3167
        %3169 = vmatprep.mubr.bf16.mxu0 0
        %3170 = vmatmul.mubr.bf16.gmra.mrb[0].mxu0 0
        %v3171 = vpop.f32.mrb[0].mxu0
        %v3172 = vadd.f32 %v2839, %v3171
        %v3173 = vpop.f32.mrb[0].mxu0
        %v3174 = vadd.f32 %v2841, %v3173
        %v3175 = vpop.f32.mrb[0].mxu0
        %v3176 = vadd.f32 %v2843, %v3175
        %v3177 = vpop.f32.mrb[0].mxu0
        %v3178 = vadd.f32 %v2845, %v3177
        %3179 = vmatprep.mubr.bf16.mxu0 0
        %3180 = vmatmul.mubr.bf16.gmra.mrb[0].mxu0 %v2660
        %v3181 = vpop.f32.mrb[0].mxu0
        %v3182 = vadd.f32 %v2849, %v3181
        %v3183 = vpop.f32.mrb[0].mxu0
        %v3184 = vadd.f32 %v2851, %v3183
        %v3185 = vpop.f32.mrb[0].mxu0
        %v3186 = vadd.f32 %v2853, %v3185
        %v3187 = vpop.f32.mrb[0].mxu0
        %v3188 = vadd.f32 %v2855, %v3187
        %3189 = vmatprep.mubr.bf16.mxu0 0
        %3190 = vmatmul.mubr.bf16.gmra.mrb[0].mxu0 %v2661
        %v3191 = vpop.f32.mrb[0].mxu0
        %v3192 = vadd.f32 %v2859, %v3191
        %v3193 = vpop.f32.mrb[0].mxu0
        %v3194 = vadd.f32 %v2861, %v3193
        %v3195 = vpop.f32.mrb[0].mxu0
        %v3196 = vadd.f32 %v2863, %v3195
        %v3197 = vpop.f32.mrb[0].mxu0
        %v3198 = vadd.f32 %v2865, %v3197
        %3199 = vmatprep.mubr.bf16.mxu0 0
        %3200 = vmatmul.mubr.bf16.gmra.mrb[0].mxu0 %v2662
        %v3201 = vpop.f32.mrb[0].mxu0
        %v3202 = vadd.f32 %v2869, %v3201
        %v3203 = vpop.f32.mrb[0].mxu0
        %v3204 = vadd.f32 %v2871, %v3203
        %v3205 = vpop.f32.mrb[0].mxu0
        %v3206 = vadd.f32 %v2873, %v3205
        %v3207 = vpop.f32.mrb[0].mxu0
        %v3208 = vadd.f32 %v2875, %v3207
        %3209 = vmatprep.mubr.bf16.mxu0 0
        %3210 = vmatmul.mubr.bf16.gmra.mrb[0].mxu0 %v2663
        %v3211 = vpop.f32.mrb[0].mxu0
        %v3212 = vadd.f32 %v2879, %v3211
        %v3213 = vpop.f32.mrb[0].mxu0
        %v3214 = vadd.f32 %v2881, %v3213
        %v3215 = vpop.f32.mrb[0].mxu0
        %v3216 = vadd.f32 %v2883, %v3215
        %v3217 = vpop.f32.mrb[0].mxu0
        %v3218 = vadd.f32 %v2885, %v3217
        %3219 = vmatprep.mubr.bf16.mxu0 0
        %3220 = vmatmul.mubr.bf16.gmra.mrb[0].mxu0 %v2664
        %v3221 = vpop.f32.mrb[0].mxu0
        %v3222 = vadd.f32 %v2889, %v3221
        %v3223 = vpop.f32.mrb[0].mxu0
        %v3224 = vadd.f32 %v2891, %v3223
        %v3225 = vpop.f32.mrb[0].mxu0
        %v3226 = vadd.f32 %v2893, %v3225
        %v3227 = vpop.f32.mrb[0].mxu0
        %v3228 = vadd.f32 %v2895, %v3227
        %3229 = vmatprep.mubr.bf16.mxu0 0
        %3230 = vmatmul.mubr.bf16.gmra.mrb[0].mxu0 %v2665
        %v3231 = vpop.f32.mrb[0].mxu0
        %v3232 = vadd.f32 %v2899, %v3231
        %v3233 = vpop.f32.mrb[0].mxu0
        %v3234 = vadd.f32 %v2901, %v3233
        %v3235 = vpop.f32.mrb[0].mxu0
        %v3236 = vadd.f32 %v2903, %v3235
        %v3237 = vpop.f32.mrb[0].mxu0
        %v3238 = vadd.f32 %v2905, %v3237
        %3239 = vmatprep.mubr.bf16.mxu0 0
        %3240 = vmatmul.mubr.bf16.gmra.mrb[0].mxu0 %v2666
        %v3241 = vpop.f32.mrb[0].mxu0
        %v3242 = vadd.f32 %v2909, %v3241
        %v3243 = vpop.f32.mrb[0].mxu0
        %v3244 = vadd.f32 %v2911, %v3243
        %v3245 = vpop.f32.mrb[0].mxu0
        %v3246 = vadd.f32 %v2913, %v3245
        %v3247 = vpop.f32.mrb[0].mxu0
        %v3248 = vadd.f32 %v2915, %v3247
        %3249 = vmatprep.mubr.bf16.mxu0 0
        %3250 = vmatmul.mubr.bf16.gmra.mrb[0].mxu0 %v2667
        %v3251 = vpop.f32.mrb[0].mxu0
        %v3252 = vadd.f32 %v2919, %v3251
        %v3253 = vpop.f32.mrb[0].mxu0
        %v3254 = vadd.f32 %v2921, %v3253
        %v3255 = vpop.f32.mrb[0].mxu0
        %v3256 = vadd.f32 %v2923, %v3255
        %v3257 = vpop.f32.mrb[0].mxu0
        %v3258 = vadd.f32 %v2925, %v3257
        %3259 = vmatprep.mubr.bf16.mxu0 0
        %3260 = vmatmul.mubr.bf16.gmra.mrb[0].mxu0 %v2668
        %v3261 = vpop.f32.mrb[0].mxu0
        %v3262 = vadd.f32 %v2929, %v3261
        %v3263 = vpop.f32.mrb[0].mxu0
        %v3264 = vadd.f32 %v2931, %v3263
        %v3265 = vpop.f32.mrb[0].mxu0
        %v3266 = vadd.f32 %v2933, %v3265
        %v3267 = vpop.f32.mrb[0].mxu0
        %v3268 = vadd.f32 %v2935, %v3267
        %3269 = vmatprep.mubr.bf16.mxu0 0
        %3270 = vmatmul.mubr.bf16.gmra.mrb[0].mxu0 %v2669
        %v3271 = vpop.f32.mrb[0].mxu0
        %v3272 = vadd.f32 %v2939, %v3271
        %v3273 = vpop.f32.mrb[0].mxu0
        %v3274 = vadd.f32 %v2941, %v3273
        %v3275 = vpop.f32.mrb[0].mxu0
        %v3276 = vadd.f32 %v2943, %v3275
        %v3277 = vpop.f32.mrb[0].mxu0
        %v3278 = vadd.f32 %v2945, %v3277
        %3279 = vmatprep.mubr.bf16.mxu0 0
        %3280 = vmatmul.mubr.bf16.gmra.mrb[0].mxu0 %v2670
        %v3281 = vpop.f32.mrb[0].mxu0
        %v3282 = vadd.f32 %v2949, %v3281
        %v3283 = vpop.f32.mrb[0].mxu0
        %v3284 = vadd.f32 %v2951, %v3283
        %v3285 = vpop.f32.mrb[0].mxu0
        %v3286 = vadd.f32 %v2953, %v3285
        %v3287 = vpop.f32.mrb[0].mxu0
        %v3288 = vadd.f32 %v2955, %v3287
        %3289 = vmatprep.mubr.bf16.mxu0 0
        %3290 = vmatmul.mubr.bf16.gmra.mrb[0].mxu0 %v2671
        %v3291 = vpop.f32.mrb[0].mxu0
        %v3292 = vadd.f32 %v2959, %v3291
        %v3293 = vpop.f32.mrb[0].mxu0
        %v3294 = vadd.f32 %v2961, %v3293
        %v3295 = vpop.f32.mrb[0].mxu0
        %v3296 = vadd.f32 %v2963, %v3295
        %v3297 = vpop.f32.mrb[0].mxu0
        %v3298 = vadd.f32 %v2965, %v3297
        %3299 = vmatprep.mubr.bf16.mxu0 0
        %3300 = vmatmul.mubr.bf16.gmra.mrb[0].mxu0 %v2672
        %v3301 = vpop.f32.mrb[0].mxu0
        %v3302 = vadd.f32 %v2969, %v3301
        %v3303 = vpop.f32.mrb[0].mxu0
        %v3304 = vadd.f32 %v2971, %v3303
        %v3305 = vpop.f32.mrb[0].mxu0
        %v3306 = vadd.f32 %v2973, %v3305
        %v3307 = vpop.f32.mrb[0].mxu0
        %v3308 = vadd.f32 %v2975, %v3307
        %3309 = vmatprep.mubr.bf16.mxu0 0
        %3310 = vmatmul.mubr.bf16.gmra.mrb[0].mxu0 %v2673
        %v3311 = vpop.f32.mrb[0].mxu0
        %v3312 = vadd.f32 %v2979, %v3311
        %v3313 = vpop.f32.mrb[0].mxu0
        %v3314 = vadd.f32 %v2981, %v3313
        %v3315 = vpop.f32.mrb[0].mxu0
        %v3316 = vadd.f32 %v2983, %v3315
        %v3317 = vpop.f32.mrb[0].mxu0
        %v3318 = vadd.f32 %v2985, %v3317
        %3319 = vmatprep.mubr.bf16.mxu0 0
        %3320 = vmatmul.mubr.bf16.gmra.mrb[0].mxu0 %v2674
        %v3321 = vpop.f32.mrb[0].mxu0
        %v3322 = vadd.f32 %v2989, %v3321
        %v3323 = vpop.f32.mrb[0].mxu0
        %v3324 = vadd.f32 %v2991, %v3323
        %v3325 = vpop.f32.mrb[0].mxu0
        %v3326 = vadd.f32 %v2993, %v3325
        %v3327 = vpop.f32.mrb[0].mxu0
        %v3328 = vadd.f32 %v2995, %v3327
        %3329 = vmatprep.mubr.bf16.mxu0 0
        %3330 = vmatmul.mubr.bf16.gmra.mrb[0].mxu0 %v2675
        %v3331 = vpop.f32.mrb[0].mxu0
        %v3332 = vadd.f32 %v2999, %v3331
        %v3333 = vpop.f32.mrb[0].mxu0
        %v3334 = vadd.f32 %v3001, %v3333
        %v3335 = vpop.f32.mrb[0].mxu0
        %v3336 = vadd.f32 %v3003, %v3335
        %v3337 = vpop.f32.mrb[0].mxu0
        %v3338 = vadd.f32 %v3005, %v3337
        %3339 = vmatprep.mubr.bf16.mxu0 0
        %3340 = vmatmul.mubr.bf16.gmra.mrb[0].mxu0 %v2676
        %v3341 = vpop.f32.mrb[0].mxu0
        %v3342 = vadd.f32 %v3009, %v3341
        %v3343 = vpop.f32.mrb[0].mxu0
        %v3344 = vadd.f32 %v3011, %v3343
        %v3345 = vpop.f32.mrb[0].mxu0
        %v3346 = vadd.f32 %v3013, %v3345
        %v3347 = vpop.f32.mrb[0].mxu0
        %v3348 = vadd.f32 %v3015, %v3347
        %3349 = vmatprep.mubr.bf16.mxu0 0
        %3350 = vmatmul.mubr.bf16.gmra.mrb[0].mxu0 %v2677
        %v3351 = vpop.f32.mrb[0].mxu0
        %v3352 = vadd.f32 %v3019, %v3351
        %v3353 = vpop.f32.mrb[0].mxu0
        %v3354 = vadd.f32 %v3021, %v3353
        %v3355 = vpop.f32.mrb[0].mxu0
        %v3356 = vadd.f32 %v3023, %v3355
        %v3357 = vpop.f32.mrb[0].mxu0
        %v3358 = vadd.f32 %v3025, %v3357
        %3359 = vmatprep.mubr.bf16.mxu0 0
        %3360 = vmatmul.mubr.bf16.gmra.mrb[0].mxu0 %v2678
        %v3361 = vpop.f32.mrb[0].mxu0
        %v3362 = vadd.f32 %v3029, %v3361
        %v3363 = vpop.f32.mrb[0].mxu0
        %v3364 = vadd.f32 %v3031, %v3363
        %v3365 = vpop.f32.mrb[0].mxu0
        %v3366 = vadd.f32 %v3033, %v3365
        %v3367 = vpop.f32.mrb[0].mxu0
        %v3368 = vadd.f32 %v3035, %v3367
        %3369 = vmatprep.mubr.bf16.mxu0 0
        %3370 = vmatmul.mubr.bf16.gmra.mrb[0].mxu0 %v2679
        %v3371 = vpop.f32.mrb[0].mxu0
        %v3372 = vadd.f32 %v3039, %v3371
        %v3373 = vpop.f32.mrb[0].mxu0
        %v3374 = vadd.f32 %v3041, %v3373
        %v3375 = vpop.f32.mrb[0].mxu0
        %v3376 = vadd.f32 %v3043, %v3375
        %v3377 = vpop.f32.mrb[0].mxu0
        %v3378 = vadd.f32 %v3045, %v3377
        %3379 = vdwg.mxu0
        %v3380 = vld [vmem:[#allocation19] sm:$0xff]
        %v3381 = vld [vmem:[#allocation19 + $0x8] sm:$0xff]
        %v3382 = vld [vmem:[#allocation19 + $0x10] sm:$0xff]
        %v3383 = vld [vmem:[#allocation19 + $0x18] sm:$0xff]
        %v3384 = vld [vmem:[#allocation19 + $0x20] sm:$0xff]
        %v3385 = vld [vmem:[#allocation19 + $0x28] sm:$0xff]
        %v3386 = vld [vmem:[#allocation19 + $0x30] sm:$0xff]
        %v3387 = vld [vmem:[#allocation19 + $0x38] sm:$0xff]
        %v3388 = vld [vmem:[#allocation19 + $0x40] sm:$0xff]
        %v3389 = vld [vmem:[#allocation19 + $0x48] sm:$0xff]
        %v3390 = vld [vmem:[#allocation19 + $0x50] sm:$0xff]
        %v3391 = vld [vmem:[#allocation19 + $0x58] sm:$0xff]
        %v3392 = vld [vmem:[#allocation19 + $0x60] sm:$0xff]
        %v3393 = vld [vmem:[#allocation19 + $0x68] sm:$0xff]
        %v3394 = vld [vmem:[#allocation19 + $0x70] sm:$0xff]
        %v3395 = vld [vmem:[#allocation19 + $0x78] sm:$0xff]
        %v3412 = vunpack.c.l.b16 %v3380
        %v3413 = vunpack.c.h.b16 %v3380
        %v3414 = vunpack.c.l.b16 %v3381
        %v3415 = vunpack.c.h.b16 %v3381
        %v3416 = vunpack.c.l.b16 %v3382
        %v3417 = vunpack.c.h.b16 %v3382
        %v3418 = vunpack.c.l.b16 %v3383
        %v3419 = vunpack.c.h.b16 %v3383
        %v3420 = vunpack.c.l.b16 %v3384
        %v3421 = vunpack.c.h.b16 %v3384
        %v3422 = vunpack.c.l.b16 %v3385
        %v3423 = vunpack.c.h.b16 %v3385
        %v3424 = vunpack.c.l.b16 %v3386
        %v3425 = vunpack.c.h.b16 %v3386
        %v3426 = vunpack.c.l.b16 %v3387
        %v3427 = vunpack.c.h.b16 %v3387
        %v3428 = vunpack.c.l.b16 %v3388
        %v3429 = vunpack.c.h.b16 %v3388
        %v3430 = vunpack.c.l.b16 %v3389
        %v3431 = vunpack.c.h.b16 %v3389
        %v3432 = vunpack.c.l.b16 %v3390
        %v3433 = vunpack.c.h.b16 %v3390
        %v3434 = vunpack.c.l.b16 %v3391
        %v3435 = vunpack.c.h.b16 %v3391
        %v3436 = vunpack.c.l.b16 %v3392
        %v3437 = vunpack.c.h.b16 %v3392
        %v3438 = vunpack.c.l.b16 %v3393
        %v3439 = vunpack.c.h.b16 %v3393
        %v3440 = vunpack.c.l.b16 %v3394
        %v3441 = vunpack.c.h.b16 %v3394
        %v3442 = vunpack.c.l.b16 %v3395
        %v3443 = vunpack.c.h.b16 %v3395
        %v3444 = vpack.c.b16 %v3414, %v3412
        %v3445 = vpack.c.b16 %v3415, %v3413
        %v3446 = vpack.c.b16 %v3418, %v3416
        %v3447 = vpack.c.b16 %v3419, %v3417
        %v3448 = vpack.c.b16 %v3422, %v3420
        %v3449 = vpack.c.b16 %v3423, %v3421
        %v3450 = vpack.c.b16 %v3426, %v3424
        %v3451 = vpack.c.b16 %v3427, %v3425
        %v3452 = vpack.c.b16 %v3430, %v3428
        %v3453 = vpack.c.b16 %v3431, %v3429
        %v3454 = vpack.c.b16 %v3434, %v3432
        %v3455 = vpack.c.b16 %v3435, %v3433
        %v3456 = vpack.c.b16 %v3438, %v3436
        %v3457 = vpack.c.b16 %v3439, %v3437
        %v3458 = vpack.c.b16 %v3442, %v3440
        %v3459 = vpack.c.b16 %v3443, %v3441
        %3476 = vmatprep.subr.bf16.mxu0 %v3445
        %3477 = vmatpush1.bf16.msra.mxu0 %v3444
        %3478 = vmatprep.subr.bf16.mxu0 %v3447
        %3479 = vmatpush1.bf16.msra.mxu0 %v3446
        %3480 = vmatprep.subr.bf16.mxu0 %v3449
        %3481 = vmatpush1.bf16.msra.mxu0 %v3448
        %3482 = vmatprep.subr.bf16.mxu0 %v3451
        %3483 = vmatpush1.bf16.msra.mxu0 %v3450
        %3484 = vmatprep.subr.bf16.mxu0 %v3453
        %3485 = vmatpush1.bf16.msra.mxu0 %v3452
        %3486 = vmatprep.subr.bf16.mxu0 %v3455
        %3487 = vmatpush1.bf16.msra.mxu0 %v3454
        %3488 = vmatprep.subr.bf16.mxu0 %v3457
        %3489 = vmatpush1.bf16.msra.mxu0 %v3456
        %3490 = vmatprep.subr.bf16.mxu0 %v3459
        %3491 = vmatpush1.bf16.msra.mxu0 %v3458
        %3492 = vmatprep.subr.bf16.mxu0 0
        %3493 = vmatpush1.bf16.msra.mxu0 0
        %3494 = vmatprep.subr.bf16.mxu0 0
        %3495 = vmatpush1.bf16.msra.mxu0 0
        %3496 = vmatprep.subr.bf16.mxu0 0
        %3497 = vmatpush1.bf16.msra.mxu0 0
        %3498 = vmatprep.subr.bf16.mxu0 0
        %3499 = vmatpush1.bf16.msra.mxu0 0
        %3500 = vmatprep.subr.bf16.mxu0 0
        %3501 = vmatpush1.bf16.msra.mxu0 0
        %3502 = vmatprep.subr.bf16.mxu0 0
        %3503 = vmatpush1.bf16.msra.mxu0 0
        %3504 = vmatprep.subr.bf16.mxu0 0
        %3505 = vmatpush1.bf16.msra.mxu0 0
        %3506 = vmatprep.subr.bf16.mxu0 0
        %3507 = vmatpush1.bf16.msra.mxu0 0
        %3508 = vmatprep.mubr.bf16.mxu0 0
        %3509 = vmatmul.mubr.bf16.gmra.mrb[0].mxu0 %v2662
        %v3510 = vpop.f32.mrb[0].mxu0
        %v3511 = vadd.f32 0.0, %v3510
        %v3512 = vpop.f32.mrb[0].mxu0
        %v3513 = vadd.f32 0.0, %v3512
        %v3514 = vpop.f32.mrb[0].mxu0
        %v3515 = vadd.f32 0.0, %v3514
        %v3516 = vpop.f32.mrb[0].mxu0
        %v3517 = vadd.f32 0.0, %v3516
        %3518 = vmatprep.mubr.bf16.mxu0 0
        %3519 = vmatmul.mubr.bf16.gmra.mrb[0].mxu0 %v2663
        %v3520 = vpop.f32.mrb[0].mxu0
        %v3521 = vadd.f32 0.0, %v3520
        %v3522 = vpop.f32.mrb[0].mxu0
        %v3523 = vadd.f32 0.0, %v3522
        %v3524 = vpop.f32.mrb[0].mxu0
        %v3525 = vadd.f32 0.0, %v3524
        %v3526 = vpop.f32.mrb[0].mxu0
        %v3527 = vadd.f32 0.0, %v3526
        %3528 = vmatprep.mubr.bf16.mxu0 0
        %3529 = vmatmul.mubr.bf16.gmra.mrb[0].mxu0 %v2664
        %v3530 = vpop.f32.mrb[0].mxu0
        %v3531 = vadd.f32 0.0, %v3530
        %v3532 = vpop.f32.mrb[0].mxu0
        %v3533 = vadd.f32 0.0, %v3532
        %v3534 = vpop.f32.mrb[0].mxu0
        %v3535 = vadd.f32 0.0, %v3534
        %v3536 = vpop.f32.mrb[0].mxu0
        %v3537 = vadd.f32 0.0, %v3536
        %3538 = vmatprep.mubr.bf16.mxu0 0
        %3539 = vmatmul.mubr.bf16.gmra.mrb[0].mxu0 %v2665
        %v3540 = vpop.f32.mrb[0].mxu0
        %v3541 = vadd.f32 0.0, %v3540
        %v3542 = vpop.f32.mrb[0].mxu0
        %v3543 = vadd.f32 0.0, %v3542
        %v3544 = vpop.f32.mrb[0].mxu0
        %v3545 = vadd.f32 0.0, %v3544
        %v3546 = vpop.f32.mrb[0].mxu0
        %v3547 = vadd.f32 0.0, %v3546
        %3548 = vmatprep.mubr.bf16.mxu0 0
        %3549 = vmatmul.mubr.bf16.gmra.mrb[0].mxu0 %v2666
        %v3550 = vpop.f32.mrb[0].mxu0
        %v3551 = vadd.f32 0.0, %v3550
        %v3552 = vpop.f32.mrb[0].mxu0
        %v3553 = vadd.f32 0.0, %v3552
        %v3554 = vpop.f32.mrb[0].mxu0
        %v3555 = vadd.f32 0.0, %v3554
        %v3556 = vpop.f32.mrb[0].mxu0
        %v3557 = vadd.f32 0.0, %v3556
        %3558 = vmatprep.mubr.bf16.mxu0 0
        %3559 = vmatmul.mubr.bf16.gmra.mrb[0].mxu0 %v2667
        %v3560 = vpop.f32.mrb[0].mxu0
        %v3561 = vadd.f32 0.0, %v3560
        %v3562 = vpop.f32.mrb[0].mxu0
        %v3563 = vadd.f32 0.0, %v3562
        %v3564 = vpop.f32.mrb[0].mxu0
        %v3565 = vadd.f32 0.0, %v3564
        %v3566 = vpop.f32.mrb[0].mxu0
        %v3567 = vadd.f32 0.0, %v3566
        %3568 = vmatprep.mubr.bf16.mxu0 0
        %3569 = vmatmul.mubr.bf16.gmra.mrb[0].mxu0 %v2668
        %v3570 = vpop.f32.mrb[0].mxu0
        %v3571 = vadd.f32 0.0, %v3570
        %v3572 = vpop.f32.mrb[0].mxu0
        %v3573 = vadd.f32 0.0, %v3572
        %v3574 = vpop.f32.mrb[0].mxu0
        %v3575 = vadd.f32 0.0, %v3574
        %v3576 = vpop.f32.mrb[0].mxu0
        %v3577 = vadd.f32 0.0, %v3576
        %3578 = vmatprep.mubr.bf16.mxu0 0
        %3579 = vmatmul.mubr.bf16.gmra.mrb[0].mxu0 %v2669
        %v3580 = vpop.f32.mrb[0].mxu0
        %v3581 = vadd.f32 0.0, %v3580
        %v3582 = vpop.f32.mrb[0].mxu0
        %v3583 = vadd.f32 0.0, %v3582
        %v3584 = vpop.f32.mrb[0].mxu0
        %v3585 = vadd.f32 0.0, %v3584
        %v3586 = vpop.f32.mrb[0].mxu0
        %v3587 = vadd.f32 0.0, %v3586
        %3588 = vmatprep.mubr.bf16.mxu0 0
        %3589 = vmatmul.mubr.bf16.gmra.mrb[0].mxu0 %v2670
        %v3590 = vpop.f32.mrb[0].mxu0
        %v3591 = vadd.f32 0.0, %v3590
        %v3592 = vpop.f32.mrb[0].mxu0
        %v3593 = vadd.f32 0.0, %v3592
        %v3594 = vpop.f32.mrb[0].mxu0
        %v3595 = vadd.f32 0.0, %v3594
        %v3596 = vpop.f32.mrb[0].mxu0
        %v3597 = vadd.f32 0.0, %v3596
        %3598 = vmatprep.mubr.bf16.mxu0 0
        %3599 = vmatmul.mubr.bf16.gmra.mrb[0].mxu0 %v2671
        %v3600 = vpop.f32.mrb[0].mxu0
        %v3601 = vadd.f32 0.0, %v3600
        %v3602 = vpop.f32.mrb[0].mxu0
        %v3603 = vadd.f32 0.0, %v3602
        %v3604 = vpop.f32.mrb[0].mxu0
        %v3605 = vadd.f32 0.0, %v3604
        %v3606 = vpop.f32.mrb[0].mxu0
        %v3607 = vadd.f32 0.0, %v3606
        %3608 = vmatprep.mubr.bf16.mxu0 0
        %3609 = vmatmul.mubr.bf16.gmra.mrb[0].mxu0 %v2672
        %v3610 = vpop.f32.mrb[0].mxu0
        %v3611 = vadd.f32 0.0, %v3610
        %v3612 = vpop.f32.mrb[0].mxu0
        %v3613 = vadd.f32 0.0, %v3612
        %v3614 = vpop.f32.mrb[0].mxu0
        %v3615 = vadd.f32 0.0, %v3614
        %v3616 = vpop.f32.mrb[0].mxu0
        %v3617 = vadd.f32 0.0, %v3616
        %3618 = vmatprep.mubr.bf16.mxu0 0
        %3619 = vmatmul.mubr.bf16.gmra.mrb[0].mxu0 %v2673
        %v3620 = vpop.f32.mrb[0].mxu0
        %v3621 = vadd.f32 0.0, %v3620
        %v3622 = vpop.f32.mrb[0].mxu0
        %v3623 = vadd.f32 0.0, %v3622
        %v3624 = vpop.f32.mrb[0].mxu0
        %v3625 = vadd.f32 0.0, %v3624
        %v3626 = vpop.f32.mrb[0].mxu0
        %v3627 = vadd.f32 0.0, %v3626
        %3628 = vmatprep.mubr.bf16.mxu0 0
        %3629 = vmatmul.mubr.bf16.gmra.mrb[0].mxu0 %v2674
        %v3630 = vpop.f32.mrb[0].mxu0
        %v3631 = vadd.f32 0.0, %v3630
        %v3632 = vpop.f32.mrb[0].mxu0
        %v3633 = vadd.f32 0.0, %v3632
        %v3634 = vpop.f32.mrb[0].mxu0
        %v3635 = vadd.f32 0.0, %v3634
        %v3636 = vpop.f32.mrb[0].mxu0
        %v3637 = vadd.f32 0.0, %v3636
        %3638 = vmatprep.mubr.bf16.mxu0 0
        %3639 = vmatmul.mubr.bf16.gmra.mrb[0].mxu0 %v2675
        %v3640 = vpop.f32.mrb[0].mxu0
        %v3641 = vadd.f32 0.0, %v3640
        %v3642 = vpop.f32.mrb[0].mxu0
        %v3643 = vadd.f32 0.0, %v3642
        %v3644 = vpop.f32.mrb[0].mxu0
        %v3645 = vadd.f32 0.0, %v3644
        %v3646 = vpop.f32.mrb[0].mxu0
        %v3647 = vadd.f32 0.0, %v3646
        %3648 = vmatprep.mubr.bf16.mxu0 0
        %3649 = vmatmul.mubr.bf16.gmra.mrb[0].mxu0 %v2676
        %v3650 = vpop.f32.mrb[0].mxu0
        %v3651 = vadd.f32 0.0, %v3650
        %v3652 = vpop.f32.mrb[0].mxu0
        %v3653 = vadd.f32 0.0, %v3652
        %v3654 = vpop.f32.mrb[0].mxu0
        %v3655 = vadd.f32 0.0, %v3654
        %v3656 = vpop.f32.mrb[0].mxu0
        %v3657 = vadd.f32 0.0, %v3656
        %3658 = vmatprep.mubr.bf16.mxu0 0
        %3659 = vmatmul.mubr.bf16.gmra.mrb[0].mxu0 %v2677
        %v3660 = vpop.f32.mrb[0].mxu0
        %v3661 = vadd.f32 0.0, %v3660
        %v3662 = vpop.f32.mrb[0].mxu0
        %v3663 = vadd.f32 0.0, %v3662
        %v3664 = vpop.f32.mrb[0].mxu0
        %v3665 = vadd.f32 0.0, %v3664
        %v3666 = vpop.f32.mrb[0].mxu0
        %v3667 = vadd.f32 0.0, %v3666
        %3668 = vmatprep.mubr.bf16.mxu0 0
        %3669 = vmatmul.mubr.bf16.gmra.mrb[0].mxu0 %v2678
        %v3670 = vpop.f32.mrb[0].mxu0
        %v3671 = vadd.f32 0.0, %v3670
        %v3672 = vpop.f32.mrb[0].mxu0
        %v3673 = vadd.f32 0.0, %v3672
        %v3674 = vpop.f32.mrb[0].mxu0
        %v3675 = vadd.f32 0.0, %v3674
        %v3676 = vpop.f32.mrb[0].mxu0
        %v3677 = vadd.f32 0.0, %v3676
        %3678 = vmatprep.mubr.bf16.mxu0 0
        %3679 = vmatmul.mubr.bf16.gmra.mrb[0].mxu0 %v2679
        %v3680 = vpop.f32.mrb[0].mxu0
        %v3681 = vadd.f32 0.0, %v3680
        %v3682 = vpop.f32.mrb[0].mxu0
        %v3683 = vadd.f32 0.0, %v3682
        %v3684 = vpop.f32.mrb[0].mxu0
        %v3685 = vadd.f32 0.0, %v3684
        %v3686 = vpop.f32.mrb[0].mxu0
        %v3687 = vadd.f32 0.0, %v3686
        %3688 = vmatprep.mubr.bf16.mxu0 0
        %3689 = vmatmul.mubr.bf16.gmra.mrb[0].mxu0 %v2680
        %v3690 = vpop.f32.mrb[0].mxu0
        %v3691 = vadd.f32 0.0, %v3690
        %v3692 = vpop.f32.mrb[0].mxu0
        %v3693 = vadd.f32 0.0, %v3692
        %v3694 = vpop.f32.mrb[0].mxu0
        %v3695 = vadd.f32 0.0, %v3694
        %v3696 = vpop.f32.mrb[0].mxu0
        %v3697 = vadd.f32 0.0, %v3696
        %3698 = vmatprep.mubr.bf16.mxu0 0
        %3699 = vmatmul.mubr.bf16.gmra.mrb[0].mxu0 %v2681
        %v3700 = vpop.f32.mrb[0].mxu0
        %v3701 = vadd.f32 0.0, %v3700
        %v3702 = vpop.f32.mrb[0].mxu0
        %v3703 = vadd.f32 0.0, %v3702
        %v3704 = vpop.f32.mrb[0].mxu0
        %v3705 = vadd.f32 0.0, %v3704
        %v3706 = vpop.f32.mrb[0].mxu0
        %v3707 = vadd.f32 0.0, %v3706
        %3708 = vmatprep.mubr.bf16.mxu0 0
        %3709 = vmatmul.mubr.bf16.gmra.mrb[0].mxu0 0
        %v3710 = vpop.f32.mrb[0].mxu0
        %v3711 = vadd.f32 0.0, %v3710
        %v3712 = vpop.f32.mrb[0].mxu0
        %v3713 = vadd.f32 0.0, %v3712
        %v3714 = vpop.f32.mrb[0].mxu0
        %v3715 = vadd.f32 0.0, %v3714
        %v3716 = vpop.f32.mrb[0].mxu0
        %v3717 = vadd.f32 0.0, %v3716
        %3718 = vmatprep.mubr.bf16.mxu0 0
        %3719 = vmatmul.mubr.bf16.gmra.mrb[0].mxu0 0
        %v3720 = vpop.f32.mrb[0].mxu0
        %v3721 = vadd.f32 0.0, %v3720
        %v3722 = vpop.f32.mrb[0].mxu0
        %v3723 = vadd.f32 0.0, %v3722
        %v3724 = vpop.f32.mrb[0].mxu0
        %v3725 = vadd.f32 0.0, %v3724
        %v3726 = vpop.f32.mrb[0].mxu0
        %v3727 = vadd.f32 0.0, %v3726
        %3728 = vdwg.mxu0
        %v3729 = vadd.f32 %v3162, %v3511
        %v3730 = vadd.f32 %v3164, %v3513
        %v3731 = vadd.f32 %v3166, %v3515
        %v3732 = vadd.f32 %v3168, %v3517
        %v3733 = vadd.f32 %v3172, %v3521
        %v3734 = vadd.f32 %v3174, %v3523
        %v3735 = vadd.f32 %v3176, %v3525
        %v3736 = vadd.f32 %v3178, %v3527
        %v3737 = vadd.f32 %v3182, %v3531
        %v3738 = vadd.f32 %v3184, %v3533
        %v3739 = vadd.f32 %v3186, %v3535
        %v3740 = vadd.f32 %v3188, %v3537
        %v3741 = vadd.f32 %v3192, %v3541
        %v3742 = vadd.f32 %v3194, %v3543
        %v3743 = vadd.f32 %v3196, %v3545
        %v3744 = vadd.f32 %v3198, %v3547
        %v3745 = vadd.f32 %v3202, %v3551
        %v3746 = vadd.f32 %v3204, %v3553
        %v3747 = vadd.f32 %v3206, %v3555
        %v3748 = vadd.f32 %v3208, %v3557
        %v3749 = vadd.f32 %v3212, %v3561
        %v3750 = vadd.f32 %v3214, %v3563
        %v3751 = vadd.f32 %v3216, %v3565
        %v3752 = vadd.f32 %v3218, %v3567
        %v3753 = vadd.f32 %v3222, %v3571
        %v3754 = vadd.f32 %v3224, %v3573
        %v3755 = vadd.f32 %v3226, %v3575
        %v3756 = vadd.f32 %v3228, %v3577
        %v3757 = vadd.f32 %v3232, %v3581
        %v3758 = vadd.f32 %v3234, %v3583
        %v3759 = vadd.f32 %v3236, %v3585
        %v3760 = vadd.f32 %v3238, %v3587
        %v3761 = vadd.f32 %v3242, %v3591
        %v3762 = vadd.f32 %v3244, %v3593
        %v3763 = vadd.f32 %v3246, %v3595
        %v3764 = vadd.f32 %v3248, %v3597
        %v3765 = vadd.f32 %v3252, %v3601
        %v3766 = vadd.f32 %v3254, %v3603
        %v3767 = vadd.f32 %v3256, %v3605
        %v3768 = vadd.f32 %v3258, %v3607
        %v3769 = vadd.f32 %v3262, %v3611
        %v3770 = vadd.f32 %v3264, %v3613
        %v3771 = vadd.f32 %v3266, %v3615
        %v3772 = vadd.f32 %v3268, %v3617
        %v3773 = vadd.f32 %v3272, %v3621
        %v3774 = vadd.f32 %v3274, %v3623
        %v3775 = vadd.f32 %v3276, %v3625
        %v3776 = vadd.f32 %v3278, %v3627
        %v3777 = vadd.f32 %v3282, %v3631
        %v3778 = vadd.f32 %v3284, %v3633
        %v3779 = vadd.f32 %v3286, %v3635
        %v3780 = vadd.f32 %v3288, %v3637
        %v3781 = vadd.f32 %v3292, %v3641
        %v3782 = vadd.f32 %v3294, %v3643
        %v3783 = vadd.f32 %v3296, %v3645
        %v3784 = vadd.f32 %v3298, %v3647
        %v3785 = vadd.f32 %v3302, %v3651
        %v3786 = vadd.f32 %v3304, %v3653
        %v3787 = vadd.f32 %v3306, %v3655
        %v3788 = vadd.f32 %v3308, %v3657
        %v3789 = vadd.f32 %v3312, %v3661
        %v3790 = vadd.f32 %v3314, %v3663
        %v3791 = vadd.f32 %v3316, %v3665
        %v3792 = vadd.f32 %v3318, %v3667
        %v3793 = vadd.f32 %v3322, %v3671
        %v3794 = vadd.f32 %v3324, %v3673
        %v3795 = vadd.f32 %v3326, %v3675
        %v3796 = vadd.f32 %v3328, %v3677
        %v3797 = vadd.f32 %v3332, %v3681
        %v3798 = vadd.f32 %v3334, %v3683
        %v3799 = vadd.f32 %v3336, %v3685
        %v3800 = vadd.f32 %v3338, %v3687
        %v3801 = vadd.f32 %v3342, %v3691
        %v3802 = vadd.f32 %v3344, %v3693
        %v3803 = vadd.f32 %v3346, %v3695
        %v3804 = vadd.f32 %v3348, %v3697
        %v3805 = vadd.f32 %v3352, %v3701
        %v3806 = vadd.f32 %v3354, %v3703
        %v3807 = vadd.f32 %v3356, %v3705
        %v3808 = vadd.f32 %v3358, %v3707
        %v3809 = vadd.f32 %v3362, %v3711
        %v3810 = vadd.f32 %v3364, %v3713
        %v3811 = vadd.f32 %v3366, %v3715
        %v3812 = vadd.f32 %v3368, %v3717
        %v3813 = vadd.f32 %v3372, %v3721
        %v3814 = vadd.f32 %v3374, %v3723
        %v3815 = vadd.f32 %v3376, %v3725
        %v3816 = vadd.f32 %v3378, %v3727
        %v3817 = vld [vmem:[#allocation20] sm:$0x3]
        %v3818 = vld [vmem:[#allocation22] sm:$0x3]
        %v3820 = vlaneseq
        %v3821 = vshrl.u32 %v3820, 7
        %v3822 = vsub.s32 0, %v3821
        %v3823 = vrot.slane %v3817, %v3822
        %v3824 = vlaneseq
        %v3825 = vshrl.u32 %v3824, 7
        %v3826 = vsub.s32 1, %v3825
        %v3827 = vrot.slane %v3817, %v3826
        %v3830 = vmul.f32 %v3729, %v3823
        %v3831 = vmul.f32 %v3730, %v3827
        %v3832 = vmul.f32 %v3731, %v3823
        %v3833 = vmul.f32 %v3732, %v3827
        %v3834 = vmul.f32 %v3733, %v3823
        %v3835 = vmul.f32 %v3734, %v3827
        %v3836 = vmul.f32 %v3735, %v3823
        %v3837 = vmul.f32 %v3736, %v3827
        %v3838 = vmul.f32 %v3737, %v3823
        %v3839 = vmul.f32 %v3738, %v3827
        %v3840 = vmul.f32 %v3739, %v3823
        %v3841 = vmul.f32 %v3740, %v3827
        %v3842 = vmul.f32 %v3741, %v3823
        %v3843 = vmul.f32 %v3742, %v3827
        %v3844 = vmul.f32 %v3743, %v3823
        %v3845 = vmul.f32 %v3744, %v3827
        %v3846 = vmul.f32 %v3745, %v3823
        %v3847 = vmul.f32 %v3746, %v3827
        %v3848 = vmul.f32 %v3747, %v3823
        %v3849 = vmul.f32 %v3748, %v3827
        %v3850 = vmul.f32 %v3749, %v3823
        %v3851 = vmul.f32 %v3750, %v3827
        %v3852 = vmul.f32 %v3751, %v3823
        %v3853 = vmul.f32 %v3752, %v3827
        %v3854 = vmul.f32 %v3753, %v3823
        %v3855 = vmul.f32 %v3754, %v3827
        %v3856 = vmul.f32 %v3755, %v3823
        %v3857 = vmul.f32 %v3756, %v3827
        %v3858 = vmul.f32 %v3757, %v3823
        %v3859 = vmul.f32 %v3758, %v3827
        %v3860 = vmul.f32 %v3759, %v3823
        %v3861 = vmul.f32 %v3760, %v3827
        %v3862 = vmul.f32 %v3761, %v3823
        %v3863 = vmul.f32 %v3762, %v3827
        %v3864 = vmul.f32 %v3763, %v3823
        %v3865 = vmul.f32 %v3764, %v3827
        %v3866 = vmul.f32 %v3765, %v3823
        %v3867 = vmul.f32 %v3766, %v3827
        %v3868 = vmul.f32 %v3767, %v3823
        %v3869 = vmul.f32 %v3768, %v3827
        %v3870 = vmul.f32 %v3769, %v3823
        %v3871 = vmul.f32 %v3770, %v3827
        %v3872 = vmul.f32 %v3771, %v3823
        %v3873 = vmul.f32 %v3772, %v3827
        %v3874 = vmul.f32 %v3773, %v3823
        %v3875 = vmul.f32 %v3774, %v3827
        %v3876 = vmul.f32 %v3775, %v3823
        %v3877 = vmul.f32 %v3776, %v3827
        %v3878 = vmul.f32 %v3777, %v3823
        %v3879 = vmul.f32 %v3778, %v3827
        %v3880 = vmul.f32 %v3779, %v3823
        %v3881 = vmul.f32 %v3780, %v3827
        %v3882 = vmul.f32 %v3781, %v3823
        %v3883 = vmul.f32 %v3782, %v3827
        %v3884 = vmul.f32 %v3783, %v3823
        %v3885 = vmul.f32 %v3784, %v3827
        %v3886 = vmul.f32 %v3785, %v3823
        %v3887 = vmul.f32 %v3786, %v3827
        %v3888 = vmul.f32 %v3787, %v3823
        %v3889 = vmul.f32 %v3788, %v3827
        %v3890 = vmul.f32 %v3789, %v3823
        %v3891 = vmul.f32 %v3790, %v3827
        %v3892 = vmul.f32 %v3791, %v3823
        %v3893 = vmul.f32 %v3792, %v3827
        %v3894 = vmul.f32 %v3793, %v3823
        %v3895 = vmul.f32 %v3794, %v3827
        %v3896 = vmul.f32 %v3795, %v3823
        %v3897 = vmul.f32 %v3796, %v3827
        %v3898 = vmul.f32 %v3797, %v3823
        %v3899 = vmul.f32 %v3798, %v3827
        %v3900 = vmul.f32 %v3799, %v3823
        %v3901 = vmul.f32 %v3800, %v3827
        %v3902 = vmul.f32 %v3801, %v3823
        %v3903 = vmul.f32 %v3802, %v3827
        %v3904 = vmul.f32 %v3803, %v3823
        %v3905 = vmul.f32 %v3804, %v3827
        %v3906 = vmul.f32 %v3805, %v3823
        %v3907 = vmul.f32 %v3806, %v3827
        %v3908 = vmul.f32 %v3807, %v3823
        %v3909 = vmul.f32 %v3808, %v3827
        %v3910 = vmul.f32 %v3809, %v3823
        %v3911 = vmul.f32 %v3810, %v3827
        %v3912 = vmul.f32 %v3811, %v3823
        %v3913 = vmul.f32 %v3812, %v3827
        %v3914 = vmul.f32 %v3813, %v3823
        %v3915 = vmul.f32 %v3814, %v3827
        %v3916 = vmul.f32 %v3815, %v3823
        %v3917 = vmul.f32 %v3816, %v3827
        %v3919 = vlaneseq
        %v3920 = vshrl.u32 %v3919, 7
        %v3921 = vsub.s32 0, %v3920
        %v3922 = vrot.slane %v3818, %v3921
        %v3923 = vlaneseq
        %v3924 = vshrl.u32 %v3923, 7
        %v3925 = vsub.s32 1, %v3924
        %v3926 = vrot.slane %v3818, %v3925
        %v3929 = vadd.f32 %v3830, %v3922
        %v3930 = vadd.f32 %v3831, %v3926
        %v3931 = vadd.f32 %v3832, %v3922
        %v3932 = vadd.f32 %v3833, %v3926
        %v3933 = vadd.f32 %v3834, %v3922
        %v3934 = vadd.f32 %v3835, %v3926
        %v3935 = vadd.f32 %v3836, %v3922
        %v3936 = vadd.f32 %v3837, %v3926
        %v3937 = vadd.f32 %v3838, %v3922
        %v3938 = vadd.f32 %v3839, %v3926
        %v3939 = vadd.f32 %v3840, %v3922
        %v3940 = vadd.f32 %v3841, %v3926
        %v3941 = vadd.f32 %v3842, %v3922
        %v3942 = vadd.f32 %v3843, %v3926
        %v3943 = vadd.f32 %v3844, %v3922
        %v3944 = vadd.f32 %v3845, %v3926
        %v3945 = vadd.f32 %v3846, %v3922
        %v3946 = vadd.f32 %v3847, %v3926
        %v3947 = vadd.f32 %v3848, %v3922
        %v3948 = vadd.f32 %v3849, %v3926
        %v3949 = vadd.f32 %v3850, %v3922
        %v3950 = vadd.f32 %v3851, %v3926
        %v3951 = vadd.f32 %v3852, %v3922
        %v3952 = vadd.f32 %v3853, %v3926
        %v3953 = vadd.f32 %v3854, %v3922
        %v3954 = vadd.f32 %v3855, %v3926
        %v3955 = vadd.f32 %v3856, %v3922
        %v3956 = vadd.f32 %v3857, %v3926
        %v3957 = vadd.f32 %v3858, %v3922
        %v3958 = vadd.f32 %v3859, %v3926
        %v3959 = vadd.f32 %v3860, %v3922
        %v3960 = vadd.f32 %v3861, %v3926
        %v3961 = vadd.f32 %v3862, %v3922
        %v3962 = vadd.f32 %v3863, %v3926
        %v3963 = vadd.f32 %v3864, %v3922
        %v3964 = vadd.f32 %v3865, %v3926
        %v3965 = vadd.f32 %v3866, %v3922
        %v3966 = vadd.f32 %v3867, %v3926
        %v3967 = vadd.f32 %v3868, %v3922
        %v3968 = vadd.f32 %v3869, %v3926
        %v3969 = vadd.f32 %v3870, %v3922
        %v3970 = vadd.f32 %v3871, %v3926
        %v3971 = vadd.f32 %v3872, %v3922
        %v3972 = vadd.f32 %v3873, %v3926
        %v3973 = vadd.f32 %v3874, %v3922
        %v3974 = vadd.f32 %v3875, %v3926
        %v3975 = vadd.f32 %v3876, %v3922
        %v3976 = vadd.f32 %v3877, %v3926
        %v3977 = vadd.f32 %v3878, %v3922
        %v3978 = vadd.f32 %v3879, %v3926
        %v3979 = vadd.f32 %v3880, %v3922
        %v3980 = vadd.f32 %v3881, %v3926
        %v3981 = vadd.f32 %v3882, %v3922
        %v3982 = vadd.f32 %v3883, %v3926
        %v3983 = vadd.f32 %v3884, %v3922
        %v3984 = vadd.f32 %v3885, %v3926
        %v3985 = vadd.f32 %v3886, %v3922
        %v3986 = vadd.f32 %v3887, %v3926
        %v3987 = vadd.f32 %v3888, %v3922
        %v3988 = vadd.f32 %v3889, %v3926
        %v3989 = vadd.f32 %v3890, %v3922
        %v3990 = vadd.f32 %v3891, %v3926
        %v3991 = vadd.f32 %v3892, %v3922
        %v3992 = vadd.f32 %v3893, %v3926
        %v3993 = vadd.f32 %v3894, %v3922
        %v3994 = vadd.f32 %v3895, %v3926
        %v3995 = vadd.f32 %v3896, %v3922
        %v3996 = vadd.f32 %v3897, %v3926
        %v3997 = vadd.f32 %v3898, %v3922
        %v3998 = vadd.f32 %v3899, %v3926
        %v3999 = vadd.f32 %v3900, %v3922
        %v4000 = vadd.f32 %v3901, %v3926
        %v4001 = vadd.f32 %v3902, %v3922
        %v4002 = vadd.f32 %v3903, %v3926
        %v4003 = vadd.f32 %v3904, %v3922
        %v4004 = vadd.f32 %v3905, %v3926
        %v4005 = vadd.f32 %v3906, %v3922
        %v4006 = vadd.f32 %v3907, %v3926
        %v4007 = vadd.f32 %v3908, %v3922
        %v4008 = vadd.f32 %v3909, %v3926
        %v4009 = vadd.f32 %v3910, %v3922
        %v4010 = vadd.f32 %v3911, %v3926
        %v4011 = vadd.f32 %v3912, %v3922
        %v4012 = vadd.f32 %v3913, %v3926
        %v4013 = vadd.f32 %v3914, %v3922
        %v4014 = vadd.f32 %v3915, %v3926
        %v4015 = vadd.f32 %v3916, %v3922
        %v4016 = vadd.f32 %v3917, %v3926
        %vm4017 = vcmp.gt.f32.partialorder %v3929, 0.0
        %vm4018 = vcmp.gt.f32.partialorder %v3930, 0.0
        %vm4019 = vcmp.gt.f32.partialorder %v3931, 0.0
        %vm4020 = vcmp.gt.f32.partialorder %v3932, 0.0
        %vm4021 = vcmp.gt.f32.partialorder %v3933, 0.0
        %vm4022 = vcmp.gt.f32.partialorder %v3934, 0.0
        %vm4023 = vcmp.gt.f32.partialorder %v3935, 0.0
        %vm4024 = vcmp.gt.f32.partialorder %v3936, 0.0
        %vm4025 = vcmp.gt.f32.partialorder %v3937, 0.0
        %vm4026 = vcmp.gt.f32.partialorder %v3938, 0.0
        %vm4027 = vcmp.gt.f32.partialorder %v3939, 0.0
        %vm4028 = vcmp.gt.f32.partialorder %v3940, 0.0
        %vm4029 = vcmp.gt.f32.partialorder %v3941, 0.0
        %vm4030 = vcmp.gt.f32.partialorder %v3942, 0.0
        %vm4031 = vcmp.gt.f32.partialorder %v3943, 0.0
        %vm4032 = vcmp.gt.f32.partialorder %v3944, 0.0
        %vm4033 = vcmp.gt.f32.partialorder %v3945, 0.0
        %vm4034 = vcmp.gt.f32.partialorder %v3946, 0.0
        %vm4035 = vcmp.gt.f32.partialorder %v3947, 0.0
        %vm4036 = vcmp.gt.f32.partialorder %v3948, 0.0
        %vm4037 = vcmp.gt.f32.partialorder %v3949, 0.0
        %vm4038 = vcmp.gt.f32.partialorder %v3950, 0.0
        %vm4039 = vcmp.gt.f32.partialorder %v3951, 0.0
        %vm4040 = vcmp.gt.f32.partialorder %v3952, 0.0
        %vm4041 = vcmp.gt.f32.partialorder %v3953, 0.0
        %vm4042 = vcmp.gt.f32.partialorder %v3954, 0.0
        %vm4043 = vcmp.gt.f32.partialorder %v3955, 0.0
        %vm4044 = vcmp.gt.f32.partialorder %v3956, 0.0
        %vm4045 = vcmp.gt.f32.partialorder %v3957, 0.0
        %vm4046 = vcmp.gt.f32.partialorder %v3958, 0.0
        %vm4047 = vcmp.gt.f32.partialorder %v3959, 0.0
        %vm4048 = vcmp.gt.f32.partialorder %v3960, 0.0
        %vm4049 = vcmp.gt.f32.partialorder %v3961, 0.0
        %vm4050 = vcmp.gt.f32.partialorder %v3962, 0.0
        %vm4051 = vcmp.gt.f32.partialorder %v3963, 0.0
        %vm4052 = vcmp.gt.f32.partialorder %v3964, 0.0
        %vm4053 = vcmp.gt.f32.partialorder %v3965, 0.0
        %vm4054 = vcmp.gt.f32.partialorder %v3966, 0.0
        %vm4055 = vcmp.gt.f32.partialorder %v3967, 0.0
        %vm4056 = vcmp.gt.f32.partialorder %v3968, 0.0
        %vm4057 = vcmp.gt.f32.partialorder %v3969, 0.0
        %vm4058 = vcmp.gt.f32.partialorder %v3970, 0.0
        %vm4059 = vcmp.gt.f32.partialorder %v3971, 0.0
        %vm4060 = vcmp.gt.f32.partialorder %v3972, 0.0
        %vm4061 = vcmp.gt.f32.partialorder %v3973, 0.0
        %vm4062 = vcmp.gt.f32.partialorder %v3974, 0.0
        %vm4063 = vcmp.gt.f32.partialorder %v3975, 0.0
        %vm4064 = vcmp.gt.f32.partialorder %v3976, 0.0
        %vm4065 = vcmp.gt.f32.partialorder %v3977, 0.0
        %vm4066 = vcmp.gt.f32.partialorder %v3978, 0.0
        %vm4067 = vcmp.gt.f32.partialorder %v3979, 0.0
        %vm4068 = vcmp.gt.f32.partialorder %v3980, 0.0
        %vm4069 = vcmp.gt.f32.partialorder %v3981, 0.0
        %vm4070 = vcmp.gt.f32.partialorder %v3982, 0.0
        %vm4071 = vcmp.gt.f32.partialorder %v3983, 0.0
        %vm4072 = vcmp.gt.f32.partialorder %v3984, 0.0
        %vm4073 = vcmp.gt.f32.partialorder %v3985, 0.0
        %vm4074 = vcmp.gt.f32.partialorder %v3986, 0.0
        %vm4075 = vcmp.gt.f32.partialorder %v3987, 0.0
        %vm4076 = vcmp.gt.f32.partialorder %v3988, 0.0
        %vm4077 = vcmp.gt.f32.partialorder %v3989, 0.0
        %vm4078 = vcmp.gt.f32.partialorder %v3990, 0.0
        %vm4079 = vcmp.gt.f32.partialorder %v3991, 0.0
        %vm4080 = vcmp.gt.f32.partialorder %v3992, 0.0
        %vm4081 = vcmp.gt.f32.partialorder %v3993, 0.0
        %vm4082 = vcmp.gt.f32.partialorder %v3994, 0.0
        %vm4083 = vcmp.gt.f32.partialorder %v3995, 0.0
        %vm4084 = vcmp.gt.f32.partialorder %v3996, 0.0
        %vm4085 = vcmp.gt.f32.partialorder %v3997, 0.0
        %vm4086 = vcmp.gt.f32.partialorder %v3998, 0.0
        %vm4087 = vcmp.gt.f32.partialorder %v3999, 0.0
        %vm4088 = vcmp.gt.f32.partialorder %v4000, 0.0
        %vm4089 = vcmp.gt.f32.partialorder %v4001, 0.0
        %vm4090 = vcmp.gt.f32.partialorder %v4002, 0.0
        %vm4091 = vcmp.gt.f32.partialorder %v4003, 0.0
        %vm4092 = vcmp.gt.f32.partialorder %v4004, 0.0
        %vm4093 = vcmp.gt.f32.partialorder %v4005, 0.0
        %vm4094 = vcmp.gt.f32.partialorder %v4006, 0.0
        %vm4095 = vcmp.gt.f32.partialorder %v4007, 0.0
        %vm4096 = vcmp.gt.f32.partialorder %v4008, 0.0
        %vm4097 = vcmp.gt.f32.partialorder %v4009, 0.0
        %vm4098 = vcmp.gt.f32.partialorder %v4010, 0.0
        %vm4099 = vcmp.gt.f32.partialorder %v4011, 0.0
        %vm4100 = vcmp.gt.f32.partialorder %v4012, 0.0
        %vm4101 = vcmp.gt.f32.partialorder %v4013, 0.0
        %vm4102 = vcmp.gt.f32.partialorder %v4014, 0.0
        %vm4103 = vcmp.gt.f32.partialorder %v4015, 0.0
        %vm4104 = vcmp.gt.f32.partialorder %v4016, 0.0
        %v4105 = vmul.f32 %v3929, 0.1
        %v4106 = vmul.f32 %v3930, 0.1
        %v4107 = vmul.f32 %v3931, 0.1
        %v4108 = vmul.f32 %v3932, 0.1
        %v4109 = vmul.f32 %v3933, 0.1
        %v4110 = vmul.f32 %v3934, 0.1
        %v4111 = vmul.f32 %v3935, 0.1
        %v4112 = vmul.f32 %v3936, 0.1
        %v4113 = vmul.f32 %v3937, 0.1
        %v4114 = vmul.f32 %v3938, 0.1
        %v4115 = vmul.f32 %v3939, 0.1
        %v4116 = vmul.f32 %v3940, 0.1
        %v4117 = vmul.f32 %v3941, 0.1
        %v4118 = vmul.f32 %v3942, 0.1
        %v4119 = vmul.f32 %v3943, 0.1
        %v4120 = vmul.f32 %v3944, 0.1
        %v4121 = vmul.f32 %v3945, 0.1
        %v4122 = vmul.f32 %v3946, 0.1
        %v4123 = vmul.f32 %v3947, 0.1
        %v4124 = vmul.f32 %v3948, 0.1
        %v4125 = vmul.f32 %v3949, 0.1
        %v4126 = vmul.f32 %v3950, 0.1
        %v4127 = vmul.f32 %v3951, 0.1
        %v4128 = vmul.f32 %v3952, 0.1
        %v4129 = vmul.f32 %v3953, 0.1
        %v4130 = vmul.f32 %v3954, 0.1
        %v4131 = vmul.f32 %v3955, 0.1
        %v4132 = vmul.f32 %v3956, 0.1
        %v4133 = vmul.f32 %v3957, 0.1
        %v4134 = vmul.f32 %v3958, 0.1
        %v4135 = vmul.f32 %v3959, 0.1
        %v4136 = vmul.f32 %v3960, 0.1
        %v4137 = vmul.f32 %v3961, 0.1
        %v4138 = vmul.f32 %v3962, 0.1
        %v4139 = vmul.f32 %v3963, 0.1
        %v4140 = vmul.f32 %v3964, 0.1
        %v4141 = vmul.f32 %v3965, 0.1
        %v4142 = vmul.f32 %v3966, 0.1
        %v4143 = vmul.f32 %v3967, 0.1
        %v4144 = vmul.f32 %v3968, 0.1
        %v4145 = vmul.f32 %v3969, 0.1
        %v4146 = vmul.f32 %v3970, 0.1
        %v4147 = vmul.f32 %v3971, 0.1
        %v4148 = vmul.f32 %v3972, 0.1
        %v4149 = vmul.f32 %v3973, 0.1
        %v4150 = vmul.f32 %v3974, 0.1
        %v4151 = vmul.f32 %v3975, 0.1
        %v4152 = vmul.f32 %v3976, 0.1
        %v4153 = vmul.f32 %v3977, 0.1
        %v4154 = vmul.f32 %v3978, 0.1
        %v4155 = vmul.f32 %v3979, 0.1
        %v4156 = vmul.f32 %v3980, 0.1
        %v4157 = vmul.f32 %v3981, 0.1
        %v4158 = vmul.f32 %v3982, 0.1
        %v4159 = vmul.f32 %v3983, 0.1
        %v4160 = vmul.f32 %v3984, 0.1
        %v4161 = vmul.f32 %v3985, 0.1
        %v4162 = vmul.f32 %v3986, 0.1
        %v4163 = vmul.f32 %v3987, 0.1
        %v4164 = vmul.f32 %v3988, 0.1
        %v4165 = vmul.f32 %v3989, 0.1
        %v4166 = vmul.f32 %v3990, 0.1
        %v4167 = vmul.f32 %v3991, 0.1
        %v4168 = vmul.f32 %v3992, 0.1
        %v4169 = vmul.f32 %v3993, 0.1
        %v4170 = vmul.f32 %v3994, 0.1
        %v4171 = vmul.f32 %v3995, 0.1
        %v4172 = vmul.f32 %v3996, 0.1
        %v4173 = vmul.f32 %v3997, 0.1
        %v4174 = vmul.f32 %v3998, 0.1
        %v4175 = vmul.f32 %v3999, 0.1
        %v4176 = vmul.f32 %v4000, 0.1
        %v4177 = vmul.f32 %v4001, 0.1
        %v4178 = vmul.f32 %v4002, 0.1
        %v4179 = vmul.f32 %v4003, 0.1
        %v4180 = vmul.f32 %v4004, 0.1
        %v4181 = vmul.f32 %v4005, 0.1
        %v4182 = vmul.f32 %v4006, 0.1
        %v4183 = vmul.f32 %v4007, 0.1
        %v4184 = vmul.f32 %v4008, 0.1
        %v4185 = vmul.f32 %v4009, 0.1
        %v4186 = vmul.f32 %v4010, 0.1
        %v4187 = vmul.f32 %v4011, 0.1
        %v4188 = vmul.f32 %v4012, 0.1
        %v4189 = vmul.f32 %v4013, 0.1
        %v4190 = vmul.f32 %v4014, 0.1
        %v4191 = vmul.f32 %v4015, 0.1
        %v4192 = vmul.f32 %v4016, 0.1
        %v4193 = vsel %vm4017, %v3929, %v4105
        %v4194 = vsel %vm4018, %v3930, %v4106
        %v4195 = vsel %vm4019, %v3931, %v4107
        %v4196 = vsel %vm4020, %v3932, %v4108
        %v4197 = vsel %vm4021, %v3933, %v4109
        %v4198 = vsel %vm4022, %v3934, %v4110
        %v4199 = vsel %vm4023, %v3935, %v4111
        %v4200 = vsel %vm4024, %v3936, %v4112
        %v4201 = vsel %vm4025, %v3937, %v4113
        %v4202 = vsel %vm4026, %v3938, %v4114
        %v4203 = vsel %vm4027, %v3939, %v4115
        %v4204 = vsel %vm4028, %v3940, %v4116
        %v4205 = vsel %vm4029, %v3941, %v4117
        %v4206 = vsel %vm4030, %v3942, %v4118
        %v4207 = vsel %vm4031, %v3943, %v4119
        %v4208 = vsel %vm4032, %v3944, %v4120
        %v4209 = vsel %vm4033, %v3945, %v4121
        %v4210 = vsel %vm4034, %v3946, %v4122
        %v4211 = vsel %vm4035, %v3947, %v4123
        %v4212 = vsel %vm4036, %v3948, %v4124
        %v4213 = vsel %vm4037, %v3949, %v4125
        %v4214 = vsel %vm4038, %v3950, %v4126
        %v4215 = vsel %vm4039, %v3951, %v4127
        %v4216 = vsel %vm4040, %v3952, %v4128
        %v4217 = vsel %vm4041, %v3953, %v4129
        %v4218 = vsel %vm4042, %v3954, %v4130
        %v4219 = vsel %vm4043, %v3955, %v4131
        %v4220 = vsel %vm4044, %v3956, %v4132
        %v4221 = vsel %vm4045, %v3957, %v4133
        %v4222 = vsel %vm4046, %v3958, %v4134
        %v4223 = vsel %vm4047, %v3959, %v4135
        %v4224 = vsel %vm4048, %v3960, %v4136
        %v4225 = vsel %vm4049, %v3961, %v4137
        %v4226 = vsel %vm4050, %v3962, %v4138
        %v4227 = vsel %vm4051, %v3963, %v4139
        %v4228 = vsel %vm4052, %v3964, %v4140
        %v4229 = vsel %vm4053, %v3965, %v4141
        %v4230 = vsel %vm4054, %v3966, %v4142
        %v4231 = vsel %vm4055, %v3967, %v4143
        %v4232 = vsel %vm4056, %v3968, %v4144
        %v4233 = vsel %vm4057, %v3969, %v4145
        %v4234 = vsel %vm4058, %v3970, %v4146
        %v4235 = vsel %vm4059, %v3971, %v4147
        %v4236 = vsel %vm4060, %v3972, %v4148
        %v4237 = vsel %vm4061, %v3973, %v4149
        %v4238 = vsel %vm4062, %v3974, %v4150
        %v4239 = vsel %vm4063, %v3975, %v4151
        %v4240 = vsel %vm4064, %v3976, %v4152
        %v4241 = vsel %vm4065, %v3977, %v4153
        %v4242 = vsel %vm4066, %v3978, %v4154
        %v4243 = vsel %vm4067, %v3979, %v4155
        %v4244 = vsel %vm4068, %v3980, %v4156
        %v4245 = vsel %vm4069, %v3981, %v4157
        %v4246 = vsel %vm4070, %v3982, %v4158
        %v4247 = vsel %vm4071, %v3983, %v4159
        %v4248 = vsel %vm4072, %v3984, %v4160
        %v4249 = vsel %vm4073, %v3985, %v4161
        %v4250 = vsel %vm4074, %v3986, %v4162
        %v4251 = vsel %vm4075, %v3987, %v4163
        %v4252 = vsel %vm4076, %v3988, %v4164
        %v4253 = vsel %vm4077, %v3989, %v4165
        %v4254 = vsel %vm4078, %v3990, %v4166
        %v4255 = vsel %vm4079, %v3991, %v4167
        %v4256 = vsel %vm4080, %v3992, %v4168
        %v4257 = vsel %vm4081, %v3993, %v4169
        %v4258 = vsel %vm4082, %v3994, %v4170
        %v4259 = vsel %vm4083, %v3995, %v4171
        %v4260 = vsel %vm4084, %v3996, %v4172
        %v4261 = vsel %vm4085, %v3997, %v4173
        %v4262 = vsel %vm4086, %v3998, %v4174
        %v4263 = vsel %vm4087, %v3999, %v4175
        %v4264 = vsel %vm4088, %v4000, %v4176
        %v4265 = vsel %vm4089, %v4001, %v4177
        %v4266 = vsel %vm4090, %v4002, %v4178
        %v4267 = vsel %vm4091, %v4003, %v4179
        %v4268 = vsel %vm4092, %v4004, %v4180
        %v4269 = vsel %vm4093, %v4005, %v4181
        %v4270 = vsel %vm4094, %v4006, %v4182
        %v4271 = vsel %vm4095, %v4007, %v4183
        %v4272 = vsel %vm4096, %v4008, %v4184
        %v4273 = vsel %vm4097, %v4009, %v4185
        %v4274 = vsel %vm4098, %v4010, %v4186
        %v4275 = vsel %vm4099, %v4011, %v4187
        %v4276 = vsel %vm4100, %v4012, %v4188
        %v4277 = vsel %vm4101, %v4013, %v4189
        %v4278 = vsel %vm4102, %v4014, %v4190
        %v4279 = vsel %vm4103, %v4015, %v4191
        %v4280 = vsel %vm4104, %v4016, %v4192
        %v4281 = vpack.c.bf16 %v4195, %v4193
        %v4282 = vpack.c.bf16 %v4196, %v4194
        %v4283 = vpack.c.bf16 %v4199, %v4197
        %v4284 = vpack.c.bf16 %v4200, %v4198
        %v4285 = vpack.c.bf16 %v4203, %v4201
        %v4286 = vpack.c.bf16 %v4204, %v4202
        %v4287 = vpack.c.bf16 %v4207, %v4205
        %v4288 = vpack.c.bf16 %v4208, %v4206
        %v4289 = vpack.c.bf16 %v4211, %v4209
        %v4290 = vpack.c.bf16 %v4212, %v4210
        %v4291 = vpack.c.bf16 %v4215, %v4213
        %v4292 = vpack.c.bf16 %v4216, %v4214
        %v4293 = vpack.c.bf16 %v4219, %v4217
        %v4294 = vpack.c.bf16 %v4220, %v4218
        %v4295 = vpack.c.bf16 %v4223, %v4221
        %v4296 = vpack.c.bf16 %v4224, %v4222
        %v4297 = vpack.c.bf16 %v4227, %v4225
        %v4298 = vpack.c.bf16 %v4228, %v4226
        %v4299 = vpack.c.bf16 %v4231, %v4229
        %v4300 = vpack.c.bf16 %v4232, %v4230
        %v4301 = vpack.c.bf16 %v4235, %v4233
        %v4302 = vpack.c.bf16 %v4236, %v4234
        %v4303 = vpack.c.bf16 %v4239, %v4237
        %v4304 = vpack.c.bf16 %v4240, %v4238
        %v4305 = vpack.c.bf16 %v4243, %v4241
        %v4306 = vpack.c.bf16 %v4244, %v4242
        %v4307 = vpack.c.bf16 %v4247, %v4245
        %v4308 = vpack.c.bf16 %v4248, %v4246
        %v4309 = vpack.c.bf16 %v4251, %v4249
        %v4310 = vpack.c.bf16 %v4252, %v4250
        %v4311 = vpack.c.bf16 %v4255, %v4253
        %v4312 = vpack.c.bf16 %v4256, %v4254
        %v4313 = vpack.c.bf16 %v4259, %v4257
        %v4314 = vpack.c.bf16 %v4260, %v4258
        %v4315 = vpack.c.bf16 %v4263, %v4261
        %v4316 = vpack.c.bf16 %v4264, %v4262
        %v4317 = vpack.c.bf16 %v4267, %v4265
        %v4318 = vpack.c.bf16 %v4268, %v4266
        %v4319 = vpack.c.bf16 %v4271, %v4269
        %v4320 = vpack.c.bf16 %v4272, %v4270
        %v4321 = vpack.c.bf16 %v4275, %v4273
        %v4322 = vpack.c.bf16 %v4276, %v4274
        %v4323 = vpack.c.bf16 %v4279, %v4277
        %v4324 = vpack.c.bf16 %v4280, %v4278
        %v4325 = vld [vmem:[#allocation23] sm:$0xff]
        %v4326 = vld [vmem:[#allocation23 + $0x8] sm:$0xff]
        %v4327 = vld [vmem:[#allocation23 + $0x10] sm:$0xff]
        %v4328 = vld [vmem:[#allocation23 + $0x18] sm:$0xff]
        %v4329 = vld [vmem:[#allocation23 + $0x20] sm:$0xff]
        %v4330 = vld [vmem:[#allocation23 + $0x28] sm:$0xff]
        %v4331 = vld [vmem:[#allocation23 + $0x30] sm:$0xff]
        %v4332 = vld [vmem:[#allocation23 + $0x38] sm:$0xff]
        %v4333 = vld [vmem:[#allocation23 + $0x40] sm:$0xff]
        %v4334 = vld [vmem:[#allocation23 + $0x48] sm:$0xff]
        %v4335 = vld [vmem:[#allocation23 + $0x50] sm:$0xff]
        %v4336 = vld [vmem:[#allocation23 + $0x58] sm:$0xff]
        %v4337 = vld [vmem:[#allocation23 + $0x60] sm:$0xff]
        %v4338 = vld [vmem:[#allocation23 + $0x68] sm:$0xff]
        %v4339 = vld [vmem:[#allocation23 + $0x70] sm:$0xff]
        %v4340 = vld [vmem:[#allocation23 + $0x78] sm:$0xff]
        %v4341 = vld [vmem:[#allocation23 + $0x80] sm:$0xff]
        %v4342 = vld [vmem:[#allocation23 + $0x88] sm:$0xff]
        %v4343 = vld [vmem:[#allocation23 + $0x90] sm:$0xff]
        %v4344 = vld [vmem:[#allocation23 + $0x98] sm:$0xff]
        %v4345 = vld [vmem:[#allocation23 + $0xa0] sm:$0xff]
        %v4346 = vld [vmem:[#allocation23 + $0xa8] sm:$0xff]
        %v4347 = vld [vmem:[#allocation23 + $0xb0] sm:$0xff]
        %v4348 = vld [vmem:[#allocation23 + $0xb8] sm:$0xff]
        %v4349 = vld [vmem:[#allocation23 + $0xc0] sm:$0xff]
        %v4350 = vld [vmem:[#allocation23 + $0xc8] sm:$0xff]
        %v4351 = vld [vmem:[#allocation23 + $0xd0] sm:$0xff]
        %v4352 = vld [vmem:[#allocation23 + $0xd8] sm:$0xff]
        %v4353 = vld [vmem:[#allocation23 + $0xe0] sm:$0xff]
        %v4354 = vld [vmem:[#allocation23 + $0xe8] sm:$0xff]
        %v4355 = vld [vmem:[#allocation23 + $0xf0] sm:$0xff]
        %v4356 = vld [vmem:[#allocation23 + $0xf8] sm:$0xff]
        %v4357 = vld [vmem:[#allocation23 + $0x100] sm:$0xff]
        %v4358 = vld [vmem:[#allocation23 + $0x108] sm:$0xff]
        %v4359 = vld [vmem:[#allocation23 + $0x110] sm:$0xff]
        %v4360 = vld [vmem:[#allocation23 + $0x118] sm:$0xff]
        %v4361 = vld [vmem:[#allocation23 + $0x120] sm:$0xff]
        %v4362 = vld [vmem:[#allocation23 + $0x128] sm:$0xff]
        %v4363 = vld [vmem:[#allocation23 + $0x130] sm:$0xff]
        %v4364 = vld [vmem:[#allocation23 + $0x138] sm:$0xff]
        %v4365 = vld [vmem:[#allocation23 + $0x140] sm:$0xff]
        %v4366 = vld [vmem:[#allocation23 + $0x148] sm:$0xff]
        %v4367 = vld [vmem:[#allocation23 + $0x150] sm:$0xff]
        %v4368 = vld [vmem:[#allocation23 + $0x158] sm:$0xff]
        %v4369 = vld [vmem:[#allocation23 + $0x160] sm:$0xff]
        %v4370 = vld [vmem:[#allocation23 + $0x168] sm:$0xff]
        %v4371 = vld [vmem:[#allocation23 + $0x170] sm:$0xff]
        %v4372 = vld [vmem:[#allocation23 + $0x178] sm:$0xff]
        %v4373 = vld [vmem:[#allocation23 + $0x180] sm:$0xff]
        %v4374 = vld [vmem:[#allocation23 + $0x188] sm:$0xff]
        %v4375 = vld [vmem:[#allocation23 + $0x190] sm:$0xff]
        %v4376 = vld [vmem:[#allocation23 + $0x198] sm:$0xff]
        %v4377 = vld [vmem:[#allocation23 + $0x1a0] sm:$0xff]
        %v4378 = vld [vmem:[#allocation23 + $0x1a8] sm:$0xff]
        %v4379 = vld [vmem:[#allocation23 + $0x1b0] sm:$0xff]
        %v4380 = vld [vmem:[#allocation23 + $0x1b8] sm:$0xff]
        %v4381 = vld [vmem:[#allocation23 + $0x1c0] sm:$0xff]
        %v4382 = vld [vmem:[#allocation23 + $0x1c8] sm:$0xff]
        %v4383 = vld [vmem:[#allocation23 + $0x1d0] sm:$0xff]
        %v4384 = vld [vmem:[#allocation23 + $0x1d8] sm:$0xff]
        %v4385 = vld [vmem:[#allocation23 + $0x1e0] sm:$0xff]
        %v4386 = vld [vmem:[#allocation23 + $0x1e8] sm:$0xff]
        %v4387 = vld [vmem:[#allocation23 + $0x1f0] sm:$0xff]
        %v4388 = vld [vmem:[#allocation23 + $0x1f8] sm:$0xff]
        %v4421 = vunpack.c.l.b16 %v4357
        %v4422 = vunpack.c.h.b16 %v4357
        %v4423 = vunpack.c.l.b16 %v4358
        %v4424 = vunpack.c.h.b16 %v4358
        %v4425 = vunpack.c.l.b16 %v4359
        %v4426 = vunpack.c.h.b16 %v4359
        %v4427 = vunpack.c.l.b16 %v4360
        %v4428 = vunpack.c.h.b16 %v4360
        %v4429 = vunpack.c.l.b16 %v4361
        %v4430 = vunpack.c.h.b16 %v4361
        %v4431 = vunpack.c.l.b16 %v4362
        %v4432 = vunpack.c.h.b16 %v4362
        %v4433 = vunpack.c.l.b16 %v4363
        %v4434 = vunpack.c.h.b16 %v4363
        %v4435 = vunpack.c.l.b16 %v4364
        %v4436 = vunpack.c.h.b16 %v4364
        %v4437 = vunpack.c.l.b16 %v4365
        %v4438 = vunpack.c.h.b16 %v4365
        %v4439 = vunpack.c.l.b16 %v4366
        %v4440 = vunpack.c.h.b16 %v4366
        %v4441 = vunpack.c.l.b16 %v4367
        %v4442 = vunpack.c.h.b16 %v4367
        %v4443 = vunpack.c.l.b16 %v4368
        %v4444 = vunpack.c.h.b16 %v4368
        %v4445 = vunpack.c.l.b16 %v4369
        %v4446 = vunpack.c.h.b16 %v4369
        %v4447 = vunpack.c.l.b16 %v4370
        %v4448 = vunpack.c.h.b16 %v4370
        %v4449 = vunpack.c.l.b16 %v4371
        %v4450 = vunpack.c.h.b16 %v4371
        %v4451 = vunpack.c.l.b16 %v4372
        %v4452 = vunpack.c.h.b16 %v4372
        %v4453 = vunpack.c.l.b16 %v4373
        %v4454 = vunpack.c.h.b16 %v4373
        %v4455 = vunpack.c.l.b16 %v4374
        %v4456 = vunpack.c.h.b16 %v4374
        %v4457 = vunpack.c.l.b16 %v4375
        %v4458 = vunpack.c.h.b16 %v4375
        %v4459 = vunpack.c.l.b16 %v4376
        %v4460 = vunpack.c.h.b16 %v4376
        %v4461 = vunpack.c.l.b16 %v4377
        %v4462 = vunpack.c.h.b16 %v4377
        %v4463 = vunpack.c.l.b16 %v4378
        %v4464 = vunpack.c.h.b16 %v4378
        %v4465 = vunpack.c.l.b16 %v4379
        %v4466 = vunpack.c.h.b16 %v4379
        %v4467 = vunpack.c.l.b16 %v4380
        %v4468 = vunpack.c.h.b16 %v4380
        %v4469 = vunpack.c.l.b16 %v4381
        %v4470 = vunpack.c.h.b16 %v4381
        %v4471 = vunpack.c.l.b16 %v4382
        %v4472 = vunpack.c.h.b16 %v4382
        %v4473 = vunpack.c.l.b16 %v4383
        %v4474 = vunpack.c.h.b16 %v4383
        %v4475 = vunpack.c.l.b16 %v4384
        %v4476 = vunpack.c.h.b16 %v4384
        %v4477 = vunpack.c.l.b16 %v4385
        %v4478 = vunpack.c.h.b16 %v4385
        %v4479 = vunpack.c.l.b16 %v4386
        %v4480 = vunpack.c.h.b16 %v4386
        %v4481 = vunpack.c.l.b16 %v4387
        %v4482 = vunpack.c.h.b16 %v4387
        %v4483 = vunpack.c.l.b16 %v4388
        %v4484 = vunpack.c.h.b16 %v4388
        %v4485 = vpack.c.b16 %v4423, %v4421
        %v4486 = vpack.c.b16 %v4424, %v4422
        %v4487 = vpack.c.b16 %v4427, %v4425
        %v4488 = vpack.c.b16 %v4428, %v4426
        %v4489 = vpack.c.b16 %v4431, %v4429
        %v4490 = vpack.c.b16 %v4432, %v4430
        %v4491 = vpack.c.b16 %v4435, %v4433
        %v4492 = vpack.c.b16 %v4436, %v4434
        %v4493 = vpack.c.b16 %v4439, %v4437
        %v4494 = vpack.c.b16 %v4440, %v4438
        %v4495 = vpack.c.b16 %v4443, %v4441
        %v4496 = vpack.c.b16 %v4444, %v4442
        %v4497 = vpack.c.b16 %v4447, %v4445
        %v4498 = vpack.c.b16 %v4448, %v4446
        %v4499 = vpack.c.b16 %v4451, %v4449
        %v4500 = vpack.c.b16 %v4452, %v4450
        %v4501 = vpack.c.b16 %v4455, %v4453
        %v4502 = vpack.c.b16 %v4456, %v4454
        %v4503 = vpack.c.b16 %v4459, %v4457
        %v4504 = vpack.c.b16 %v4460, %v4458
        %v4505 = vpack.c.b16 %v4463, %v4461
        %v4506 = vpack.c.b16 %v4464, %v4462
        %v4507 = vpack.c.b16 %v4467, %v4465
        %v4508 = vpack.c.b16 %v4468, %v4466
        %v4509 = vpack.c.b16 %v4471, %v4469
        %v4510 = vpack.c.b16 %v4472, %v4470
        %v4511 = vpack.c.b16 %v4475, %v4473
        %v4512 = vpack.c.b16 %v4476, %v4474
        %v4513 = vpack.c.b16 %v4479, %v4477
        %v4514 = vpack.c.b16 %v4480, %v4478
        %v4515 = vpack.c.b16 %v4483, %v4481
        %v4516 = vpack.c.b16 %v4484, %v4482
        %4549 = vmatprep.subr.bf16.mxu0 %v4486
        %4550 = vmatpush1.bf16.msra.mxu0 %v4485
        %4551 = vmatprep.subr.bf16.mxu0 %v4488
        %4552 = vmatpush1.bf16.msra.mxu0 %v4487
        %4553 = vmatprep.subr.bf16.mxu0 %v4490
        %4554 = vmatpush1.bf16.msra.mxu0 %v4489
        %4555 = vmatprep.subr.bf16.mxu0 %v4492
        %4556 = vmatpush1.bf16.msra.mxu0 %v4491
        %4557 = vmatprep.subr.bf16.mxu0 %v4494
        %4558 = vmatpush1.bf16.msra.mxu0 %v4493
        %4559 = vmatprep.subr.bf16.mxu0 %v4496
        %4560 = vmatpush1.bf16.msra.mxu0 %v4495
        %4561 = vmatprep.subr.bf16.mxu0 %v4498
        %4562 = vmatpush1.bf16.msra.mxu0 %v4497
        %4563 = vmatprep.subr.bf16.mxu0 %v4500
        %4564 = vmatpush1.bf16.msra.mxu0 %v4499
        %4565 = vmatprep.subr.bf16.mxu0 %v4502
        %4566 = vmatpush1.bf16.msra.mxu0 %v4501
        %4567 = vmatprep.subr.bf16.mxu0 %v4504
        %4568 = vmatpush1.bf16.msra.mxu0 %v4503
        %4569 = vmatprep.subr.bf16.mxu0 %v4506
        %4570 = vmatpush1.bf16.msra.mxu0 %v4505
        %4571 = vmatprep.subr.bf16.mxu0 %v4508
        %4572 = vmatpush1.bf16.msra.mxu0 %v4507
        %4573 = vmatprep.subr.bf16.mxu0 %v4510
        %4574 = vmatpush1.bf16.msra.mxu0 %v4509
        %4575 = vmatprep.subr.bf16.mxu0 %v4512
        %4576 = vmatpush1.bf16.msra.mxu0 %v4511
        %4577 = vmatprep.subr.bf16.mxu0 %v4514
        %4578 = vmatpush1.bf16.msra.mxu0 %v4513
        %4579 = vmatprep.subr.bf16.mxu0 %v4516
        %4580 = vmatpush1.bf16.msra.mxu0 %v4515
        %4581 = vmatprep.mubr.bf16.mxu0 %v4286
        %4582 = vmatmul.mubr.bf16.gmra.mrb[0].mxu0 %v4285
        %v4583 = vpop.f32.mrb[0].mxu0
        %v4584 = vadd.f32 0.0, %v4583
        %v4585 = vpop.f32.mrb[0].mxu0
        %v4586 = vadd.f32 0.0, %v4585
        %v4587 = vpop.f32.mrb[0].mxu0
        %v4588 = vadd.f32 0.0, %v4587
        %v4589 = vpop.f32.mrb[0].mxu0
        %v4590 = vadd.f32 0.0, %v4589
        %4591 = vmatprep.mubr.bf16.mxu0 %v4288
        %4592 = vmatmul.mubr.bf16.gmra.mrb[0].mxu0 %v4287
        %v4593 = vpop.f32.mrb[0].mxu0
        %v4594 = vadd.f32 0.0, %v4593
        %v4595 = vpop.f32.mrb[0].mxu0
        %v4596 = vadd.f32 0.0, %v4595
        %v4597 = vpop.f32.mrb[0].mxu0
        %v4598 = vadd.f32 0.0, %v4597
        %v4599 = vpop.f32.mrb[0].mxu0
        %v4600 = vadd.f32 0.0, %v4599
        %4601 = vdwg.mxu0
        %v4634 = vunpack.c.l.b16 %v4325
        %v4635 = vunpack.c.h.b16 %v4325
        %v4636 = vunpack.c.l.b16 %v4326
        %v4637 = vunpack.c.h.b16 %v4326
        %v4638 = vunpack.c.l.b16 %v4327
        %v4639 = vunpack.c.h.b16 %v4327
        %v4640 = vunpack.c.l.b16 %v4328
        %v4641 = vunpack.c.h.b16 %v4328
        %v4642 = vunpack.c.l.b16 %v4329
        %v4643 = vunpack.c.h.b16 %v4329
        %v4644 = vunpack.c.l.b16 %v4330
        %v4645 = vunpack.c.h.b16 %v4330
        %v4646 = vunpack.c.l.b16 %v4331
        %v4647 = vunpack.c.h.b16 %v4331
        %v4648 = vunpack.c.l.b16 %v4332
        %v4649 = vunpack.c.h.b16 %v4332
        %v4650 = vunpack.c.l.b16 %v4333
        %v4651 = vunpack.c.h.b16 %v4333
        %v4652 = vunpack.c.l.b16 %v4334
        %v4653 = vunpack.c.h.b16 %v4334
        %v4654 = vunpack.c.l.b16 %v4335
        %v4655 = vunpack.c.h.b16 %v4335
        %v4656 = vunpack.c.l.b16 %v4336
        %v4657 = vunpack.c.h.b16 %v4336
        %v4658 = vunpack.c.l.b16 %v4337
        %v4659 = vunpack.c.h.b16 %v4337
        %v4660 = vunpack.c.l.b16 %v4338
        %v4661 = vunpack.c.h.b16 %v4338
        %v4662 = vunpack.c.l.b16 %v4339
        %v4663 = vunpack.c.h.b16 %v4339
        %v4664 = vunpack.c.l.b16 %v4340
        %v4665 = vunpack.c.h.b16 %v4340
        %v4666 = vunpack.c.l.b16 %v4341
        %v4667 = vunpack.c.h.b16 %v4341
        %v4668 = vunpack.c.l.b16 %v4342
        %v4669 = vunpack.c.h.b16 %v4342
        %v4670 = vunpack.c.l.b16 %v4343
        %v4671 = vunpack.c.h.b16 %v4343
        %v4672 = vunpack.c.l.b16 %v4344
        %v4673 = vunpack.c.h.b16 %v4344
        %v4674 = vunpack.c.l.b16 %v4345
        %v4675 = vunpack.c.h.b16 %v4345
        %v4676 = vunpack.c.l.b16 %v4346
        %v4677 = vunpack.c.h.b16 %v4346
        %v4678 = vunpack.c.l.b16 %v4347
        %v4679 = vunpack.c.h.b16 %v4347
        %v4680 = vunpack.c.l.b16 %v4348
        %v4681 = vunpack.c.h.b16 %v4348
        %v4682 = vunpack.c.l.b16 %v4349
        %v4683 = vunpack.c.h.b16 %v4349
        %v4684 = vunpack.c.l.b16 %v4350
        %v4685 = vunpack.c.h.b16 %v4350
        %v4686 = vunpack.c.l.b16 %v4351
        %v4687 = vunpack.c.h.b16 %v4351
        %v4688 = vunpack.c.l.b16 %v4352
        %v4689 = vunpack.c.h.b16 %v4352
        %v4690 = vunpack.c.l.b16 %v4353
        %v4691 = vunpack.c.h.b16 %v4353
        %v4692 = vunpack.c.l.b16 %v4354
        %v4693 = vunpack.c.h.b16 %v4354
        %v4694 = vunpack.c.l.b16 %v4355
        %v4695 = vunpack.c.h.b16 %v4355
        %v4696 = vunpack.c.l.b16 %v4356
        %v4697 = vunpack.c.h.b16 %v4356
        %v4698 = vpack.c.b16 %v4636, %v4634
        %v4699 = vpack.c.b16 %v4637, %v4635
        %v4700 = vpack.c.b16 %v4640, %v4638
        %v4701 = vpack.c.b16 %v4641, %v4639
        %v4702 = vpack.c.b16 %v4644, %v4642
        %v4703 = vpack.c.b16 %v4645, %v4643
        %v4704 = vpack.c.b16 %v4648, %v4646
        %v4705 = vpack.c.b16 %v4649, %v4647
        %v4706 = vpack.c.b16 %v4652, %v4650
        %v4707 = vpack.c.b16 %v4653, %v4651
        %v4708 = vpack.c.b16 %v4656, %v4654
        %v4709 = vpack.c.b16 %v4657, %v4655
        %v4710 = vpack.c.b16 %v4660, %v4658
        %v4711 = vpack.c.b16 %v4661, %v4659
        %v4712 = vpack.c.b16 %v4664, %v4662
        %v4713 = vpack.c.b16 %v4665, %v4663
        %v4714 = vpack.c.b16 %v4668, %v4666
        %v4715 = vpack.c.b16 %v4669, %v4667
        %v4716 = vpack.c.b16 %v4672, %v4670
        %v4717 = vpack.c.b16 %v4673, %v4671
        %v4718 = vpack.c.b16 %v4676, %v4674
        %v4719 = vpack.c.b16 %v4677, %v4675
        %v4720 = vpack.c.b16 %v4680, %v4678
        %v4721 = vpack.c.b16 %v4681, %v4679
        %v4722 = vpack.c.b16 %v4684, %v4682
        %v4723 = vpack.c.b16 %v4685, %v4683
        %v4724 = vpack.c.b16 %v4688, %v4686
        %v4725 = vpack.c.b16 %v4689, %v4687
        %v4726 = vpack.c.b16 %v4692, %v4690
        %v4727 = vpack.c.b16 %v4693, %v4691
        %v4728 = vpack.c.b16 %v4696, %v4694
        %v4729 = vpack.c.b16 %v4697, %v4695
        %4762 = vmatprep.subr.bf16.mxu0 %v4699
        %4763 = vmatpush1.bf16.msra.mxu0 %v4698
        %4764 = vmatprep.subr.bf16.mxu0 %v4701
        %4765 = vmatpush1.bf16.msra.mxu0 %v4700
        %4766 = vmatprep.subr.bf16.mxu0 %v4703
        %4767 = vmatpush1.bf16.msra.mxu0 %v4702
        %4768 = vmatprep.subr.bf16.mxu0 %v4705
        %4769 = vmatpush1.bf16.msra.mxu0 %v4704
        %4770 = vmatprep.subr.bf16.mxu0 %v4707
        %4771 = vmatpush1.bf16.msra.mxu0 %v4706
        %4772 = vmatprep.subr.bf16.mxu0 %v4709
        %4773 = vmatpush1.bf16.msra.mxu0 %v4708
        %4774 = vmatprep.subr.bf16.mxu0 %v4711
        %4775 = vmatpush1.bf16.msra.mxu0 %v4710
        %4776 = vmatprep.subr.bf16.mxu0 %v4713
        %4777 = vmatpush1.bf16.msra.mxu0 %v4712
        %4778 = vmatprep.subr.bf16.mxu0 %v4715
        %4779 = vmatpush1.bf16.msra.mxu0 %v4714
        %4780 = vmatprep.subr.bf16.mxu0 %v4717
        %4781 = vmatpush1.bf16.msra.mxu0 %v4716
        %4782 = vmatprep.subr.bf16.mxu0 %v4719
        %4783 = vmatpush1.bf16.msra.mxu0 %v4718
        %4784 = vmatprep.subr.bf16.mxu0 %v4721
        %4785 = vmatpush1.bf16.msra.mxu0 %v4720
        %4786 = vmatprep.subr.bf16.mxu0 %v4723
        %4787 = vmatpush1.bf16.msra.mxu0 %v4722
        %4788 = vmatprep.subr.bf16.mxu0 %v4725
        %4789 = vmatpush1.bf16.msra.mxu0 %v4724
        %4790 = vmatprep.subr.bf16.mxu0 %v4727
        %4791 = vmatpush1.bf16.msra.mxu0 %v4726
        %4792 = vmatprep.subr.bf16.mxu0 %v4729
        %4793 = vmatpush1.bf16.msra.mxu0 %v4728
        %4794 = vmatprep.mubr.bf16.mxu0 %v4282
        %4795 = vmatmul.mubr.bf16.gmra.mrb[0].mxu0 %v4281
        %v4796 = vpop.f32.mrb[0].mxu0
        %v4797 = vadd.f32 %v4584, %v4796
        %v4798 = vpop.f32.mrb[0].mxu0
        %v4799 = vadd.f32 %v4586, %v4798
        %v4800 = vpop.f32.mrb[0].mxu0
        %v4801 = vadd.f32 %v4588, %v4800
        %v4802 = vpop.f32.mrb[0].mxu0
        %v4803 = vadd.f32 %v4590, %v4802
        %4804 = vmatprep.mubr.bf16.mxu0 %v4284
        %4805 = vmatmul.mubr.bf16.gmra.mrb[0].mxu0 %v4283
        %v4806 = vpop.f32.mrb[0].mxu0
        %v4807 = vadd.f32 %v4594, %v4806
        %v4808 = vpop.f32.mrb[0].mxu0
        %v4809 = vadd.f32 %v4596, %v4808
        %v4810 = vpop.f32.mrb[0].mxu0
        %v4811 = vadd.f32 %v4598, %v4810
        %v4812 = vpop.f32.mrb[0].mxu0
        %v4813 = vadd.f32 %v4600, %v4812
        %4814 = vdwg.mxu0
        %v4815 = vld [vmem:[#allocation23 + $0x200] sm:$0xff]
        %v4816 = vld [vmem:[#allocation23 + $0x208] sm:$0xff]
        %v4817 = vld [vmem:[#allocation23 + $0x210] sm:$0xff]
        %v4818 = vld [vmem:[#allocation23 + $0x218] sm:$0xff]
        %v4819 = vld [vmem:[#allocation23 + $0x220] sm:$0xff]
        %v4820 = vld [vmem:[#allocation23 + $0x228] sm:$0xff]
        %v4821 = vld [vmem:[#allocation23 + $0x230] sm:$0xff]
        %v4822 = vld [vmem:[#allocation23 + $0x238] sm:$0xff]
        %v4823 = vld [vmem:[#allocation23 + $0x240] sm:$0xff]
        %v4824 = vld [vmem:[#allocation23 + $0x248] sm:$0xff]
        %v4825 = vld [vmem:[#allocation23 + $0x250] sm:$0xff]
        %v4826 = vld [vmem:[#allocation23 + $0x258] sm:$0xff]
        %v4827 = vld [vmem:[#allocation23 + $0x260] sm:$0xff]
        %v4828 = vld [vmem:[#allocation23 + $0x268] sm:$0xff]
        %v4829 = vld [vmem:[#allocation23 + $0x270] sm:$0xff]
        %v4830 = vld [vmem:[#allocation23 + $0x278] sm:$0xff]
        %v4831 = vld [vmem:[#allocation23 + $0x280] sm:$0xff]
        %v4832 = vld [vmem:[#allocation23 + $0x288] sm:$0xff]
        %v4833 = vld [vmem:[#allocation23 + $0x290] sm:$0xff]
        %v4834 = vld [vmem:[#allocation23 + $0x298] sm:$0xff]
        %v4835 = vld [vmem:[#allocation23 + $0x2a0] sm:$0xff]
        %v4836 = vld [vmem:[#allocation23 + $0x2a8] sm:$0xff]
        %v4837 = vld [vmem:[#allocation23 + $0x2b0] sm:$0xff]
        %v4838 = vld [vmem:[#allocation23 + $0x2b8] sm:$0xff]
        %v4839 = vld [vmem:[#allocation23 + $0x2c0] sm:$0xff]
        %v4840 = vld [vmem:[#allocation23 + $0x2c8] sm:$0xff]
        %v4841 = vld [vmem:[#allocation23 + $0x2d0] sm:$0xff]
        %v4842 = vld [vmem:[#allocation23 + $0x2d8] sm:$0xff]
        %v4843 = vld [vmem:[#allocation23 + $0x2e0] sm:$0xff]
        %v4844 = vld [vmem:[#allocation23 + $0x2e8] sm:$0xff]
        %v4845 = vld [vmem:[#allocation23 + $0x2f0] sm:$0xff]
        %v4846 = vld [vmem:[#allocation23 + $0x2f8] sm:$0xff]
        %v4879 = vunpack.c.l.b16 %v4815
        %v4880 = vunpack.c.h.b16 %v4815
        %v4881 = vunpack.c.l.b16 %v4816
        %v4882 = vunpack.c.h.b16 %v4816
        %v4883 = vunpack.c.l.b16 %v4817
        %v4884 = vunpack.c.h.b16 %v4817
        %v4885 = vunpack.c.l.b16 %v4818
        %v4886 = vunpack.c.h.b16 %v4818
        %v4887 = vunpack.c.l.b16 %v4819
        %v4888 = vunpack.c.h.b16 %v4819
        %v4889 = vunpack.c.l.b16 %v4820
        %v4890 = vunpack.c.h.b16 %v4820
        %v4891 = vunpack.c.l.b16 %v4821
        %v4892 = vunpack.c.h.b16 %v4821
        %v4893 = vunpack.c.l.b16 %v4822
        %v4894 = vunpack.c.h.b16 %v4822
        %v4895 = vunpack.c.l.b16 %v4823
        %v4896 = vunpack.c.h.b16 %v4823
        %v4897 = vunpack.c.l.b16 %v4824
        %v4898 = vunpack.c.h.b16 %v4824
        %v4899 = vunpack.c.l.b16 %v4825
        %v4900 = vunpack.c.h.b16 %v4825
        %v4901 = vunpack.c.l.b16 %v4826
        %v4902 = vunpack.c.h.b16 %v4826
        %v4903 = vunpack.c.l.b16 %v4827
        %v4904 = vunpack.c.h.b16 %v4827
        %v4905 = vunpack.c.l.b16 %v4828
        %v4906 = vunpack.c.h.b16 %v4828
        %v4907 = vunpack.c.l.b16 %v4829
        %v4908 = vunpack.c.h.b16 %v4829
        %v4909 = vunpack.c.l.b16 %v4830
        %v4910 = vunpack.c.h.b16 %v4830
        %v4911 = vunpack.c.l.b16 %v4831
        %v4912 = vunpack.c.h.b16 %v4831
        %v4913 = vunpack.c.l.b16 %v4832
        %v4914 = vunpack.c.h.b16 %v4832
        %v4915 = vunpack.c.l.b16 %v4833
        %v4916 = vunpack.c.h.b16 %v4833
        %v4917 = vunpack.c.l.b16 %v4834
        %v4918 = vunpack.c.h.b16 %v4834
        %v4919 = vunpack.c.l.b16 %v4835
        %v4920 = vunpack.c.h.b16 %v4835
        %v4921 = vunpack.c.l.b16 %v4836
        %v4922 = vunpack.c.h.b16 %v4836
        %v4923 = vunpack.c.l.b16 %v4837
        %v4924 = vunpack.c.h.b16 %v4837
        %v4925 = vunpack.c.l.b16 %v4838
        %v4926 = vunpack.c.h.b16 %v4838
        %v4927 = vunpack.c.l.b16 %v4839
        %v4928 = vunpack.c.h.b16 %v4839
        %v4929 = vunpack.c.l.b16 %v4840
        %v4930 = vunpack.c.h.b16 %v4840
        %v4931 = vunpack.c.l.b16 %v4841
        %v4932 = vunpack.c.h.b16 %v4841
        %v4933 = vunpack.c.l.b16 %v4842
        %v4934 = vunpack.c.h.b16 %v4842
        %v4935 = vunpack.c.l.b16 %v4843
        %v4936 = vunpack.c.h.b16 %v4843
        %v4937 = vunpack.c.l.b16 %v4844
        %v4938 = vunpack.c.h.b16 %v4844
        %v4939 = vunpack.c.l.b16 %v4845
        %v4940 = vunpack.c.h.b16 %v4845
        %v4941 = vunpack.c.l.b16 %v4846
        %v4942 = vunpack.c.h.b16 %v4846
        %v4943 = vpack.c.b16 %v4881, %v4879
        %v4944 = vpack.c.b16 %v4882, %v4880
        %v4945 = vpack.c.b16 %v4885, %v4883
        %v4946 = vpack.c.b16 %v4886, %v4884
        %v4947 = vpack.c.b16 %v4889, %v4887
        %v4948 = vpack.c.b16 %v4890, %v4888
        %v4949 = vpack.c.b16 %v4893, %v4891
        %v4950 = vpack.c.b16 %v4894, %v4892
        %v4951 = vpack.c.b16 %v4897, %v4895
        %v4952 = vpack.c.b16 %v4898, %v4896
        %v4953 = vpack.c.b16 %v4901, %v4899
        %v4954 = vpack.c.b16 %v4902, %v4900
        %v4955 = vpack.c.b16 %v4905, %v4903
        %v4956 = vpack.c.b16 %v4906, %v4904
        %v4957 = vpack.c.b16 %v4909, %v4907
        %v4958 = vpack.c.b16 %v4910, %v4908
        %v4959 = vpack.c.b16 %v4913, %v4911
        %v4960 = vpack.c.b16 %v4914, %v4912
        %v4961 = vpack.c.b16 %v4917, %v4915
        %v4962 = vpack.c.b16 %v4918, %v4916
        %v4963 = vpack.c.b16 %v4921, %v4919
        %v4964 = vpack.c.b16 %v4922, %v4920
        %v4965 = vpack.c.b16 %v4925, %v4923
        %v4966 = vpack.c.b16 %v4926, %v4924
        %v4967 = vpack.c.b16 %v4929, %v4927
        %v4968 = vpack.c.b16 %v4930, %v4928
        %v4969 = vpack.c.b16 %v4933, %v4931
        %v4970 = vpack.c.b16 %v4934, %v4932
        %v4971 = vpack.c.b16 %v4937, %v4935
        %v4972 = vpack.c.b16 %v4938, %v4936
        %v4973 = vpack.c.b16 %v4941, %v4939
        %v4974 = vpack.c.b16 %v4942, %v4940
        %5007 = vmatprep.subr.bf16.mxu0 %v4944
        %5008 = vmatpush1.bf16.msra.mxu0 %v4943
        %5009 = vmatprep.subr.bf16.mxu0 %v4946
        %5010 = vmatpush1.bf16.msra.mxu0 %v4945
        %5011 = vmatprep.subr.bf16.mxu0 %v4948
        %5012 = vmatpush1.bf16.msra.mxu0 %v4947
        %5013 = vmatprep.subr.bf16.mxu0 %v4950
        %5014 = vmatpush1.bf16.msra.mxu0 %v4949
        %5015 = vmatprep.subr.bf16.mxu0 %v4952
        %5016 = vmatpush1.bf16.msra.mxu0 %v4951
        %5017 = vmatprep.subr.bf16.mxu0 %v4954
        %5018 = vmatpush1.bf16.msra.mxu0 %v4953
        %5019 = vmatprep.subr.bf16.mxu0 %v4956
        %5020 = vmatpush1.bf16.msra.mxu0 %v4955
        %5021 = vmatprep.subr.bf16.mxu0 %v4958
        %5022 = vmatpush1.bf16.msra.mxu0 %v4957
        %5023 = vmatprep.subr.bf16.mxu0 %v4960
        %5024 = vmatpush1.bf16.msra.mxu0 %v4959
        %5025 = vmatprep.subr.bf16.mxu0 %v4962
        %5026 = vmatpush1.bf16.msra.mxu0 %v4961
        %5027 = vmatprep.subr.bf16.mxu0 %v4964
        %5028 = vmatpush1.bf16.msra.mxu0 %v4963
        %5029 = vmatprep.subr.bf16.mxu0 %v4966
        %5030 = vmatpush1.bf16.msra.mxu0 %v4965
        %5031 = vmatprep.subr.bf16.mxu0 %v4968
        %5032 = vmatpush1.bf16.msra.mxu0 %v4967
        %5033 = vmatprep.subr.bf16.mxu0 %v4970
        %5034 = vmatpush1.bf16.msra.mxu0 %v4969
        %5035 = vmatprep.subr.bf16.mxu0 %v4972
        %5036 = vmatpush1.bf16.msra.mxu0 %v4971
        %5037 = vmatprep.subr.bf16.mxu0 %v4974
        %5038 = vmatpush1.bf16.msra.mxu0 %v4973
        %5039 = vmatprep.mubr.bf16.mxu0 %v4290
        %5040 = vmatmul.mubr.bf16.gmra.mrb[0].mxu0 %v4289
        %v5041 = vpop.f32.mrb[0].mxu0
        %v5042 = vadd.f32 0.0, %v5041
        %v5043 = vpop.f32.mrb[0].mxu0
        %v5044 = vadd.f32 0.0, %v5043
        %v5045 = vpop.f32.mrb[0].mxu0
        %v5046 = vadd.f32 0.0, %v5045
        %v5047 = vpop.f32.mrb[0].mxu0
        %v5048 = vadd.f32 0.0, %v5047
        %5049 = vmatprep.mubr.bf16.mxu0 %v4292
        %5050 = vmatmul.mubr.bf16.gmra.mrb[0].mxu0 %v4291
        %v5051 = vpop.f32.mrb[0].mxu0
        %v5052 = vadd.f32 0.0, %v5051
        %v5053 = vpop.f32.mrb[0].mxu0
        %v5054 = vadd.f32 0.0, %v5053
        %v5055 = vpop.f32.mrb[0].mxu0
        %v5056 = vadd.f32 0.0, %v5055
        %v5057 = vpop.f32.mrb[0].mxu0
        %v5058 = vadd.f32 0.0, %v5057
        %5059 = vdwg.mxu0
        %v5060 = vadd.f32 %v4797, %v5042
        %v5061 = vadd.f32 %v4799, %v5044
        %v5062 = vadd.f32 %v4801, %v5046
        %v5063 = vadd.f32 %v4803, %v5048
        %v5064 = vadd.f32 %v4807, %v5052
        %v5065 = vadd.f32 %v4809, %v5054
        %v5066 = vadd.f32 %v4811, %v5056
        %v5067 = vadd.f32 %v4813, %v5058
        %v5068 = vld [vmem:[#allocation23 + $0x300] sm:$0xff]
        %v5069 = vld [vmem:[#allocation23 + $0x308] sm:$0xff]
        %v5070 = vld [vmem:[#allocation23 + $0x310] sm:$0xff]
        %v5071 = vld [vmem:[#allocation23 + $0x318] sm:$0xff]
        %v5072 = vld [vmem:[#allocation23 + $0x320] sm:$0xff]
        %v5073 = vld [vmem:[#allocation23 + $0x328] sm:$0xff]
        %v5074 = vld [vmem:[#allocation23 + $0x330] sm:$0xff]
        %v5075 = vld [vmem:[#allocation23 + $0x338] sm:$0xff]
        %v5076 = vld [vmem:[#allocation23 + $0x340] sm:$0xff]
        %v5077 = vld [vmem:[#allocation23 + $0x348] sm:$0xff]
        %v5078 = vld [vmem:[#allocation23 + $0x350] sm:$0xff]
        %v5079 = vld [vmem:[#allocation23 + $0x358] sm:$0xff]
        %v5080 = vld [vmem:[#allocation23 + $0x360] sm:$0xff]
        %v5081 = vld [vmem:[#allocation23 + $0x368] sm:$0xff]
        %v5082 = vld [vmem:[#allocation23 + $0x370] sm:$0xff]
        %v5083 = vld [vmem:[#allocation23 + $0x378] sm:$0xff]
        %v5084 = vld [vmem:[#allocation23 + $0x380] sm:$0xff]
        %v5085 = vld [vmem:[#allocation23 + $0x388] sm:$0xff]
        %v5086 = vld [vmem:[#allocation23 + $0x390] sm:$0xff]
        %v5087 = vld [vmem:[#allocation23 + $0x398] sm:$0xff]
        %v5088 = vld [vmem:[#allocation23 + $0x3a0] sm:$0xff]
        %v5089 = vld [vmem:[#allocation23 + $0x3a8] sm:$0xff]
        %v5090 = vld [vmem:[#allocation23 + $0x3b0] sm:$0xff]
        %v5091 = vld [vmem:[#allocation23 + $0x3b8] sm:$0xff]
        %v5092 = vld [vmem:[#allocation23 + $0x3c0] sm:$0xff]
        %v5093 = vld [vmem:[#allocation23 + $0x3c8] sm:$0xff]
        %v5094 = vld [vmem:[#allocation23 + $0x3d0] sm:$0xff]
        %v5095 = vld [vmem:[#allocation23 + $0x3d8] sm:$0xff]
        %v5096 = vld [vmem:[#allocation23 + $0x3e0] sm:$0xff]
        %v5097 = vld [vmem:[#allocation23 + $0x3e8] sm:$0xff]
        %v5098 = vld [vmem:[#allocation23 + $0x3f0] sm:$0xff]
        %v5099 = vld [vmem:[#allocation23 + $0x3f8] sm:$0xff]
        %v5132 = vunpack.c.l.b16 %v5068
        %v5133 = vunpack.c.h.b16 %v5068
        %v5134 = vunpack.c.l.b16 %v5069
        %v5135 = vunpack.c.h.b16 %v5069
        %v5136 = vunpack.c.l.b16 %v5070
        %v5137 = vunpack.c.h.b16 %v5070
        %v5138 = vunpack.c.l.b16 %v5071
        %v5139 = vunpack.c.h.b16 %v5071
        %v5140 = vunpack.c.l.b16 %v5072
        %v5141 = vunpack.c.h.b16 %v5072
        %v5142 = vunpack.c.l.b16 %v5073
        %v5143 = vunpack.c.h.b16 %v5073
        %v5144 = vunpack.c.l.b16 %v5074
        %v5145 = vunpack.c.h.b16 %v5074
        %v5146 = vunpack.c.l.b16 %v5075
        %v5147 = vunpack.c.h.b16 %v5075
        %v5148 = vunpack.c.l.b16 %v5076
        %v5149 = vunpack.c.h.b16 %v5076
        %v5150 = vunpack.c.l.b16 %v5077
        %v5151 = vunpack.c.h.b16 %v5077
        %v5152 = vunpack.c.l.b16 %v5078
        %v5153 = vunpack.c.h.b16 %v5078
        %v5154 = vunpack.c.l.b16 %v5079
        %v5155 = vunpack.c.h.b16 %v5079
        %v5156 = vunpack.c.l.b16 %v5080
        %v5157 = vunpack.c.h.b16 %v5080
        %v5158 = vunpack.c.l.b16 %v5081
        %v5159 = vunpack.c.h.b16 %v5081
        %v5160 = vunpack.c.l.b16 %v5082
        %v5161 = vunpack.c.h.b16 %v5082
        %v5162 = vunpack.c.l.b16 %v5083
        %v5163 = vunpack.c.h.b16 %v5083
        %v5164 = vunpack.c.l.b16 %v5084
        %v5165 = vunpack.c.h.b16 %v5084
        %v5166 = vunpack.c.l.b16 %v5085
        %v5167 = vunpack.c.h.b16 %v5085
        %v5168 = vunpack.c.l.b16 %v5086
        %v5169 = vunpack.c.h.b16 %v5086
        %v5170 = vunpack.c.l.b16 %v5087
        %v5171 = vunpack.c.h.b16 %v5087
        %v5172 = vunpack.c.l.b16 %v5088
        %v5173 = vunpack.c.h.b16 %v5088
        %v5174 = vunpack.c.l.b16 %v5089
        %v5175 = vunpack.c.h.b16 %v5089
        %v5176 = vunpack.c.l.b16 %v5090
        %v5177 = vunpack.c.h.b16 %v5090
        %v5178 = vunpack.c.l.b16 %v5091
        %v5179 = vunpack.c.h.b16 %v5091
        %v5180 = vunpack.c.l.b16 %v5092
        %v5181 = vunpack.c.h.b16 %v5092
        %v5182 = vunpack.c.l.b16 %v5093
        %v5183 = vunpack.c.h.b16 %v5093
        %v5184 = vunpack.c.l.b16 %v5094
        %v5185 = vunpack.c.h.b16 %v5094
        %v5186 = vunpack.c.l.b16 %v5095
        %v5187 = vunpack.c.h.b16 %v5095
        %v5188 = vunpack.c.l.b16 %v5096
        %v5189 = vunpack.c.h.b16 %v5096
        %v5190 = vunpack.c.l.b16 %v5097
        %v5191 = vunpack.c.h.b16 %v5097
        %v5192 = vunpack.c.l.b16 %v5098
        %v5193 = vunpack.c.h.b16 %v5098
        %v5194 = vunpack.c.l.b16 %v5099
        %v5195 = vunpack.c.h.b16 %v5099
        %v5196 = vpack.c.b16 %v5134, %v5132
        %v5197 = vpack.c.b16 %v5135, %v5133
        %v5198 = vpack.c.b16 %v5138, %v5136
        %v5199 = vpack.c.b16 %v5139, %v5137
        %v5200 = vpack.c.b16 %v5142, %v5140
        %v5201 = vpack.c.b16 %v5143, %v5141
        %v5202 = vpack.c.b16 %v5146, %v5144
        %v5203 = vpack.c.b16 %v5147, %v5145
        %v5204 = vpack.c.b16 %v5150, %v5148
        %v5205 = vpack.c.b16 %v5151, %v5149
        %v5206 = vpack.c.b16 %v5154, %v5152
        %v5207 = vpack.c.b16 %v5155, %v5153
        %v5208 = vpack.c.b16 %v5158, %v5156
        %v5209 = vpack.c.b16 %v5159, %v5157
        %v5210 = vpack.c.b16 %v5162, %v5160
        %v5211 = vpack.c.b16 %v5163, %v5161
        %v5212 = vpack.c.b16 %v5166, %v5164
        %v5213 = vpack.c.b16 %v5167, %v5165
        %v5214 = vpack.c.b16 %v5170, %v5168
        %v5215 = vpack.c.b16 %v5171, %v5169
        %v5216 = vpack.c.b16 %v5174, %v5172
        %v5217 = vpack.c.b16 %v5175, %v5173
        %v5218 = vpack.c.b16 %v5178, %v5176
        %v5219 = vpack.c.b16 %v5179, %v5177
        %v5220 = vpack.c.b16 %v5182, %v5180
        %v5221 = vpack.c.b16 %v5183, %v5181
        %v5222 = vpack.c.b16 %v5186, %v5184
        %v5223 = vpack.c.b16 %v5187, %v5185
        %v5224 = vpack.c.b16 %v5190, %v5188
        %v5225 = vpack.c.b16 %v5191, %v5189
        %v5226 = vpack.c.b16 %v5194, %v5192
        %v5227 = vpack.c.b16 %v5195, %v5193
        %5260 = vmatprep.subr.bf16.mxu0 %v5197
        %5261 = vmatpush1.bf16.msra.mxu0 %v5196
        %5262 = vmatprep.subr.bf16.mxu0 %v5199
        %5263 = vmatpush1.bf16.msra.mxu0 %v5198
        %5264 = vmatprep.subr.bf16.mxu0 %v5201
        %5265 = vmatpush1.bf16.msra.mxu0 %v5200
        %5266 = vmatprep.subr.bf16.mxu0 %v5203
        %5267 = vmatpush1.bf16.msra.mxu0 %v5202
        %5268 = vmatprep.subr.bf16.mxu0 %v5205
        %5269 = vmatpush1.bf16.msra.mxu0 %v5204
        %5270 = vmatprep.subr.bf16.mxu0 %v5207
        %5271 = vmatpush1.bf16.msra.mxu0 %v5206
        %5272 = vmatprep.subr.bf16.mxu0 %v5209
        %5273 = vmatpush1.bf16.msra.mxu0 %v5208
        %5274 = vmatprep.subr.bf16.mxu0 %v5211
        %5275 = vmatpush1.bf16.msra.mxu0 %v5210
        %5276 = vmatprep.subr.bf16.mxu0 %v5213
        %5277 = vmatpush1.bf16.msra.mxu0 %v5212
        %5278 = vmatprep.subr.bf16.mxu0 %v5215
        %5279 = vmatpush1.bf16.msra.mxu0 %v5214
        %5280 = vmatprep.subr.bf16.mxu0 %v5217
        %5281 = vmatpush1.bf16.msra.mxu0 %v5216
        %5282 = vmatprep.subr.bf16.mxu0 %v5219
        %5283 = vmatpush1.bf16.msra.mxu0 %v5218
        %5284 = vmatprep.subr.bf16.mxu0 %v5221
        %5285 = vmatpush1.bf16.msra.mxu0 %v5220
        %5286 = vmatprep.subr.bf16.mxu0 %v5223
        %5287 = vmatpush1.bf16.msra.mxu0 %v5222
        %5288 = vmatprep.subr.bf16.mxu0 %v5225
        %5289 = vmatpush1.bf16.msra.mxu0 %v5224
        %5290 = vmatprep.subr.bf16.mxu0 %v5227
        %5291 = vmatpush1.bf16.msra.mxu0 %v5226
        %5292 = vmatprep.mubr.bf16.mxu0 %v4294
        %5293 = vmatmul.mubr.bf16.gmra.mrb[0].mxu0 %v4293
        %v5294 = vpop.f32.mrb[0].mxu0
        %v5295 = vadd.f32 0.0, %v5294
        %v5296 = vpop.f32.mrb[0].mxu0
        %v5297 = vadd.f32 0.0, %v5296
        %v5298 = vpop.f32.mrb[0].mxu0
        %v5299 = vadd.f32 0.0, %v5298
        %v5300 = vpop.f32.mrb[0].mxu0
        %v5301 = vadd.f32 0.0, %v5300
        %5302 = vmatprep.mubr.bf16.mxu0 %v4296
        %5303 = vmatmul.mubr.bf16.gmra.mrb[0].mxu0 %v4295
        %v5304 = vpop.f32.mrb[0].mxu0
        %v5305 = vadd.f32 0.0, %v5304
        %v5306 = vpop.f32.mrb[0].mxu0
        %v5307 = vadd.f32 0.0, %v5306
        %v5308 = vpop.f32.mrb[0].mxu0
        %v5309 = vadd.f32 0.0, %v5308
        %v5310 = vpop.f32.mrb[0].mxu0
        %v5311 = vadd.f32 0.0, %v5310
        %5312 = vdwg.mxu0
        %v5313 = vadd.f32 %v5060, %v5295
        %v5314 = vadd.f32 %v5061, %v5297
        %v5315 = vadd.f32 %v5062, %v5299
        %v5316 = vadd.f32 %v5063, %v5301
        %v5317 = vadd.f32 %v5064, %v5305
        %v5318 = vadd.f32 %v5065, %v5307
        %v5319 = vadd.f32 %v5066, %v5309
        %v5320 = vadd.f32 %v5067, %v5311
        %v5321 = vld [vmem:[#allocation23 + $0x400] sm:$0xff]
        %v5322 = vld [vmem:[#allocation23 + $0x408] sm:$0xff]
        %v5323 = vld [vmem:[#allocation23 + $0x410] sm:$0xff]
        %v5324 = vld [vmem:[#allocation23 + $0x418] sm:$0xff]
        %v5325 = vld [vmem:[#allocation23 + $0x420] sm:$0xff]
        %v5326 = vld [vmem:[#allocation23 + $0x428] sm:$0xff]
        %v5327 = vld [vmem:[#allocation23 + $0x430] sm:$0xff]
        %v5328 = vld [vmem:[#allocation23 + $0x438] sm:$0xff]
        %v5329 = vld [vmem:[#allocation23 + $0x440] sm:$0xff]
        %v5330 = vld [vmem:[#allocation23 + $0x448] sm:$0xff]
        %v5331 = vld [vmem:[#allocation23 + $0x450] sm:$0xff]
        %v5332 = vld [vmem:[#allocation23 + $0x458] sm:$0xff]
        %v5333 = vld [vmem:[#allocation23 + $0x460] sm:$0xff]
        %v5334 = vld [vmem:[#allocation23 + $0x468] sm:$0xff]
        %v5335 = vld [vmem:[#allocation23 + $0x470] sm:$0xff]
        %v5336 = vld [vmem:[#allocation23 + $0x478] sm:$0xff]
        %v5337 = vld [vmem:[#allocation23 + $0x480] sm:$0xff]
        %v5338 = vld [vmem:[#allocation23 + $0x488] sm:$0xff]
        %v5339 = vld [vmem:[#allocation23 + $0x490] sm:$0xff]
        %v5340 = vld [vmem:[#allocation23 + $0x498] sm:$0xff]
        %v5341 = vld [vmem:[#allocation23 + $0x4a0] sm:$0xff]
        %v5342 = vld [vmem:[#allocation23 + $0x4a8] sm:$0xff]
        %v5343 = vld [vmem:[#allocation23 + $0x4b0] sm:$0xff]
        %v5344 = vld [vmem:[#allocation23 + $0x4b8] sm:$0xff]
        %v5345 = vld [vmem:[#allocation23 + $0x4c0] sm:$0xff]
        %v5346 = vld [vmem:[#allocation23 + $0x4c8] sm:$0xff]
        %v5347 = vld [vmem:[#allocation23 + $0x4d0] sm:$0xff]
        %v5348 = vld [vmem:[#allocation23 + $0x4d8] sm:$0xff]
        %v5349 = vld [vmem:[#allocation23 + $0x4e0] sm:$0xff]
        %v5350 = vld [vmem:[#allocation23 + $0x4e8] sm:$0xff]
        %v5351 = vld [vmem:[#allocation23 + $0x4f0] sm:$0xff]
        %v5352 = vld [vmem:[#allocation23 + $0x4f8] sm:$0xff]
        %v5385 = vunpack.c.l.b16 %v5321
        %v5386 = vunpack.c.h.b16 %v5321
        %v5387 = vunpack.c.l.b16 %v5322
        %v5388 = vunpack.c.h.b16 %v5322
        %v5389 = vunpack.c.l.b16 %v5323
        %v5390 = vunpack.c.h.b16 %v5323
        %v5391 = vunpack.c.l.b16 %v5324
        %v5392 = vunpack.c.h.b16 %v5324
        %v5393 = vunpack.c.l.b16 %v5325
        %v5394 = vunpack.c.h.b16 %v5325
        %v5395 = vunpack.c.l.b16 %v5326
        %v5396 = vunpack.c.h.b16 %v5326
        %v5397 = vunpack.c.l.b16 %v5327
        %v5398 = vunpack.c.h.b16 %v5327
        %v5399 = vunpack.c.l.b16 %v5328
        %v5400 = vunpack.c.h.b16 %v5328
        %v5401 = vunpack.c.l.b16 %v5329
        %v5402 = vunpack.c.h.b16 %v5329
        %v5403 = vunpack.c.l.b16 %v5330
        %v5404 = vunpack.c.h.b16 %v5330
        %v5405 = vunpack.c.l.b16 %v5331
        %v5406 = vunpack.c.h.b16 %v5331
        %v5407 = vunpack.c.l.b16 %v5332
        %v5408 = vunpack.c.h.b16 %v5332
        %v5409 = vunpack.c.l.b16 %v5333
        %v5410 = vunpack.c.h.b16 %v5333
        %v5411 = vunpack.c.l.b16 %v5334
        %v5412 = vunpack.c.h.b16 %v5334
        %v5413 = vunpack.c.l.b16 %v5335
        %v5414 = vunpack.c.h.b16 %v5335
        %v5415 = vunpack.c.l.b16 %v5336
        %v5416 = vunpack.c.h.b16 %v5336
        %v5417 = vunpack.c.l.b16 %v5337
        %v5418 = vunpack.c.h.b16 %v5337
        %v5419 = vunpack.c.l.b16 %v5338
        %v5420 = vunpack.c.h.b16 %v5338
        %v5421 = vunpack.c.l.b16 %v5339
        %v5422 = vunpack.c.h.b16 %v5339
        %v5423 = vunpack.c.l.b16 %v5340
        %v5424 = vunpack.c.h.b16 %v5340
        %v5425 = vunpack.c.l.b16 %v5341
        %v5426 = vunpack.c.h.b16 %v5341
        %v5427 = vunpack.c.l.b16 %v5342
        %v5428 = vunpack.c.h.b16 %v5342
        %v5429 = vunpack.c.l.b16 %v5343
        %v5430 = vunpack.c.h.b16 %v5343
        %v5431 = vunpack.c.l.b16 %v5344
        %v5432 = vunpack.c.h.b16 %v5344
        %v5433 = vunpack.c.l.b16 %v5345
        %v5434 = vunpack.c.h.b16 %v5345
        %v5435 = vunpack.c.l.b16 %v5346
        %v5436 = vunpack.c.h.b16 %v5346
        %v5437 = vunpack.c.l.b16 %v5347
        %v5438 = vunpack.c.h.b16 %v5347
        %v5439 = vunpack.c.l.b16 %v5348
        %v5440 = vunpack.c.h.b16 %v5348
        %v5441 = vunpack.c.l.b16 %v5349
        %v5442 = vunpack.c.h.b16 %v5349
        %v5443 = vunpack.c.l.b16 %v5350
        %v5444 = vunpack.c.h.b16 %v5350
        %v5445 = vunpack.c.l.b16 %v5351
        %v5446 = vunpack.c.h.b16 %v5351
        %v5447 = vunpack.c.l.b16 %v5352
        %v5448 = vunpack.c.h.b16 %v5352
        %v5449 = vpack.c.b16 %v5387, %v5385
        %v5450 = vpack.c.b16 %v5388, %v5386
        %v5451 = vpack.c.b16 %v5391, %v5389
        %v5452 = vpack.c.b16 %v5392, %v5390
        %v5453 = vpack.c.b16 %v5395, %v5393
        %v5454 = vpack.c.b16 %v5396, %v5394
        %v5455 = vpack.c.b16 %v5399, %v5397
        %v5456 = vpack.c.b16 %v5400, %v5398
        %v5457 = vpack.c.b16 %v5403, %v5401
        %v5458 = vpack.c.b16 %v5404, %v5402
        %v5459 = vpack.c.b16 %v5407, %v5405
        %v5460 = vpack.c.b16 %v5408, %v5406
        %v5461 = vpack.c.b16 %v5411, %v5409
        %v5462 = vpack.c.b16 %v5412, %v5410
        %v5463 = vpack.c.b16 %v5415, %v5413
        %v5464 = vpack.c.b16 %v5416, %v5414
        %v5465 = vpack.c.b16 %v5419, %v5417
        %v5466 = vpack.c.b16 %v5420, %v5418
        %v5467 = vpack.c.b16 %v5423, %v5421
        %v5468 = vpack.c.b16 %v5424, %v5422
        %v5469 = vpack.c.b16 %v5427, %v5425
        %v5470 = vpack.c.b16 %v5428, %v5426
        %v5471 = vpack.c.b16 %v5431, %v5429
        %v5472 = vpack.c.b16 %v5432, %v5430
        %v5473 = vpack.c.b16 %v5435, %v5433
        %v5474 = vpack.c.b16 %v5436, %v5434
        %v5475 = vpack.c.b16 %v5439, %v5437
        %v5476 = vpack.c.b16 %v5440, %v5438
        %v5477 = vpack.c.b16 %v5443, %v5441
        %v5478 = vpack.c.b16 %v5444, %v5442
        %v5479 = vpack.c.b16 %v5447, %v5445
        %v5480 = vpack.c.b16 %v5448, %v5446
        %5513 = vmatprep.subr.bf16.mxu0 %v5450
        %5514 = vmatpush1.bf16.msra.mxu0 %v5449
        %5515 = vmatprep.subr.bf16.mxu0 %v5452
        %5516 = vmatpush1.bf16.msra.mxu0 %v5451
        %5517 = vmatprep.subr.bf16.mxu0 %v5454
        %5518 = vmatpush1.bf16.msra.mxu0 %v5453
        %5519 = vmatprep.subr.bf16.mxu0 %v5456
        %5520 = vmatpush1.bf16.msra.mxu0 %v5455
        %5521 = vmatprep.subr.bf16.mxu0 %v5458
        %5522 = vmatpush1.bf16.msra.mxu0 %v5457
        %5523 = vmatprep.subr.bf16.mxu0 %v5460
        %5524 = vmatpush1.bf16.msra.mxu0 %v5459
        %5525 = vmatprep.subr.bf16.mxu0 %v5462
        %5526 = vmatpush1.bf16.msra.mxu0 %v5461
        %5527 = vmatprep.subr.bf16.mxu0 %v5464
        %5528 = vmatpush1.bf16.msra.mxu0 %v5463
        %5529 = vmatprep.subr.bf16.mxu0 %v5466
        %5530 = vmatpush1.bf16.msra.mxu0 %v5465
        %5531 = vmatprep.subr.bf16.mxu0 %v5468
        %5532 = vmatpush1.bf16.msra.mxu0 %v5467
        %5533 = vmatprep.subr.bf16.mxu0 %v5470
        %5534 = vmatpush1.bf16.msra.mxu0 %v5469
        %5535 = vmatprep.subr.bf16.mxu0 %v5472
        %5536 = vmatpush1.bf16.msra.mxu0 %v5471
        %5537 = vmatprep.subr.bf16.mxu0 %v5474
        %5538 = vmatpush1.bf16.msra.mxu0 %v5473
        %5539 = vmatprep.subr.bf16.mxu0 %v5476
        %5540 = vmatpush1.bf16.msra.mxu0 %v5475
        %5541 = vmatprep.subr.bf16.mxu0 %v5478
        %5542 = vmatpush1.bf16.msra.mxu0 %v5477
        %5543 = vmatprep.subr.bf16.mxu0 %v5480
        %5544 = vmatpush1.bf16.msra.mxu0 %v5479
        %5545 = vmatprep.mubr.bf16.mxu0 %v4298
        %5546 = vmatmul.mubr.bf16.gmra.mrb[0].mxu0 %v4297
        %v5547 = vpop.f32.mrb[0].mxu0
        %v5548 = vadd.f32 0.0, %v5547
        %v5549 = vpop.f32.mrb[0].mxu0
        %v5550 = vadd.f32 0.0, %v5549
        %v5551 = vpop.f32.mrb[0].mxu0
        %v5552 = vadd.f32 0.0, %v5551
        %v5553 = vpop.f32.mrb[0].mxu0
        %v5554 = vadd.f32 0.0, %v5553
        %5555 = vmatprep.mubr.bf16.mxu0 %v4300
        %5556 = vmatmul.mubr.bf16.gmra.mrb[0].mxu0 %v4299
        %v5557 = vpop.f32.mrb[0].mxu0
        %v5558 = vadd.f32 0.0, %v5557
        %v5559 = vpop.f32.mrb[0].mxu0
        %v5560 = vadd.f32 0.0, %v5559
        %v5561 = vpop.f32.mrb[0].mxu0
        %v5562 = vadd.f32 0.0, %v5561
        %v5563 = vpop.f32.mrb[0].mxu0
        %v5564 = vadd.f32 0.0, %v5563
        %5565 = vdwg.mxu0
        %v5566 = vadd.f32 %v5313, %v5548
        %v5567 = vadd.f32 %v5314, %v5550
        %v5568 = vadd.f32 %v5315, %v5552
        %v5569 = vadd.f32 %v5316, %v5554
        %v5570 = vadd.f32 %v5317, %v5558
        %v5571 = vadd.f32 %v5318, %v5560
        %v5572 = vadd.f32 %v5319, %v5562
        %v5573 = vadd.f32 %v5320, %v5564
        %v5574 = vld [vmem:[#allocation23 + $0x500] sm:$0xff]
        %v5575 = vld [vmem:[#allocation23 + $0x508] sm:$0xff]
        %v5576 = vld [vmem:[#allocation23 + $0x510] sm:$0xff]
        %v5577 = vld [vmem:[#allocation23 + $0x518] sm:$0xff]
        %v5578 = vld [vmem:[#allocation23 + $0x520] sm:$0xff]
        %v5579 = vld [vmem:[#allocation23 + $0x528] sm:$0xff]
        %v5580 = vld [vmem:[#allocation23 + $0x530] sm:$0xff]
        %v5581 = vld [vmem:[#allocation23 + $0x538] sm:$0xff]
        %v5582 = vld [vmem:[#allocation23 + $0x540] sm:$0xff]
        %v5583 = vld [vmem:[#allocation23 + $0x548] sm:$0xff]
        %v5584 = vld [vmem:[#allocation23 + $0x550] sm:$0xff]
        %v5585 = vld [vmem:[#allocation23 + $0x558] sm:$0xff]
        %v5586 = vld [vmem:[#allocation23 + $0x560] sm:$0xff]
        %v5587 = vld [vmem:[#allocation23 + $0x568] sm:$0xff]
        %v5588 = vld [vmem:[#allocation23 + $0x570] sm:$0xff]
        %v5589 = vld [vmem:[#allocation23 + $0x578] sm:$0xff]
        %v5590 = vld [vmem:[#allocation23 + $0x580] sm:$0xff]
        %v5591 = vld [vmem:[#allocation23 + $0x588] sm:$0xff]
        %v5592 = vld [vmem:[#allocation23 + $0x590] sm:$0xff]
        %v5593 = vld [vmem:[#allocation23 + $0x598] sm:$0xff]
        %v5594 = vld [vmem:[#allocation23 + $0x5a0] sm:$0xff]
        %v5595 = vld [vmem:[#allocation23 + $0x5a8] sm:$0xff]
        %v5596 = vld [vmem:[#allocation23 + $0x5b0] sm:$0xff]
        %v5597 = vld [vmem:[#allocation23 + $0x5b8] sm:$0xff]
        %v5598 = vld [vmem:[#allocation23 + $0x5c0] sm:$0xff]
        %v5599 = vld [vmem:[#allocation23 + $0x5c8] sm:$0xff]
        %v5600 = vld [vmem:[#allocation23 + $0x5d0] sm:$0xff]
        %v5601 = vld [vmem:[#allocation23 + $0x5d8] sm:$0xff]
        %v5602 = vld [vmem:[#allocation23 + $0x5e0] sm:$0xff]
        %v5603 = vld [vmem:[#allocation23 + $0x5e8] sm:$0xff]
        %v5604 = vld [vmem:[#allocation23 + $0x5f0] sm:$0xff]
        %v5605 = vld [vmem:[#allocation23 + $0x5f8] sm:$0xff]
        %v5638 = vunpack.c.l.b16 %v5574
        %v5639 = vunpack.c.h.b16 %v5574
        %v5640 = vunpack.c.l.b16 %v5575
        %v5641 = vunpack.c.h.b16 %v5575
        %v5642 = vunpack.c.l.b16 %v5576
        %v5643 = vunpack.c.h.b16 %v5576
        %v5644 = vunpack.c.l.b16 %v5577
        %v5645 = vunpack.c.h.b16 %v5577
        %v5646 = vunpack.c.l.b16 %v5578
        %v5647 = vunpack.c.h.b16 %v5578
        %v5648 = vunpack.c.l.b16 %v5579
        %v5649 = vunpack.c.h.b16 %v5579
        %v5650 = vunpack.c.l.b16 %v5580
        %v5651 = vunpack.c.h.b16 %v5580
        %v5652 = vunpack.c.l.b16 %v5581
        %v5653 = vunpack.c.h.b16 %v5581
        %v5654 = vunpack.c.l.b16 %v5582
        %v5655 = vunpack.c.h.b16 %v5582
        %v5656 = vunpack.c.l.b16 %v5583
        %v5657 = vunpack.c.h.b16 %v5583
        %v5658 = vunpack.c.l.b16 %v5584
        %v5659 = vunpack.c.h.b16 %v5584
        %v5660 = vunpack.c.l.b16 %v5585
        %v5661 = vunpack.c.h.b16 %v5585
        %v5662 = vunpack.c.l.b16 %v5586
        %v5663 = vunpack.c.h.b16 %v5586
        %v5664 = vunpack.c.l.b16 %v5587
        %v5665 = vunpack.c.h.b16 %v5587
        %v5666 = vunpack.c.l.b16 %v5588
        %v5667 = vunpack.c.h.b16 %v5588
        %v5668 = vunpack.c.l.b16 %v5589
        %v5669 = vunpack.c.h.b16 %v5589
        %v5670 = vunpack.c.l.b16 %v5590
        %v5671 = vunpack.c.h.b16 %v5590
        %v5672 = vunpack.c.l.b16 %v5591
        %v5673 = vunpack.c.h.b16 %v5591
        %v5674 = vunpack.c.l.b16 %v5592
        %v5675 = vunpack.c.h.b16 %v5592
        %v5676 = vunpack.c.l.b16 %v5593
        %v5677 = vunpack.c.h.b16 %v5593
        %v5678 = vunpack.c.l.b16 %v5594
        %v5679 = vunpack.c.h.b16 %v5594
        %v5680 = vunpack.c.l.b16 %v5595
        %v5681 = vunpack.c.h.b16 %v5595
        %v5682 = vunpack.c.l.b16 %v5596
        %v5683 = vunpack.c.h.b16 %v5596
        %v5684 = vunpack.c.l.b16 %v5597
        %v5685 = vunpack.c.h.b16 %v5597
        %v5686 = vunpack.c.l.b16 %v5598
        %v5687 = vunpack.c.h.b16 %v5598
        %v5688 = vunpack.c.l.b16 %v5599
        %v5689 = vunpack.c.h.b16 %v5599
        %v5690 = vunpack.c.l.b16 %v5600
        %v5691 = vunpack.c.h.b16 %v5600
        %v5692 = vunpack.c.l.b16 %v5601
        %v5693 = vunpack.c.h.b16 %v5601
        %v5694 = vunpack.c.l.b16 %v5602
        %v5695 = vunpack.c.h.b16 %v5602
        %v5696 = vunpack.c.l.b16 %v5603
        %v5697 = vunpack.c.h.b16 %v5603
        %v5698 = vunpack.c.l.b16 %v5604
        %v5699 = vunpack.c.h.b16 %v5604
        %v5700 = vunpack.c.l.b16 %v5605
        %v5701 = vunpack.c.h.b16 %v5605
        %v5702 = vpack.c.b16 %v5640, %v5638
        %v5703 = vpack.c.b16 %v5641, %v5639
        %v5704 = vpack.c.b16 %v5644, %v5642
        %v5705 = vpack.c.b16 %v5645, %v5643
        %v5706 = vpack.c.b16 %v5648, %v5646
        %v5707 = vpack.c.b16 %v5649, %v5647
        %v5708 = vpack.c.b16 %v5652, %v5650
        %v5709 = vpack.c.b16 %v5653, %v5651
        %v5710 = vpack.c.b16 %v5656, %v5654
        %v5711 = vpack.c.b16 %v5657, %v5655
        %v5712 = vpack.c.b16 %v5660, %v5658
        %v5713 = vpack.c.b16 %v5661, %v5659
        %v5714 = vpack.c.b16 %v5664, %v5662
        %v5715 = vpack.c.b16 %v5665, %v5663
        %v5716 = vpack.c.b16 %v5668, %v5666
        %v5717 = vpack.c.b16 %v5669, %v5667
        %v5718 = vpack.c.b16 %v5672, %v5670
        %v5719 = vpack.c.b16 %v5673, %v5671
        %v5720 = vpack.c.b16 %v5676, %v5674
        %v5721 = vpack.c.b16 %v5677, %v5675
        %v5722 = vpack.c.b16 %v5680, %v5678
        %v5723 = vpack.c.b16 %v5681, %v5679
        %v5724 = vpack.c.b16 %v5684, %v5682
        %v5725 = vpack.c.b16 %v5685, %v5683
        %v5726 = vpack.c.b16 %v5688, %v5686
        %v5727 = vpack.c.b16 %v5689, %v5687
        %v5728 = vpack.c.b16 %v5692, %v5690
        %v5729 = vpack.c.b16 %v5693, %v5691
        %v5730 = vpack.c.b16 %v5696, %v5694
        %v5731 = vpack.c.b16 %v5697, %v5695
        %v5732 = vpack.c.b16 %v5700, %v5698
        %v5733 = vpack.c.b16 %v5701, %v5699
        %5766 = vmatprep.subr.bf16.mxu0 %v5703
        %5767 = vmatpush1.bf16.msra.mxu0 %v5702
        %5768 = vmatprep.subr.bf16.mxu0 %v5705
        %5769 = vmatpush1.bf16.msra.mxu0 %v5704
        %5770 = vmatprep.subr.bf16.mxu0 %v5707
        %5771 = vmatpush1.bf16.msra.mxu0 %v5706
        %5772 = vmatprep.subr.bf16.mxu0 %v5709
        %5773 = vmatpush1.bf16.msra.mxu0 %v5708
        %5774 = vmatprep.subr.bf16.mxu0 %v5711
        %5775 = vmatpush1.bf16.msra.mxu0 %v5710
        %5776 = vmatprep.subr.bf16.mxu0 %v5713
        %5777 = vmatpush1.bf16.msra.mxu0 %v5712
        %5778 = vmatprep.subr.bf16.mxu0 %v5715
        %5779 = vmatpush1.bf16.msra.mxu0 %v5714
        %5780 = vmatprep.subr.bf16.mxu0 %v5717
        %5781 = vmatpush1.bf16.msra.mxu0 %v5716
        %5782 = vmatprep.subr.bf16.mxu0 %v5719
        %5783 = vmatpush1.bf16.msra.mxu0 %v5718
        %5784 = vmatprep.subr.bf16.mxu0 %v5721
        %5785 = vmatpush1.bf16.msra.mxu0 %v5720
        %5786 = vmatprep.subr.bf16.mxu0 %v5723
        %5787 = vmatpush1.bf16.msra.mxu0 %v5722
        %5788 = vmatprep.subr.bf16.mxu0 %v5725
        %5789 = vmatpush1.bf16.msra.mxu0 %v5724
        %5790 = vmatprep.subr.bf16.mxu0 %v5727
        %5791 = vmatpush1.bf16.msra.mxu0 %v5726
        %5792 = vmatprep.subr.bf16.mxu0 %v5729
        %5793 = vmatpush1.bf16.msra.mxu0 %v5728
        %5794 = vmatprep.subr.bf16.mxu0 %v5731
        %5795 = vmatpush1.bf16.msra.mxu0 %v5730
        %5796 = vmatprep.subr.bf16.mxu0 %v5733
        %5797 = vmatpush1.bf16.msra.mxu0 %v5732
        %5798 = vmatprep.mubr.bf16.mxu0 %v4302
        %5799 = vmatmul.mubr.bf16.gmra.mrb[0].mxu0 %v4301
        %v5800 = vpop.f32.mrb[0].mxu0
        %v5801 = vadd.f32 0.0, %v5800
        %v5802 = vpop.f32.mrb[0].mxu0
        %v5803 = vadd.f32 0.0, %v5802
        %v5804 = vpop.f32.mrb[0].mxu0
        %v5805 = vadd.f32 0.0, %v5804
        %v5806 = vpop.f32.mrb[0].mxu0
        %v5807 = vadd.f32 0.0, %v5806
        %5808 = vmatprep.mubr.bf16.mxu0 %v4304
        %5809 = vmatmul.mubr.bf16.gmra.mrb[0].mxu0 %v4303
        %v5810 = vpop.f32.mrb[0].mxu0
        %v5811 = vadd.f32 0.0, %v5810
        %v5812 = vpop.f32.mrb[0].mxu0
        %v5813 = vadd.f32 0.0, %v5812
        %v5814 = vpop.f32.mrb[0].mxu0
        %v5815 = vadd.f32 0.0, %v5814
        %v5816 = vpop.f32.mrb[0].mxu0
        %v5817 = vadd.f32 0.0, %v5816
        %5818 = vdwg.mxu0
        %v5819 = vadd.f32 %v5566, %v5801
        %v5820 = vadd.f32 %v5567, %v5803
        %v5821 = vadd.f32 %v5568, %v5805
        %v5822 = vadd.f32 %v5569, %v5807
        %v5823 = vadd.f32 %v5570, %v5811
        %v5824 = vadd.f32 %v5571, %v5813
        %v5825 = vadd.f32 %v5572, %v5815
        %v5826 = vadd.f32 %v5573, %v5817
        %v5827 = vld [vmem:[#allocation23 + $0x600] sm:$0xff]
        %v5828 = vld [vmem:[#allocation23 + $0x608] sm:$0xff]
        %v5829 = vld [vmem:[#allocation23 + $0x610] sm:$0xff]
        %v5830 = vld [vmem:[#allocation23 + $0x618] sm:$0xff]
        %v5831 = vld [vmem:[#allocation23 + $0x620] sm:$0xff]
        %v5832 = vld [vmem:[#allocation23 + $0x628] sm:$0xff]
        %v5833 = vld [vmem:[#allocation23 + $0x630] sm:$0xff]
        %v5834 = vld [vmem:[#allocation23 + $0x638] sm:$0xff]
        %v5835 = vld [vmem:[#allocation23 + $0x640] sm:$0xff]
        %v5836 = vld [vmem:[#allocation23 + $0x648] sm:$0xff]
        %v5837 = vld [vmem:[#allocation23 + $0x650] sm:$0xff]
        %v5838 = vld [vmem:[#allocation23 + $0x658] sm:$0xff]
        %v5839 = vld [vmem:[#allocation23 + $0x660] sm:$0xff]
        %v5840 = vld [vmem:[#allocation23 + $0x668] sm:$0xff]
        %v5841 = vld [vmem:[#allocation23 + $0x670] sm:$0xff]
        %v5842 = vld [vmem:[#allocation23 + $0x678] sm:$0xff]
        %v5843 = vld [vmem:[#allocation23 + $0x680] sm:$0xff]
        %v5844 = vld [vmem:[#allocation23 + $0x688] sm:$0xff]
        %v5845 = vld [vmem:[#allocation23 + $0x690] sm:$0xff]
        %v5846 = vld [vmem:[#allocation23 + $0x698] sm:$0xff]
        %v5847 = vld [vmem:[#allocation23 + $0x6a0] sm:$0xff]
        %v5848 = vld [vmem:[#allocation23 + $0x6a8] sm:$0xff]
        %v5849 = vld [vmem:[#allocation23 + $0x6b0] sm:$0xff]
        %v5850 = vld [vmem:[#allocation23 + $0x6b8] sm:$0xff]
        %v5851 = vld [vmem:[#allocation23 + $0x6c0] sm:$0xff]
        %v5852 = vld [vmem:[#allocation23 + $0x6c8] sm:$0xff]
        %v5853 = vld [vmem:[#allocation23 + $0x6d0] sm:$0xff]
        %v5854 = vld [vmem:[#allocation23 + $0x6d8] sm:$0xff]
        %v5855 = vld [vmem:[#allocation23 + $0x6e0] sm:$0xff]
        %v5856 = vld [vmem:[#allocation23 + $0x6e8] sm:$0xff]
        %v5857 = vld [vmem:[#allocation23 + $0x6f0] sm:$0xff]
        %v5858 = vld [vmem:[#allocation23 + $0x6f8] sm:$0xff]
        %v5891 = vunpack.c.l.b16 %v5827
        %v5892 = vunpack.c.h.b16 %v5827
        %v5893 = vunpack.c.l.b16 %v5828
        %v5894 = vunpack.c.h.b16 %v5828
        %v5895 = vunpack.c.l.b16 %v5829
        %v5896 = vunpack.c.h.b16 %v5829
        %v5897 = vunpack.c.l.b16 %v5830
        %v5898 = vunpack.c.h.b16 %v5830
        %v5899 = vunpack.c.l.b16 %v5831
        %v5900 = vunpack.c.h.b16 %v5831
        %v5901 = vunpack.c.l.b16 %v5832
        %v5902 = vunpack.c.h.b16 %v5832
        %v5903 = vunpack.c.l.b16 %v5833
        %v5904 = vunpack.c.h.b16 %v5833
        %v5905 = vunpack.c.l.b16 %v5834
        %v5906 = vunpack.c.h.b16 %v5834
        %v5907 = vunpack.c.l.b16 %v5835
        %v5908 = vunpack.c.h.b16 %v5835
        %v5909 = vunpack.c.l.b16 %v5836
        %v5910 = vunpack.c.h.b16 %v5836
        %v5911 = vunpack.c.l.b16 %v5837
        %v5912 = vunpack.c.h.b16 %v5837
        %v5913 = vunpack.c.l.b16 %v5838
        %v5914 = vunpack.c.h.b16 %v5838
        %v5915 = vunpack.c.l.b16 %v5839
        %v5916 = vunpack.c.h.b16 %v5839
        %v5917 = vunpack.c.l.b16 %v5840
        %v5918 = vunpack.c.h.b16 %v5840
        %v5919 = vunpack.c.l.b16 %v5841
        %v5920 = vunpack.c.h.b16 %v5841
        %v5921 = vunpack.c.l.b16 %v5842
        %v5922 = vunpack.c.h.b16 %v5842
        %v5923 = vunpack.c.l.b16 %v5843
        %v5924 = vunpack.c.h.b16 %v5843
        %v5925 = vunpack.c.l.b16 %v5844
        %v5926 = vunpack.c.h.b16 %v5844
        %v5927 = vunpack.c.l.b16 %v5845
        %v5928 = vunpack.c.h.b16 %v5845
        %v5929 = vunpack.c.l.b16 %v5846
        %v5930 = vunpack.c.h.b16 %v5846
        %v5931 = vunpack.c.l.b16 %v5847
        %v5932 = vunpack.c.h.b16 %v5847
        %v5933 = vunpack.c.l.b16 %v5848
        %v5934 = vunpack.c.h.b16 %v5848
        %v5935 = vunpack.c.l.b16 %v5849
        %v5936 = vunpack.c.h.b16 %v5849
        %v5937 = vunpack.c.l.b16 %v5850
        %v5938 = vunpack.c.h.b16 %v5850
        %v5939 = vunpack.c.l.b16 %v5851
        %v5940 = vunpack.c.h.b16 %v5851
        %v5941 = vunpack.c.l.b16 %v5852
        %v5942 = vunpack.c.h.b16 %v5852
        %v5943 = vunpack.c.l.b16 %v5853
        %v5944 = vunpack.c.h.b16 %v5853
        %v5945 = vunpack.c.l.b16 %v5854
        %v5946 = vunpack.c.h.b16 %v5854
        %v5947 = vunpack.c.l.b16 %v5855
        %v5948 = vunpack.c.h.b16 %v5855
        %v5949 = vunpack.c.l.b16 %v5856
        %v5950 = vunpack.c.h.b16 %v5856
        %v5951 = vunpack.c.l.b16 %v5857
        %v5952 = vunpack.c.h.b16 %v5857
        %v5953 = vunpack.c.l.b16 %v5858
        %v5954 = vunpack.c.h.b16 %v5858
        %v5955 = vpack.c.b16 %v5893, %v5891
        %v5956 = vpack.c.b16 %v5894, %v5892
        %v5957 = vpack.c.b16 %v5897, %v5895
        %v5958 = vpack.c.b16 %v5898, %v5896
        %v5959 = vpack.c.b16 %v5901, %v5899
        %v5960 = vpack.c.b16 %v5902, %v5900
        %v5961 = vpack.c.b16 %v5905, %v5903
        %v5962 = vpack.c.b16 %v5906, %v5904
        %v5963 = vpack.c.b16 %v5909, %v5907
        %v5964 = vpack.c.b16 %v5910, %v5908
        %v5965 = vpack.c.b16 %v5913, %v5911
        %v5966 = vpack.c.b16 %v5914, %v5912
        %v5967 = vpack.c.b16 %v5917, %v5915
        %v5968 = vpack.c.b16 %v5918, %v5916
        %v5969 = vpack.c.b16 %v5921, %v5919
        %v5970 = vpack.c.b16 %v5922, %v5920
        %v5971 = vpack.c.b16 %v5925, %v5923
        %v5972 = vpack.c.b16 %v5926, %v5924
        %v5973 = vpack.c.b16 %v5929, %v5927
        %v5974 = vpack.c.b16 %v5930, %v5928
        %v5975 = vpack.c.b16 %v5933, %v5931
        %v5976 = vpack.c.b16 %v5934, %v5932
        %v5977 = vpack.c.b16 %v5937, %v5935
        %v5978 = vpack.c.b16 %v5938, %v5936
        %v5979 = vpack.c.b16 %v5941, %v5939
        %v5980 = vpack.c.b16 %v5942, %v5940
        %v5981 = vpack.c.b16 %v5945, %v5943
        %v5982 = vpack.c.b16 %v5946, %v5944
        %v5983 = vpack.c.b16 %v5949, %v5947
        %v5984 = vpack.c.b16 %v5950, %v5948
        %v5985 = vpack.c.b16 %v5953, %v5951
        %v5986 = vpack.c.b16 %v5954, %v5952
        %6019 = vmatprep.subr.bf16.mxu0 %v5956
        %6020 = vmatpush1.bf16.msra.mxu0 %v5955
        %6021 = vmatprep.subr.bf16.mxu0 %v5958
        %6022 = vmatpush1.bf16.msra.mxu0 %v5957
        %6023 = vmatprep.subr.bf16.mxu0 %v5960
        %6024 = vmatpush1.bf16.msra.mxu0 %v5959
        %6025 = vmatprep.subr.bf16.mxu0 %v5962
        %6026 = vmatpush1.bf16.msra.mxu0 %v5961
        %6027 = vmatprep.subr.bf16.mxu0 %v5964
        %6028 = vmatpush1.bf16.msra.mxu0 %v5963
        %6029 = vmatprep.subr.bf16.mxu0 %v5966
        %6030 = vmatpush1.bf16.msra.mxu0 %v5965
        %6031 = vmatprep.subr.bf16.mxu0 %v5968
        %6032 = vmatpush1.bf16.msra.mxu0 %v5967
        %6033 = vmatprep.subr.bf16.mxu0 %v5970
        %6034 = vmatpush1.bf16.msra.mxu0 %v5969
        %6035 = vmatprep.subr.bf16.mxu0 %v5972
        %6036 = vmatpush1.bf16.msra.mxu0 %v5971
        %6037 = vmatprep.subr.bf16.mxu0 %v5974
        %6038 = vmatpush1.bf16.msra.mxu0 %v5973
        %6039 = vmatprep.subr.bf16.mxu0 %v5976
        %6040 = vmatpush1.bf16.msra.mxu0 %v5975
        %6041 = vmatprep.subr.bf16.mxu0 %v5978
        %6042 = vmatpush1.bf16.msra.mxu0 %v5977
        %6043 = vmatprep.subr.bf16.mxu0 %v5980
        %6044 = vmatpush1.bf16.msra.mxu0 %v5979
        %6045 = vmatprep.subr.bf16.mxu0 %v5982
        %6046 = vmatpush1.bf16.msra.mxu0 %v5981
        %6047 = vmatprep.subr.bf16.mxu0 %v5984
        %6048 = vmatpush1.bf16.msra.mxu0 %v5983
        %6049 = vmatprep.subr.bf16.mxu0 %v5986
        %6050 = vmatpush1.bf16.msra.mxu0 %v5985
        %6051 = vmatprep.mubr.bf16.mxu0 %v4306
        %6052 = vmatmul.mubr.bf16.gmra.mrb[0].mxu0 %v4305
        %v6053 = vpop.f32.mrb[0].mxu0
        %v6054 = vadd.f32 0.0, %v6053
        %v6055 = vpop.f32.mrb[0].mxu0
        %v6056 = vadd.f32 0.0, %v6055
        %v6057 = vpop.f32.mrb[0].mxu0
        %v6058 = vadd.f32 0.0, %v6057
        %v6059 = vpop.f32.mrb[0].mxu0
        %v6060 = vadd.f32 0.0, %v6059
        %6061 = vmatprep.mubr.bf16.mxu0 %v4308
        %6062 = vmatmul.mubr.bf16.gmra.mrb[0].mxu0 %v4307
        %v6063 = vpop.f32.mrb[0].mxu0
        %v6064 = vadd.f32 0.0, %v6063
        %v6065 = vpop.f32.mrb[0].mxu0
        %v6066 = vadd.f32 0.0, %v6065
        %v6067 = vpop.f32.mrb[0].mxu0
        %v6068 = vadd.f32 0.0, %v6067
        %v6069 = vpop.f32.mrb[0].mxu0
        %v6070 = vadd.f32 0.0, %v6069
        %6071 = vdwg.mxu0
        %v6072 = vadd.f32 %v5819, %v6054
        %v6073 = vadd.f32 %v5820, %v6056
        %v6074 = vadd.f32 %v5821, %v6058
        %v6075 = vadd.f32 %v5822, %v6060
        %v6076 = vadd.f32 %v5823, %v6064
        %v6077 = vadd.f32 %v5824, %v6066
        %v6078 = vadd.f32 %v5825, %v6068
        %v6079 = vadd.f32 %v5826, %v6070
        %v6080 = vld [vmem:[#allocation23 + $0x700] sm:$0xff]
        %v6081 = vld [vmem:[#allocation23 + $0x708] sm:$0xff]
        %v6082 = vld [vmem:[#allocation23 + $0x710] sm:$0xff]
        %v6083 = vld [vmem:[#allocation23 + $0x718] sm:$0xff]
        %v6084 = vld [vmem:[#allocation23 + $0x720] sm:$0xff]
        %v6085 = vld [vmem:[#allocation23 + $0x728] sm:$0xff]
        %v6086 = vld [vmem:[#allocation23 + $0x730] sm:$0xff]
        %v6087 = vld [vmem:[#allocation23 + $0x738] sm:$0xff]
        %v6088 = vld [vmem:[#allocation23 + $0x740] sm:$0xff]
        %v6089 = vld [vmem:[#allocation23 + $0x748] sm:$0xff]
        %v6090 = vld [vmem:[#allocation23 + $0x750] sm:$0xff]
        %v6091 = vld [vmem:[#allocation23 + $0x758] sm:$0xff]
        %v6092 = vld [vmem:[#allocation23 + $0x760] sm:$0xff]
        %v6093 = vld [vmem:[#allocation23 + $0x768] sm:$0xff]
        %v6094 = vld [vmem:[#allocation23 + $0x770] sm:$0xff]
        %v6095 = vld [vmem:[#allocation23 + $0x778] sm:$0xff]
        %v6096 = vld [vmem:[#allocation23 + $0x780] sm:$0xff]
        %v6097 = vld [vmem:[#allocation23 + $0x788] sm:$0xff]
        %v6098 = vld [vmem:[#allocation23 + $0x790] sm:$0xff]
        %v6099 = vld [vmem:[#allocation23 + $0x798] sm:$0xff]
        %v6100 = vld [vmem:[#allocation23 + $0x7a0] sm:$0xff]
        %v6101 = vld [vmem:[#allocation23 + $0x7a8] sm:$0xff]
        %v6102 = vld [vmem:[#allocation23 + $0x7b0] sm:$0xff]
        %v6103 = vld [vmem:[#allocation23 + $0x7b8] sm:$0xff]
        %v6104 = vld [vmem:[#allocation23 + $0x7c0] sm:$0xff]
        %v6105 = vld [vmem:[#allocation23 + $0x7c8] sm:$0xff]
        %v6106 = vld [vmem:[#allocation23 + $0x7d0] sm:$0xff]
        %v6107 = vld [vmem:[#allocation23 + $0x7d8] sm:$0xff]
        %v6108 = vld [vmem:[#allocation23 + $0x7e0] sm:$0xff]
        %v6109 = vld [vmem:[#allocation23 + $0x7e8] sm:$0xff]
        %v6110 = vld [vmem:[#allocation23 + $0x7f0] sm:$0xff]
        %v6111 = vld [vmem:[#allocation23 + $0x7f8] sm:$0xff]
        %v6144 = vunpack.c.l.b16 %v6080
        %v6145 = vunpack.c.h.b16 %v6080
        %v6146 = vunpack.c.l.b16 %v6081
        %v6147 = vunpack.c.h.b16 %v6081
        %v6148 = vunpack.c.l.b16 %v6082
        %v6149 = vunpack.c.h.b16 %v6082
        %v6150 = vunpack.c.l.b16 %v6083
        %v6151 = vunpack.c.h.b16 %v6083
        %v6152 = vunpack.c.l.b16 %v6084
        %v6153 = vunpack.c.h.b16 %v6084
        %v6154 = vunpack.c.l.b16 %v6085
        %v6155 = vunpack.c.h.b16 %v6085
        %v6156 = vunpack.c.l.b16 %v6086
        %v6157 = vunpack.c.h.b16 %v6086
        %v6158 = vunpack.c.l.b16 %v6087
        %v6159 = vunpack.c.h.b16 %v6087
        %v6160 = vunpack.c.l.b16 %v6088
        %v6161 = vunpack.c.h.b16 %v6088
        %v6162 = vunpack.c.l.b16 %v6089
        %v6163 = vunpack.c.h.b16 %v6089
        %v6164 = vunpack.c.l.b16 %v6090
        %v6165 = vunpack.c.h.b16 %v6090
        %v6166 = vunpack.c.l.b16 %v6091
        %v6167 = vunpack.c.h.b16 %v6091
        %v6168 = vunpack.c.l.b16 %v6092
        %v6169 = vunpack.c.h.b16 %v6092
        %v6170 = vunpack.c.l.b16 %v6093
        %v6171 = vunpack.c.h.b16 %v6093
        %v6172 = vunpack.c.l.b16 %v6094
        %v6173 = vunpack.c.h.b16 %v6094
        %v6174 = vunpack.c.l.b16 %v6095
        %v6175 = vunpack.c.h.b16 %v6095
        %v6176 = vunpack.c.l.b16 %v6096
        %v6177 = vunpack.c.h.b16 %v6096
        %v6178 = vunpack.c.l.b16 %v6097
        %v6179 = vunpack.c.h.b16 %v6097
        %v6180 = vunpack.c.l.b16 %v6098
        %v6181 = vunpack.c.h.b16 %v6098
        %v6182 = vunpack.c.l.b16 %v6099
        %v6183 = vunpack.c.h.b16 %v6099
        %v6184 = vunpack.c.l.b16 %v6100
        %v6185 = vunpack.c.h.b16 %v6100
        %v6186 = vunpack.c.l.b16 %v6101
        %v6187 = vunpack.c.h.b16 %v6101
        %v6188 = vunpack.c.l.b16 %v6102
        %v6189 = vunpack.c.h.b16 %v6102
        %v6190 = vunpack.c.l.b16 %v6103
        %v6191 = vunpack.c.h.b16 %v6103
        %v6192 = vunpack.c.l.b16 %v6104
        %v6193 = vunpack.c.h.b16 %v6104
        %v6194 = vunpack.c.l.b16 %v6105
        %v6195 = vunpack.c.h.b16 %v6105
        %v6196 = vunpack.c.l.b16 %v6106
        %v6197 = vunpack.c.h.b16 %v6106
        %v6198 = vunpack.c.l.b16 %v6107
        %v6199 = vunpack.c.h.b16 %v6107
        %v6200 = vunpack.c.l.b16 %v6108
        %v6201 = vunpack.c.h.b16 %v6108
        %v6202 = vunpack.c.l.b16 %v6109
        %v6203 = vunpack.c.h.b16 %v6109
        %v6204 = vunpack.c.l.b16 %v6110
        %v6205 = vunpack.c.h.b16 %v6110
        %v6206 = vunpack.c.l.b16 %v6111
        %v6207 = vunpack.c.h.b16 %v6111
        %v6208 = vpack.c.b16 %v6146, %v6144
        %v6209 = vpack.c.b16 %v6147, %v6145
        %v6210 = vpack.c.b16 %v6150, %v6148
        %v6211 = vpack.c.b16 %v6151, %v6149
        %v6212 = vpack.c.b16 %v6154, %v6152
        %v6213 = vpack.c.b16 %v6155, %v6153
        %v6214 = vpack.c.b16 %v6158, %v6156
        %v6215 = vpack.c.b16 %v6159, %v6157
        %v6216 = vpack.c.b16 %v6162, %v6160
        %v6217 = vpack.c.b16 %v6163, %v6161
        %v6218 = vpack.c.b16 %v6166, %v6164
        %v6219 = vpack.c.b16 %v6167, %v6165
        %v6220 = vpack.c.b16 %v6170, %v6168
        %v6221 = vpack.c.b16 %v6171, %v6169
        %v6222 = vpack.c.b16 %v6174, %v6172
        %v6223 = vpack.c.b16 %v6175, %v6173
        %v6224 = vpack.c.b16 %v6178, %v6176
        %v6225 = vpack.c.b16 %v6179, %v6177
        %v6226 = vpack.c.b16 %v6182, %v6180
        %v6227 = vpack.c.b16 %v6183, %v6181
        %v6228 = vpack.c.b16 %v6186, %v6184
        %v6229 = vpack.c.b16 %v6187, %v6185
        %v6230 = vpack.c.b16 %v6190, %v6188
        %v6231 = vpack.c.b16 %v6191, %v6189
        %v6232 = vpack.c.b16 %v6194, %v6192
        %v6233 = vpack.c.b16 %v6195, %v6193
        %v6234 = vpack.c.b16 %v6198, %v6196
        %v6235 = vpack.c.b16 %v6199, %v6197
        %v6236 = vpack.c.b16 %v6202, %v6200
        %v6237 = vpack.c.b16 %v6203, %v6201
        %v6238 = vpack.c.b16 %v6206, %v6204
        %v6239 = vpack.c.b16 %v6207, %v6205
        %6272 = vmatprep.subr.bf16.mxu0 %v6209
        %6273 = vmatpush1.bf16.msra.mxu0 %v6208
        %6274 = vmatprep.subr.bf16.mxu0 %v6211
        %6275 = vmatpush1.bf16.msra.mxu0 %v6210
        %6276 = vmatprep.subr.bf16.mxu0 %v6213
        %6277 = vmatpush1.bf16.msra.mxu0 %v6212
        %6278 = vmatprep.subr.bf16.mxu0 %v6215
        %6279 = vmatpush1.bf16.msra.mxu0 %v6214
        %6280 = vmatprep.subr.bf16.mxu0 %v6217
        %6281 = vmatpush1.bf16.msra.mxu0 %v6216
        %6282 = vmatprep.subr.bf16.mxu0 %v6219
        %6283 = vmatpush1.bf16.msra.mxu0 %v6218
        %6284 = vmatprep.subr.bf16.mxu0 %v6221
        %6285 = vmatpush1.bf16.msra.mxu0 %v6220
        %6286 = vmatprep.subr.bf16.mxu0 %v6223
        %6287 = vmatpush1.bf16.msra.mxu0 %v6222
        %6288 = vmatprep.subr.bf16.mxu0 %v6225
        %6289 = vmatpush1.bf16.msra.mxu0 %v6224
        %6290 = vmatprep.subr.bf16.mxu0 %v6227
        %6291 = vmatpush1.bf16.msra.mxu0 %v6226
        %6292 = vmatprep.subr.bf16.mxu0 %v6229
        %6293 = vmatpush1.bf16.msra.mxu0 %v6228
        %6294 = vmatprep.subr.bf16.mxu0 %v6231
        %6295 = vmatpush1.bf16.msra.mxu0 %v6230
        %6296 = vmatprep.subr.bf16.mxu0 %v6233
        %6297 = vmatpush1.bf16.msra.mxu0 %v6232
        %6298 = vmatprep.subr.bf16.mxu0 %v6235
        %6299 = vmatpush1.bf16.msra.mxu0 %v6234
        %6300 = vmatprep.subr.bf16.mxu0 %v6237
        %6301 = vmatpush1.bf16.msra.mxu0 %v6236
        %6302 = vmatprep.subr.bf16.mxu0 %v6239
        %6303 = vmatpush1.bf16.msra.mxu0 %v6238
        %6304 = vmatprep.mubr.bf16.mxu0 %v4310
        %6305 = vmatmul.mubr.bf16.gmra.mrb[0].mxu0 %v4309
        %v6306 = vpop.f32.mrb[0].mxu0
        %v6307 = vadd.f32 0.0, %v6306
        %v6308 = vpop.f32.mrb[0].mxu0
        %v6309 = vadd.f32 0.0, %v6308
        %v6310 = vpop.f32.mrb[0].mxu0
        %v6311 = vadd.f32 0.0, %v6310
        %v6312 = vpop.f32.mrb[0].mxu0
        %v6313 = vadd.f32 0.0, %v6312
        %6314 = vmatprep.mubr.bf16.mxu0 %v4312
        %6315 = vmatmul.mubr.bf16.gmra.mrb[0].mxu0 %v4311
        %v6316 = vpop.f32.mrb[0].mxu0
        %v6317 = vadd.f32 0.0, %v6316
        %v6318 = vpop.f32.mrb[0].mxu0
        %v6319 = vadd.f32 0.0, %v6318
        %v6320 = vpop.f32.mrb[0].mxu0
        %v6321 = vadd.f32 0.0, %v6320
        %v6322 = vpop.f32.mrb[0].mxu0
        %v6323 = vadd.f32 0.0, %v6322
        %6324 = vdwg.mxu0
        %v6325 = vadd.f32 %v6072, %v6307
        %v6326 = vadd.f32 %v6073, %v6309
        %v6327 = vadd.f32 %v6074, %v6311
        %v6328 = vadd.f32 %v6075, %v6313
        %v6329 = vadd.f32 %v6076, %v6317
        %v6330 = vadd.f32 %v6077, %v6319
        %v6331 = vadd.f32 %v6078, %v6321
        %v6332 = vadd.f32 %v6079, %v6323
        %v6333 = vld [vmem:[#allocation23 + $0x800] sm:$0xff]
        %v6334 = vld [vmem:[#allocation23 + $0x808] sm:$0xff]
        %v6335 = vld [vmem:[#allocation23 + $0x810] sm:$0xff]
        %v6336 = vld [vmem:[#allocation23 + $0x818] sm:$0xff]
        %v6337 = vld [vmem:[#allocation23 + $0x820] sm:$0xff]
        %v6338 = vld [vmem:[#allocation23 + $0x828] sm:$0xff]
        %v6339 = vld [vmem:[#allocation23 + $0x830] sm:$0xff]
        %v6340 = vld [vmem:[#allocation23 + $0x838] sm:$0xff]
        %v6341 = vld [vmem:[#allocation23 + $0x840] sm:$0xff]
        %v6342 = vld [vmem:[#allocation23 + $0x848] sm:$0xff]
        %v6343 = vld [vmem:[#allocation23 + $0x850] sm:$0xff]
        %v6344 = vld [vmem:[#allocation23 + $0x858] sm:$0xff]
        %v6345 = vld [vmem:[#allocation23 + $0x860] sm:$0xff]
        %v6346 = vld [vmem:[#allocation23 + $0x868] sm:$0xff]
        %v6347 = vld [vmem:[#allocation23 + $0x870] sm:$0xff]
        %v6348 = vld [vmem:[#allocation23 + $0x878] sm:$0xff]
        %v6349 = vld [vmem:[#allocation23 + $0x880] sm:$0xff]
        %v6350 = vld [vmem:[#allocation23 + $0x888] sm:$0xff]
        %v6351 = vld [vmem:[#allocation23 + $0x890] sm:$0xff]
        %v6352 = vld [vmem:[#allocation23 + $0x898] sm:$0xff]
        %v6353 = vld [vmem:[#allocation23 + $0x8a0] sm:$0xff]
        %v6354 = vld [vmem:[#allocation23 + $0x8a8] sm:$0xff]
        %v6355 = vld [vmem:[#allocation23 + $0x8b0] sm:$0xff]
        %v6356 = vld [vmem:[#allocation23 + $0x8b8] sm:$0xff]
        %v6357 = vld [vmem:[#allocation23 + $0x8c0] sm:$0xff]
        %v6358 = vld [vmem:[#allocation23 + $0x8c8] sm:$0xff]
        %v6359 = vld [vmem:[#allocation23 + $0x8d0] sm:$0xff]
        %v6360 = vld [vmem:[#allocation23 + $0x8d8] sm:$0xff]
        %v6361 = vld [vmem:[#allocation23 + $0x8e0] sm:$0xff]
        %v6362 = vld [vmem:[#allocation23 + $0x8e8] sm:$0xff]
        %v6363 = vld [vmem:[#allocation23 + $0x8f0] sm:$0xff]
        %v6364 = vld [vmem:[#allocation23 + $0x8f8] sm:$0xff]
        %v6397 = vunpack.c.l.b16 %v6333
        %v6398 = vunpack.c.h.b16 %v6333
        %v6399 = vunpack.c.l.b16 %v6334
        %v6400 = vunpack.c.h.b16 %v6334
        %v6401 = vunpack.c.l.b16 %v6335
        %v6402 = vunpack.c.h.b16 %v6335
        %v6403 = vunpack.c.l.b16 %v6336
        %v6404 = vunpack.c.h.b16 %v6336
        %v6405 = vunpack.c.l.b16 %v6337
        %v6406 = vunpack.c.h.b16 %v6337
        %v6407 = vunpack.c.l.b16 %v6338
        %v6408 = vunpack.c.h.b16 %v6338
        %v6409 = vunpack.c.l.b16 %v6339
        %v6410 = vunpack.c.h.b16 %v6339
        %v6411 = vunpack.c.l.b16 %v6340
        %v6412 = vunpack.c.h.b16 %v6340
        %v6413 = vunpack.c.l.b16 %v6341
        %v6414 = vunpack.c.h.b16 %v6341
        %v6415 = vunpack.c.l.b16 %v6342
        %v6416 = vunpack.c.h.b16 %v6342
        %v6417 = vunpack.c.l.b16 %v6343
        %v6418 = vunpack.c.h.b16 %v6343
        %v6419 = vunpack.c.l.b16 %v6344
        %v6420 = vunpack.c.h.b16 %v6344
        %v6421 = vunpack.c.l.b16 %v6345
        %v6422 = vunpack.c.h.b16 %v6345
        %v6423 = vunpack.c.l.b16 %v6346
        %v6424 = vunpack.c.h.b16 %v6346
        %v6425 = vunpack.c.l.b16 %v6347
        %v6426 = vunpack.c.h.b16 %v6347
        %v6427 = vunpack.c.l.b16 %v6348
        %v6428 = vunpack.c.h.b16 %v6348
        %v6429 = vunpack.c.l.b16 %v6349
        %v6430 = vunpack.c.h.b16 %v6349
        %v6431 = vunpack.c.l.b16 %v6350
        %v6432 = vunpack.c.h.b16 %v6350
        %v6433 = vunpack.c.l.b16 %v6351
        %v6434 = vunpack.c.h.b16 %v6351
        %v6435 = vunpack.c.l.b16 %v6352
        %v6436 = vunpack.c.h.b16 %v6352
        %v6437 = vunpack.c.l.b16 %v6353
        %v6438 = vunpack.c.h.b16 %v6353
        %v6439 = vunpack.c.l.b16 %v6354
        %v6440 = vunpack.c.h.b16 %v6354
        %v6441 = vunpack.c.l.b16 %v6355
        %v6442 = vunpack.c.h.b16 %v6355
        %v6443 = vunpack.c.l.b16 %v6356
        %v6444 = vunpack.c.h.b16 %v6356
        %v6445 = vunpack.c.l.b16 %v6357
        %v6446 = vunpack.c.h.b16 %v6357
        %v6447 = vunpack.c.l.b16 %v6358
        %v6448 = vunpack.c.h.b16 %v6358
        %v6449 = vunpack.c.l.b16 %v6359
        %v6450 = vunpack.c.h.b16 %v6359
        %v6451 = vunpack.c.l.b16 %v6360
        %v6452 = vunpack.c.h.b16 %v6360
        %v6453 = vunpack.c.l.b16 %v6361
        %v6454 = vunpack.c.h.b16 %v6361
        %v6455 = vunpack.c.l.b16 %v6362
        %v6456 = vunpack.c.h.b16 %v6362
        %v6457 = vunpack.c.l.b16 %v6363
        %v6458 = vunpack.c.h.b16 %v6363
        %v6459 = vunpack.c.l.b16 %v6364
        %v6460 = vunpack.c.h.b16 %v6364
        %v6461 = vpack.c.b16 %v6399, %v6397
        %v6462 = vpack.c.b16 %v6400, %v6398
        %v6463 = vpack.c.b16 %v6403, %v6401
        %v6464 = vpack.c.b16 %v6404, %v6402
        %v6465 = vpack.c.b16 %v6407, %v6405
        %v6466 = vpack.c.b16 %v6408, %v6406
        %v6467 = vpack.c.b16 %v6411, %v6409
        %v6468 = vpack.c.b16 %v6412, %v6410
        %v6469 = vpack.c.b16 %v6415, %v6413
        %v6470 = vpack.c.b16 %v6416, %v6414
        %v6471 = vpack.c.b16 %v6419, %v6417
        %v6472 = vpack.c.b16 %v6420, %v6418
        %v6473 = vpack.c.b16 %v6423, %v6421
        %v6474 = vpack.c.b16 %v6424, %v6422
        %v6475 = vpack.c.b16 %v6427, %v6425
        %v6476 = vpack.c.b16 %v6428, %v6426
        %v6477 = vpack.c.b16 %v6431, %v6429
        %v6478 = vpack.c.b16 %v6432, %v6430
        %v6479 = vpack.c.b16 %v6435, %v6433
        %v6480 = vpack.c.b16 %v6436, %v6434
        %v6481 = vpack.c.b16 %v6439, %v6437
        %v6482 = vpack.c.b16 %v6440, %v6438
        %v6483 = vpack.c.b16 %v6443, %v6441
        %v6484 = vpack.c.b16 %v6444, %v6442
        %v6485 = vpack.c.b16 %v6447, %v6445
        %v6486 = vpack.c.b16 %v6448, %v6446
        %v6487 = vpack.c.b16 %v6451, %v6449
        %v6488 = vpack.c.b16 %v6452, %v6450
        %v6489 = vpack.c.b16 %v6455, %v6453
        %v6490 = vpack.c.b16 %v6456, %v6454
        %v6491 = vpack.c.b16 %v6459, %v6457
        %v6492 = vpack.c.b16 %v6460, %v6458
        %6525 = vmatprep.subr.bf16.mxu0 %v6462
        %6526 = vmatpush1.bf16.msra.mxu0 %v6461
        %6527 = vmatprep.subr.bf16.mxu0 %v6464
        %6528 = vmatpush1.bf16.msra.mxu0 %v6463
        %6529 = vmatprep.subr.bf16.mxu0 %v6466
        %6530 = vmatpush1.bf16.msra.mxu0 %v6465
        %6531 = vmatprep.subr.bf16.mxu0 %v6468
        %6532 = vmatpush1.bf16.msra.mxu0 %v6467
        %6533 = vmatprep.subr.bf16.mxu0 %v6470
        %6534 = vmatpush1.bf16.msra.mxu0 %v6469
        %6535 = vmatprep.subr.bf16.mxu0 %v6472
        %6536 = vmatpush1.bf16.msra.mxu0 %v6471
        %6537 = vmatprep.subr.bf16.mxu0 %v6474
        %6538 = vmatpush1.bf16.msra.mxu0 %v6473
        %6539 = vmatprep.subr.bf16.mxu0 %v6476
        %6540 = vmatpush1.bf16.msra.mxu0 %v6475
        %6541 = vmatprep.subr.bf16.mxu0 %v6478
        %6542 = vmatpush1.bf16.msra.mxu0 %v6477
        %6543 = vmatprep.subr.bf16.mxu0 %v6480
        %6544 = vmatpush1.bf16.msra.mxu0 %v6479
        %6545 = vmatprep.subr.bf16.mxu0 %v6482
        %6546 = vmatpush1.bf16.msra.mxu0 %v6481
        %6547 = vmatprep.subr.bf16.mxu0 %v6484
        %6548 = vmatpush1.bf16.msra.mxu0 %v6483
        %6549 = vmatprep.subr.bf16.mxu0 %v6486
        %6550 = vmatpush1.bf16.msra.mxu0 %v6485
        %6551 = vmatprep.subr.bf16.mxu0 %v6488
        %6552 = vmatpush1.bf16.msra.mxu0 %v6487
        %6553 = vmatprep.subr.bf16.mxu0 %v6490
        %6554 = vmatpush1.bf16.msra.mxu0 %v6489
        %6555 = vmatprep.subr.bf16.mxu0 %v6492
        %6556 = vmatpush1.bf16.msra.mxu0 %v6491
        %6557 = vmatprep.mubr.bf16.mxu0 %v4314
        %6558 = vmatmul.mubr.bf16.gmra.mrb[0].mxu0 %v4313
        %v6559 = vpop.f32.mrb[0].mxu0
        %v6560 = vadd.f32 0.0, %v6559
        %v6561 = vpop.f32.mrb[0].mxu0
        %v6562 = vadd.f32 0.0, %v6561
        %v6563 = vpop.f32.mrb[0].mxu0
        %v6564 = vadd.f32 0.0, %v6563
        %v6565 = vpop.f32.mrb[0].mxu0
        %v6566 = vadd.f32 0.0, %v6565
        %6567 = vmatprep.mubr.bf16.mxu0 %v4316
        %6568 = vmatmul.mubr.bf16.gmra.mrb[0].mxu0 %v4315
        %v6569 = vpop.f32.mrb[0].mxu0
        %v6570 = vadd.f32 0.0, %v6569
        %v6571 = vpop.f32.mrb[0].mxu0
        %v6572 = vadd.f32 0.0, %v6571
        %v6573 = vpop.f32.mrb[0].mxu0
        %v6574 = vadd.f32 0.0, %v6573
        %v6575 = vpop.f32.mrb[0].mxu0
        %v6576 = vadd.f32 0.0, %v6575
        %6577 = vdwg.mxu0
        %v6578 = vadd.f32 %v6325, %v6560
        %v6579 = vadd.f32 %v6326, %v6562
        %v6580 = vadd.f32 %v6327, %v6564
        %v6581 = vadd.f32 %v6328, %v6566
        %v6582 = vadd.f32 %v6329, %v6570
        %v6583 = vadd.f32 %v6330, %v6572
        %v6584 = vadd.f32 %v6331, %v6574
        %v6585 = vadd.f32 %v6332, %v6576
        %v6586 = vld [vmem:[#allocation23 + $0x900] sm:$0xff]
        %v6587 = vld [vmem:[#allocation23 + $0x908] sm:$0xff]
        %v6588 = vld [vmem:[#allocation23 + $0x910] sm:$0xff]
        %v6589 = vld [vmem:[#allocation23 + $0x918] sm:$0xff]
        %v6590 = vld [vmem:[#allocation23 + $0x920] sm:$0xff]
        %v6591 = vld [vmem:[#allocation23 + $0x928] sm:$0xff]
        %v6592 = vld [vmem:[#allocation23 + $0x930] sm:$0xff]
        %v6593 = vld [vmem:[#allocation23 + $0x938] sm:$0xff]
        %v6594 = vld [vmem:[#allocation23 + $0x940] sm:$0xff]
        %v6595 = vld [vmem:[#allocation23 + $0x948] sm:$0xff]
        %v6596 = vld [vmem:[#allocation23 + $0x950] sm:$0xff]
        %v6597 = vld [vmem:[#allocation23 + $0x958] sm:$0xff]
        %v6598 = vld [vmem:[#allocation23 + $0x960] sm:$0xff]
        %v6599 = vld [vmem:[#allocation23 + $0x968] sm:$0xff]
        %v6600 = vld [vmem:[#allocation23 + $0x970] sm:$0xff]
        %v6601 = vld [vmem:[#allocation23 + $0x978] sm:$0xff]
        %v6602 = vld [vmem:[#allocation23 + $0x980] sm:$0xff]
        %v6603 = vld [vmem:[#allocation23 + $0x988] sm:$0xff]
        %v6604 = vld [vmem:[#allocation23 + $0x990] sm:$0xff]
        %v6605 = vld [vmem:[#allocation23 + $0x998] sm:$0xff]
        %v6606 = vld [vmem:[#allocation23 + $0x9a0] sm:$0xff]
        %v6607 = vld [vmem:[#allocation23 + $0x9a8] sm:$0xff]
        %v6608 = vld [vmem:[#allocation23 + $0x9b0] sm:$0xff]
        %v6609 = vld [vmem:[#allocation23 + $0x9b8] sm:$0xff]
        %v6610 = vld [vmem:[#allocation23 + $0x9c0] sm:$0xff]
        %v6611 = vld [vmem:[#allocation23 + $0x9c8] sm:$0xff]
        %v6612 = vld [vmem:[#allocation23 + $0x9d0] sm:$0xff]
        %v6613 = vld [vmem:[#allocation23 + $0x9d8] sm:$0xff]
        %v6614 = vld [vmem:[#allocation23 + $0x9e0] sm:$0xff]
        %v6615 = vld [vmem:[#allocation23 + $0x9e8] sm:$0xff]
        %v6616 = vld [vmem:[#allocation23 + $0x9f0] sm:$0xff]
        %v6617 = vld [vmem:[#allocation23 + $0x9f8] sm:$0xff]
        %v6650 = vunpack.c.l.b16 %v6586
        %v6651 = vunpack.c.h.b16 %v6586
        %v6652 = vunpack.c.l.b16 %v6587
        %v6653 = vunpack.c.h.b16 %v6587
        %v6654 = vunpack.c.l.b16 %v6588
        %v6655 = vunpack.c.h.b16 %v6588
        %v6656 = vunpack.c.l.b16 %v6589
        %v6657 = vunpack.c.h.b16 %v6589
        %v6658 = vunpack.c.l.b16 %v6590
        %v6659 = vunpack.c.h.b16 %v6590
        %v6660 = vunpack.c.l.b16 %v6591
        %v6661 = vunpack.c.h.b16 %v6591
        %v6662 = vunpack.c.l.b16 %v6592
        %v6663 = vunpack.c.h.b16 %v6592
        %v6664 = vunpack.c.l.b16 %v6593
        %v6665 = vunpack.c.h.b16 %v6593
        %v6666 = vunpack.c.l.b16 %v6594
        %v6667 = vunpack.c.h.b16 %v6594
        %v6668 = vunpack.c.l.b16 %v6595
        %v6669 = vunpack.c.h.b16 %v6595
        %v6670 = vunpack.c.l.b16 %v6596
        %v6671 = vunpack.c.h.b16 %v6596
        %v6672 = vunpack.c.l.b16 %v6597
        %v6673 = vunpack.c.h.b16 %v6597
        %v6674 = vunpack.c.l.b16 %v6598
        %v6675 = vunpack.c.h.b16 %v6598
        %v6676 = vunpack.c.l.b16 %v6599
        %v6677 = vunpack.c.h.b16 %v6599
        %v6678 = vunpack.c.l.b16 %v6600
        %v6679 = vunpack.c.h.b16 %v6600
        %v6680 = vunpack.c.l.b16 %v6601
        %v6681 = vunpack.c.h.b16 %v6601
        %v6682 = vunpack.c.l.b16 %v6602
        %v6683 = vunpack.c.h.b16 %v6602
        %v6684 = vunpack.c.l.b16 %v6603
        %v6685 = vunpack.c.h.b16 %v6603
        %v6686 = vunpack.c.l.b16 %v6604
        %v6687 = vunpack.c.h.b16 %v6604
        %v6688 = vunpack.c.l.b16 %v6605
        %v6689 = vunpack.c.h.b16 %v6605
        %v6690 = vunpack.c.l.b16 %v6606
        %v6691 = vunpack.c.h.b16 %v6606
        %v6692 = vunpack.c.l.b16 %v6607
        %v6693 = vunpack.c.h.b16 %v6607
        %v6694 = vunpack.c.l.b16 %v6608
        %v6695 = vunpack.c.h.b16 %v6608
        %v6696 = vunpack.c.l.b16 %v6609
        %v6697 = vunpack.c.h.b16 %v6609
        %v6698 = vunpack.c.l.b16 %v6610
        %v6699 = vunpack.c.h.b16 %v6610
        %v6700 = vunpack.c.l.b16 %v6611
        %v6701 = vunpack.c.h.b16 %v6611
        %v6702 = vunpack.c.l.b16 %v6612
        %v6703 = vunpack.c.h.b16 %v6612
        %v6704 = vunpack.c.l.b16 %v6613
        %v6705 = vunpack.c.h.b16 %v6613
        %v6706 = vunpack.c.l.b16 %v6614
        %v6707 = vunpack.c.h.b16 %v6614
        %v6708 = vunpack.c.l.b16 %v6615
        %v6709 = vunpack.c.h.b16 %v6615
        %v6710 = vunpack.c.l.b16 %v6616
        %v6711 = vunpack.c.h.b16 %v6616
        %v6712 = vunpack.c.l.b16 %v6617
        %v6713 = vunpack.c.h.b16 %v6617
        %v6714 = vpack.c.b16 %v6652, %v6650
        %v6715 = vpack.c.b16 %v6653, %v6651
        %v6716 = vpack.c.b16 %v6656, %v6654
        %v6717 = vpack.c.b16 %v6657, %v6655
        %v6718 = vpack.c.b16 %v6660, %v6658
        %v6719 = vpack.c.b16 %v6661, %v6659
        %v6720 = vpack.c.b16 %v6664, %v6662
        %v6721 = vpack.c.b16 %v6665, %v6663
        %v6722 = vpack.c.b16 %v6668, %v6666
        %v6723 = vpack.c.b16 %v6669, %v6667
        %v6724 = vpack.c.b16 %v6672, %v6670
        %v6725 = vpack.c.b16 %v6673, %v6671
        %v6726 = vpack.c.b16 %v6676, %v6674
        %v6727 = vpack.c.b16 %v6677, %v6675
        %v6728 = vpack.c.b16 %v6680, %v6678
        %v6729 = vpack.c.b16 %v6681, %v6679
        %v6730 = vpack.c.b16 %v6684, %v6682
        %v6731 = vpack.c.b16 %v6685, %v6683
        %v6732 = vpack.c.b16 %v6688, %v6686
        %v6733 = vpack.c.b16 %v6689, %v6687
        %v6734 = vpack.c.b16 %v6692, %v6690
        %v6735 = vpack.c.b16 %v6693, %v6691
        %v6736 = vpack.c.b16 %v6696, %v6694
        %v6737 = vpack.c.b16 %v6697, %v6695
        %v6738 = vpack.c.b16 %v6700, %v6698
        %v6739 = vpack.c.b16 %v6701, %v6699
        %v6740 = vpack.c.b16 %v6704, %v6702
        %v6741 = vpack.c.b16 %v6705, %v6703
        %v6742 = vpack.c.b16 %v6708, %v6706
        %v6743 = vpack.c.b16 %v6709, %v6707
        %v6744 = vpack.c.b16 %v6712, %v6710
        %v6745 = vpack.c.b16 %v6713, %v6711
        %6778 = vmatprep.subr.bf16.mxu0 %v6715
        %6779 = vmatpush1.bf16.msra.mxu0 %v6714
        %6780 = vmatprep.subr.bf16.mxu0 %v6717
        %6781 = vmatpush1.bf16.msra.mxu0 %v6716
        %6782 = vmatprep.subr.bf16.mxu0 %v6719
        %6783 = vmatpush1.bf16.msra.mxu0 %v6718
        %6784 = vmatprep.subr.bf16.mxu0 %v6721
        %6785 = vmatpush1.bf16.msra.mxu0 %v6720
        %6786 = vmatprep.subr.bf16.mxu0 %v6723
        %6787 = vmatpush1.bf16.msra.mxu0 %v6722
        %6788 = vmatprep.subr.bf16.mxu0 %v6725
        %6789 = vmatpush1.bf16.msra.mxu0 %v6724
        %6790 = vmatprep.subr.bf16.mxu0 %v6727
        %6791 = vmatpush1.bf16.msra.mxu0 %v6726
        %6792 = vmatprep.subr.bf16.mxu0 %v6729
        %6793 = vmatpush1.bf16.msra.mxu0 %v6728
        %6794 = vmatprep.subr.bf16.mxu0 %v6731
        %6795 = vmatpush1.bf16.msra.mxu0 %v6730
        %6796 = vmatprep.subr.bf16.mxu0 %v6733
        %6797 = vmatpush1.bf16.msra.mxu0 %v6732
        %6798 = vmatprep.subr.bf16.mxu0 %v6735
        %6799 = vmatpush1.bf16.msra.mxu0 %v6734
        %6800 = vmatprep.subr.bf16.mxu0 %v6737
        %6801 = vmatpush1.bf16.msra.mxu0 %v6736
        %6802 = vmatprep.subr.bf16.mxu0 %v6739
        %6803 = vmatpush1.bf16.msra.mxu0 %v6738
        %6804 = vmatprep.subr.bf16.mxu0 %v6741
        %6805 = vmatpush1.bf16.msra.mxu0 %v6740
        %6806 = vmatprep.subr.bf16.mxu0 %v6743
        %6807 = vmatpush1.bf16.msra.mxu0 %v6742
        %6808 = vmatprep.subr.bf16.mxu0 %v6745
        %6809 = vmatpush1.bf16.msra.mxu0 %v6744
        %6810 = vmatprep.mubr.bf16.mxu0 %v4318
        %6811 = vmatmul.mubr.bf16.gmra.mrb[0].mxu0 %v4317
        %v6812 = vpop.f32.mrb[0].mxu0
        %v6813 = vadd.f32 0.0, %v6812
        %v6814 = vpop.f32.mrb[0].mxu0
        %v6815 = vadd.f32 0.0, %v6814
        %v6816 = vpop.f32.mrb[0].mxu0
        %v6817 = vadd.f32 0.0, %v6816
        %v6818 = vpop.f32.mrb[0].mxu0
        %v6819 = vadd.f32 0.0, %v6818
        %6820 = vmatprep.mubr.bf16.mxu0 %v4320
        %6821 = vmatmul.mubr.bf16.gmra.mrb[0].mxu0 %v4319
        %v6822 = vpop.f32.mrb[0].mxu0
        %v6823 = vadd.f32 0.0, %v6822
        %v6824 = vpop.f32.mrb[0].mxu0
        %v6825 = vadd.f32 0.0, %v6824
        %v6826 = vpop.f32.mrb[0].mxu0
        %v6827 = vadd.f32 0.0, %v6826
        %v6828 = vpop.f32.mrb[0].mxu0
        %v6829 = vadd.f32 0.0, %v6828
        %6830 = vdwg.mxu0
        %v6831 = vadd.f32 %v6578, %v6813
        %v6832 = vadd.f32 %v6579, %v6815
        %v6833 = vadd.f32 %v6580, %v6817
        %v6834 = vadd.f32 %v6581, %v6819
        %v6835 = vadd.f32 %v6582, %v6823
        %v6836 = vadd.f32 %v6583, %v6825
        %v6837 = vadd.f32 %v6584, %v6827
        %v6838 = vadd.f32 %v6585, %v6829
        %v6839 = vld [vmem:[#allocation23 + $0xa00] sm:$0xff]
        %v6840 = vld [vmem:[#allocation23 + $0xa08] sm:$0xff]
        %v6841 = vld [vmem:[#allocation23 + $0xa10] sm:$0xff]
        %v6842 = vld [vmem:[#allocation23 + $0xa18] sm:$0xff]
        %v6843 = vld [vmem:[#allocation23 + $0xa20] sm:$0xff]
        %v6844 = vld [vmem:[#allocation23 + $0xa28] sm:$0xff]
        %v6845 = vld [vmem:[#allocation23 + $0xa30] sm:$0xff]
        %v6846 = vld [vmem:[#allocation23 + $0xa38] sm:$0xff]
        %v6847 = vld [vmem:[#allocation23 + $0xa40] sm:$0xff]
        %v6848 = vld [vmem:[#allocation23 + $0xa48] sm:$0xff]
        %v6849 = vld [vmem:[#allocation23 + $0xa50] sm:$0xff]
        %v6850 = vld [vmem:[#allocation23 + $0xa58] sm:$0xff]
        %v6851 = vld [vmem:[#allocation23 + $0xa60] sm:$0xff]
        %v6852 = vld [vmem:[#allocation23 + $0xa68] sm:$0xff]
        %v6853 = vld [vmem:[#allocation23 + $0xa70] sm:$0xff]
        %v6854 = vld [vmem:[#allocation23 + $0xa78] sm:$0xff]
        %v6855 = vld [vmem:[#allocation23 + $0xa80] sm:$0xff]
        %v6856 = vld [vmem:[#allocation23 + $0xa88] sm:$0xff]
        %v6857 = vld [vmem:[#allocation23 + $0xa90] sm:$0xff]
        %v6858 = vld [vmem:[#allocation23 + $0xa98] sm:$0xff]
        %v6859 = vld [vmem:[#allocation23 + $0xaa0] sm:$0xff]
        %v6860 = vld [vmem:[#allocation23 + $0xaa8] sm:$0xff]
        %v6861 = vld [vmem:[#allocation23 + $0xab0] sm:$0xff]
        %v6862 = vld [vmem:[#allocation23 + $0xab8] sm:$0xff]
        %v6863 = vld [vmem:[#allocation23 + $0xac0] sm:$0xff]
        %v6864 = vld [vmem:[#allocation23 + $0xac8] sm:$0xff]
        %v6865 = vld [vmem:[#allocation23 + $0xad0] sm:$0xff]
        %v6866 = vld [vmem:[#allocation23 + $0xad8] sm:$0xff]
        %v6867 = vld [vmem:[#allocation23 + $0xae0] sm:$0xff]
        %v6868 = vld [vmem:[#allocation23 + $0xae8] sm:$0xff]
        %v6869 = vld [vmem:[#allocation23 + $0xaf0] sm:$0xff]
        %v6870 = vld [vmem:[#allocation23 + $0xaf8] sm:$0xff]
        %v6903 = vunpack.c.l.b16 %v6839
        %v6904 = vunpack.c.h.b16 %v6839
        %v6905 = vunpack.c.l.b16 %v6840
        %v6906 = vunpack.c.h.b16 %v6840
        %v6907 = vunpack.c.l.b16 %v6841
        %v6908 = vunpack.c.h.b16 %v6841
        %v6909 = vunpack.c.l.b16 %v6842
        %v6910 = vunpack.c.h.b16 %v6842
        %v6911 = vunpack.c.l.b16 %v6843
        %v6912 = vunpack.c.h.b16 %v6843
        %v6913 = vunpack.c.l.b16 %v6844
        %v6914 = vunpack.c.h.b16 %v6844
        %v6915 = vunpack.c.l.b16 %v6845
        %v6916 = vunpack.c.h.b16 %v6845
        %v6917 = vunpack.c.l.b16 %v6846
        %v6918 = vunpack.c.h.b16 %v6846
        %v6919 = vunpack.c.l.b16 %v6847
        %v6920 = vunpack.c.h.b16 %v6847
        %v6921 = vunpack.c.l.b16 %v6848
        %v6922 = vunpack.c.h.b16 %v6848
        %v6923 = vunpack.c.l.b16 %v6849
        %v6924 = vunpack.c.h.b16 %v6849
        %v6925 = vunpack.c.l.b16 %v6850
        %v6926 = vunpack.c.h.b16 %v6850
        %v6927 = vunpack.c.l.b16 %v6851
        %v6928 = vunpack.c.h.b16 %v6851
        %v6929 = vunpack.c.l.b16 %v6852
        %v6930 = vunpack.c.h.b16 %v6852
        %v6931 = vunpack.c.l.b16 %v6853
        %v6932 = vunpack.c.h.b16 %v6853
        %v6933 = vunpack.c.l.b16 %v6854
        %v6934 = vunpack.c.h.b16 %v6854
        %v6935 = vunpack.c.l.b16 %v6855
        %v6936 = vunpack.c.h.b16 %v6855
        %v6937 = vunpack.c.l.b16 %v6856
        %v6938 = vunpack.c.h.b16 %v6856
        %v6939 = vunpack.c.l.b16 %v6857
        %v6940 = vunpack.c.h.b16 %v6857
        %v6941 = vunpack.c.l.b16 %v6858
        %v6942 = vunpack.c.h.b16 %v6858
        %v6943 = vunpack.c.l.b16 %v6859
        %v6944 = vunpack.c.h.b16 %v6859
        %v6945 = vunpack.c.l.b16 %v6860
        %v6946 = vunpack.c.h.b16 %v6860
        %v6947 = vunpack.c.l.b16 %v6861
        %v6948 = vunpack.c.h.b16 %v6861
        %v6949 = vunpack.c.l.b16 %v6862
        %v6950 = vunpack.c.h.b16 %v6862
        %v6951 = vunpack.c.l.b16 %v6863
        %v6952 = vunpack.c.h.b16 %v6863
        %v6953 = vunpack.c.l.b16 %v6864
        %v6954 = vunpack.c.h.b16 %v6864
        %v6955 = vunpack.c.l.b16 %v6865
        %v6956 = vunpack.c.h.b16 %v6865
        %v6957 = vunpack.c.l.b16 %v6866
        %v6958 = vunpack.c.h.b16 %v6866
        %v6959 = vunpack.c.l.b16 %v6867
        %v6960 = vunpack.c.h.b16 %v6867
        %v6961 = vunpack.c.l.b16 %v6868
        %v6962 = vunpack.c.h.b16 %v6868
        %v6963 = vunpack.c.l.b16 %v6869
        %v6964 = vunpack.c.h.b16 %v6869
        %v6965 = vunpack.c.l.b16 %v6870
        %v6966 = vunpack.c.h.b16 %v6870
        %v6967 = vpack.c.b16 %v6905, %v6903
        %v6968 = vpack.c.b16 %v6906, %v6904
        %v6969 = vpack.c.b16 %v6909, %v6907
        %v6970 = vpack.c.b16 %v6910, %v6908
        %v6971 = vpack.c.b16 %v6913, %v6911
        %v6972 = vpack.c.b16 %v6914, %v6912
        %v6973 = vpack.c.b16 %v6917, %v6915
        %v6974 = vpack.c.b16 %v6918, %v6916
        %v6975 = vpack.c.b16 %v6921, %v6919
        %v6976 = vpack.c.b16 %v6922, %v6920
        %v6977 = vpack.c.b16 %v6925, %v6923
        %v6978 = vpack.c.b16 %v6926, %v6924
        %v6979 = vpack.c.b16 %v6929, %v6927
        %v6980 = vpack.c.b16 %v6930, %v6928
        %v6981 = vpack.c.b16 %v6933, %v6931
        %v6982 = vpack.c.b16 %v6934, %v6932
        %v6983 = vpack.c.b16 %v6937, %v6935
        %v6984 = vpack.c.b16 %v6938, %v6936
        %v6985 = vpack.c.b16 %v6941, %v6939
        %v6986 = vpack.c.b16 %v6942, %v6940
        %v6987 = vpack.c.b16 %v6945, %v6943
        %v6988 = vpack.c.b16 %v6946, %v6944
        %v6989 = vpack.c.b16 %v6949, %v6947
        %v6990 = vpack.c.b16 %v6950, %v6948
        %v6991 = vpack.c.b16 %v6953, %v6951
        %v6992 = vpack.c.b16 %v6954, %v6952
        %v6993 = vpack.c.b16 %v6957, %v6955
        %v6994 = vpack.c.b16 %v6958, %v6956
        %v6995 = vpack.c.b16 %v6961, %v6959
        %v6996 = vpack.c.b16 %v6962, %v6960
        %v6997 = vpack.c.b16 %v6965, %v6963
        %v6998 = vpack.c.b16 %v6966, %v6964
        %7031 = vmatprep.subr.bf16.mxu0 %v6968
        %7032 = vmatpush1.bf16.msra.mxu0 %v6967
        %7033 = vmatprep.subr.bf16.mxu0 %v6970
        %7034 = vmatpush1.bf16.msra.mxu0 %v6969
        %7035 = vmatprep.subr.bf16.mxu0 %v6972
        %7036 = vmatpush1.bf16.msra.mxu0 %v6971
        %7037 = vmatprep.subr.bf16.mxu0 %v6974
        %7038 = vmatpush1.bf16.msra.mxu0 %v6973
        %7039 = vmatprep.subr.bf16.mxu0 %v6976
        %7040 = vmatpush1.bf16.msra.mxu0 %v6975
        %7041 = vmatprep.subr.bf16.mxu0 %v6978
        %7042 = vmatpush1.bf16.msra.mxu0 %v6977
        %7043 = vmatprep.subr.bf16.mxu0 %v6980
        %7044 = vmatpush1.bf16.msra.mxu0 %v6979
        %7045 = vmatprep.subr.bf16.mxu0 %v6982
        %7046 = vmatpush1.bf16.msra.mxu0 %v6981
        %7047 = vmatprep.subr.bf16.mxu0 %v6984
        %7048 = vmatpush1.bf16.msra.mxu0 %v6983
        %7049 = vmatprep.subr.bf16.mxu0 %v6986
        %7050 = vmatpush1.bf16.msra.mxu0 %v6985
        %7051 = vmatprep.subr.bf16.mxu0 %v6988
        %7052 = vmatpush1.bf16.msra.mxu0 %v6987
        %7053 = vmatprep.subr.bf16.mxu0 %v6990
        %7054 = vmatpush1.bf16.msra.mxu0 %v6989
        %7055 = vmatprep.subr.bf16.mxu0 %v6992
        %7056 = vmatpush1.bf16.msra.mxu0 %v6991
        %7057 = vmatprep.subr.bf16.mxu0 %v6994
        %7058 = vmatpush1.bf16.msra.mxu0 %v6993
        %7059 = vmatprep.subr.bf16.mxu0 %v6996
        %7060 = vmatpush1.bf16.msra.mxu0 %v6995
        %7061 = vmatprep.subr.bf16.mxu0 %v6998
        %7062 = vmatpush1.bf16.msra.mxu0 %v6997
        %7063 = vmatprep.mubr.bf16.mxu0 %v4322
        %7064 = vmatmul.mubr.bf16.gmra.mrb[0].mxu0 %v4321
        %v7065 = vpop.f32.mrb[0].mxu0
        %v7066 = vadd.f32 0.0, %v7065
        %v7067 = vpop.f32.mrb[0].mxu0
        %v7068 = vadd.f32 0.0, %v7067
        %v7069 = vpop.f32.mrb[0].mxu0
        %v7070 = vadd.f32 0.0, %v7069
        %v7071 = vpop.f32.mrb[0].mxu0
        %v7072 = vadd.f32 0.0, %v7071
        %7073 = vmatprep.mubr.bf16.mxu0 %v4324
        %7074 = vmatmul.mubr.bf16.gmra.mrb[0].mxu0 %v4323
        %v7075 = vpop.f32.mrb[0].mxu0
        %v7076 = vadd.f32 0.0, %v7075
        %v7077 = vpop.f32.mrb[0].mxu0
        %v7078 = vadd.f32 0.0, %v7077
        %v7079 = vpop.f32.mrb[0].mxu0
        %v7080 = vadd.f32 0.0, %v7079
        %v7081 = vpop.f32.mrb[0].mxu0
        %v7082 = vadd.f32 0.0, %v7081
        %7083 = vdwg.mxu0
        %v7084 = vadd.f32 %v6831, %v7066
        %v7085 = vadd.f32 %v6832, %v7068
        %v7086 = vadd.f32 %v6833, %v7070
        %v7087 = vadd.f32 %v6834, %v7072
        %v7088 = vadd.f32 %v6835, %v7076
        %v7089 = vadd.f32 %v6836, %v7078
        %v7090 = vadd.f32 %v6837, %v7080
        %v7091 = vadd.f32 %v6838, %v7082
        %v7092 = vld [vmem:[#allocation25] sm:$0x3]
        %v7094 = vlaneseq
        %v7095 = vshrl.u32 %v7094, 7
        %v7096 = vsub.s32 0, %v7095
        %v7097 = vrot.slane %v7092, %v7096
        %v7098 = vlaneseq
        %v7099 = vshrl.u32 %v7098, 7
        %v7100 = vsub.s32 1, %v7099
        %v7101 = vrot.slane %v7092, %v7100
        %v7104 = vadd.f32 %v7084, %v7097
        %v7105 = vadd.f32 %v7085, %v7101
        %v7106 = vadd.f32 %v7086, %v7097
        %v7107 = vadd.f32 %v7087, %v7101
        %v7108 = vadd.f32 %v7088, %v7097
        %v7109 = vadd.f32 %v7089, %v7101
        %v7110 = vadd.f32 %v7090, %v7097
        %v7111 = vadd.f32 %v7091, %v7101
        %v7112 = vpack.c.bf16 %v7106, %v7104
        %v7113 = vpack.c.bf16 %v7107, %v7105
        %v7114 = vpack.c.bf16 %v7110, %v7108
        %v7115 = vpack.c.bf16 %v7111, %v7109
        %v7116 = vld [vmem:[#allocation26] sm:$0xf]
        %v7117 = vld [vmem:[#allocation26 + $0x4] sm:$0xf]
        %v7118 = vld [vmem:[#allocation26 + $0x8] sm:$0xf]
        %v7119 = vld [vmem:[#allocation26 + $0xc] sm:$0xf]
        %v7120 = vld [vmem:[#allocation26 + $0x10] sm:$0xf]
        %v7121 = vld [vmem:[#allocation26 + $0x14] sm:$0xf]
        %v7122 = vld [vmem:[#allocation26 + $0x18] sm:$0xf]
        %v7123 = vld [vmem:[#allocation26 + $0x1c] sm:$0xf]
        %v7124 = vld [vmem:[#allocation26 + $0x20] sm:$0xf]
        %v7125 = vld [vmem:[#allocation26 + $0x24] sm:$0xf]
        %v7126 = vld [vmem:[#allocation26 + $0x28] sm:$0xf]
        %v7127 = vld [vmem:[#allocation26 + $0x2c] sm:$0xf]
        %v7128 = vld [vmem:[#allocation26 + $0x30] sm:$0xf]
        %v7129 = vld [vmem:[#allocation26 + $0x34] sm:$0xf]
        %v7130 = vld [vmem:[#allocation26 + $0x38] sm:$0xf]
        %v7131 = vld [vmem:[#allocation26 + $0x3c] sm:$0xf]
        %v7132 = vld [vmem:[#allocation26 + $0x40] sm:$0xf]
        %v7133 = vld [vmem:[#allocation26 + $0x44] sm:$0xf]
        %v7134 = vld [vmem:[#allocation26 + $0x48] sm:$0xf]
        %v7135 = vld [vmem:[#allocation26 + $0x4c] sm:$0xf]
        %v7136 = vld [vmem:[#allocation26 + $0x50] sm:$0xf]
        %v7137 = vld [vmem:[#allocation26 + $0x54] sm:$0xf]
        %v7138 = vld [vmem:[#allocation26 + $0x58] sm:$0xf]
        %v7139 = vld [vmem:[#allocation26 + $0x5c] sm:$0xf]
        %v7140 = vld [vmem:[#allocation26 + $0x60] sm:$0xf]
        %v7141 = vld [vmem:[#allocation26 + $0x64] sm:$0xf]
        %v7142 = vld [vmem:[#allocation26 + $0x68] sm:$0xf]
        %v7143 = vld [vmem:[#allocation26 + $0x6c] sm:$0xf]
        %v7144 = vld [vmem:[#allocation26 + $0x70] sm:$0xf]
        %v7145 = vld [vmem:[#allocation26 + $0x74] sm:$0xf]
        %v7146 = vld [vmem:[#allocation26 + $0x78] sm:$0xf]
        %v7147 = vld [vmem:[#allocation26 + $0x7c] sm:$0xf]
        %v7148 = vld [vmem:[#allocation28] sm:$0x1]
        %v7150 = vlaneseq
        %v7151 = vshrl.u32 %v7150, 7
        %v7152 = vsub.s32 0, %v7151
        %v7153 = vrot.slane %v7148, %v7152
        %v7187 = vunpack.c.l.b16 %v7116
        %v7188 = vunpack.c.l.b16 %v7117
        %v7189 = vunpack.c.l.b16 %v7118
        %v7190 = vunpack.c.l.b16 %v7119
        %v7191 = vunpack.c.l.b16 %v7120
        %v7192 = vunpack.c.l.b16 %v7121
        %v7193 = vunpack.c.l.b16 %v7122
        %v7194 = vunpack.c.l.b16 %v7123
        %v7195 = vunpack.c.l.b16 %v7124
        %v7196 = vunpack.c.l.b16 %v7125
        %v7197 = vunpack.c.l.b16 %v7126
        %v7198 = vunpack.c.l.b16 %v7127
        %v7199 = vunpack.c.l.b16 %v7128
        %v7200 = vunpack.c.l.b16 %v7129
        %v7201 = vunpack.c.l.b16 %v7130
        %v7202 = vunpack.c.l.b16 %v7131
        %v7203 = vunpack.c.l.b16 %v7132
        %v7204 = vunpack.c.l.b16 %v7133
        %v7205 = vunpack.c.l.b16 %v7134
        %v7206 = vunpack.c.l.b16 %v7135
        %v7207 = vunpack.c.l.b16 %v7136
        %v7208 = vunpack.c.l.b16 %v7137
        %v7209 = vunpack.c.l.b16 %v7138
        %v7210 = vunpack.c.l.b16 %v7139
        %v7211 = vunpack.c.l.b16 %v7140
        %v7212 = vunpack.c.l.b16 %v7141
        %v7213 = vunpack.c.l.b16 %v7142
        %v7214 = vunpack.c.l.b16 %v7143
        %v7215 = vunpack.c.l.b16 %v7144
        %v7216 = vunpack.c.l.b16 %v7145
        %v7217 = vunpack.c.l.b16 %v7146
        %v7218 = vunpack.c.l.b16 %v7147
        %v7219 = vpack.c.b16 %v7188, %v7187
        %v7220 = vpack.c.b16 %v7190, %v7189
        %v7221 = vpack.c.b16 %v7192, %v7191
        %v7222 = vpack.c.b16 %v7194, %v7193
        %v7223 = vpack.c.b16 %v7196, %v7195
        %v7224 = vpack.c.b16 %v7198, %v7197
        %v7225 = vpack.c.b16 %v7200, %v7199
        %v7226 = vpack.c.b16 %v7202, %v7201
        %v7227 = vpack.c.b16 %v7204, %v7203
        %v7228 = vpack.c.b16 %v7206, %v7205
        %v7229 = vpack.c.b16 %v7208, %v7207
        %v7230 = vpack.c.b16 %v7210, %v7209
        %v7231 = vpack.c.b16 %v7212, %v7211
        %v7232 = vpack.c.b16 %v7214, %v7213
        %v7233 = vpack.c.b16 %v7216, %v7215
        %v7234 = vpack.c.b16 %v7218, %v7217
        %7251 = vmatprep.subr.bf16.mxu0 0
        %7252 = vmatpush1.bf16.msra.mxu0 %v7219
        %7253 = vmatprep.subr.bf16.mxu0 0
        %7254 = vmatpush1.bf16.msra.mxu0 %v7220
        %7255 = vmatprep.subr.bf16.mxu0 0
        %7256 = vmatpush1.bf16.msra.mxu0 %v7221
        %7257 = vmatprep.subr.bf16.mxu0 0
        %7258 = vmatpush1.bf16.msra.mxu0 %v7222
        %7259 = vmatprep.subr.bf16.mxu0 0
        %7260 = vmatpush1.bf16.msra.mxu0 %v7223
        %7261 = vmatprep.subr.bf16.mxu0 0
        %7262 = vmatpush1.bf16.msra.mxu0 %v7224
        %7263 = vmatprep.subr.bf16.mxu0 0
        %7264 = vmatpush1.bf16.msra.mxu0 %v7225
        %7265 = vmatprep.subr.bf16.mxu0 0
        %7266 = vmatpush1.bf16.msra.mxu0 %v7226
        %7267 = vmatprep.subr.bf16.mxu0 0
        %7268 = vmatpush1.bf16.msra.mxu0 %v7227
        %7269 = vmatprep.subr.bf16.mxu0 0
        %7270 = vmatpush1.bf16.msra.mxu0 %v7228
        %7271 = vmatprep.subr.bf16.mxu0 0
        %7272 = vmatpush1.bf16.msra.mxu0 %v7229
        %7273 = vmatprep.subr.bf16.mxu0 0
        %7274 = vmatpush1.bf16.msra.mxu0 %v7230
        %7275 = vmatprep.subr.bf16.mxu0 0
        %7276 = vmatpush1.bf16.msra.mxu0 %v7231
        %7277 = vmatprep.subr.bf16.mxu0 0
        %7278 = vmatpush1.bf16.msra.mxu0 %v7232
        %7279 = vmatprep.subr.bf16.mxu0 0
        %7280 = vmatpush1.bf16.msra.mxu0 %v7233
        %7281 = vmatprep.subr.bf16.mxu0 0
        %7282 = vmatpush1.bf16.msra.mxu0 %v7234
        %7283 = vmatprep.mubr.bf16.mxu0 %v7113
        %7284 = vmatmul.mubr.bf16.gmra.mrb[0].mxu0 %v7112
        %v7285 = vpop.f32.mrb[0].mxu0
        %v7286 = vadd.f32 %v7153, %v7285
        %v7287 = vpop.f32.mrb[0].mxu0
        %v7288 = vpop.f32.mrb[0].mxu0
        %v7289 = vadd.f32 %v7153, %v7288
        %v7290 = vpop.f32.mrb[0].mxu0
        %7291 = vmatprep.mubr.bf16.mxu0 %v7115
        %7292 = vmatmul.mubr.bf16.gmra.mrb[0].mxu0 %v7114
        %v7293 = vpop.f32.mrb[0].mxu0
        %v7294 = vadd.f32 %v7153, %v7293
        %v7295 = vpop.f32.mrb[0].mxu0
        %v7296 = vpop.f32.mrb[0].mxu0
        %v7297 = vadd.f32 %v7153, %v7296
        %v7298 = vpop.f32.mrb[0].mxu0
        %7299 = vdwg.mxu0
        %v7300 = vmax.f32 %v7286, 0.0
        %v7301 = vmax.f32 %v7289, 0.0
        %v7302 = vmax.f32 %v7294, 0.0
        %v7303 = vmax.f32 %v7297, 0.0
        %v7304 = vpack.c.bf16 %v7301, %v7300
        %v7305 = vpack.c.bf16 %v7303, %v7302
        %v7306 = vld [vmem:[#allocation29] sm:$0xf]
        %v7307 = vld [vmem:[#allocation29 + $0x4] sm:$0xf]
        %v7308 = vld [vmem:[#allocation29 + $0x8] sm:$0xf]
        %v7309 = vld [vmem:[#allocation29 + $0xc] sm:$0xf]
        %v7310 = vld [vmem:[#allocation29 + $0x10] sm:$0xf]
        %v7311 = vld [vmem:[#allocation29 + $0x14] sm:$0xf]
        %v7312 = vld [vmem:[#allocation29 + $0x18] sm:$0xf]
        %v7313 = vld [vmem:[#allocation29 + $0x1c] sm:$0xf]
        %v7314 = vld [vmem:[#allocation29 + $0x20] sm:$0xf]
        %v7315 = vld [vmem:[#allocation29 + $0x24] sm:$0xf]
        %v7316 = vld [vmem:[#allocation29 + $0x28] sm:$0xf]
        %v7317 = vld [vmem:[#allocation29 + $0x2c] sm:$0xf]
        %v7318 = vld [vmem:[#allocation29 + $0x30] sm:$0xf]
        %v7319 = vld [vmem:[#allocation29 + $0x34] sm:$0xf]
        %v7320 = vld [vmem:[#allocation29 + $0x38] sm:$0xf]
        %v7321 = vld [vmem:[#allocation29 + $0x3c] sm:$0xf]
        %v7322 = vld [vmem:[#allocation31] sm:$0x1]
        %v7324 = vlaneseq
        %v7325 = vshrl.u32 %v7324, 7
        %v7326 = vsub.s32 0, %v7325
        %v7327 = vrot.slane %v7322, %v7326
        %v7345 = vunpack.c.l.b16 %v7306
        %v7346 = vunpack.c.l.b16 %v7307
        %v7347 = vunpack.c.l.b16 %v7308
        %v7348 = vunpack.c.l.b16 %v7309
        %v7349 = vunpack.c.l.b16 %v7310
        %v7350 = vunpack.c.l.b16 %v7311
        %v7351 = vunpack.c.l.b16 %v7312
        %v7352 = vunpack.c.l.b16 %v7313
        %v7353 = vunpack.c.l.b16 %v7314
        %v7354 = vunpack.c.l.b16 %v7315
        %v7355 = vunpack.c.l.b16 %v7316
        %v7356 = vunpack.c.l.b16 %v7317
        %v7357 = vunpack.c.l.b16 %v7318
        %v7358 = vunpack.c.l.b16 %v7319
        %v7359 = vunpack.c.l.b16 %v7320
        %v7360 = vunpack.c.l.b16 %v7321
        %v7361 = vpack.c.b16 %v7346, %v7345
        %v7362 = vpack.c.b16 %v7348, %v7347
        %v7363 = vpack.c.b16 %v7350, %v7349
        %v7364 = vpack.c.b16 %v7352, %v7351
        %v7365 = vpack.c.b16 %v7354, %v7353
        %v7366 = vpack.c.b16 %v7356, %v7355
        %v7367 = vpack.c.b16 %v7358, %v7357
        %v7368 = vpack.c.b16 %v7360, %v7359
        %7377 = vmatprep.subr.bf16.mxu0 0
        %7378 = vmatpush1.bf16.msra.mxu0 %v7361
        %7379 = vmatprep.subr.bf16.mxu0 0
        %7380 = vmatpush1.bf16.msra.mxu0 %v7362
        %7381 = vmatprep.subr.bf16.mxu0 0
        %7382 = vmatpush1.bf16.msra.mxu0 %v7363
        %7383 = vmatprep.subr.bf16.mxu0 0
        %7384 = vmatpush1.bf16.msra.mxu0 %v7364
        %7385 = vmatprep.subr.bf16.mxu0 0
        %7386 = vmatpush1.bf16.msra.mxu0 %v7365
        %7387 = vmatprep.subr.bf16.mxu0 0
        %7388 = vmatpush1.bf16.msra.mxu0 %v7366
        %7389 = vmatprep.subr.bf16.mxu0 0
        %7390 = vmatpush1.bf16.msra.mxu0 %v7367
        %7391 = vmatprep.subr.bf16.mxu0 0
        %7392 = vmatpush1.bf16.msra.mxu0 %v7368
        %7393 = vmatprep.subr.bf16.mxu0 0
        %7394 = vmatpush1.bf16.msra.mxu0 0
        %7395 = vmatprep.subr.bf16.mxu0 0
        %7396 = vmatpush1.bf16.msra.mxu0 0
        %7397 = vmatprep.subr.bf16.mxu0 0
        %7398 = vmatpush1.bf16.msra.mxu0 0
        %7399 = vmatprep.subr.bf16.mxu0 0
        %7400 = vmatpush1.bf16.msra.mxu0 0
        %7401 = vmatprep.subr.bf16.mxu0 0
        %7402 = vmatpush1.bf16.msra.mxu0 0
        %7403 = vmatprep.subr.bf16.mxu0 0
        %7404 = vmatpush1.bf16.msra.mxu0 0
        %7405 = vmatprep.subr.bf16.mxu0 0
        %7406 = vmatpush1.bf16.msra.mxu0 0
        %7407 = vmatprep.subr.bf16.mxu0 0
        %7408 = vmatpush1.bf16.msra.mxu0 0
        %7409 = vmatprep.mubr.bf16.mxu0 0
        %7410 = vmatmul.mubr.bf16.gmra.mrb[0].mxu0 %v7304
        %v7411 = vpop.f32.mrb[0].mxu0
        %v7412 = vadd.f32 %v7327, %v7411
        %v7413 = vpop.f32.mrb[0].mxu0
        %v7414 = vpop.f32.mrb[0].mxu0
        %v7415 = vadd.f32 %v7327, %v7414
        %v7416 = vpop.f32.mrb[0].mxu0
        %7417 = vmatprep.mubr.bf16.mxu0 0
        %7418 = vmatmul.mubr.bf16.gmra.mrb[0].mxu0 %v7305
        %v7419 = vpop.f32.mrb[0].mxu0
        %v7420 = vadd.f32 %v7327, %v7419
        %v7421 = vpop.f32.mrb[0].mxu0
        %v7422 = vpop.f32.mrb[0].mxu0
        %v7423 = vadd.f32 %v7327, %v7422
        %v7424 = vpop.f32.mrb[0].mxu0
        %7425 = vdwg.mxu0
        %v7426 = vlaneseq
        %v7427 = vand.u32 %v7426, 127
        %vm7428 = vcmp.ge.s32.totalorder %v7427, 3
        %vm7429 = vcmp.lt.s32.totalorder %v7427, 7
        %vm7430 = vmand %vm7428, %vm7429
        %v7431 = vmul.f32 %v7412, %v7412
        %v7432 = vmul.f32 %v7415, %v7415
        %v7433 = vmul.f32 %v7420, %v7420
        %v7434 = vmul.f32 %v7423, %v7423
        %v7435 = vsel %vm7430, %v7431, 0.0
        %v7436 = vsel %vm7430, %v7432, 0.0
        %v7437 = vsel %vm7430, %v7433, 0.0
        %v7438 = vsel %vm7430, %v7434, 0.0
        %7439 = vadd.xlane.f32.xlu0 %v7435
        %v7440 = vpop.xlane.xlu0 %7439
        %7441 = vadd.xlane.f32.xlu0 %v7436
        %v7442 = vpop.xlane.xlu0 %7441
        %7443 = vadd.xlane.f32.xlu0 %v7437
        %v7444 = vpop.xlane.xlu0 %7443
        %7445 = vadd.xlane.f32.xlu0 %v7438
        %v7446 = vpop.xlane.xlu0 %7445
        %v7447 = vmax.f32 %v7440, 1e-24
        %v7448 = vmax.f32 %v7442, 1e-24
        %v7449 = vmax.f32 %v7444, 1e-24
        %v7450 = vmax.f32 %v7446, 1e-24
        %v7451 = vrsqrt.pop %v7447
        %v7452 = vrsqrt.pop %v7448
        %v7453 = vrsqrt.pop %v7449
        %v7454 = vrsqrt.pop %v7450
        %v7455 = vmul.f32 %v7412, %v7451
        %v7456 = vmul.f32 %v7415, %v7452
        %v7457 = vmul.f32 %v7420, %v7453
        %v7458 = vmul.f32 %v7423, %v7454
        %v7459 = vsel %vm7430, %v7455, %v7412
        %v7460 = vsel %vm7430, %v7456, %v7415
        %v7461 = vsel %vm7430, %v7457, %v7420
        %v7462 = vsel %vm7430, %v7458, %v7423
        %7463 = vst [vmem:[%s880] sm:$0xff] %v7459
        %7464 = vst [vmem:[%s880 + $0x8] sm:$0xff] %v7460
        %7465 = vst [vmem:[%s880 + $0x10] sm:$0xff] %v7461
        %7466 = vst [vmem:[%s880 + $0x18] sm:$0xff] %v7462
        %s7467 = sand.u32 %s477, 1
        %s7468 = scalar_lea.sflag [#allocation4], %s7467
        %s7469 = sand.u32 %s477, 1
        %s7470 = smul.addr %s7469, 32
        %s7471 = scalar_lea.vmem [#allocation32], %s7470
        // Predicated region
        $region177: #{tpu_custom_call.1} parent=99 // pred_check
          %p7472 = pneg %p487
        $region178: #{tpu_custom_call.1} parent=99 // pred_check_branch
          %7474 = sbr.rel (%p7472) target = $region180
        $region179: #{tpu_custom_call.1} parent=99 // pred_region
          %s7476 = ssub.s32 512, 512
          %7477 = vsyncadd %s7468, %s7476
          %s7478 = smul.addr %s44, 4
          %s7479 = smul.addr %s7478, 128
          %s7480 = scalar_lea.hbm %s20, %s7479
          %s7481 = sshll.u32 %s7471, 4
          %s7482 = int_to_ptr.vmem [resolvable:$true] %s7481
          %7487 = dma.vmem_to_hbm [thread:$0]  %s7482, 512, %s7480, %s7468, 128, 128, 8
        $region180: #{tpu_custom_call.1} parent=99 // pred_fallthru
          _
      $region100: #{tpu_custom_call.1} parent=5 // pred_fallthru
        _
      %p7488 = scmp.le.s32.totalorder 2, %s39
      // Predicated region
      $region181: #{tpu_custom_call.1} parent=5 // pred_check
        %p7489 = pneg %p7488
      $region182: #{tpu_custom_call.1} parent=5 // pred_check_branch
        %7491 = sbr.rel (%p7489) target = $region184
      $region183: #{tpu_custom_call.1} parent=5 // pred_region
        %s7492 = ssub.s32 %s39, 2
        // Predicated region
        $region185: #{tpu_custom_call.1} parent=183 // pred_check
          %p7493 = pneg %p493
        $region186: #{tpu_custom_call.1} parent=183 // pred_check_branch
          %7495 = sbr.rel (%p7493) target = $region188
        $region187: #{tpu_custom_call.1} parent=183 // pred_region
          %s7496 = sand.u32 %s478, 1
          %s7497 = scalar_lea.sflag [#allocation4], %s7496
          %s7498 = sand.u32 %s478, 1
          %s7499 = smul.addr %s7498, 32
          %s7500 = scalar_lea.vmem [#allocation32], %s7499
          %7501 = dma.done %s7497, 512
        $region188: #{tpu_custom_call.1} parent=183 // pred_fallthru
          _
      $region184: #{tpu_custom_call.1} parent=5 // pred_fallthru
        _
    $region6: #{tpu_custom_call.1} parent=1 // loop_footer
      %s43 = sadd.s32 1, %s39
    $region7: #{tpu_custom_call.1} parent=1 // loop_footer_branch
      %38 = sbr.rel target = $region3
    $region8: #{tpu_custom_call.1} parent=1 // loop_exit
      _
    %7502 = vsyncpa [#allocation3], 1
    %s7503 = scalar_lea.sflag [#allocation3], 1
    %7504 = vsyncpa %s7503, 1
    %7505 = vsyncpa [#allocation6], 1
    %7506 = vsyncpa [#allocation9], 1
    %7507 = vsyncpa [#allocation12], 1
    %7508 = vsyncpa [#allocation15], 1
    %7509 = vsyncpa [#allocation18], 1
    %7510 = vsyncpa [#allocation21], 1
    %7511 = vsyncpa [#allocation24], 1
    %7512 = vsyncpa [#allocation27], 1
    %7513 = vsyncpa [#allocation30], 1
    %7514 = vsyncpa [#allocation4], 1
    %s7515 = scalar_lea.sflag [#allocation4], 1
    %7516 = vsyncpa %s7515, 1

</llo_original>
